<compile_context>
chip_gen: v7x
topology: tpu7x:2x2x1
jax: 0.10.0
libtpu: 0.0.40
codegen_flags: <defaults>
</compile_context>

<pallas_src>
import jax
import jax.numpy as jnp
from jax.experimental import pallas as pl
from jax.experimental.pallas import tpu as pltpu

IN_DIM = 128
H1 = 1024
H2 = 2048
OUT_DIM = 784
OUT_PAD = 896  # 7 * 128 -> lane-dense output


def generator_kernel(x_ref, w1_ref, b1_ref, w2_ref, b2_ref, w3_ref, b3_ref, out_ref):
    # fc1 + relu (bf16 MXU inputs, f32 accumulation / epilogue)
    h1 = jnp.dot(x_ref[...].astype(jnp.bfloat16), w1_ref[...],
                 preferred_element_type=jnp.float32) + b1_ref[...]
    h1 = jnp.maximum(h1, 0.0)
    # fc2 + relu
    h2 = jnp.dot(h1.astype(jnp.bfloat16), w2_ref[...],
                 preferred_element_type=jnp.float32) + b2_ref[...]
    h2 = jnp.maximum(h2, 0.0)
    # fc3 (padded to 896 cols) + tanh (EUP), all f32
    h3 = jnp.dot(h2.astype(jnp.bfloat16), w3_ref[...],
                 preferred_element_type=jnp.float32) + b3_ref[...]
    out_ref[...] = jnp.tanh(h3).astype(out_ref.dtype)


def _round_up(n, m):
    return ((n + m - 1) // m) * m


def generator_forward(x, params, *, tb=256):
    """x: (B, 128) float32 -> (B, 1, 28, 28) float32."""
    w1, b1, w2, b2, w3, b3 = params
    B = x.shape[0]

    # Batch tile (sublane aligned) and padded batch so the grid divides evenly.
    TB = min(tb, _round_up(B, 8))
    B_pad = _round_up(B, TB)
    if B_pad != B:
        x = jnp.pad(x, ((0, B_pad - B), (0, 0)))

    # bf16 weights (MXU inputs), f32 biases; pad fc3 to 896 output columns.
    w1b = w1.astype(jnp.bfloat16)
    w2b = w2.astype(jnp.bfloat16)
    w3b = jnp.pad(w3, ((0, 0), (0, OUT_PAD - OUT_DIM))).astype(jnp.bfloat16)
    b3p = jnp.pad(b3, ((0, 0), (0, OUT_PAD - OUT_DIM)))

    grid = (B_pad // TB,)
    resident = lambda i: (0, 0)  # weights/biases: same block every grid step

    flops = 2 * B_pad * (IN_DIM * H1 + H1 * H2 + H2 * OUT_PAD)
    bytes_accessed = (
        (IN_DIM * H1 + H1 * H2 + H2 * OUT_PAD) * 2       # bf16 weights
        + (H1 + H2 + OUT_PAD) * 4                        # f32 biases
        + B_pad * IN_DIM * 4 + B_pad * OUT_PAD * 4       # activations in/out
    )

    flat = pl.pallas_call(
        generator_kernel,
        out_shape=jax.ShapeDtypeStruct((B_pad, OUT_PAD), jnp.float32),
        grid=grid,
        in_specs=[
            pl.BlockSpec((TB, IN_DIM), lambda i: (i, 0)),   # x tile, pipelined
            pl.BlockSpec((IN_DIM, H1), resident),           # W1
            pl.BlockSpec((1, H1), resident),                # b1
            pl.BlockSpec((H1, H2), resident),               # W2
            pl.BlockSpec((1, H2), resident),                # b2
            pl.BlockSpec((H2, OUT_PAD), resident),          # W3 (padded)
            pl.BlockSpec((1, OUT_PAD), resident),           # b3 (padded)
        ],
        out_specs=pl.BlockSpec((TB, OUT_PAD), lambda i: (i, 0)),
        compiler_params=pltpu.CompilerParams(
            dimension_semantics=("parallel",),
            vmem_limit_bytes=48 * 1024 * 1024,  # fits v7x's 64 MiB physical VMEM
        ),
        cost_estimate=pl.CostEstimate(
            flops=flops,
            transcendentals=B_pad * OUT_PAD,
            bytes_accessed=bytes_accessed,
        ),
    )(x, w1b, b1, w2b, b2, w3b, b3p)

    # Drop batch/output padding; equivalent of PyTorch x.view(-1, 1, 28, 28).
    return flat[:B, :OUT_DIM].reshape(-1, 1, 28, 28)


def init_params(key):
    """Deterministic synthetic parameters matching the nn.Linear shapes.

    Weights kept as (in, out) so the kernel computes x @ W + b (== x @ W.T + b with
    PyTorch's (out, in) layout); biases as (1, out) for lane-friendly broadcast.
    """
    k1, k2, k3, k4, k5, k6 = jax.random.split(key, 6)
    s1 = 1.0 / jnp.sqrt(128.0)
    s2 = 1.0 / jnp.sqrt(1024.0)
    s3 = 1.0 / jnp.sqrt(2048.0)
    w1 = jax.random.uniform(k1, (128, 1024), jnp.float32, -s1, s1)
    b1 = jax.random.uniform(k2, (1, 1024), jnp.float32, -s1, s1)
    w2 = jax.random.uniform(k3, (1024, 2048), jnp.float32, -s2, s2)
    b2 = jax.random.uniform(k4, (1, 2048), jnp.float32, -s2, s2)
    w3 = jax.random.uniform(k5, (2048, 784), jnp.float32, -s3, s3)
    b3 = jax.random.uniform(k6, (1, 784), jnp.float32, -s3, s3)
    return (w1, b1, w2, b2, w3, b3)


def reference_forward(x, params):
    """Pure-JAX reference mirroring the kernel's bf16-input / f32-accumulate math."""
    w1, b1, w2, b2, w3, b3 = params
    h = jnp.dot(x.astype(jnp.bfloat16), w1.astype(jnp.bfloat16),
                preferred_element_type=jnp.float32) + b1
    h = jnp.maximum(h, 0.0)
    h = jnp.dot(h.astype(jnp.bfloat16), w2.astype(jnp.bfloat16),
                preferred_element_type=jnp.float32) + b2
    h = jnp.maximum(h, 0.0)
    h = jnp.dot(h.astype(jnp.bfloat16), w3.astype(jnp.bfloat16),
                preferred_element_type=jnp.float32) + b3
    return jnp.tanh(h).reshape(-1, 1, 28, 28)


if __name__ == "__main__":
    key = jax.random.PRNGKey(0)
    k_params, k_x = jax.random.split(key)
    params = init_params(k_params)

    B = 2
    x = jax.random.normal(k_x, (B, 128), jnp.float32)

    out = jax.block_until_ready(jax.jit(generator_forward)(x, params))
    ref = reference_forward(x, params)

    assert out.shape == (B, 1, 28, 28), out.shape
    err = float(jnp.max(jnp.abs(out - ref)))
    assert jnp.allclose(out, ref, atol=1e-3, rtol=1e-3), f"mismatch vs reference, max |err|={err}"

    print("KERNEL_OK")
</pallas_src>

<mosaic_0001>
module attributes {stable_mosaic.version = 11 : i64} {
  func.func @generator_kernel(%arg0: i32, %arg1: memref<8x128xf32, #tpu.memory_space<vmem>>, %arg2: memref<128x1024xbf16, #tpu.memory_space<vmem>>, %arg3: memref<1x1024xf32, #tpu.memory_space<vmem>>, %arg4: memref<1024x2048xbf16, #tpu.memory_space<vmem>>, %arg5: memref<1x2048xf32, #tpu.memory_space<vmem>>, %arg6: memref<2048x896xbf16, #tpu.memory_space<vmem>>, %arg7: memref<1x896xf32, #tpu.memory_space<vmem>>, %arg8: memref<8x896xf32, #tpu.memory_space<vmem>>) attributes {dimension_semantics = [#tpu.dimension_semantics<parallel>], iteration_bounds = array<i64: 1>, scalar_prefetch = 0 : i64, scratch_operands = 0 : i64, tpu.core_type = #tpu.core_type<tc>, window_params = [{transform_indices = @transform_0, window_bounds = array<i64: 8, 128>}, {pipeline_mode = #tpu.pipeline_mode<synchronous>, transform_indices = @transform_1, window_bounds = array<i64: 128, 1024>}, {pipeline_mode = #tpu.pipeline_mode<synchronous>, transform_indices = @transform_2, window_bounds = array<i64: 1, 1024>}, {pipeline_mode = #tpu.pipeline_mode<synchronous>, transform_indices = @transform_3, window_bounds = array<i64: 1024, 2048>}, {pipeline_mode = #tpu.pipeline_mode<synchronous>, transform_indices = @transform_4, window_bounds = array<i64: 1, 2048>}, {pipeline_mode = #tpu.pipeline_mode<synchronous>, transform_indices = @transform_5, window_bounds = array<i64: 2048, 896>}, {pipeline_mode = #tpu.pipeline_mode<synchronous>, transform_indices = @transform_6, window_bounds = array<i64: 1, 896>}, {transform_indices = @transform_7, window_bounds = array<i64: 8, 896>}]} {
    %c0 = arith.constant 0 : index
    %c0_0 = arith.constant 0 : index
    %0 = vector.load %arg1[%c0, %c0_0] : memref<8x128xf32, #tpu.memory_space<vmem>>, vector<8x128xf32>
    %1 = arith.truncf %0 : vector<8x128xf32> to vector<8x128xbf16>
    %c0_1 = arith.constant 0 : index
    %c0_2 = arith.constant 0 : index
    %2 = vector.load %arg2[%c0_1, %c0_2] : memref<128x1024xbf16, #tpu.memory_space<vmem>>, vector<128x1024xbf16>
    %cst = arith.constant dense<0.000000e+00> : vector<8x1024xf32>
    %3 = tpu.matmul %1, %2, %cst {dimension_numbers = #tpu.dot_dimension_numbers<[1], [0], [0], [1], [0, 0, 1, 1], [], []>} : vector<8x128xbf16>, vector<128x1024xbf16>, vector<8x1024xf32> -> vector<8x1024xf32>
    %c0_3 = arith.constant 0 : index
    %c0_4 = arith.constant 0 : index
    %4 = vector.load %arg3[%c0_3, %c0_4] : memref<1x1024xf32, #tpu.memory_space<vmem>>, vector<1x1024xf32>
    %5 = vector.broadcast %4 : vector<1x1024xf32> to vector<8x1024xf32>
    %6 = arith.addf %3, %5 : vector<8x1024xf32>
    %cst_5 = arith.constant 0.000000e+00 : f32
    %7 = vector.broadcast %cst_5 : f32 to vector<8x1024xf32>
    %8 = arith.maximumf %6, %7 : vector<8x1024xf32>
    %9 = arith.truncf %8 : vector<8x1024xf32> to vector<8x1024xbf16>
    %c0_6 = arith.constant 0 : index
    %c0_7 = arith.constant 0 : index
    %10 = vector.load %arg4[%c0_6, %c0_7] : memref<1024x2048xbf16, #tpu.memory_space<vmem>>, vector<1024x2048xbf16>
    %cst_8 = arith.constant dense<0.000000e+00> : vector<8x2048xf32>
    %11 = tpu.matmul %9, %10, %cst_8 {dimension_numbers = #tpu.dot_dimension_numbers<[1], [0], [0], [1], [0, 0, 1, 1], [], []>} : vector<8x1024xbf16>, vector<1024x2048xbf16>, vector<8x2048xf32> -> vector<8x2048xf32>
    %c0_9 = arith.constant 0 : index
    %c0_10 = arith.constant 0 : index
    %12 = vector.load %arg5[%c0_9, %c0_10] : memref<1x2048xf32, #tpu.memory_space<vmem>>, vector<1x2048xf32>
    %13 = vector.broadcast %12 : vector<1x2048xf32> to vector<8x2048xf32>
    %14 = arith.addf %11, %13 : vector<8x2048xf32>
    %cst_11 = arith.constant 0.000000e+00 : f32
    %15 = vector.broadcast %cst_11 : f32 to vector<8x2048xf32>
    %16 = arith.maximumf %14, %15 : vector<8x2048xf32>
    %17 = arith.truncf %16 : vector<8x2048xf32> to vector<8x2048xbf16>
    %c0_12 = arith.constant 0 : index
    %c0_13 = arith.constant 0 : index
    %18 = vector.load %arg6[%c0_12, %c0_13] : memref<2048x896xbf16, #tpu.memory_space<vmem>>, vector<2048x896xbf16>
    %cst_14 = arith.constant dense<0.000000e+00> : vector<8x896xf32>
    %19 = tpu.matmul %17, %18, %cst_14 {dimension_numbers = #tpu.dot_dimension_numbers<[1], [0], [0], [1], [0, 0, 1, 1], [], []>} : vector<8x2048xbf16>, vector<2048x896xbf16>, vector<8x896xf32> -> vector<8x896xf32>
    %c0_15 = arith.constant 0 : index
    %c0_16 = arith.constant 0 : index
    %20 = vector.load %arg7[%c0_15, %c0_16] : memref<1x896xf32, #tpu.memory_space<vmem>>, vector<1x896xf32>
    %21 = vector.broadcast %20 : vector<1x896xf32> to vector<8x896xf32>
    %22 = arith.addf %19, %21 : vector<8x896xf32>
    %23 = math.tanh %22 : vector<8x896xf32>
    %c0_17 = arith.constant 0 : index
    %c0_18 = arith.constant 0 : index
    %24 = vector.load %arg8[%c0_17, %c0_18] : memref<8x896xf32, #tpu.memory_space<vmem>>, vector<8x896xf32>
    tpu.vector_store %arg8[%c0_17, %c0_18], %23 {strides = array<i32>} : memref<8x896xf32, #tpu.memory_space<vmem>>, vector<8x896xf32>,
    return
  }
  func.func @transform_0(%arg0: i32) -> (i32, i32) {
    %c0_i32 = arith.constant 0 : i32
    %c0_i32_0 = arith.constant 0 : i32
    return %arg0, %c0_i32 : i32, i32
  }
  func.func @transform_1(%arg0: i32) -> (i32, i32) {
    %c0_i32 = arith.constant 0 : i32
    %c0_i32_0 = arith.constant 0 : i32
    %c0_i32_1 = arith.constant 0 : i32
    return %c0_i32, %c0_i32_0 : i32, i32
  }
  func.func @transform_2(%arg0: i32) -> (i32, i32) {
    %c0_i32 = arith.constant 0 : i32
    %c0_i32_0 = arith.constant 0 : i32
    %c0_i32_1 = arith.constant 0 : i32
    return %c0_i32, %c0_i32_0 : i32, i32
  }
  func.func @transform_3(%arg0: i32) -> (i32, i32) {
    %c0_i32 = arith.constant 0 : i32
    %c0_i32_0 = arith.constant 0 : i32
    %c0_i32_1 = arith.constant 0 : i32
    return %c0_i32, %c0_i32_0 : i32, i32
  }
  func.func @transform_4(%arg0: i32) -> (i32, i32) {
    %c0_i32 = arith.constant 0 : i32
    %c0_i32_0 = arith.constant 0 : i32
    %c0_i32_1 = arith.constant 0 : i32
    return %c0_i32, %c0_i32_0 : i32, i32
  }
  func.func @transform_5(%arg0: i32) -> (i32, i32) {
    %c0_i32 = arith.constant 0 : i32
    %c0_i32_0 = arith.constant 0 : i32
    %c0_i32_1 = arith.constant 0 : i32
    return %c0_i32, %c0_i32_0 : i32, i32
  }
  func.func @transform_6(%arg0: i32) -> (i32, i32) {
    %c0_i32 = arith.constant 0 : i32
    %c0_i32_0 = arith.constant 0 : i32
    %c0_i32_1 = arith.constant 0 : i32
    return %c0_i32, %c0_i32_0 : i32, i32
  }
  func.func @transform_7(%arg0: i32) -> (i32, i32) {
    %c0_i32 = arith.constant 0 : i32
    %c0_i32_0 = arith.constant 0 : i32
    return %arg0, %c0_i32 : i32, i32
  }
}

</mosaic_0001>

<llo_original>
// kernel: generator_forward.1
$region0: #{generator_forward.1}
  #allocation0 [shape = 'u32[]', space=smem, size = 0x4, offset = 0x4, fixed_abs, tag = 'smem constant byte address 0x4 - core index']
  #allocation1 [shape = 'u32[144,128]{1,0:T(1,128)}', space=vmem, size = 0x12000, scoped, tag = 'internal scratch']
  %s0 = inlined_call_operand.vmem [shape: f32[8,128], index: 0, kind: input, shape index: {}]
  %s1 = inlined_call_operand.vmem [shape: bf16[128,1024], index: 1, kind: input, shape index: {}]
  %s2 = inlined_call_operand.vmem [shape: f32[1,1024], index: 2, kind: input, shape index: {}]
  %s3 = inlined_call_operand.vmem [shape: bf16[1024,2048], index: 3, kind: input, shape index: {}]
  %s4 = inlined_call_operand.vmem [shape: f32[1,2048], index: 4, kind: input, shape index: {}]
  %s5 = inlined_call_operand.vmem [shape: bf16[2048,896], index: 5, kind: input, shape index: {}]
  %s6 = inlined_call_operand.vmem [shape: f32[1,896], index: 6, kind: input, shape index: {}]
  %s7 = inlined_call_operand.vmem [shape: f32[8,896], index: 7, kind: output, shape index: {}]
  %s8 = sld [smem:[#allocation0]]
  $region38: #{generator_forward.1} parent=0
    _
  %s10 = ssub.s32 1, %s8
  %s11 = scalar_select 0, %s10, %s8
  // Predicated region
  $region2: #{generator_forward.1} parent=0 // pred_check
    _
  $region3: #{generator_forward.1} parent=0 // pred_check_branch
    %13 = sbr.rel (0) target = $region5
  $region4: #{generator_forward.1} parent=0 // pred_region
    _
  $region5: #{generator_forward.1} parent=0 // pred_fallthru
    _
  // Predicated region
  $region6: #{generator_forward.1} parent=0 // pred_check
    _
  $region7: #{generator_forward.1} parent=0 // pred_check_branch
    %15 = sbr.rel (0) target = $region9
  $region8: #{generator_forward.1} parent=0 // pred_region
    _
  $region9: #{generator_forward.1} parent=0 // pred_fallthru
    _
  // Predicated region
  $region10: #{generator_forward.1} parent=0 // pred_check
    _
  $region11: #{generator_forward.1} parent=0 // pred_check_branch
    %17 = sbr.rel (0) target = $region13
  $region12: #{generator_forward.1} parent=0 // pred_region
    _
  $region13: #{generator_forward.1} parent=0 // pred_fallthru
    _
  // Predicated region
  $region14: #{generator_forward.1} parent=0 // pred_check
    _
  $region15: #{generator_forward.1} parent=0 // pred_check_branch
    %19 = sbr.rel (0) target = $region17
  $region16: #{generator_forward.1} parent=0 // pred_region
    _
  $region17: #{generator_forward.1} parent=0 // pred_fallthru
    _
  // Predicated region
  $region18: #{generator_forward.1} parent=0 // pred_check
    _
  $region19: #{generator_forward.1} parent=0 // pred_check_branch
    %21 = sbr.rel (0) target = $region21
  $region20: #{generator_forward.1} parent=0 // pred_region
    _
  $region21: #{generator_forward.1} parent=0 // pred_fallthru
    _
  // Predicated region
  $region22: #{generator_forward.1} parent=0 // pred_check
    _
  $region23: #{generator_forward.1} parent=0 // pred_check_branch
    %23 = sbr.rel (0) target = $region25
  $region24: #{generator_forward.1} parent=0 // pred_region
    _
  $region25: #{generator_forward.1} parent=0 // pred_fallthru
    _
  // Predicated region
  $region26: #{generator_forward.1} parent=0 // pred_check
    _
  $region27: #{generator_forward.1} parent=0 // pred_check_branch
    %25 = sbr.rel (0) target = $region29
  $region28: #{generator_forward.1} parent=0 // pred_region
    _
  $region29: #{generator_forward.1} parent=0 // pred_fallthru
    _
  %v27 = vld [vmem:[%s0] sm:$0xff]
  %v28 = vpack.c.bf16 %v27, %v27
  %v29 = vld [vmem:[%s1] sm:$0xff]
  %v30 = vld [vmem:[%s1 + $0x8] sm:$0xff]
  %v31 = vld [vmem:[%s1 + $0x10] sm:$0xff]
  %v32 = vld [vmem:[%s1 + $0x18] sm:$0xff]
  %v33 = vld [vmem:[%s1 + $0x20] sm:$0xff]
  %v34 = vld [vmem:[%s1 + $0x28] sm:$0xff]
  %v35 = vld [vmem:[%s1 + $0x30] sm:$0xff]
  %v36 = vld [vmem:[%s1 + $0x38] sm:$0xff]
  %v37 = vld [vmem:[%s1 + $0x40] sm:$0xff]
  %v38 = vld [vmem:[%s1 + $0x48] sm:$0xff]
  %v39 = vld [vmem:[%s1 + $0x50] sm:$0xff]
  %v40 = vld [vmem:[%s1 + $0x58] sm:$0xff]
  %v41 = vld [vmem:[%s1 + $0x60] sm:$0xff]
  %v42 = vld [vmem:[%s1 + $0x68] sm:$0xff]
  %v43 = vld [vmem:[%s1 + $0x70] sm:$0xff]
  %v44 = vld [vmem:[%s1 + $0x78] sm:$0xff]
  %v45 = vld [vmem:[%s1 + $0x80] sm:$0xff]
  %v46 = vld [vmem:[%s1 + $0x88] sm:$0xff]
  %v47 = vld [vmem:[%s1 + $0x90] sm:$0xff]
  %v48 = vld [vmem:[%s1 + $0x98] sm:$0xff]
  %v49 = vld [vmem:[%s1 + $0xa0] sm:$0xff]
  %v50 = vld [vmem:[%s1 + $0xa8] sm:$0xff]
  %v51 = vld [vmem:[%s1 + $0xb0] sm:$0xff]
  %v52 = vld [vmem:[%s1 + $0xb8] sm:$0xff]
  %v53 = vld [vmem:[%s1 + $0xc0] sm:$0xff]
  %v54 = vld [vmem:[%s1 + $0xc8] sm:$0xff]
  %v55 = vld [vmem:[%s1 + $0xd0] sm:$0xff]
  %v56 = vld [vmem:[%s1 + $0xd8] sm:$0xff]
  %v57 = vld [vmem:[%s1 + $0xe0] sm:$0xff]
  %v58 = vld [vmem:[%s1 + $0xe8] sm:$0xff]
  %v59 = vld [vmem:[%s1 + $0xf0] sm:$0xff]
  %v60 = vld [vmem:[%s1 + $0xf8] sm:$0xff]
  %v61 = vld [vmem:[%s1 + $0x100] sm:$0xff]
  %v62 = vld [vmem:[%s1 + $0x108] sm:$0xff]
  %v63 = vld [vmem:[%s1 + $0x110] sm:$0xff]
  %v64 = vld [vmem:[%s1 + $0x118] sm:$0xff]
  %v65 = vld [vmem:[%s1 + $0x120] sm:$0xff]
  %v66 = vld [vmem:[%s1 + $0x128] sm:$0xff]
  %v67 = vld [vmem:[%s1 + $0x130] sm:$0xff]
  %v68 = vld [vmem:[%s1 + $0x138] sm:$0xff]
  %v69 = vld [vmem:[%s1 + $0x140] sm:$0xff]
  %v70 = vld [vmem:[%s1 + $0x148] sm:$0xff]
  %v71 = vld [vmem:[%s1 + $0x150] sm:$0xff]
  %v72 = vld [vmem:[%s1 + $0x158] sm:$0xff]
  %v73 = vld [vmem:[%s1 + $0x160] sm:$0xff]
  %v74 = vld [vmem:[%s1 + $0x168] sm:$0xff]
  %v75 = vld [vmem:[%s1 + $0x170] sm:$0xff]
  %v76 = vld [vmem:[%s1 + $0x178] sm:$0xff]
  %v77 = vld [vmem:[%s1 + $0x180] sm:$0xff]
  %v78 = vld [vmem:[%s1 + $0x188] sm:$0xff]
  %v79 = vld [vmem:[%s1 + $0x190] sm:$0xff]
  %v80 = vld [vmem:[%s1 + $0x198] sm:$0xff]
  %v81 = vld [vmem:[%s1 + $0x1a0] sm:$0xff]
  %v82 = vld [vmem:[%s1 + $0x1a8] sm:$0xff]
  %v83 = vld [vmem:[%s1 + $0x1b0] sm:$0xff]
  %v84 = vld [vmem:[%s1 + $0x1b8] sm:$0xff]
  %v85 = vld [vmem:[%s1 + $0x1c0] sm:$0xff]
  %v86 = vld [vmem:[%s1 + $0x1c8] sm:$0xff]
  %v87 = vld [vmem:[%s1 + $0x1d0] sm:$0xff]
  %v88 = vld [vmem:[%s1 + $0x1d8] sm:$0xff]
  %v89 = vld [vmem:[%s1 + $0x1e0] sm:$0xff]
  %v90 = vld [vmem:[%s1 + $0x1e8] sm:$0xff]
  %v91 = vld [vmem:[%s1 + $0x1f0] sm:$0xff]
  %v92 = vld [vmem:[%s1 + $0x1f8] sm:$0xff]
  %v93 = vld [vmem:[%s2] sm:$0xff]
  %v95 = vlaneseq
  %v96 = vshrl.u32 %v95, 7
  %v97 = vsub.s32 0, %v96
  %v98 = vrot.slane %v93, %v97
  %v99 = vlaneseq
  %v100 = vshrl.u32 %v99, 7
  %v101 = vsub.s32 1, %v100
  %v102 = vrot.slane %v93, %v101
  %v103 = vlaneseq
  %v104 = vshrl.u32 %v103, 7
  %v105 = vsub.s32 2, %v104
  %v106 = vrot.slane %v93, %v105
  %v107 = vlaneseq
  %v108 = vshrl.u32 %v107, 7
  %v109 = vsub.s32 3, %v108
  %v110 = vrot.slane %v93, %v109
  %v111 = vlaneseq
  %v112 = vshrl.u32 %v111, 7
  %v113 = vsub.s32 4, %v112
  %v114 = vrot.slane %v93, %v113
  %v115 = vlaneseq
  %v116 = vshrl.u32 %v115, 7
  %v117 = vsub.s32 5, %v116
  %v118 = vrot.slane %v93, %v117
  %v119 = vlaneseq
  %v120 = vshrl.u32 %v119, 7
  %v121 = vsub.s32 6, %v120
  %v122 = vrot.slane %v93, %v121
  %v123 = vlaneseq
  %v124 = vshrl.u32 %v123, 7
  %v125 = vsub.s32 7, %v124
  %v126 = vrot.slane %v93, %v125
  %v199 = vunpack.c.l.b16 %v29
  %v200 = vunpack.c.h.b16 %v29
  %v201 = vunpack.c.l.b16 %v30
  %v202 = vunpack.c.h.b16 %v30
  %v203 = vunpack.c.l.b16 %v31
  %v204 = vunpack.c.h.b16 %v31
  %v205 = vunpack.c.l.b16 %v32
  %v206 = vunpack.c.h.b16 %v32
  %v207 = vunpack.c.l.b16 %v33
  %v208 = vunpack.c.h.b16 %v33
  %v209 = vunpack.c.l.b16 %v34
  %v210 = vunpack.c.h.b16 %v34
  %v211 = vunpack.c.l.b16 %v35
  %v212 = vunpack.c.h.b16 %v35
  %v213 = vunpack.c.l.b16 %v36
  %v214 = vunpack.c.h.b16 %v36
  %v215 = vunpack.c.l.b16 %v37
  %v216 = vunpack.c.h.b16 %v37
  %v217 = vunpack.c.l.b16 %v38
  %v218 = vunpack.c.h.b16 %v38
  %v219 = vunpack.c.l.b16 %v39
  %v220 = vunpack.c.h.b16 %v39
  %v221 = vunpack.c.l.b16 %v40
  %v222 = vunpack.c.h.b16 %v40
  %v223 = vunpack.c.l.b16 %v41
  %v224 = vunpack.c.h.b16 %v41
  %v225 = vunpack.c.l.b16 %v42
  %v226 = vunpack.c.h.b16 %v42
  %v227 = vunpack.c.l.b16 %v43
  %v228 = vunpack.c.h.b16 %v43
  %v229 = vunpack.c.l.b16 %v44
  %v230 = vunpack.c.h.b16 %v44
  %v231 = vunpack.c.l.b16 %v45
  %v232 = vunpack.c.h.b16 %v45
  %v233 = vunpack.c.l.b16 %v46
  %v234 = vunpack.c.h.b16 %v46
  %v235 = vunpack.c.l.b16 %v47
  %v236 = vunpack.c.h.b16 %v47
  %v237 = vunpack.c.l.b16 %v48
  %v238 = vunpack.c.h.b16 %v48
  %v239 = vunpack.c.l.b16 %v49
  %v240 = vunpack.c.h.b16 %v49
  %v241 = vunpack.c.l.b16 %v50
  %v242 = vunpack.c.h.b16 %v50
  %v243 = vunpack.c.l.b16 %v51
  %v244 = vunpack.c.h.b16 %v51
  %v245 = vunpack.c.l.b16 %v52
  %v246 = vunpack.c.h.b16 %v52
  %v247 = vunpack.c.l.b16 %v53
  %v248 = vunpack.c.h.b16 %v53
  %v249 = vunpack.c.l.b16 %v54
  %v250 = vunpack.c.h.b16 %v54
  %v251 = vunpack.c.l.b16 %v55
  %v252 = vunpack.c.h.b16 %v55
  %v253 = vunpack.c.l.b16 %v56
  %v254 = vunpack.c.h.b16 %v56
  %v255 = vunpack.c.l.b16 %v57
  %v256 = vunpack.c.h.b16 %v57
  %v257 = vunpack.c.l.b16 %v58
  %v258 = vunpack.c.h.b16 %v58
  %v259 = vunpack.c.l.b16 %v59
  %v260 = vunpack.c.h.b16 %v59
  %v261 = vunpack.c.l.b16 %v60
  %v262 = vunpack.c.h.b16 %v60
  %v263 = vunpack.c.l.b16 %v61
  %v264 = vunpack.c.h.b16 %v61
  %v265 = vunpack.c.l.b16 %v62
  %v266 = vunpack.c.h.b16 %v62
  %v267 = vunpack.c.l.b16 %v63
  %v268 = vunpack.c.h.b16 %v63
  %v269 = vunpack.c.l.b16 %v64
  %v270 = vunpack.c.h.b16 %v64
  %v271 = vunpack.c.l.b16 %v65
  %v272 = vunpack.c.h.b16 %v65
  %v273 = vunpack.c.l.b16 %v66
  %v274 = vunpack.c.h.b16 %v66
  %v275 = vunpack.c.l.b16 %v67
  %v276 = vunpack.c.h.b16 %v67
  %v277 = vunpack.c.l.b16 %v68
  %v278 = vunpack.c.h.b16 %v68
  %v279 = vunpack.c.l.b16 %v69
  %v280 = vunpack.c.h.b16 %v69
  %v281 = vunpack.c.l.b16 %v70
  %v282 = vunpack.c.h.b16 %v70
  %v283 = vunpack.c.l.b16 %v71
  %v284 = vunpack.c.h.b16 %v71
  %v285 = vunpack.c.l.b16 %v72
  %v286 = vunpack.c.h.b16 %v72
  %v287 = vunpack.c.l.b16 %v73
  %v288 = vunpack.c.h.b16 %v73
  %v289 = vunpack.c.l.b16 %v74
  %v290 = vunpack.c.h.b16 %v74
  %v291 = vunpack.c.l.b16 %v75
  %v292 = vunpack.c.h.b16 %v75
  %v293 = vunpack.c.l.b16 %v76
  %v294 = vunpack.c.h.b16 %v76
  %v295 = vunpack.c.l.b16 %v77
  %v296 = vunpack.c.h.b16 %v77
  %v297 = vunpack.c.l.b16 %v78
  %v298 = vunpack.c.h.b16 %v78
  %v299 = vunpack.c.l.b16 %v79
  %v300 = vunpack.c.h.b16 %v79
  %v301 = vunpack.c.l.b16 %v80
  %v302 = vunpack.c.h.b16 %v80
  %v303 = vunpack.c.l.b16 %v81
  %v304 = vunpack.c.h.b16 %v81
  %v305 = vunpack.c.l.b16 %v82
  %v306 = vunpack.c.h.b16 %v82
  %v307 = vunpack.c.l.b16 %v83
  %v308 = vunpack.c.h.b16 %v83
  %v309 = vunpack.c.l.b16 %v84
  %v310 = vunpack.c.h.b16 %v84
  %v311 = vunpack.c.l.b16 %v85
  %v312 = vunpack.c.h.b16 %v85
  %v313 = vunpack.c.l.b16 %v86
  %v314 = vunpack.c.h.b16 %v86
  %v315 = vunpack.c.l.b16 %v87
  %v316 = vunpack.c.h.b16 %v87
  %v317 = vunpack.c.l.b16 %v88
  %v318 = vunpack.c.h.b16 %v88
  %v319 = vunpack.c.l.b16 %v89
  %v320 = vunpack.c.h.b16 %v89
  %v321 = vunpack.c.l.b16 %v90
  %v322 = vunpack.c.h.b16 %v90
  %v323 = vunpack.c.l.b16 %v91
  %v324 = vunpack.c.h.b16 %v91
  %v325 = vunpack.c.l.b16 %v92
  %v326 = vunpack.c.h.b16 %v92
  %v327 = vpack.c.b16 %v207, %v199
  %v328 = vpack.c.b16 %v208, %v200
  %v329 = vpack.c.b16 %v209, %v201
  %v330 = vpack.c.b16 %v210, %v202
  %v331 = vpack.c.b16 %v211, %v203
  %v332 = vpack.c.b16 %v212, %v204
  %v333 = vpack.c.b16 %v213, %v205
  %v334 = vpack.c.b16 %v214, %v206
  %v335 = vpack.c.b16 %v223, %v215
  %v336 = vpack.c.b16 %v224, %v216
  %v337 = vpack.c.b16 %v225, %v217
  %v338 = vpack.c.b16 %v226, %v218
  %v339 = vpack.c.b16 %v227, %v219
  %v340 = vpack.c.b16 %v228, %v220
  %v341 = vpack.c.b16 %v229, %v221
  %v342 = vpack.c.b16 %v230, %v222
  %v343 = vpack.c.b16 %v239, %v231
  %v344 = vpack.c.b16 %v240, %v232
  %v345 = vpack.c.b16 %v241, %v233
  %v346 = vpack.c.b16 %v242, %v234
  %v347 = vpack.c.b16 %v243, %v235
  %v348 = vpack.c.b16 %v244, %v236
  %v349 = vpack.c.b16 %v245, %v237
  %v350 = vpack.c.b16 %v246, %v238
  %v351 = vpack.c.b16 %v255, %v247
  %v352 = vpack.c.b16 %v256, %v248
  %v353 = vpack.c.b16 %v257, %v249
  %v354 = vpack.c.b16 %v258, %v250
  %v355 = vpack.c.b16 %v259, %v251
  %v356 = vpack.c.b16 %v260, %v252
  %v357 = vpack.c.b16 %v261, %v253
  %v358 = vpack.c.b16 %v262, %v254
  %v359 = vpack.c.b16 %v271, %v263
  %v360 = vpack.c.b16 %v272, %v264
  %v361 = vpack.c.b16 %v273, %v265
  %v362 = vpack.c.b16 %v274, %v266
  %v363 = vpack.c.b16 %v275, %v267
  %v364 = vpack.c.b16 %v276, %v268
  %v365 = vpack.c.b16 %v277, %v269
  %v366 = vpack.c.b16 %v278, %v270
  %v367 = vpack.c.b16 %v287, %v279
  %v368 = vpack.c.b16 %v288, %v280
  %v369 = vpack.c.b16 %v289, %v281
  %v370 = vpack.c.b16 %v290, %v282
  %v371 = vpack.c.b16 %v291, %v283
  %v372 = vpack.c.b16 %v292, %v284
  %v373 = vpack.c.b16 %v293, %v285
  %v374 = vpack.c.b16 %v294, %v286
  %v375 = vpack.c.b16 %v303, %v295
  %v376 = vpack.c.b16 %v304, %v296
  %v377 = vpack.c.b16 %v305, %v297
  %v378 = vpack.c.b16 %v306, %v298
  %v379 = vpack.c.b16 %v307, %v299
  %v380 = vpack.c.b16 %v308, %v300
  %v381 = vpack.c.b16 %v309, %v301
  %v382 = vpack.c.b16 %v310, %v302
  %v383 = vpack.c.b16 %v319, %v311
  %v384 = vpack.c.b16 %v320, %v312
  %v385 = vpack.c.b16 %v321, %v313
  %v386 = vpack.c.b16 %v322, %v314
  %v387 = vpack.c.b16 %v323, %v315
  %v388 = vpack.c.b16 %v324, %v316
  %v389 = vpack.c.b16 %v325, %v317
  %v390 = vpack.c.b16 %v326, %v318
  %455 = vmatprep.subr.bf16.mxu0 %v328
  %456 = vmatpush1.bf16.msra.mxu0 %v327
  %457 = vmatprep.subr.bf16.mxu0 %v336
  %458 = vmatpush1.bf16.msra.mxu0 %v335
  %459 = vmatprep.subr.bf16.mxu0 %v344
  %460 = vmatpush1.bf16.msra.mxu0 %v343
  %461 = vmatprep.subr.bf16.mxu0 %v352
  %462 = vmatpush1.bf16.msra.mxu0 %v351
  %463 = vmatprep.subr.bf16.mxu0 %v360
  %464 = vmatpush1.bf16.msra.mxu0 %v359
  %465 = vmatprep.subr.bf16.mxu0 %v368
  %466 = vmatpush1.bf16.msra.mxu0 %v367
  %467 = vmatprep.subr.bf16.mxu0 %v376
  %468 = vmatpush1.bf16.msra.mxu0 %v375
  %469 = vmatprep.subr.bf16.mxu0 %v384
  %470 = vmatpush1.bf16.msra.mxu0 %v383
  %471 = vmatprep.subr.bf16.mxu0 0
  %472 = vmatpush1.bf16.msra.mxu0 0
  %473 = vmatprep.subr.bf16.mxu0 0
  %474 = vmatpush1.bf16.msra.mxu0 0
  %475 = vmatprep.subr.bf16.mxu0 0
  %476 = vmatpush1.bf16.msra.mxu0 0
  %477 = vmatprep.subr.bf16.mxu0 0
  %478 = vmatpush1.bf16.msra.mxu0 0
  %479 = vmatprep.subr.bf16.mxu0 0
  %480 = vmatpush1.bf16.msra.mxu0 0
  %481 = vmatprep.subr.bf16.mxu0 0
  %482 = vmatpush1.bf16.msra.mxu0 0
  %483 = vmatprep.subr.bf16.mxu0 0
  %484 = vmatpush1.bf16.msra.mxu0 0
  %485 = vmatprep.subr.bf16.mxu0 0
  %486 = vmatpush1.bf16.msra.mxu0 0
  %487 = vmatprep.mubr.bf16.mxu0 0
  %488 = vmatmul.mubr.bf16.gmra.mrb[0].mxu0 %v28
  %v489 = vpop.f32.mrb[0].mxu0
  %v490 = vadd.f32 %v98, %v489
  %v491 = vpop.f32.mrb[0].mxu0
  %v492 = vadd.f32 %v102, %v491
  %v493 = vpop.f32.mrb[0].mxu0
  %v494 = vpop.f32.mrb[0].mxu0
  %495 = vdwg.mxu0
  %496 = vmatprep.subr.bf16.mxu0 %v330
  %497 = vmatpush1.bf16.msra.mxu0 %v329
  %498 = vmatprep.subr.bf16.mxu0 %v338
  %499 = vmatpush1.bf16.msra.mxu0 %v337
  %500 = vmatprep.subr.bf16.mxu0 %v346
  %501 = vmatpush1.bf16.msra.mxu0 %v345
  %502 = vmatprep.subr.bf16.mxu0 %v354
  %503 = vmatpush1.bf16.msra.mxu0 %v353
  %504 = vmatprep.subr.bf16.mxu0 %v362
  %505 = vmatpush1.bf16.msra.mxu0 %v361
  %506 = vmatprep.subr.bf16.mxu0 %v370
  %507 = vmatpush1.bf16.msra.mxu0 %v369
  %508 = vmatprep.subr.bf16.mxu0 %v378
  %509 = vmatpush1.bf16.msra.mxu0 %v377
  %510 = vmatprep.subr.bf16.mxu0 %v386
  %511 = vmatpush1.bf16.msra.mxu0 %v385
  %512 = vmatprep.subr.bf16.mxu0 0
  %513 = vmatpush1.bf16.msra.mxu0 0
  %514 = vmatprep.subr.bf16.mxu0 0
  %515 = vmatpush1.bf16.msra.mxu0 0
  %516 = vmatprep.subr.bf16.mxu0 0
  %517 = vmatpush1.bf16.msra.mxu0 0
  %518 = vmatprep.subr.bf16.mxu0 0
  %519 = vmatpush1.bf16.msra.mxu0 0
  %520 = vmatprep.subr.bf16.mxu0 0
  %521 = vmatpush1.bf16.msra.mxu0 0
  %522 = vmatprep.subr.bf16.mxu0 0
  %523 = vmatpush1.bf16.msra.mxu0 0
  %524 = vmatprep.subr.bf16.mxu0 0
  %525 = vmatpush1.bf16.msra.mxu0 0
  %526 = vmatprep.subr.bf16.mxu0 0
  %527 = vmatpush1.bf16.msra.mxu0 0
  %528 = vmatprep.mubr.bf16.mxu0 0
  %529 = vmatmul.mubr.bf16.gmra.mrb[0].mxu0 %v28
  %v530 = vpop.f32.mrb[0].mxu0
  %v531 = vadd.f32 %v106, %v530
  %v532 = vpop.f32.mrb[0].mxu0
  %v533 = vadd.f32 %v110, %v532
  %v534 = vpop.f32.mrb[0].mxu0
  %v535 = vpop.f32.mrb[0].mxu0
  %536 = vdwg.mxu0
  %537 = vmatprep.subr.bf16.mxu0 %v332
  %538 = vmatpush1.bf16.msra.mxu0 %v331
  %539 = vmatprep.subr.bf16.mxu0 %v340
  %540 = vmatpush1.bf16.msra.mxu0 %v339
  %541 = vmatprep.subr.bf16.mxu0 %v348
  %542 = vmatpush1.bf16.msra.mxu0 %v347
  %543 = vmatprep.subr.bf16.mxu0 %v356
  %544 = vmatpush1.bf16.msra.mxu0 %v355
  %545 = vmatprep.subr.bf16.mxu0 %v364
  %546 = vmatpush1.bf16.msra.mxu0 %v363
  %547 = vmatprep.subr.bf16.mxu0 %v372
  %548 = vmatpush1.bf16.msra.mxu0 %v371
  %549 = vmatprep.subr.bf16.mxu0 %v380
  %550 = vmatpush1.bf16.msra.mxu0 %v379
  %551 = vmatprep.subr.bf16.mxu0 %v388
  %552 = vmatpush1.bf16.msra.mxu0 %v387
  %553 = vmatprep.subr.bf16.mxu0 0
  %554 = vmatpush1.bf16.msra.mxu0 0
  %555 = vmatprep.subr.bf16.mxu0 0
  %556 = vmatpush1.bf16.msra.mxu0 0
  %557 = vmatprep.subr.bf16.mxu0 0
  %558 = vmatpush1.bf16.msra.mxu0 0
  %559 = vmatprep.subr.bf16.mxu0 0
  %560 = vmatpush1.bf16.msra.mxu0 0
  %561 = vmatprep.subr.bf16.mxu0 0
  %562 = vmatpush1.bf16.msra.mxu0 0
  %563 = vmatprep.subr.bf16.mxu0 0
  %564 = vmatpush1.bf16.msra.mxu0 0
  %565 = vmatprep.subr.bf16.mxu0 0
  %566 = vmatpush1.bf16.msra.mxu0 0
  %567 = vmatprep.subr.bf16.mxu0 0
  %568 = vmatpush1.bf16.msra.mxu0 0
  %569 = vmatprep.mubr.bf16.mxu0 0
  %570 = vmatmul.mubr.bf16.gmra.mrb[0].mxu0 %v28
  %v571 = vpop.f32.mrb[0].mxu0
  %v572 = vadd.f32 %v114, %v571
  %v573 = vpop.f32.mrb[0].mxu0
  %v574 = vadd.f32 %v118, %v573
  %v575 = vpop.f32.mrb[0].mxu0
  %v576 = vpop.f32.mrb[0].mxu0
  %577 = vdwg.mxu0
  %578 = vmatprep.subr.bf16.mxu0 %v334
  %579 = vmatpush1.bf16.msra.mxu0 %v333
  %580 = vmatprep.subr.bf16.mxu0 %v342
  %581 = vmatpush1.bf16.msra.mxu0 %v341
  %582 = vmatprep.subr.bf16.mxu0 %v350
  %583 = vmatpush1.bf16.msra.mxu0 %v349
  %584 = vmatprep.subr.bf16.mxu0 %v358
  %585 = vmatpush1.bf16.msra.mxu0 %v357
  %586 = vmatprep.subr.bf16.mxu0 %v366
  %587 = vmatpush1.bf16.msra.mxu0 %v365
  %588 = vmatprep.subr.bf16.mxu0 %v374
  %589 = vmatpush1.bf16.msra.mxu0 %v373
  %590 = vmatprep.subr.bf16.mxu0 %v382
  %591 = vmatpush1.bf16.msra.mxu0 %v381
  %592 = vmatprep.subr.bf16.mxu0 %v390
  %593 = vmatpush1.bf16.msra.mxu0 %v389
  %594 = vmatprep.subr.bf16.mxu0 0
  %595 = vmatpush1.bf16.msra.mxu0 0
  %596 = vmatprep.subr.bf16.mxu0 0
  %597 = vmatpush1.bf16.msra.mxu0 0
  %598 = vmatprep.subr.bf16.mxu0 0
  %599 = vmatpush1.bf16.msra.mxu0 0
  %600 = vmatprep.subr.bf16.mxu0 0
  %601 = vmatpush1.bf16.msra.mxu0 0
  %602 = vmatprep.subr.bf16.mxu0 0
  %603 = vmatpush1.bf16.msra.mxu0 0
  %604 = vmatprep.subr.bf16.mxu0 0
  %605 = vmatpush1.bf16.msra.mxu0 0
  %606 = vmatprep.subr.bf16.mxu0 0
  %607 = vmatpush1.bf16.msra.mxu0 0
  %608 = vmatprep.subr.bf16.mxu0 0
  %609 = vmatpush1.bf16.msra.mxu0 0
  %610 = vmatprep.mubr.bf16.mxu0 0
  %611 = vmatmul.mubr.bf16.gmra.mrb[0].mxu0 %v28
  %v612 = vpop.f32.mrb[0].mxu0
  %v613 = vadd.f32 %v122, %v612
  %v614 = vpop.f32.mrb[0].mxu0
  %v615 = vadd.f32 %v126, %v614
  %v616 = vpop.f32.mrb[0].mxu0
  %v617 = vpop.f32.mrb[0].mxu0
  %618 = vdwg.mxu0
  %v619 = vmax.f32 %v490, 0.0
  %v620 = vmax.f32 %v492, 0.0
  %v621 = vmax.f32 %v531, 0.0
  %v622 = vmax.f32 %v533, 0.0
  %v623 = vmax.f32 %v572, 0.0
  %v624 = vmax.f32 %v574, 0.0
  %v625 = vmax.f32 %v613, 0.0
  %v626 = vmax.f32 %v615, 0.0
  %v627 = vpack.c.bf16 %v619, %v619
  %v628 = vpack.c.bf16 %v620, %v620
  %v629 = vpack.c.bf16 %v621, %v621
  %v630 = vpack.c.bf16 %v622, %v622
  %v631 = vpack.c.bf16 %v623, %v623
  %v632 = vpack.c.bf16 %v624, %v624
  %v633 = vpack.c.bf16 %v625, %v625
  %v634 = vpack.c.bf16 %v626, %v626
  %v635 = vld [vmem:[%s3] sm:$0xff]
  %v636 = vld [vmem:[%s3 + $0x8] sm:$0xff]
  %v637 = vld [vmem:[%s3 + $0x10] sm:$0xff]
  %v638 = vld [vmem:[%s3 + $0x18] sm:$0xff]
  %v639 = vld [vmem:[%s3 + $0x20] sm:$0xff]
  %v640 = vld [vmem:[%s3 + $0x28] sm:$0xff]
  %v641 = vld [vmem:[%s3 + $0x30] sm:$0xff]
  %v642 = vld [vmem:[%s3 + $0x38] sm:$0xff]
  %v643 = vld [vmem:[%s3 + $0x40] sm:$0xff]
  %v644 = vld [vmem:[%s3 + $0x48] sm:$0xff]
  %v645 = vld [vmem:[%s3 + $0x50] sm:$0xff]
  %v646 = vld [vmem:[%s3 + $0x58] sm:$0xff]
  %v647 = vld [vmem:[%s3 + $0x60] sm:$0xff]
  %v648 = vld [vmem:[%s3 + $0x68] sm:$0xff]
  %v649 = vld [vmem:[%s3 + $0x70] sm:$0xff]
  %v650 = vld [vmem:[%s3 + $0x78] sm:$0xff]
  %v651 = vld [vmem:[%s3 + $0x80] sm:$0xff]
  %v652 = vld [vmem:[%s3 + $0x88] sm:$0xff]
  %v653 = vld [vmem:[%s3 + $0x90] sm:$0xff]
  %v654 = vld [vmem:[%s3 + $0x98] sm:$0xff]
  %v655 = vld [vmem:[%s3 + $0xa0] sm:$0xff]
  %v656 = vld [vmem:[%s3 + $0xa8] sm:$0xff]
  %v657 = vld [vmem:[%s3 + $0xb0] sm:$0xff]
  %v658 = vld [vmem:[%s3 + $0xb8] sm:$0xff]
  %v659 = vld [vmem:[%s3 + $0xc0] sm:$0xff]
  %v660 = vld [vmem:[%s3 + $0xc8] sm:$0xff]
  %v661 = vld [vmem:[%s3 + $0xd0] sm:$0xff]
  %v662 = vld [vmem:[%s3 + $0xd8] sm:$0xff]
  %v663 = vld [vmem:[%s3 + $0xe0] sm:$0xff]
  %v664 = vld [vmem:[%s3 + $0xe8] sm:$0xff]
  %v665 = vld [vmem:[%s3 + $0xf0] sm:$0xff]
  %v666 = vld [vmem:[%s3 + $0xf8] sm:$0xff]
  %v667 = vld [vmem:[%s3 + $0x100] sm:$0xff]
  %v668 = vld [vmem:[%s3 + $0x108] sm:$0xff]
  %v669 = vld [vmem:[%s3 + $0x110] sm:$0xff]
  %v670 = vld [vmem:[%s3 + $0x118] sm:$0xff]
  %v671 = vld [vmem:[%s3 + $0x120] sm:$0xff]
  %v672 = vld [vmem:[%s3 + $0x128] sm:$0xff]
  %v673 = vld [vmem:[%s3 + $0x130] sm:$0xff]
  %v674 = vld [vmem:[%s3 + $0x138] sm:$0xff]
  %v675 = vld [vmem:[%s3 + $0x140] sm:$0xff]
  %v676 = vld [vmem:[%s3 + $0x148] sm:$0xff]
  %v677 = vld [vmem:[%s3 + $0x150] sm:$0xff]
  %v678 = vld [vmem:[%s3 + $0x158] sm:$0xff]
  %v679 = vld [vmem:[%s3 + $0x160] sm:$0xff]
  %v680 = vld [vmem:[%s3 + $0x168] sm:$0xff]
  %v681 = vld [vmem:[%s3 + $0x170] sm:$0xff]
  %v682 = vld [vmem:[%s3 + $0x178] sm:$0xff]
  %v683 = vld [vmem:[%s3 + $0x180] sm:$0xff]
  %v684 = vld [vmem:[%s3 + $0x188] sm:$0xff]
  %v685 = vld [vmem:[%s3 + $0x190] sm:$0xff]
  %v686 = vld [vmem:[%s3 + $0x198] sm:$0xff]
  %v687 = vld [vmem:[%s3 + $0x1a0] sm:$0xff]
  %v688 = vld [vmem:[%s3 + $0x1a8] sm:$0xff]
  %v689 = vld [vmem:[%s3 + $0x1b0] sm:$0xff]
  %v690 = vld [vmem:[%s3 + $0x1b8] sm:$0xff]
  %v691 = vld [vmem:[%s3 + $0x1c0] sm:$0xff]
  %v692 = vld [vmem:[%s3 + $0x1c8] sm:$0xff]
  %v693 = vld [vmem:[%s3 + $0x1d0] sm:$0xff]
  %v694 = vld [vmem:[%s3 + $0x1d8] sm:$0xff]
  %v695 = vld [vmem:[%s3 + $0x1e0] sm:$0xff]
  %v696 = vld [vmem:[%s3 + $0x1e8] sm:$0xff]
  %v697 = vld [vmem:[%s3 + $0x1f0] sm:$0xff]
  %v698 = vld [vmem:[%s3 + $0x1f8] sm:$0xff]
  %v699 = vld [vmem:[%s3 + $0x200] sm:$0xff]
  %v700 = vld [vmem:[%s3 + $0x208] sm:$0xff]
  %v701 = vld [vmem:[%s3 + $0x210] sm:$0xff]
  %v702 = vld [vmem:[%s3 + $0x218] sm:$0xff]
  %v703 = vld [vmem:[%s3 + $0x220] sm:$0xff]
  %v704 = vld [vmem:[%s3 + $0x228] sm:$0xff]
  %v705 = vld [vmem:[%s3 + $0x230] sm:$0xff]
  %v706 = vld [vmem:[%s3 + $0x238] sm:$0xff]
  %v707 = vld [vmem:[%s3 + $0x240] sm:$0xff]
  %v708 = vld [vmem:[%s3 + $0x248] sm:$0xff]
  %v709 = vld [vmem:[%s3 + $0x250] sm:$0xff]
  %v710 = vld [vmem:[%s3 + $0x258] sm:$0xff]
  %v711 = vld [vmem:[%s3 + $0x260] sm:$0xff]
  %v712 = vld [vmem:[%s3 + $0x268] sm:$0xff]
  %v713 = vld [vmem:[%s3 + $0x270] sm:$0xff]
  %v714 = vld [vmem:[%s3 + $0x278] sm:$0xff]
  %v715 = vld [vmem:[%s3 + $0x280] sm:$0xff]
  %v716 = vld [vmem:[%s3 + $0x288] sm:$0xff]
  %v717 = vld [vmem:[%s3 + $0x290] sm:$0xff]
  %v718 = vld [vmem:[%s3 + $0x298] sm:$0xff]
  %v719 = vld [vmem:[%s3 + $0x2a0] sm:$0xff]
  %v720 = vld [vmem:[%s3 + $0x2a8] sm:$0xff]
  %v721 = vld [vmem:[%s3 + $0x2b0] sm:$0xff]
  %v722 = vld [vmem:[%s3 + $0x2b8] sm:$0xff]
  %v723 = vld [vmem:[%s3 + $0x2c0] sm:$0xff]
  %v724 = vld [vmem:[%s3 + $0x2c8] sm:$0xff]
  %v725 = vld [vmem:[%s3 + $0x2d0] sm:$0xff]
  %v726 = vld [vmem:[%s3 + $0x2d8] sm:$0xff]
  %v727 = vld [vmem:[%s3 + $0x2e0] sm:$0xff]
  %v728 = vld [vmem:[%s3 + $0x2e8] sm:$0xff]
  %v729 = vld [vmem:[%s3 + $0x2f0] sm:$0xff]
  %v730 = vld [vmem:[%s3 + $0x2f8] sm:$0xff]
  %v731 = vld [vmem:[%s3 + $0x300] sm:$0xff]
  %v732 = vld [vmem:[%s3 + $0x308] sm:$0xff]
  %v733 = vld [vmem:[%s3 + $0x310] sm:$0xff]
  %v734 = vld [vmem:[%s3 + $0x318] sm:$0xff]
  %v735 = vld [vmem:[%s3 + $0x320] sm:$0xff]
  %v736 = vld [vmem:[%s3 + $0x328] sm:$0xff]
  %v737 = vld [vmem:[%s3 + $0x330] sm:$0xff]
  %v738 = vld [vmem:[%s3 + $0x338] sm:$0xff]
  %v739 = vld [vmem:[%s3 + $0x340] sm:$0xff]
  %v740 = vld [vmem:[%s3 + $0x348] sm:$0xff]
  %v741 = vld [vmem:[%s3 + $0x350] sm:$0xff]
  %v742 = vld [vmem:[%s3 + $0x358] sm:$0xff]
  %v743 = vld [vmem:[%s3 + $0x360] sm:$0xff]
  %v744 = vld [vmem:[%s3 + $0x368] sm:$0xff]
  %v745 = vld [vmem:[%s3 + $0x370] sm:$0xff]
  %v746 = vld [vmem:[%s3 + $0x378] sm:$0xff]
  %v747 = vld [vmem:[%s3 + $0x380] sm:$0xff]
  %v748 = vld [vmem:[%s3 + $0x388] sm:$0xff]
  %v749 = vld [vmem:[%s3 + $0x390] sm:$0xff]
  %v750 = vld [vmem:[%s3 + $0x398] sm:$0xff]
  %v751 = vld [vmem:[%s3 + $0x3a0] sm:$0xff]
  %v752 = vld [vmem:[%s3 + $0x3a8] sm:$0xff]
  %v753 = vld [vmem:[%s3 + $0x3b0] sm:$0xff]
  %v754 = vld [vmem:[%s3 + $0x3b8] sm:$0xff]
  %v755 = vld [vmem:[%s3 + $0x3c0] sm:$0xff]
  %v756 = vld [vmem:[%s3 + $0x3c8] sm:$0xff]
  %v757 = vld [vmem:[%s3 + $0x3d0] sm:$0xff]
  %v758 = vld [vmem:[%s3 + $0x3d8] sm:$0xff]
  %v759 = vld [vmem:[%s3 + $0x3e0] sm:$0xff]
  %v760 = vld [vmem:[%s3 + $0x3e8] sm:$0xff]
  %v761 = vld [vmem:[%s3 + $0x3f0] sm:$0xff]
  %v762 = vld [vmem:[%s3 + $0x3f8] sm:$0xff]
  %v763 = vld [vmem:[%s3 + $0x400] sm:$0xff]
  %v764 = vld [vmem:[%s3 + $0x408] sm:$0xff]
  %v765 = vld [vmem:[%s3 + $0x410] sm:$0xff]
  %v766 = vld [vmem:[%s3 + $0x418] sm:$0xff]
  %v767 = vld [vmem:[%s3 + $0x420] sm:$0xff]
  %v768 = vld [vmem:[%s3 + $0x428] sm:$0xff]
  %v769 = vld [vmem:[%s3 + $0x430] sm:$0xff]
  %v770 = vld [vmem:[%s3 + $0x438] sm:$0xff]
  %v771 = vld [vmem:[%s3 + $0x440] sm:$0xff]
  %v772 = vld [vmem:[%s3 + $0x448] sm:$0xff]
  %v773 = vld [vmem:[%s3 + $0x450] sm:$0xff]
  %v774 = vld [vmem:[%s3 + $0x458] sm:$0xff]
  %v775 = vld [vmem:[%s3 + $0x460] sm:$0xff]
  %v776 = vld [vmem:[%s3 + $0x468] sm:$0xff]
  %v777 = vld [vmem:[%s3 + $0x470] sm:$0xff]
  %v778 = vld [vmem:[%s3 + $0x478] sm:$0xff]
  %v779 = vld [vmem:[%s3 + $0x480] sm:$0xff]
  %v780 = vld [vmem:[%s3 + $0x488] sm:$0xff]
  %v781 = vld [vmem:[%s3 + $0x490] sm:$0xff]
  %v782 = vld [vmem:[%s3 + $0x498] sm:$0xff]
  %v783 = vld [vmem:[%s3 + $0x4a0] sm:$0xff]
  %v784 = vld [vmem:[%s3 + $0x4a8] sm:$0xff]
  %v785 = vld [vmem:[%s3 + $0x4b0] sm:$0xff]
  %v786 = vld [vmem:[%s3 + $0x4b8] sm:$0xff]
  %v787 = vld [vmem:[%s3 + $0x4c0] sm:$0xff]
  %v788 = vld [vmem:[%s3 + $0x4c8] sm:$0xff]
  %v789 = vld [vmem:[%s3 + $0x4d0] sm:$0xff]
  %v790 = vld [vmem:[%s3 + $0x4d8] sm:$0xff]
  %v791 = vld [vmem:[%s3 + $0x4e0] sm:$0xff]
  %v792 = vld [vmem:[%s3 + $0x4e8] sm:$0xff]
  %v793 = vld [vmem:[%s3 + $0x4f0] sm:$0xff]
  %v794 = vld [vmem:[%s3 + $0x4f8] sm:$0xff]
  %v795 = vld [vmem:[%s3 + $0x500] sm:$0xff]
  %v796 = vld [vmem:[%s3 + $0x508] sm:$0xff]
  %v797 = vld [vmem:[%s3 + $0x510] sm:$0xff]
  %v798 = vld [vmem:[%s3 + $0x518] sm:$0xff]
  %v799 = vld [vmem:[%s3 + $0x520] sm:$0xff]
  %v800 = vld [vmem:[%s3 + $0x528] sm:$0xff]
  %v801 = vld [vmem:[%s3 + $0x530] sm:$0xff]
  %v802 = vld [vmem:[%s3 + $0x538] sm:$0xff]
  %v803 = vld [vmem:[%s3 + $0x540] sm:$0xff]
  %v804 = vld [vmem:[%s3 + $0x548] sm:$0xff]
  %v805 = vld [vmem:[%s3 + $0x550] sm:$0xff]
  %v806 = vld [vmem:[%s3 + $0x558] sm:$0xff]
  %v807 = vld [vmem:[%s3 + $0x560] sm:$0xff]
  %v808 = vld [vmem:[%s3 + $0x568] sm:$0xff]
  %v809 = vld [vmem:[%s3 + $0x570] sm:$0xff]
  %v810 = vld [vmem:[%s3 + $0x578] sm:$0xff]
  %v811 = vld [vmem:[%s3 + $0x580] sm:$0xff]
  %v812 = vld [vmem:[%s3 + $0x588] sm:$0xff]
  %v813 = vld [vmem:[%s3 + $0x590] sm:$0xff]
  %v814 = vld [vmem:[%s3 + $0x598] sm:$0xff]
  %v815 = vld [vmem:[%s3 + $0x5a0] sm:$0xff]
  %v816 = vld [vmem:[%s3 + $0x5a8] sm:$0xff]
  %v817 = vld [vmem:[%s3 + $0x5b0] sm:$0xff]
  %v818 = vld [vmem:[%s3 + $0x5b8] sm:$0xff]
  %v819 = vld [vmem:[%s3 + $0x5c0] sm:$0xff]
  %v820 = vld [vmem:[%s3 + $0x5c8] sm:$0xff]
  %v821 = vld [vmem:[%s3 + $0x5d0] sm:$0xff]
  %v822 = vld [vmem:[%s3 + $0x5d8] sm:$0xff]
  %v823 = vld [vmem:[%s3 + $0x5e0] sm:$0xff]
  %v824 = vld [vmem:[%s3 + $0x5e8] sm:$0xff]
  %v825 = vld [vmem:[%s3 + $0x5f0] sm:$0xff]
  %v826 = vld [vmem:[%s3 + $0x5f8] sm:$0xff]
  %v827 = vld [vmem:[%s3 + $0x600] sm:$0xff]
  %v828 = vld [vmem:[%s3 + $0x608] sm:$0xff]
  %v829 = vld [vmem:[%s3 + $0x610] sm:$0xff]
  %v830 = vld [vmem:[%s3 + $0x618] sm:$0xff]
  %v831 = vld [vmem:[%s3 + $0x620] sm:$0xff]
  %v832 = vld [vmem:[%s3 + $0x628] sm:$0xff]
  %v833 = vld [vmem:[%s3 + $0x630] sm:$0xff]
  %v834 = vld [vmem:[%s3 + $0x638] sm:$0xff]
  %v835 = vld [vmem:[%s3 + $0x640] sm:$0xff]
  %v836 = vld [vmem:[%s3 + $0x648] sm:$0xff]
  %v837 = vld [vmem:[%s3 + $0x650] sm:$0xff]
  %v838 = vld [vmem:[%s3 + $0x658] sm:$0xff]
  %v839 = vld [vmem:[%s3 + $0x660] sm:$0xff]
  %v840 = vld [vmem:[%s3 + $0x668] sm:$0xff]
  %v841 = vld [vmem:[%s3 + $0x670] sm:$0xff]
  %v842 = vld [vmem:[%s3 + $0x678] sm:$0xff]
  %v843 = vld [vmem:[%s3 + $0x680] sm:$0xff]
  %v844 = vld [vmem:[%s3 + $0x688] sm:$0xff]
  %v845 = vld [vmem:[%s3 + $0x690] sm:$0xff]
  %v846 = vld [vmem:[%s3 + $0x698] sm:$0xff]
  %v847 = vld [vmem:[%s3 + $0x6a0] sm:$0xff]
  %v848 = vld [vmem:[%s3 + $0x6a8] sm:$0xff]
  %v849 = vld [vmem:[%s3 + $0x6b0] sm:$0xff]
  %v850 = vld [vmem:[%s3 + $0x6b8] sm:$0xff]
  %v851 = vld [vmem:[%s3 + $0x6c0] sm:$0xff]
  %v852 = vld [vmem:[%s3 + $0x6c8] sm:$0xff]
  %v853 = vld [vmem:[%s3 + $0x6d0] sm:$0xff]
  %v854 = vld [vmem:[%s3 + $0x6d8] sm:$0xff]
  %v855 = vld [vmem:[%s3 + $0x6e0] sm:$0xff]
  %v856 = vld [vmem:[%s3 + $0x6e8] sm:$0xff]
  %v857 = vld [vmem:[%s3 + $0x6f0] sm:$0xff]
  %v858 = vld [vmem:[%s3 + $0x6f8] sm:$0xff]
  %v859 = vld [vmem:[%s3 + $0x700] sm:$0xff]
  %v860 = vld [vmem:[%s3 + $0x708] sm:$0xff]
  %v861 = vld [vmem:[%s3 + $0x710] sm:$0xff]
  %v862 = vld [vmem:[%s3 + $0x718] sm:$0xff]
  %v863 = vld [vmem:[%s3 + $0x720] sm:$0xff]
  %v864 = vld [vmem:[%s3 + $0x728] sm:$0xff]
  %v865 = vld [vmem:[%s3 + $0x730] sm:$0xff]
  %v866 = vld [vmem:[%s3 + $0x738] sm:$0xff]
  %v867 = vld [vmem:[%s3 + $0x740] sm:$0xff]
  %v868 = vld [vmem:[%s3 + $0x748] sm:$0xff]
  %v869 = vld [vmem:[%s3 + $0x750] sm:$0xff]
  %v870 = vld [vmem:[%s3 + $0x758] sm:$0xff]
  %v871 = vld [vmem:[%s3 + $0x760] sm:$0xff]
  %v872 = vld [vmem:[%s3 + $0x768] sm:$0xff]
  %v873 = vld [vmem:[%s3 + $0x770] sm:$0xff]
  %v874 = vld [vmem:[%s3 + $0x778] sm:$0xff]
  %v875 = vld [vmem:[%s3 + $0x780] sm:$0xff]
  %v876 = vld [vmem:[%s3 + $0x788] sm:$0xff]
  %v877 = vld [vmem:[%s3 + $0x790] sm:$0xff]
  %v878 = vld [vmem:[%s3 + $0x798] sm:$0xff]
  %v879 = vld [vmem:[%s3 + $0x7a0] sm:$0xff]
  %v880 = vld [vmem:[%s3 + $0x7a8] sm:$0xff]
  %v881 = vld [vmem:[%s3 + $0x7b0] sm:$0xff]
  %v882 = vld [vmem:[%s3 + $0x7b8] sm:$0xff]
  %v883 = vld [vmem:[%s3 + $0x7c0] sm:$0xff]
  %v884 = vld [vmem:[%s3 + $0x7c8] sm:$0xff]
  %v885 = vld [vmem:[%s3 + $0x7d0] sm:$0xff]
  %v886 = vld [vmem:[%s3 + $0x7d8] sm:$0xff]
  %v887 = vld [vmem:[%s3 + $0x7e0] sm:$0xff]
  %v888 = vld [vmem:[%s3 + $0x7e8] sm:$0xff]
  %v889 = vld [vmem:[%s3 + $0x7f0] sm:$0xff]
  %v890 = vld [vmem:[%s3 + $0x7f8] sm:$0xff]
  %v891 = vld [vmem:[%s3 + $0x800] sm:$0xff]
  %v892 = vld [vmem:[%s3 + $0x808] sm:$0xff]
  %v893 = vld [vmem:[%s3 + $0x810] sm:$0xff]
  %v894 = vld [vmem:[%s3 + $0x818] sm:$0xff]
  %v895 = vld [vmem:[%s3 + $0x820] sm:$0xff]
  %v896 = vld [vmem:[%s3 + $0x828] sm:$0xff]
  %v897 = vld [vmem:[%s3 + $0x830] sm:$0xff]
  %v898 = vld [vmem:[%s3 + $0x838] sm:$0xff]
  %v899 = vld [vmem:[%s3 + $0x840] sm:$0xff]
  %v900 = vld [vmem:[%s3 + $0x848] sm:$0xff]
  %v901 = vld [vmem:[%s3 + $0x850] sm:$0xff]
  %v902 = vld [vmem:[%s3 + $0x858] sm:$0xff]
  %v903 = vld [vmem:[%s3 + $0x860] sm:$0xff]
  %v904 = vld [vmem:[%s3 + $0x868] sm:$0xff]
  %v905 = vld [vmem:[%s3 + $0x870] sm:$0xff]
  %v906 = vld [vmem:[%s3 + $0x878] sm:$0xff]
  %v907 = vld [vmem:[%s3 + $0x880] sm:$0xff]
  %v908 = vld [vmem:[%s3 + $0x888] sm:$0xff]
  %v909 = vld [vmem:[%s3 + $0x890] sm:$0xff]
  %v910 = vld [vmem:[%s3 + $0x898] sm:$0xff]
  %v911 = vld [vmem:[%s3 + $0x8a0] sm:$0xff]
  %v912 = vld [vmem:[%s3 + $0x8a8] sm:$0xff]
  %v913 = vld [vmem:[%s3 + $0x8b0] sm:$0xff]
  %v914 = vld [vmem:[%s3 + $0x8b8] sm:$0xff]
  %v915 = vld [vmem:[%s3 + $0x8c0] sm:$0xff]
  %v916 = vld [vmem:[%s3 + $0x8c8] sm:$0xff]
  %v917 = vld [vmem:[%s3 + $0x8d0] sm:$0xff]
  %v918 = vld [vmem:[%s3 + $0x8d8] sm:$0xff]
  %v919 = vld [vmem:[%s3 + $0x8e0] sm:$0xff]
  %v920 = vld [vmem:[%s3 + $0x8e8] sm:$0xff]
  %v921 = vld [vmem:[%s3 + $0x8f0] sm:$0xff]
  %v922 = vld [vmem:[%s3 + $0x8f8] sm:$0xff]
  %v923 = vld [vmem:[%s3 + $0x900] sm:$0xff]
  %v924 = vld [vmem:[%s3 + $0x908] sm:$0xff]
  %v925 = vld [vmem:[%s3 + $0x910] sm:$0xff]
  %v926 = vld [vmem:[%s3 + $0x918] sm:$0xff]
  %v927 = vld [vmem:[%s3 + $0x920] sm:$0xff]
  %v928 = vld [vmem:[%s3 + $0x928] sm:$0xff]
  %v929 = vld [vmem:[%s3 + $0x930] sm:$0xff]
  %v930 = vld [vmem:[%s3 + $0x938] sm:$0xff]
  %v931 = vld [vmem:[%s3 + $0x940] sm:$0xff]
  %v932 = vld [vmem:[%s3 + $0x948] sm:$0xff]
  %v933 = vld [vmem:[%s3 + $0x950] sm:$0xff]
  %v934 = vld [vmem:[%s3 + $0x958] sm:$0xff]
  %v935 = vld [vmem:[%s3 + $0x960] sm:$0xff]
  %v936 = vld [vmem:[%s3 + $0x968] sm:$0xff]
  %v937 = vld [vmem:[%s3 + $0x970] sm:$0xff]
  %v938 = vld [vmem:[%s3 + $0x978] sm:$0xff]
  %v939 = vld [vmem:[%s3 + $0x980] sm:$0xff]
  %v940 = vld [vmem:[%s3 + $0x988] sm:$0xff]
  %v941 = vld [vmem:[%s3 + $0x990] sm:$0xff]
  %v942 = vld [vmem:[%s3 + $0x998] sm:$0xff]
  %v943 = vld [vmem:[%s3 + $0x9a0] sm:$0xff]
  %v944 = vld [vmem:[%s3 + $0x9a8] sm:$0xff]
  %v945 = vld [vmem:[%s3 + $0x9b0] sm:$0xff]
  %v946 = vld [vmem:[%s3 + $0x9b8] sm:$0xff]
  %v947 = vld [vmem:[%s3 + $0x9c0] sm:$0xff]
  %v948 = vld [vmem:[%s3 + $0x9c8] sm:$0xff]
  %v949 = vld [vmem:[%s3 + $0x9d0] sm:$0xff]
  %v950 = vld [vmem:[%s3 + $0x9d8] sm:$0xff]
  %v951 = vld [vmem:[%s3 + $0x9e0] sm:$0xff]
  %v952 = vld [vmem:[%s3 + $0x9e8] sm:$0xff]
  %v953 = vld [vmem:[%s3 + $0x9f0] sm:$0xff]
  %v954 = vld [vmem:[%s3 + $0x9f8] sm:$0xff]
  %v955 = vld [vmem:[%s3 + $0xa00] sm:$0xff]
  %v956 = vld [vmem:[%s3 + $0xa08] sm:$0xff]
  %v957 = vld [vmem:[%s3 + $0xa10] sm:$0xff]
  %v958 = vld [vmem:[%s3 + $0xa18] sm:$0xff]
  %v959 = vld [vmem:[%s3 + $0xa20] sm:$0xff]
  %v960 = vld [vmem:[%s3 + $0xa28] sm:$0xff]
  %v961 = vld [vmem:[%s3 + $0xa30] sm:$0xff]
  %v962 = vld [vmem:[%s3 + $0xa38] sm:$0xff]
  %v963 = vld [vmem:[%s3 + $0xa40] sm:$0xff]
  %v964 = vld [vmem:[%s3 + $0xa48] sm:$0xff]
  %v965 = vld [vmem:[%s3 + $0xa50] sm:$0xff]
  %v966 = vld [vmem:[%s3 + $0xa58] sm:$0xff]
  %v967 = vld [vmem:[%s3 + $0xa60] sm:$0xff]
  %v968 = vld [vmem:[%s3 + $0xa68] sm:$0xff]
  %v969 = vld [vmem:[%s3 + $0xa70] sm:$0xff]
  %v970 = vld [vmem:[%s3 + $0xa78] sm:$0xff]
  %v971 = vld [vmem:[%s3 + $0xa80] sm:$0xff]
  %v972 = vld [vmem:[%s3 + $0xa88] sm:$0xff]
  %v973 = vld [vmem:[%s3 + $0xa90] sm:$0xff]
  %v974 = vld [vmem:[%s3 + $0xa98] sm:$0xff]
  %v975 = vld [vmem:[%s3 + $0xaa0] sm:$0xff]
  %v976 = vld [vmem:[%s3 + $0xaa8] sm:$0xff]
  %v977 = vld [vmem:[%s3 + $0xab0] sm:$0xff]
  %v978 = vld [vmem:[%s3 + $0xab8] sm:$0xff]
  %v979 = vld [vmem:[%s3 + $0xac0] sm:$0xff]
  %v980 = vld [vmem:[%s3 + $0xac8] sm:$0xff]
  %v981 = vld [vmem:[%s3 + $0xad0] sm:$0xff]
  %v982 = vld [vmem:[%s3 + $0xad8] sm:$0xff]
  %v983 = vld [vmem:[%s3 + $0xae0] sm:$0xff]
  %v984 = vld [vmem:[%s3 + $0xae8] sm:$0xff]
  %v985 = vld [vmem:[%s3 + $0xaf0] sm:$0xff]
  %v986 = vld [vmem:[%s3 + $0xaf8] sm:$0xff]
  %v987 = vld [vmem:[%s3 + $0xb00] sm:$0xff]
  %v988 = vld [vmem:[%s3 + $0xb08] sm:$0xff]
  %v989 = vld [vmem:[%s3 + $0xb10] sm:$0xff]
  %v990 = vld [vmem:[%s3 + $0xb18] sm:$0xff]
  %v991 = vld [vmem:[%s3 + $0xb20] sm:$0xff]
  %v992 = vld [vmem:[%s3 + $0xb28] sm:$0xff]
  %v993 = vld [vmem:[%s3 + $0xb30] sm:$0xff]
  %v994 = vld [vmem:[%s3 + $0xb38] sm:$0xff]
  %v995 = vld [vmem:[%s3 + $0xb40] sm:$0xff]
  %v996 = vld [vmem:[%s3 + $0xb48] sm:$0xff]
  %v997 = vld [vmem:[%s3 + $0xb50] sm:$0xff]
  %v998 = vld [vmem:[%s3 + $0xb58] sm:$0xff]
  %v999 = vld [vmem:[%s3 + $0xb60] sm:$0xff]
  %v1000 = vld [vmem:[%s3 + $0xb68] sm:$0xff]
  %v1001 = vld [vmem:[%s3 + $0xb70] sm:$0xff]
  %v1002 = vld [vmem:[%s3 + $0xb78] sm:$0xff]
  %v1003 = vld [vmem:[%s3 + $0xb80] sm:$0xff]
  %v1004 = vld [vmem:[%s3 + $0xb88] sm:$0xff]
  %v1005 = vld [vmem:[%s3 + $0xb90] sm:$0xff]
  %v1006 = vld [vmem:[%s3 + $0xb98] sm:$0xff]
  %v1007 = vld [vmem:[%s3 + $0xba0] sm:$0xff]
  %v1008 = vld [vmem:[%s3 + $0xba8] sm:$0xff]
  %v1009 = vld [vmem:[%s3 + $0xbb0] sm:$0xff]
  %v1010 = vld [vmem:[%s3 + $0xbb8] sm:$0xff]
  %v1011 = vld [vmem:[%s3 + $0xbc0] sm:$0xff]
  %v1012 = vld [vmem:[%s3 + $0xbc8] sm:$0xff]
  %v1013 = vld [vmem:[%s3 + $0xbd0] sm:$0xff]
  %v1014 = vld [vmem:[%s3 + $0xbd8] sm:$0xff]
  %v1015 = vld [vmem:[%s3 + $0xbe0] sm:$0xff]
  %v1016 = vld [vmem:[%s3 + $0xbe8] sm:$0xff]
  %v1017 = vld [vmem:[%s3 + $0xbf0] sm:$0xff]
  %v1018 = vld [vmem:[%s3 + $0xbf8] sm:$0xff]
  %v1019 = vld [vmem:[%s3 + $0xc00] sm:$0xff]
  %v1020 = vld [vmem:[%s3 + $0xc08] sm:$0xff]
  %v1021 = vld [vmem:[%s3 + $0xc10] sm:$0xff]
  %v1022 = vld [vmem:[%s3 + $0xc18] sm:$0xff]
  %v1023 = vld [vmem:[%s3 + $0xc20] sm:$0xff]
  %v1024 = vld [vmem:[%s3 + $0xc28] sm:$0xff]
  %v1025 = vld [vmem:[%s3 + $0xc30] sm:$0xff]
  %v1026 = vld [vmem:[%s3 + $0xc38] sm:$0xff]
  %v1027 = vld [vmem:[%s3 + $0xc40] sm:$0xff]
  %v1028 = vld [vmem:[%s3 + $0xc48] sm:$0xff]
  %v1029 = vld [vmem:[%s3 + $0xc50] sm:$0xff]
  %v1030 = vld [vmem:[%s3 + $0xc58] sm:$0xff]
  %v1031 = vld [vmem:[%s3 + $0xc60] sm:$0xff]
  %v1032 = vld [vmem:[%s3 + $0xc68] sm:$0xff]
  %v1033 = vld [vmem:[%s3 + $0xc70] sm:$0xff]
  %v1034 = vld [vmem:[%s3 + $0xc78] sm:$0xff]
  %v1035 = vld [vmem:[%s3 + $0xc80] sm:$0xff]
  %v1036 = vld [vmem:[%s3 + $0xc88] sm:$0xff]
  %v1037 = vld [vmem:[%s3 + $0xc90] sm:$0xff]
  %v1038 = vld [vmem:[%s3 + $0xc98] sm:$0xff]
  %v1039 = vld [vmem:[%s3 + $0xca0] sm:$0xff]
  %v1040 = vld [vmem:[%s3 + $0xca8] sm:$0xff]
  %v1041 = vld [vmem:[%s3 + $0xcb0] sm:$0xff]
  %v1042 = vld [vmem:[%s3 + $0xcb8] sm:$0xff]
  %v1043 = vld [vmem:[%s3 + $0xcc0] sm:$0xff]
  %v1044 = vld [vmem:[%s3 + $0xcc8] sm:$0xff]
  %v1045 = vld [vmem:[%s3 + $0xcd0] sm:$0xff]
  %v1046 = vld [vmem:[%s3 + $0xcd8] sm:$0xff]
  %v1047 = vld [vmem:[%s3 + $0xce0] sm:$0xff]
  %v1048 = vld [vmem:[%s3 + $0xce8] sm:$0xff]
  %v1049 = vld [vmem:[%s3 + $0xcf0] sm:$0xff]
  %v1050 = vld [vmem:[%s3 + $0xcf8] sm:$0xff]
  %v1051 = vld [vmem:[%s3 + $0xd00] sm:$0xff]
  %v1052 = vld [vmem:[%s3 + $0xd08] sm:$0xff]
  %v1053 = vld [vmem:[%s3 + $0xd10] sm:$0xff]
  %v1054 = vld [vmem:[%s3 + $0xd18] sm:$0xff]
  %v1055 = vld [vmem:[%s3 + $0xd20] sm:$0xff]
  %v1056 = vld [vmem:[%s3 + $0xd28] sm:$0xff]
  %v1057 = vld [vmem:[%s3 + $0xd30] sm:$0xff]
  %v1058 = vld [vmem:[%s3 + $0xd38] sm:$0xff]
  %v1059 = vld [vmem:[%s3 + $0xd40] sm:$0xff]
  %v1060 = vld [vmem:[%s3 + $0xd48] sm:$0xff]
  %v1061 = vld [vmem:[%s3 + $0xd50] sm:$0xff]
  %v1062 = vld [vmem:[%s3 + $0xd58] sm:$0xff]
  %v1063 = vld [vmem:[%s3 + $0xd60] sm:$0xff]
  %v1064 = vld [vmem:[%s3 + $0xd68] sm:$0xff]
  %v1065 = vld [vmem:[%s3 + $0xd70] sm:$0xff]
  %v1066 = vld [vmem:[%s3 + $0xd78] sm:$0xff]
  %v1067 = vld [vmem:[%s3 + $0xd80] sm:$0xff]
  %v1068 = vld [vmem:[%s3 + $0xd88] sm:$0xff]
  %v1069 = vld [vmem:[%s3 + $0xd90] sm:$0xff]
  %v1070 = vld [vmem:[%s3 + $0xd98] sm:$0xff]
  %v1071 = vld [vmem:[%s3 + $0xda0] sm:$0xff]
  %v1072 = vld [vmem:[%s3 + $0xda8] sm:$0xff]
  %v1073 = vld [vmem:[%s3 + $0xdb0] sm:$0xff]
  %v1074 = vld [vmem:[%s3 + $0xdb8] sm:$0xff]
  %v1075 = vld [vmem:[%s3 + $0xdc0] sm:$0xff]
  %v1076 = vld [vmem:[%s3 + $0xdc8] sm:$0xff]
  %v1077 = vld [vmem:[%s3 + $0xdd0] sm:$0xff]
  %v1078 = vld [vmem:[%s3 + $0xdd8] sm:$0xff]
  %v1079 = vld [vmem:[%s3 + $0xde0] sm:$0xff]
  %v1080 = vld [vmem:[%s3 + $0xde8] sm:$0xff]
  %v1081 = vld [vmem:[%s3 + $0xdf0] sm:$0xff]
  %v1082 = vld [vmem:[%s3 + $0xdf8] sm:$0xff]
  %v1083 = vld [vmem:[%s3 + $0xe00] sm:$0xff]
  %v1084 = vld [vmem:[%s3 + $0xe08] sm:$0xff]
  %v1085 = vld [vmem:[%s3 + $0xe10] sm:$0xff]
  %v1086 = vld [vmem:[%s3 + $0xe18] sm:$0xff]
  %v1087 = vld [vmem:[%s3 + $0xe20] sm:$0xff]
  %v1088 = vld [vmem:[%s3 + $0xe28] sm:$0xff]
  %v1089 = vld [vmem:[%s3 + $0xe30] sm:$0xff]
  %v1090 = vld [vmem:[%s3 + $0xe38] sm:$0xff]
  %v1091 = vld [vmem:[%s3 + $0xe40] sm:$0xff]
  %v1092 = vld [vmem:[%s3 + $0xe48] sm:$0xff]
  %v1093 = vld [vmem:[%s3 + $0xe50] sm:$0xff]
  %v1094 = vld [vmem:[%s3 + $0xe58] sm:$0xff]
  %v1095 = vld [vmem:[%s3 + $0xe60] sm:$0xff]
  %v1096 = vld [vmem:[%s3 + $0xe68] sm:$0xff]
  %v1097 = vld [vmem:[%s3 + $0xe70] sm:$0xff]
  %v1098 = vld [vmem:[%s3 + $0xe78] sm:$0xff]
  %v1099 = vld [vmem:[%s3 + $0xe80] sm:$0xff]
  %v1100 = vld [vmem:[%s3 + $0xe88] sm:$0xff]
  %v1101 = vld [vmem:[%s3 + $0xe90] sm:$0xff]
  %v1102 = vld [vmem:[%s3 + $0xe98] sm:$0xff]
  %v1103 = vld [vmem:[%s3 + $0xea0] sm:$0xff]
  %v1104 = vld [vmem:[%s3 + $0xea8] sm:$0xff]
  %v1105 = vld [vmem:[%s3 + $0xeb0] sm:$0xff]
  %v1106 = vld [vmem:[%s3 + $0xeb8] sm:$0xff]
  %v1107 = vld [vmem:[%s3 + $0xec0] sm:$0xff]
  %v1108 = vld [vmem:[%s3 + $0xec8] sm:$0xff]
  %v1109 = vld [vmem:[%s3 + $0xed0] sm:$0xff]
  %v1110 = vld [vmem:[%s3 + $0xed8] sm:$0xff]
  %v1111 = vld [vmem:[%s3 + $0xee0] sm:$0xff]
  %v1112 = vld [vmem:[%s3 + $0xee8] sm:$0xff]
  %v1113 = vld [vmem:[%s3 + $0xef0] sm:$0xff]
  %v1114 = vld [vmem:[%s3 + $0xef8] sm:$0xff]
  %v1115 = vld [vmem:[%s3 + $0xf00] sm:$0xff]
  %v1116 = vld [vmem:[%s3 + $0xf08] sm:$0xff]
  %v1117 = vld [vmem:[%s3 + $0xf10] sm:$0xff]
  %v1118 = vld [vmem:[%s3 + $0xf18] sm:$0xff]
  %v1119 = vld [vmem:[%s3 + $0xf20] sm:$0xff]
  %v1120 = vld [vmem:[%s3 + $0xf28] sm:$0xff]
  %v1121 = vld [vmem:[%s3 + $0xf30] sm:$0xff]
  %v1122 = vld [vmem:[%s3 + $0xf38] sm:$0xff]
  %v1123 = vld [vmem:[%s3 + $0xf40] sm:$0xff]
  %v1124 = vld [vmem:[%s3 + $0xf48] sm:$0xff]
  %v1125 = vld [vmem:[%s3 + $0xf50] sm:$0xff]
  %v1126 = vld [vmem:[%s3 + $0xf58] sm:$0xff]
  %v1127 = vld [vmem:[%s3 + $0xf60] sm:$0xff]
  %v1128 = vld [vmem:[%s3 + $0xf68] sm:$0xff]
  %v1129 = vld [vmem:[%s3 + $0xf70] sm:$0xff]
  %v1130 = vld [vmem:[%s3 + $0xf78] sm:$0xff]
  %v1131 = vld [vmem:[%s3 + $0xf80] sm:$0xff]
  %v1132 = vld [vmem:[%s3 + $0xf88] sm:$0xff]
  %v1133 = vld [vmem:[%s3 + $0xf90] sm:$0xff]
  %v1134 = vld [vmem:[%s3 + $0xf98] sm:$0xff]
  %v1135 = vld [vmem:[%s3 + $0xfa0] sm:$0xff]
  %v1136 = vld [vmem:[%s3 + $0xfa8] sm:$0xff]
  %v1137 = vld [vmem:[%s3 + $0xfb0] sm:$0xff]
  %v1138 = vld [vmem:[%s3 + $0xfb8] sm:$0xff]
  %v1139 = vld [vmem:[%s3 + $0xfc0] sm:$0xff]
  %v1140 = vld [vmem:[%s3 + $0xfc8] sm:$0xff]
  %v1141 = vld [vmem:[%s3 + $0xfd0] sm:$0xff]
  %v1142 = vld [vmem:[%s3 + $0xfd8] sm:$0xff]
  %v1143 = vld [vmem:[%s3 + $0xfe0] sm:$0xff]
  %v1144 = vld [vmem:[%s3 + $0xfe8] sm:$0xff]
  %v1145 = vld [vmem:[%s3 + $0xff0] sm:$0xff]
  %v1146 = vld [vmem:[%s3 + $0xff8] sm:$0xff]
  %v1147 = vld [vmem:[%s3 + $0x1000] sm:$0xff]
  %v1148 = vld [vmem:[%s3 + $0x1008] sm:$0xff]
  %v1149 = vld [vmem:[%s3 + $0x1010] sm:$0xff]
  %v1150 = vld [vmem:[%s3 + $0x1018] sm:$0xff]
  %v1151 = vld [vmem:[%s3 + $0x1020] sm:$0xff]
  %v1152 = vld [vmem:[%s3 + $0x1028] sm:$0xff]
  %v1153 = vld [vmem:[%s3 + $0x1030] sm:$0xff]
  %v1154 = vld [vmem:[%s3 + $0x1038] sm:$0xff]
  %v1155 = vld [vmem:[%s3 + $0x1040] sm:$0xff]
  %v1156 = vld [vmem:[%s3 + $0x1048] sm:$0xff]
  %v1157 = vld [vmem:[%s3 + $0x1050] sm:$0xff]
  %v1158 = vld [vmem:[%s3 + $0x1058] sm:$0xff]
  %v1159 = vld [vmem:[%s3 + $0x1060] sm:$0xff]
  %v1160 = vld [vmem:[%s3 + $0x1068] sm:$0xff]
  %v1161 = vld [vmem:[%s3 + $0x1070] sm:$0xff]
  %v1162 = vld [vmem:[%s3 + $0x1078] sm:$0xff]
  %v1163 = vld [vmem:[%s3 + $0x1080] sm:$0xff]
  %v1164 = vld [vmem:[%s3 + $0x1088] sm:$0xff]
  %v1165 = vld [vmem:[%s3 + $0x1090] sm:$0xff]
  %v1166 = vld [vmem:[%s3 + $0x1098] sm:$0xff]
  %v1167 = vld [vmem:[%s3 + $0x10a0] sm:$0xff]
  %v1168 = vld [vmem:[%s3 + $0x10a8] sm:$0xff]
  %v1169 = vld [vmem:[%s3 + $0x10b0] sm:$0xff]
  %v1170 = vld [vmem:[%s3 + $0x10b8] sm:$0xff]
  %v1171 = vld [vmem:[%s3 + $0x10c0] sm:$0xff]
  %v1172 = vld [vmem:[%s3 + $0x10c8] sm:$0xff]
  %v1173 = vld [vmem:[%s3 + $0x10d0] sm:$0xff]
  %v1174 = vld [vmem:[%s3 + $0x10d8] sm:$0xff]
  %v1175 = vld [vmem:[%s3 + $0x10e0] sm:$0xff]
  %v1176 = vld [vmem:[%s3 + $0x10e8] sm:$0xff]
  %v1177 = vld [vmem:[%s3 + $0x10f0] sm:$0xff]
  %v1178 = vld [vmem:[%s3 + $0x10f8] sm:$0xff]
  %v1179 = vld [vmem:[%s3 + $0x1100] sm:$0xff]
  %v1180 = vld [vmem:[%s3 + $0x1108] sm:$0xff]
  %v1181 = vld [vmem:[%s3 + $0x1110] sm:$0xff]
  %v1182 = vld [vmem:[%s3 + $0x1118] sm:$0xff]
  %v1183 = vld [vmem:[%s3 + $0x1120] sm:$0xff]
  %v1184 = vld [vmem:[%s3 + $0x1128] sm:$0xff]
  %v1185 = vld [vmem:[%s3 + $0x1130] sm:$0xff]
  %v1186 = vld [vmem:[%s3 + $0x1138] sm:$0xff]
  %v1187 = vld [vmem:[%s3 + $0x1140] sm:$0xff]
  %v1188 = vld [vmem:[%s3 + $0x1148] sm:$0xff]
  %v1189 = vld [vmem:[%s3 + $0x1150] sm:$0xff]
  %v1190 = vld [vmem:[%s3 + $0x1158] sm:$0xff]
  %v1191 = vld [vmem:[%s3 + $0x1160] sm:$0xff]
  %v1192 = vld [vmem:[%s3 + $0x1168] sm:$0xff]
  %v1193 = vld [vmem:[%s3 + $0x1170] sm:$0xff]
  %v1194 = vld [vmem:[%s3 + $0x1178] sm:$0xff]
  %v1195 = vld [vmem:[%s3 + $0x1180] sm:$0xff]
  %v1196 = vld [vmem:[%s3 + $0x1188] sm:$0xff]
  %v1197 = vld [vmem:[%s3 + $0x1190] sm:$0xff]
  %v1198 = vld [vmem:[%s3 + $0x1198] sm:$0xff]
  %v1199 = vld [vmem:[%s3 + $0x11a0] sm:$0xff]
  %v1200 = vld [vmem:[%s3 + $0x11a8] sm:$0xff]
  %v1201 = vld [vmem:[%s3 + $0x11b0] sm:$0xff]
  %v1202 = vld [vmem:[%s3 + $0x11b8] sm:$0xff]
  %v1203 = vld [vmem:[%s3 + $0x11c0] sm:$0xff]
  %v1204 = vld [vmem:[%s3 + $0x11c8] sm:$0xff]
  %v1205 = vld [vmem:[%s3 + $0x11d0] sm:$0xff]
  %v1206 = vld [vmem:[%s3 + $0x11d8] sm:$0xff]
  %v1207 = vld [vmem:[%s3 + $0x11e0] sm:$0xff]
  %v1208 = vld [vmem:[%s3 + $0x11e8] sm:$0xff]
  %v1209 = vld [vmem:[%s3 + $0x11f0] sm:$0xff]
  %v1210 = vld [vmem:[%s3 + $0x11f8] sm:$0xff]
  %v1211 = vld [vmem:[%s3 + $0x1200] sm:$0xff]
  %v1212 = vld [vmem:[%s3 + $0x1208] sm:$0xff]
  %v1213 = vld [vmem:[%s3 + $0x1210] sm:$0xff]
  %v1214 = vld [vmem:[%s3 + $0x1218] sm:$0xff]
  %v1215 = vld [vmem:[%s3 + $0x1220] sm:$0xff]
  %v1216 = vld [vmem:[%s3 + $0x1228] sm:$0xff]
  %v1217 = vld [vmem:[%s3 + $0x1230] sm:$0xff]
  %v1218 = vld [vmem:[%s3 + $0x1238] sm:$0xff]
  %v1219 = vld [vmem:[%s3 + $0x1240] sm:$0xff]
  %v1220 = vld [vmem:[%s3 + $0x1248] sm:$0xff]
  %v1221 = vld [vmem:[%s3 + $0x1250] sm:$0xff]
  %v1222 = vld [vmem:[%s3 + $0x1258] sm:$0xff]
  %v1223 = vld [vmem:[%s3 + $0x1260] sm:$0xff]
  %v1224 = vld [vmem:[%s3 + $0x1268] sm:$0xff]
  %v1225 = vld [vmem:[%s3 + $0x1270] sm:$0xff]
  %v1226 = vld [vmem:[%s3 + $0x1278] sm:$0xff]
  %v1227 = vld [vmem:[%s3 + $0x1280] sm:$0xff]
  %v1228 = vld [vmem:[%s3 + $0x1288] sm:$0xff]
  %v1229 = vld [vmem:[%s3 + $0x1290] sm:$0xff]
  %v1230 = vld [vmem:[%s3 + $0x1298] sm:$0xff]
  %v1231 = vld [vmem:[%s3 + $0x12a0] sm:$0xff]
  %v1232 = vld [vmem:[%s3 + $0x12a8] sm:$0xff]
  %v1233 = vld [vmem:[%s3 + $0x12b0] sm:$0xff]
  %v1234 = vld [vmem:[%s3 + $0x12b8] sm:$0xff]
  %v1235 = vld [vmem:[%s3 + $0x12c0] sm:$0xff]
  %v1236 = vld [vmem:[%s3 + $0x12c8] sm:$0xff]
  %v1237 = vld [vmem:[%s3 + $0x12d0] sm:$0xff]
  %v1238 = vld [vmem:[%s3 + $0x12d8] sm:$0xff]
  %v1239 = vld [vmem:[%s3 + $0x12e0] sm:$0xff]
  %v1240 = vld [vmem:[%s3 + $0x12e8] sm:$0xff]
  %v1241 = vld [vmem:[%s3 + $0x12f0] sm:$0xff]
  %v1242 = vld [vmem:[%s3 + $0x12f8] sm:$0xff]
  %v1243 = vld [vmem:[%s3 + $0x1300] sm:$0xff]
  %v1244 = vld [vmem:[%s3 + $0x1308] sm:$0xff]
  %v1245 = vld [vmem:[%s3 + $0x1310] sm:$0xff]
  %v1246 = vld [vmem:[%s3 + $0x1318] sm:$0xff]
  %v1247 = vld [vmem:[%s3 + $0x1320] sm:$0xff]
  %v1248 = vld [vmem:[%s3 + $0x1328] sm:$0xff]
  %v1249 = vld [vmem:[%s3 + $0x1330] sm:$0xff]
  %v1250 = vld [vmem:[%s3 + $0x1338] sm:$0xff]
  %v1251 = vld [vmem:[%s3 + $0x1340] sm:$0xff]
  %v1252 = vld [vmem:[%s3 + $0x1348] sm:$0xff]
  %v1253 = vld [vmem:[%s3 + $0x1350] sm:$0xff]
  %v1254 = vld [vmem:[%s3 + $0x1358] sm:$0xff]
  %v1255 = vld [vmem:[%s3 + $0x1360] sm:$0xff]
  %v1256 = vld [vmem:[%s3 + $0x1368] sm:$0xff]
  %v1257 = vld [vmem:[%s3 + $0x1370] sm:$0xff]
  %v1258 = vld [vmem:[%s3 + $0x1378] sm:$0xff]
  %v1259 = vld [vmem:[%s3 + $0x1380] sm:$0xff]
  %v1260 = vld [vmem:[%s3 + $0x1388] sm:$0xff]
  %v1261 = vld [vmem:[%s3 + $0x1390] sm:$0xff]
  %v1262 = vld [vmem:[%s3 + $0x1398] sm:$0xff]
  %v1263 = vld [vmem:[%s3 + $0x13a0] sm:$0xff]
  %v1264 = vld [vmem:[%s3 + $0x13a8] sm:$0xff]
  %v1265 = vld [vmem:[%s3 + $0x13b0] sm:$0xff]
  %v1266 = vld [vmem:[%s3 + $0x13b8] sm:$0xff]
  %v1267 = vld [vmem:[%s3 + $0x13c0] sm:$0xff]
  %v1268 = vld [vmem:[%s3 + $0x13c8] sm:$0xff]
  %v1269 = vld [vmem:[%s3 + $0x13d0] sm:$0xff]
  %v1270 = vld [vmem:[%s3 + $0x13d8] sm:$0xff]
  %v1271 = vld [vmem:[%s3 + $0x13e0] sm:$0xff]
  %v1272 = vld [vmem:[%s3 + $0x13e8] sm:$0xff]
  %v1273 = vld [vmem:[%s3 + $0x13f0] sm:$0xff]
  %v1274 = vld [vmem:[%s3 + $0x13f8] sm:$0xff]
  %v1275 = vld [vmem:[%s3 + $0x1400] sm:$0xff]
  %v1276 = vld [vmem:[%s3 + $0x1408] sm:$0xff]
  %v1277 = vld [vmem:[%s3 + $0x1410] sm:$0xff]
  %v1278 = vld [vmem:[%s3 + $0x1418] sm:$0xff]
  %v1279 = vld [vmem:[%s3 + $0x1420] sm:$0xff]
  %v1280 = vld [vmem:[%s3 + $0x1428] sm:$0xff]
  %v1281 = vld [vmem:[%s3 + $0x1430] sm:$0xff]
  %v1282 = vld [vmem:[%s3 + $0x1438] sm:$0xff]
  %v1283 = vld [vmem:[%s3 + $0x1440] sm:$0xff]
  %v1284 = vld [vmem:[%s3 + $0x1448] sm:$0xff]
  %v1285 = vld [vmem:[%s3 + $0x1450] sm:$0xff]
  %v1286 = vld [vmem:[%s3 + $0x1458] sm:$0xff]
  %v1287 = vld [vmem:[%s3 + $0x1460] sm:$0xff]
  %v1288 = vld [vmem:[%s3 + $0x1468] sm:$0xff]
  %v1289 = vld [vmem:[%s3 + $0x1470] sm:$0xff]
  %v1290 = vld [vmem:[%s3 + $0x1478] sm:$0xff]
  %v1291 = vld [vmem:[%s3 + $0x1480] sm:$0xff]
  %v1292 = vld [vmem:[%s3 + $0x1488] sm:$0xff]
  %v1293 = vld [vmem:[%s3 + $0x1490] sm:$0xff]
  %v1294 = vld [vmem:[%s3 + $0x1498] sm:$0xff]
  %v1295 = vld [vmem:[%s3 + $0x14a0] sm:$0xff]
  %v1296 = vld [vmem:[%s3 + $0x14a8] sm:$0xff]
  %v1297 = vld [vmem:[%s3 + $0x14b0] sm:$0xff]
  %v1298 = vld [vmem:[%s3 + $0x14b8] sm:$0xff]
  %v1299 = vld [vmem:[%s3 + $0x14c0] sm:$0xff]
  %v1300 = vld [vmem:[%s3 + $0x14c8] sm:$0xff]
  %v1301 = vld [vmem:[%s3 + $0x14d0] sm:$0xff]
  %v1302 = vld [vmem:[%s3 + $0x14d8] sm:$0xff]
  %v1303 = vld [vmem:[%s3 + $0x14e0] sm:$0xff]
  %v1304 = vld [vmem:[%s3 + $0x14e8] sm:$0xff]
  %v1305 = vld [vmem:[%s3 + $0x14f0] sm:$0xff]
  %v1306 = vld [vmem:[%s3 + $0x14f8] sm:$0xff]
  %v1307 = vld [vmem:[%s3 + $0x1500] sm:$0xff]
  %v1308 = vld [vmem:[%s3 + $0x1508] sm:$0xff]
  %v1309 = vld [vmem:[%s3 + $0x1510] sm:$0xff]
  %v1310 = vld [vmem:[%s3 + $0x1518] sm:$0xff]
  %v1311 = vld [vmem:[%s3 + $0x1520] sm:$0xff]
  %v1312 = vld [vmem:[%s3 + $0x1528] sm:$0xff]
  %v1313 = vld [vmem:[%s3 + $0x1530] sm:$0xff]
  %v1314 = vld [vmem:[%s3 + $0x1538] sm:$0xff]
  %v1315 = vld [vmem:[%s3 + $0x1540] sm:$0xff]
  %v1316 = vld [vmem:[%s3 + $0x1548] sm:$0xff]
  %v1317 = vld [vmem:[%s3 + $0x1550] sm:$0xff]
  %v1318 = vld [vmem:[%s3 + $0x1558] sm:$0xff]
  %v1319 = vld [vmem:[%s3 + $0x1560] sm:$0xff]
  %v1320 = vld [vmem:[%s3 + $0x1568] sm:$0xff]
  %v1321 = vld [vmem:[%s3 + $0x1570] sm:$0xff]
  %v1322 = vld [vmem:[%s3 + $0x1578] sm:$0xff]
  %v1323 = vld [vmem:[%s3 + $0x1580] sm:$0xff]
  %v1324 = vld [vmem:[%s3 + $0x1588] sm:$0xff]
  %v1325 = vld [vmem:[%s3 + $0x1590] sm:$0xff]
  %v1326 = vld [vmem:[%s3 + $0x1598] sm:$0xff]
  %v1327 = vld [vmem:[%s3 + $0x15a0] sm:$0xff]
  %v1328 = vld [vmem:[%s3 + $0x15a8] sm:$0xff]
  %v1329 = vld [vmem:[%s3 + $0x15b0] sm:$0xff]
  %v1330 = vld [vmem:[%s3 + $0x15b8] sm:$0xff]
  %v1331 = vld [vmem:[%s3 + $0x15c0] sm:$0xff]
  %v1332 = vld [vmem:[%s3 + $0x15c8] sm:$0xff]
  %v1333 = vld [vmem:[%s3 + $0x15d0] sm:$0xff]
  %v1334 = vld [vmem:[%s3 + $0x15d8] sm:$0xff]
  %v1335 = vld [vmem:[%s3 + $0x15e0] sm:$0xff]
  %v1336 = vld [vmem:[%s3 + $0x15e8] sm:$0xff]
  %v1337 = vld [vmem:[%s3 + $0x15f0] sm:$0xff]
  %v1338 = vld [vmem:[%s3 + $0x15f8] sm:$0xff]
  %v1339 = vld [vmem:[%s3 + $0x1600] sm:$0xff]
  %v1340 = vld [vmem:[%s3 + $0x1608] sm:$0xff]
  %v1341 = vld [vmem:[%s3 + $0x1610] sm:$0xff]
  %v1342 = vld [vmem:[%s3 + $0x1618] sm:$0xff]
  %v1343 = vld [vmem:[%s3 + $0x1620] sm:$0xff]
  %v1344 = vld [vmem:[%s3 + $0x1628] sm:$0xff]
  %v1345 = vld [vmem:[%s3 + $0x1630] sm:$0xff]
  %v1346 = vld [vmem:[%s3 + $0x1638] sm:$0xff]
  %v1347 = vld [vmem:[%s3 + $0x1640] sm:$0xff]
  %v1348 = vld [vmem:[%s3 + $0x1648] sm:$0xff]
  %v1349 = vld [vmem:[%s3 + $0x1650] sm:$0xff]
  %v1350 = vld [vmem:[%s3 + $0x1658] sm:$0xff]
  %v1351 = vld [vmem:[%s3 + $0x1660] sm:$0xff]
  %v1352 = vld [vmem:[%s3 + $0x1668] sm:$0xff]
  %v1353 = vld [vmem:[%s3 + $0x1670] sm:$0xff]
  %v1354 = vld [vmem:[%s3 + $0x1678] sm:$0xff]
  %v1355 = vld [vmem:[%s3 + $0x1680] sm:$0xff]
  %v1356 = vld [vmem:[%s3 + $0x1688] sm:$0xff]
  %v1357 = vld [vmem:[%s3 + $0x1690] sm:$0xff]
  %v1358 = vld [vmem:[%s3 + $0x1698] sm:$0xff]
  %v1359 = vld [vmem:[%s3 + $0x16a0] sm:$0xff]
  %v1360 = vld [vmem:[%s3 + $0x16a8] sm:$0xff]
  %v1361 = vld [vmem:[%s3 + $0x16b0] sm:$0xff]
  %v1362 = vld [vmem:[%s3 + $0x16b8] sm:$0xff]
  %v1363 = vld [vmem:[%s3 + $0x16c0] sm:$0xff]
  %v1364 = vld [vmem:[%s3 + $0x16c8] sm:$0xff]
  %v1365 = vld [vmem:[%s3 + $0x16d0] sm:$0xff]
  %v1366 = vld [vmem:[%s3 + $0x16d8] sm:$0xff]
  %v1367 = vld [vmem:[%s3 + $0x16e0] sm:$0xff]
  %v1368 = vld [vmem:[%s3 + $0x16e8] sm:$0xff]
  %v1369 = vld [vmem:[%s3 + $0x16f0] sm:$0xff]
  %v1370 = vld [vmem:[%s3 + $0x16f8] sm:$0xff]
  %v1371 = vld [vmem:[%s3 + $0x1700] sm:$0xff]
  %v1372 = vld [vmem:[%s3 + $0x1708] sm:$0xff]
  %v1373 = vld [vmem:[%s3 + $0x1710] sm:$0xff]
  %v1374 = vld [vmem:[%s3 + $0x1718] sm:$0xff]
  %v1375 = vld [vmem:[%s3 + $0x1720] sm:$0xff]
  %v1376 = vld [vmem:[%s3 + $0x1728] sm:$0xff]
  %v1377 = vld [vmem:[%s3 + $0x1730] sm:$0xff]
  %v1378 = vld [vmem:[%s3 + $0x1738] sm:$0xff]
  %v1379 = vld [vmem:[%s3 + $0x1740] sm:$0xff]
  %v1380 = vld [vmem:[%s3 + $0x1748] sm:$0xff]
  %v1381 = vld [vmem:[%s3 + $0x1750] sm:$0xff]
  %v1382 = vld [vmem:[%s3 + $0x1758] sm:$0xff]
  %v1383 = vld [vmem:[%s3 + $0x1760] sm:$0xff]
  %v1384 = vld [vmem:[%s3 + $0x1768] sm:$0xff]
  %v1385 = vld [vmem:[%s3 + $0x1770] sm:$0xff]
  %v1386 = vld [vmem:[%s3 + $0x1778] sm:$0xff]
  %v1387 = vld [vmem:[%s3 + $0x1780] sm:$0xff]
  %v1388 = vld [vmem:[%s3 + $0x1788] sm:$0xff]
  %v1389 = vld [vmem:[%s3 + $0x1790] sm:$0xff]
  %v1390 = vld [vmem:[%s3 + $0x1798] sm:$0xff]
  %v1391 = vld [vmem:[%s3 + $0x17a0] sm:$0xff]
  %v1392 = vld [vmem:[%s3 + $0x17a8] sm:$0xff]
  %v1393 = vld [vmem:[%s3 + $0x17b0] sm:$0xff]
  %v1394 = vld [vmem:[%s3 + $0x17b8] sm:$0xff]
  %v1395 = vld [vmem:[%s3 + $0x17c0] sm:$0xff]
  %v1396 = vld [vmem:[%s3 + $0x17c8] sm:$0xff]
  %v1397 = vld [vmem:[%s3 + $0x17d0] sm:$0xff]
  %v1398 = vld [vmem:[%s3 + $0x17d8] sm:$0xff]
  %v1399 = vld [vmem:[%s3 + $0x17e0] sm:$0xff]
  %v1400 = vld [vmem:[%s3 + $0x17e8] sm:$0xff]
  %v1401 = vld [vmem:[%s3 + $0x17f0] sm:$0xff]
  %v1402 = vld [vmem:[%s3 + $0x17f8] sm:$0xff]
  %v1403 = vld [vmem:[%s3 + $0x1800] sm:$0xff]
  %v1404 = vld [vmem:[%s3 + $0x1808] sm:$0xff]
  %v1405 = vld [vmem:[%s3 + $0x1810] sm:$0xff]
  %v1406 = vld [vmem:[%s3 + $0x1818] sm:$0xff]
  %v1407 = vld [vmem:[%s3 + $0x1820] sm:$0xff]
  %v1408 = vld [vmem:[%s3 + $0x1828] sm:$0xff]
  %v1409 = vld [vmem:[%s3 + $0x1830] sm:$0xff]
  %v1410 = vld [vmem:[%s3 + $0x1838] sm:$0xff]
  %v1411 = vld [vmem:[%s3 + $0x1840] sm:$0xff]
  %v1412 = vld [vmem:[%s3 + $0x1848] sm:$0xff]
  %v1413 = vld [vmem:[%s3 + $0x1850] sm:$0xff]
  %v1414 = vld [vmem:[%s3 + $0x1858] sm:$0xff]
  %v1415 = vld [vmem:[%s3 + $0x1860] sm:$0xff]
  %v1416 = vld [vmem:[%s3 + $0x1868] sm:$0xff]
  %v1417 = vld [vmem:[%s3 + $0x1870] sm:$0xff]
  %v1418 = vld [vmem:[%s3 + $0x1878] sm:$0xff]
  %v1419 = vld [vmem:[%s3 + $0x1880] sm:$0xff]
  %v1420 = vld [vmem:[%s3 + $0x1888] sm:$0xff]
  %v1421 = vld [vmem:[%s3 + $0x1890] sm:$0xff]
  %v1422 = vld [vmem:[%s3 + $0x1898] sm:$0xff]
  %v1423 = vld [vmem:[%s3 + $0x18a0] sm:$0xff]
  %v1424 = vld [vmem:[%s3 + $0x18a8] sm:$0xff]
  %v1425 = vld [vmem:[%s3 + $0x18b0] sm:$0xff]
  %v1426 = vld [vmem:[%s3 + $0x18b8] sm:$0xff]
  %v1427 = vld [vmem:[%s3 + $0x18c0] sm:$0xff]
  %v1428 = vld [vmem:[%s3 + $0x18c8] sm:$0xff]
  %v1429 = vld [vmem:[%s3 + $0x18d0] sm:$0xff]
  %v1430 = vld [vmem:[%s3 + $0x18d8] sm:$0xff]
  %v1431 = vld [vmem:[%s3 + $0x18e0] sm:$0xff]
  %v1432 = vld [vmem:[%s3 + $0x18e8] sm:$0xff]
  %v1433 = vld [vmem:[%s3 + $0x18f0] sm:$0xff]
  %v1434 = vld [vmem:[%s3 + $0x18f8] sm:$0xff]
  %v1435 = vld [vmem:[%s3 + $0x1900] sm:$0xff]
  %v1436 = vld [vmem:[%s3 + $0x1908] sm:$0xff]
  %v1437 = vld [vmem:[%s3 + $0x1910] sm:$0xff]
  %v1438 = vld [vmem:[%s3 + $0x1918] sm:$0xff]
  %v1439 = vld [vmem:[%s3 + $0x1920] sm:$0xff]
  %v1440 = vld [vmem:[%s3 + $0x1928] sm:$0xff]
  %v1441 = vld [vmem:[%s3 + $0x1930] sm:$0xff]
  %v1442 = vld [vmem:[%s3 + $0x1938] sm:$0xff]
  %v1443 = vld [vmem:[%s3 + $0x1940] sm:$0xff]
  %v1444 = vld [vmem:[%s3 + $0x1948] sm:$0xff]
  %v1445 = vld [vmem:[%s3 + $0x1950] sm:$0xff]
  %v1446 = vld [vmem:[%s3 + $0x1958] sm:$0xff]
  %v1447 = vld [vmem:[%s3 + $0x1960] sm:$0xff]
  %v1448 = vld [vmem:[%s3 + $0x1968] sm:$0xff]
  %v1449 = vld [vmem:[%s3 + $0x1970] sm:$0xff]
  %v1450 = vld [vmem:[%s3 + $0x1978] sm:$0xff]
  %v1451 = vld [vmem:[%s3 + $0x1980] sm:$0xff]
  %v1452 = vld [vmem:[%s3 + $0x1988] sm:$0xff]
  %v1453 = vld [vmem:[%s3 + $0x1990] sm:$0xff]
  %v1454 = vld [vmem:[%s3 + $0x1998] sm:$0xff]
  %v1455 = vld [vmem:[%s3 + $0x19a0] sm:$0xff]
  %v1456 = vld [vmem:[%s3 + $0x19a8] sm:$0xff]
  %v1457 = vld [vmem:[%s3 + $0x19b0] sm:$0xff]
  %v1458 = vld [vmem:[%s3 + $0x19b8] sm:$0xff]
  %v1459 = vld [vmem:[%s3 + $0x19c0] sm:$0xff]
  %v1460 = vld [vmem:[%s3 + $0x19c8] sm:$0xff]
  %v1461 = vld [vmem:[%s3 + $0x19d0] sm:$0xff]
  %v1462 = vld [vmem:[%s3 + $0x19d8] sm:$0xff]
  %v1463 = vld [vmem:[%s3 + $0x19e0] sm:$0xff]
  %v1464 = vld [vmem:[%s3 + $0x19e8] sm:$0xff]
  %v1465 = vld [vmem:[%s3 + $0x19f0] sm:$0xff]
  %v1466 = vld [vmem:[%s3 + $0x19f8] sm:$0xff]
  %v1467 = vld [vmem:[%s3 + $0x1a00] sm:$0xff]
  %v1468 = vld [vmem:[%s3 + $0x1a08] sm:$0xff]
  %v1469 = vld [vmem:[%s3 + $0x1a10] sm:$0xff]
  %v1470 = vld [vmem:[%s3 + $0x1a18] sm:$0xff]
  %v1471 = vld [vmem:[%s3 + $0x1a20] sm:$0xff]
  %v1472 = vld [vmem:[%s3 + $0x1a28] sm:$0xff]
  %v1473 = vld [vmem:[%s3 + $0x1a30] sm:$0xff]
  %v1474 = vld [vmem:[%s3 + $0x1a38] sm:$0xff]
  %v1475 = vld [vmem:[%s3 + $0x1a40] sm:$0xff]
  %v1476 = vld [vmem:[%s3 + $0x1a48] sm:$0xff]
  %v1477 = vld [vmem:[%s3 + $0x1a50] sm:$0xff]
  %v1478 = vld [vmem:[%s3 + $0x1a58] sm:$0xff]
  %v1479 = vld [vmem:[%s3 + $0x1a60] sm:$0xff]
  %v1480 = vld [vmem:[%s3 + $0x1a68] sm:$0xff]
  %v1481 = vld [vmem:[%s3 + $0x1a70] sm:$0xff]
  %v1482 = vld [vmem:[%s3 + $0x1a78] sm:$0xff]
  %v1483 = vld [vmem:[%s3 + $0x1a80] sm:$0xff]
  %v1484 = vld [vmem:[%s3 + $0x1a88] sm:$0xff]
  %v1485 = vld [vmem:[%s3 + $0x1a90] sm:$0xff]
  %v1486 = vld [vmem:[%s3 + $0x1a98] sm:$0xff]
  %v1487 = vld [vmem:[%s3 + $0x1aa0] sm:$0xff]
  %v1488 = vld [vmem:[%s3 + $0x1aa8] sm:$0xff]
  %v1489 = vld [vmem:[%s3 + $0x1ab0] sm:$0xff]
  %v1490 = vld [vmem:[%s3 + $0x1ab8] sm:$0xff]
  %v1491 = vld [vmem:[%s3 + $0x1ac0] sm:$0xff]
  %v1492 = vld [vmem:[%s3 + $0x1ac8] sm:$0xff]
  %v1493 = vld [vmem:[%s3 + $0x1ad0] sm:$0xff]
  %v1494 = vld [vmem:[%s3 + $0x1ad8] sm:$0xff]
  %v1495 = vld [vmem:[%s3 + $0x1ae0] sm:$0xff]
  %v1496 = vld [vmem:[%s3 + $0x1ae8] sm:$0xff]
  %v1497 = vld [vmem:[%s3 + $0x1af0] sm:$0xff]
  %v1498 = vld [vmem:[%s3 + $0x1af8] sm:$0xff]
  %v1499 = vld [vmem:[%s3 + $0x1b00] sm:$0xff]
  %v1500 = vld [vmem:[%s3 + $0x1b08] sm:$0xff]
  %v1501 = vld [vmem:[%s3 + $0x1b10] sm:$0xff]
  %v1502 = vld [vmem:[%s3 + $0x1b18] sm:$0xff]
  %v1503 = vld [vmem:[%s3 + $0x1b20] sm:$0xff]
  %v1504 = vld [vmem:[%s3 + $0x1b28] sm:$0xff]
  %v1505 = vld [vmem:[%s3 + $0x1b30] sm:$0xff]
  %v1506 = vld [vmem:[%s3 + $0x1b38] sm:$0xff]
  %v1507 = vld [vmem:[%s3 + $0x1b40] sm:$0xff]
  %v1508 = vld [vmem:[%s3 + $0x1b48] sm:$0xff]
  %v1509 = vld [vmem:[%s3 + $0x1b50] sm:$0xff]
  %v1510 = vld [vmem:[%s3 + $0x1b58] sm:$0xff]
  %v1511 = vld [vmem:[%s3 + $0x1b60] sm:$0xff]
  %v1512 = vld [vmem:[%s3 + $0x1b68] sm:$0xff]
  %v1513 = vld [vmem:[%s3 + $0x1b70] sm:$0xff]
  %v1514 = vld [vmem:[%s3 + $0x1b78] sm:$0xff]
  %v1515 = vld [vmem:[%s3 + $0x1b80] sm:$0xff]
  %v1516 = vld [vmem:[%s3 + $0x1b88] sm:$0xff]
  %v1517 = vld [vmem:[%s3 + $0x1b90] sm:$0xff]
  %v1518 = vld [vmem:[%s3 + $0x1b98] sm:$0xff]
  %v1519 = vld [vmem:[%s3 + $0x1ba0] sm:$0xff]
  %v1520 = vld [vmem:[%s3 + $0x1ba8] sm:$0xff]
  %v1521 = vld [vmem:[%s3 + $0x1bb0] sm:$0xff]
  %v1522 = vld [vmem:[%s3 + $0x1bb8] sm:$0xff]
  %v1523 = vld [vmem:[%s3 + $0x1bc0] sm:$0xff]
  %v1524 = vld [vmem:[%s3 + $0x1bc8] sm:$0xff]
  %v1525 = vld [vmem:[%s3 + $0x1bd0] sm:$0xff]
  %v1526 = vld [vmem:[%s3 + $0x1bd8] sm:$0xff]
  %v1527 = vld [vmem:[%s3 + $0x1be0] sm:$0xff]
  %v1528 = vld [vmem:[%s3 + $0x1be8] sm:$0xff]
  %v1529 = vld [vmem:[%s3 + $0x1bf0] sm:$0xff]
  %v1530 = vld [vmem:[%s3 + $0x1bf8] sm:$0xff]
  %v1531 = vld [vmem:[%s3 + $0x1c00] sm:$0xff]
  %v1532 = vld [vmem:[%s3 + $0x1c08] sm:$0xff]
  %v1533 = vld [vmem:[%s3 + $0x1c10] sm:$0xff]
  %v1534 = vld [vmem:[%s3 + $0x1c18] sm:$0xff]
  %v1535 = vld [vmem:[%s3 + $0x1c20] sm:$0xff]
  %v1536 = vld [vmem:[%s3 + $0x1c28] sm:$0xff]
  %v1537 = vld [vmem:[%s3 + $0x1c30] sm:$0xff]
  %v1538 = vld [vmem:[%s3 + $0x1c38] sm:$0xff]
  %v1539 = vld [vmem:[%s3 + $0x1c40] sm:$0xff]
  %v1540 = vld [vmem:[%s3 + $0x1c48] sm:$0xff]
  %v1541 = vld [vmem:[%s3 + $0x1c50] sm:$0xff]
  %v1542 = vld [vmem:[%s3 + $0x1c58] sm:$0xff]
  %v1543 = vld [vmem:[%s3 + $0x1c60] sm:$0xff]
  %v1544 = vld [vmem:[%s3 + $0x1c68] sm:$0xff]
  %v1545 = vld [vmem:[%s3 + $0x1c70] sm:$0xff]
  %v1546 = vld [vmem:[%s3 + $0x1c78] sm:$0xff]
  %v1547 = vld [vmem:[%s3 + $0x1c80] sm:$0xff]
  %v1548 = vld [vmem:[%s3 + $0x1c88] sm:$0xff]
  %v1549 = vld [vmem:[%s3 + $0x1c90] sm:$0xff]
  %v1550 = vld [vmem:[%s3 + $0x1c98] sm:$0xff]
  %v1551 = vld [vmem:[%s3 + $0x1ca0] sm:$0xff]
  %v1552 = vld [vmem:[%s3 + $0x1ca8] sm:$0xff]
  %v1553 = vld [vmem:[%s3 + $0x1cb0] sm:$0xff]
  %v1554 = vld [vmem:[%s3 + $0x1cb8] sm:$0xff]
  %v1555 = vld [vmem:[%s3 + $0x1cc0] sm:$0xff]
  %v1556 = vld [vmem:[%s3 + $0x1cc8] sm:$0xff]
  %v1557 = vld [vmem:[%s3 + $0x1cd0] sm:$0xff]
  %v1558 = vld [vmem:[%s3 + $0x1cd8] sm:$0xff]
  %v1559 = vld [vmem:[%s3 + $0x1ce0] sm:$0xff]
  %v1560 = vld [vmem:[%s3 + $0x1ce8] sm:$0xff]
  %v1561 = vld [vmem:[%s3 + $0x1cf0] sm:$0xff]
  %v1562 = vld [vmem:[%s3 + $0x1cf8] sm:$0xff]
  %v1563 = vld [vmem:[%s3 + $0x1d00] sm:$0xff]
  %v1564 = vld [vmem:[%s3 + $0x1d08] sm:$0xff]
  %v1565 = vld [vmem:[%s3 + $0x1d10] sm:$0xff]
  %v1566 = vld [vmem:[%s3 + $0x1d18] sm:$0xff]
  %v1567 = vld [vmem:[%s3 + $0x1d20] sm:$0xff]
  %v1568 = vld [vmem:[%s3 + $0x1d28] sm:$0xff]
  %v1569 = vld [vmem:[%s3 + $0x1d30] sm:$0xff]
  %v1570 = vld [vmem:[%s3 + $0x1d38] sm:$0xff]
  %v1571 = vld [vmem:[%s3 + $0x1d40] sm:$0xff]
  %v1572 = vld [vmem:[%s3 + $0x1d48] sm:$0xff]
  %v1573 = vld [vmem:[%s3 + $0x1d50] sm:$0xff]
  %v1574 = vld [vmem:[%s3 + $0x1d58] sm:$0xff]
  %v1575 = vld [vmem:[%s3 + $0x1d60] sm:$0xff]
  %v1576 = vld [vmem:[%s3 + $0x1d68] sm:$0xff]
  %v1577 = vld [vmem:[%s3 + $0x1d70] sm:$0xff]
  %v1578 = vld [vmem:[%s3 + $0x1d78] sm:$0xff]
  %v1579 = vld [vmem:[%s3 + $0x1d80] sm:$0xff]
  %v1580 = vld [vmem:[%s3 + $0x1d88] sm:$0xff]
  %v1581 = vld [vmem:[%s3 + $0x1d90] sm:$0xff]
  %v1582 = vld [vmem:[%s3 + $0x1d98] sm:$0xff]
  %v1583 = vld [vmem:[%s3 + $0x1da0] sm:$0xff]
  %v1584 = vld [vmem:[%s3 + $0x1da8] sm:$0xff]
  %v1585 = vld [vmem:[%s3 + $0x1db0] sm:$0xff]
  %v1586 = vld [vmem:[%s3 + $0x1db8] sm:$0xff]
  %v1587 = vld [vmem:[%s3 + $0x1dc0] sm:$0xff]
  %v1588 = vld [vmem:[%s3 + $0x1dc8] sm:$0xff]
  %v1589 = vld [vmem:[%s3 + $0x1dd0] sm:$0xff]
  %v1590 = vld [vmem:[%s3 + $0x1dd8] sm:$0xff]
  %v1591 = vld [vmem:[%s3 + $0x1de0] sm:$0xff]
  %v1592 = vld [vmem:[%s3 + $0x1de8] sm:$0xff]
  %v1593 = vld [vmem:[%s3 + $0x1df0] sm:$0xff]
  %v1594 = vld [vmem:[%s3 + $0x1df8] sm:$0xff]
  %v1595 = vld [vmem:[%s3 + $0x1e00] sm:$0xff]
  %v1596 = vld [vmem:[%s3 + $0x1e08] sm:$0xff]
  %v1597 = vld [vmem:[%s3 + $0x1e10] sm:$0xff]
  %v1598 = vld [vmem:[%s3 + $0x1e18] sm:$0xff]
  %v1599 = vld [vmem:[%s3 + $0x1e20] sm:$0xff]
  %v1600 = vld [vmem:[%s3 + $0x1e28] sm:$0xff]
  %v1601 = vld [vmem:[%s3 + $0x1e30] sm:$0xff]
  %v1602 = vld [vmem:[%s3 + $0x1e38] sm:$0xff]
  %v1603 = vld [vmem:[%s3 + $0x1e40] sm:$0xff]
  %v1604 = vld [vmem:[%s3 + $0x1e48] sm:$0xff]
  %v1605 = vld [vmem:[%s3 + $0x1e50] sm:$0xff]
  %v1606 = vld [vmem:[%s3 + $0x1e58] sm:$0xff]
  %v1607 = vld [vmem:[%s3 + $0x1e60] sm:$0xff]
  %v1608 = vld [vmem:[%s3 + $0x1e68] sm:$0xff]
  %v1609 = vld [vmem:[%s3 + $0x1e70] sm:$0xff]
  %v1610 = vld [vmem:[%s3 + $0x1e78] sm:$0xff]
  %v1611 = vld [vmem:[%s3 + $0x1e80] sm:$0xff]
  %v1612 = vld [vmem:[%s3 + $0x1e88] sm:$0xff]
  %v1613 = vld [vmem:[%s3 + $0x1e90] sm:$0xff]
  %v1614 = vld [vmem:[%s3 + $0x1e98] sm:$0xff]
  %v1615 = vld [vmem:[%s3 + $0x1ea0] sm:$0xff]
  %v1616 = vld [vmem:[%s3 + $0x1ea8] sm:$0xff]
  %v1617 = vld [vmem:[%s3 + $0x1eb0] sm:$0xff]
  %v1618 = vld [vmem:[%s3 + $0x1eb8] sm:$0xff]
  %v1619 = vld [vmem:[%s3 + $0x1ec0] sm:$0xff]
  %v1620 = vld [vmem:[%s3 + $0x1ec8] sm:$0xff]
  %v1621 = vld [vmem:[%s3 + $0x1ed0] sm:$0xff]
  %v1622 = vld [vmem:[%s3 + $0x1ed8] sm:$0xff]
  %v1623 = vld [vmem:[%s3 + $0x1ee0] sm:$0xff]
  %v1624 = vld [vmem:[%s3 + $0x1ee8] sm:$0xff]
  %v1625 = vld [vmem:[%s3 + $0x1ef0] sm:$0xff]
  %v1626 = vld [vmem:[%s3 + $0x1ef8] sm:$0xff]
  %v1627 = vld [vmem:[%s3 + $0x1f00] sm:$0xff]
  %v1628 = vld [vmem:[%s3 + $0x1f08] sm:$0xff]
  %v1629 = vld [vmem:[%s3 + $0x1f10] sm:$0xff]
  %v1630 = vld [vmem:[%s3 + $0x1f18] sm:$0xff]
  %v1631 = vld [vmem:[%s3 + $0x1f20] sm:$0xff]
  %v1632 = vld [vmem:[%s3 + $0x1f28] sm:$0xff]
  %v1633 = vld [vmem:[%s3 + $0x1f30] sm:$0xff]
  %v1634 = vld [vmem:[%s3 + $0x1f38] sm:$0xff]
  %v1635 = vld [vmem:[%s3 + $0x1f40] sm:$0xff]
  %v1636 = vld [vmem:[%s3 + $0x1f48] sm:$0xff]
  %v1637 = vld [vmem:[%s3 + $0x1f50] sm:$0xff]
  %v1638 = vld [vmem:[%s3 + $0x1f58] sm:$0xff]
  %v1639 = vld [vmem:[%s3 + $0x1f60] sm:$0xff]
  %v1640 = vld [vmem:[%s3 + $0x1f68] sm:$0xff]
  %v1641 = vld [vmem:[%s3 + $0x1f70] sm:$0xff]
  %v1642 = vld [vmem:[%s3 + $0x1f78] sm:$0xff]
  %v1643 = vld [vmem:[%s3 + $0x1f80] sm:$0xff]
  %v1644 = vld [vmem:[%s3 + $0x1f88] sm:$0xff]
  %v1645 = vld [vmem:[%s3 + $0x1f90] sm:$0xff]
  %v1646 = vld [vmem:[%s3 + $0x1f98] sm:$0xff]
  %v1647 = vld [vmem:[%s3 + $0x1fa0] sm:$0xff]
  %v1648 = vld [vmem:[%s3 + $0x1fa8] sm:$0xff]
  %v1649 = vld [vmem:[%s3 + $0x1fb0] sm:$0xff]
  %v1650 = vld [vmem:[%s3 + $0x1fb8] sm:$0xff]
  %v1651 = vld [vmem:[%s3 + $0x1fc0] sm:$0xff]
  %v1652 = vld [vmem:[%s3 + $0x1fc8] sm:$0xff]
  %v1653 = vld [vmem:[%s3 + $0x1fd0] sm:$0xff]
  %v1654 = vld [vmem:[%s3 + $0x1fd8] sm:$0xff]
  %v1655 = vld [vmem:[%s3 + $0x1fe0] sm:$0xff]
  %v1656 = vld [vmem:[%s3 + $0x1fe8] sm:$0xff]
  %v1657 = vld [vmem:[%s3 + $0x1ff0] sm:$0xff]
  %v1658 = vld [vmem:[%s3 + $0x1ff8] sm:$0xff]
  %v1659 = vld [vmem:[%s4] sm:$0xff]
  %v1660 = vld [vmem:[%s4 + $0x8] sm:$0xff]
  %v1663 = vlaneseq
  %v1664 = vshrl.u32 %v1663, 7
  %v1665 = vsub.s32 0, %v1664
  %v1666 = vrot.slane %v1659, %v1665
  %v1667 = vlaneseq
  %v1668 = vshrl.u32 %v1667, 7
  %v1669 = vsub.s32 1, %v1668
  %v1670 = vrot.slane %v1659, %v1669
  %v1671 = vlaneseq
  %v1672 = vshrl.u32 %v1671, 7
  %v1673 = vsub.s32 2, %v1672
  %v1674 = vrot.slane %v1659, %v1673
  %v1675 = vlaneseq
  %v1676 = vshrl.u32 %v1675, 7
  %v1677 = vsub.s32 3, %v1676
  %v1678 = vrot.slane %v1659, %v1677
  %v1679 = vlaneseq
  %v1680 = vshrl.u32 %v1679, 7
  %v1681 = vsub.s32 4, %v1680
  %v1682 = vrot.slane %v1659, %v1681
  %v1683 = vlaneseq
  %v1684 = vshrl.u32 %v1683, 7
  %v1685 = vsub.s32 5, %v1684
  %v1686 = vrot.slane %v1659, %v1685
  %v1687 = vlaneseq
  %v1688 = vshrl.u32 %v1687, 7
  %v1689 = vsub.s32 6, %v1688
  %v1690 = vrot.slane %v1659, %v1689
  %v1691 = vlaneseq
  %v1692 = vshrl.u32 %v1691, 7
  %v1693 = vsub.s32 7, %v1692
  %v1694 = vrot.slane %v1659, %v1693
  %v1695 = vlaneseq
  %v1696 = vshrl.u32 %v1695, 7
  %v1697 = vsub.s32 0, %v1696
  %v1698 = vrot.slane %v1660, %v1697
  %v1699 = vlaneseq
  %v1700 = vshrl.u32 %v1699, 7
  %v1701 = vsub.s32 1, %v1700
  %v1702 = vrot.slane %v1660, %v1701
  %v1703 = vlaneseq
  %v1704 = vshrl.u32 %v1703, 7
  %v1705 = vsub.s32 2, %v1704
  %v1706 = vrot.slane %v1660, %v1705
  %v1707 = vlaneseq
  %v1708 = vshrl.u32 %v1707, 7
  %v1709 = vsub.s32 3, %v1708
  %v1710 = vrot.slane %v1660, %v1709
  %v1711 = vlaneseq
  %v1712 = vshrl.u32 %v1711, 7
  %v1713 = vsub.s32 4, %v1712
  %v1714 = vrot.slane %v1660, %v1713
  %v1715 = vlaneseq
  %v1716 = vshrl.u32 %v1715, 7
  %v1717 = vsub.s32 5, %v1716
  %v1718 = vrot.slane %v1660, %v1717
  %v1719 = vlaneseq
  %v1720 = vshrl.u32 %v1719, 7
  %v1721 = vsub.s32 6, %v1720
  %v1722 = vrot.slane %v1660, %v1721
  %v1723 = vlaneseq
  %v1724 = vshrl.u32 %v1723, 7
  %v1725 = vsub.s32 7, %v1724
  %v1726 = vrot.slane %v1660, %v1725
  %v2767 = vunpack.c.l.b16 %v635
  %v2768 = vunpack.c.h.b16 %v635
  %v2769 = vunpack.c.l.b16 %v636
  %v2770 = vunpack.c.h.b16 %v636
  %v2771 = vunpack.c.l.b16 %v637
  %v2772 = vunpack.c.h.b16 %v637
  %v2773 = vunpack.c.l.b16 %v638
  %v2774 = vunpack.c.h.b16 %v638
  %v2775 = vunpack.c.l.b16 %v639
  %v2776 = vunpack.c.h.b16 %v639
  %v2777 = vunpack.c.l.b16 %v640
  %v2778 = vunpack.c.h.b16 %v640
  %v2779 = vunpack.c.l.b16 %v641
  %v2780 = vunpack.c.h.b16 %v641
  %v2781 = vunpack.c.l.b16 %v642
  %v2782 = vunpack.c.h.b16 %v642
  %v2783 = vunpack.c.l.b16 %v643
  %v2784 = vunpack.c.h.b16 %v643
  %v2785 = vunpack.c.l.b16 %v644
  %v2786 = vunpack.c.h.b16 %v644
  %v2787 = vunpack.c.l.b16 %v645
  %v2788 = vunpack.c.h.b16 %v645
  %v2789 = vunpack.c.l.b16 %v646
  %v2790 = vunpack.c.h.b16 %v646
  %v2791 = vunpack.c.l.b16 %v647
  %v2792 = vunpack.c.h.b16 %v647
  %v2793 = vunpack.c.l.b16 %v648
  %v2794 = vunpack.c.h.b16 %v648
  %v2795 = vunpack.c.l.b16 %v649
  %v2796 = vunpack.c.h.b16 %v649
  %v2797 = vunpack.c.l.b16 %v650
  %v2798 = vunpack.c.h.b16 %v650
  %v2799 = vunpack.c.l.b16 %v651
  %v2800 = vunpack.c.h.b16 %v651
  %v2801 = vunpack.c.l.b16 %v652
  %v2802 = vunpack.c.h.b16 %v652
  %v2803 = vunpack.c.l.b16 %v653
  %v2804 = vunpack.c.h.b16 %v653
  %v2805 = vunpack.c.l.b16 %v654
  %v2806 = vunpack.c.h.b16 %v654
  %v2807 = vunpack.c.l.b16 %v655
  %v2808 = vunpack.c.h.b16 %v655
  %v2809 = vunpack.c.l.b16 %v656
  %v2810 = vunpack.c.h.b16 %v656
  %v2811 = vunpack.c.l.b16 %v657
  %v2812 = vunpack.c.h.b16 %v657
  %v2813 = vunpack.c.l.b16 %v658
  %v2814 = vunpack.c.h.b16 %v658
  %v2815 = vunpack.c.l.b16 %v659
  %v2816 = vunpack.c.h.b16 %v659
  %v2817 = vunpack.c.l.b16 %v660
  %v2818 = vunpack.c.h.b16 %v660
  %v2819 = vunpack.c.l.b16 %v661
  %v2820 = vunpack.c.h.b16 %v661
  %v2821 = vunpack.c.l.b16 %v662
  %v2822 = vunpack.c.h.b16 %v662
  %v2823 = vunpack.c.l.b16 %v663
  %v2824 = vunpack.c.h.b16 %v663
  %v2825 = vunpack.c.l.b16 %v664
  %v2826 = vunpack.c.h.b16 %v664
  %v2827 = vunpack.c.l.b16 %v665
  %v2828 = vunpack.c.h.b16 %v665
  %v2829 = vunpack.c.l.b16 %v666
  %v2830 = vunpack.c.h.b16 %v666
  %v2831 = vunpack.c.l.b16 %v667
  %v2832 = vunpack.c.h.b16 %v667
  %v2833 = vunpack.c.l.b16 %v668
  %v2834 = vunpack.c.h.b16 %v668
  %v2835 = vunpack.c.l.b16 %v669
  %v2836 = vunpack.c.h.b16 %v669
  %v2837 = vunpack.c.l.b16 %v670
  %v2838 = vunpack.c.h.b16 %v670
  %v2839 = vunpack.c.l.b16 %v671
  %v2840 = vunpack.c.h.b16 %v671
  %v2841 = vunpack.c.l.b16 %v672
  %v2842 = vunpack.c.h.b16 %v672
  %v2843 = vunpack.c.l.b16 %v673
  %v2844 = vunpack.c.h.b16 %v673
  %v2845 = vunpack.c.l.b16 %v674
  %v2846 = vunpack.c.h.b16 %v674
  %v2847 = vunpack.c.l.b16 %v675
  %v2848 = vunpack.c.h.b16 %v675
  %v2849 = vunpack.c.l.b16 %v676
  %v2850 = vunpack.c.h.b16 %v676
  %v2851 = vunpack.c.l.b16 %v677
  %v2852 = vunpack.c.h.b16 %v677
  %v2853 = vunpack.c.l.b16 %v678
  %v2854 = vunpack.c.h.b16 %v678
  %v2855 = vunpack.c.l.b16 %v679
  %v2856 = vunpack.c.h.b16 %v679
  %v2857 = vunpack.c.l.b16 %v680
  %v2858 = vunpack.c.h.b16 %v680
  %v2859 = vunpack.c.l.b16 %v681
  %v2860 = vunpack.c.h.b16 %v681
  %v2861 = vunpack.c.l.b16 %v682
  %v2862 = vunpack.c.h.b16 %v682
  %v2863 = vunpack.c.l.b16 %v683
  %v2864 = vunpack.c.h.b16 %v683
  %v2865 = vunpack.c.l.b16 %v684
  %v2866 = vunpack.c.h.b16 %v684
  %v2867 = vunpack.c.l.b16 %v685
  %v2868 = vunpack.c.h.b16 %v685
  %v2869 = vunpack.c.l.b16 %v686
  %v2870 = vunpack.c.h.b16 %v686
  %v2871 = vunpack.c.l.b16 %v687
  %v2872 = vunpack.c.h.b16 %v687
  %v2873 = vunpack.c.l.b16 %v688
  %v2874 = vunpack.c.h.b16 %v688
  %v2875 = vunpack.c.l.b16 %v689
  %v2876 = vunpack.c.h.b16 %v689
  %v2877 = vunpack.c.l.b16 %v690
  %v2878 = vunpack.c.h.b16 %v690
  %v2879 = vunpack.c.l.b16 %v691
  %v2880 = vunpack.c.h.b16 %v691
  %v2881 = vunpack.c.l.b16 %v692
  %v2882 = vunpack.c.h.b16 %v692
  %v2883 = vunpack.c.l.b16 %v693
  %v2884 = vunpack.c.h.b16 %v693
  %v2885 = vunpack.c.l.b16 %v694
  %v2886 = vunpack.c.h.b16 %v694
  %v2887 = vunpack.c.l.b16 %v695
  %v2888 = vunpack.c.h.b16 %v695
  %v2889 = vunpack.c.l.b16 %v696
  %v2890 = vunpack.c.h.b16 %v696
  %v2891 = vunpack.c.l.b16 %v697
  %v2892 = vunpack.c.h.b16 %v697
  %v2893 = vunpack.c.l.b16 %v698
  %v2894 = vunpack.c.h.b16 %v698
  %v2895 = vunpack.c.l.b16 %v699
  %v2896 = vunpack.c.h.b16 %v699
  %v2897 = vunpack.c.l.b16 %v700
  %v2898 = vunpack.c.h.b16 %v700
  %v2899 = vunpack.c.l.b16 %v701
  %v2900 = vunpack.c.h.b16 %v701
  %v2901 = vunpack.c.l.b16 %v702
  %v2902 = vunpack.c.h.b16 %v702
  %v2903 = vunpack.c.l.b16 %v703
  %v2904 = vunpack.c.h.b16 %v703
  %v2905 = vunpack.c.l.b16 %v704
  %v2906 = vunpack.c.h.b16 %v704
  %v2907 = vunpack.c.l.b16 %v705
  %v2908 = vunpack.c.h.b16 %v705
  %v2909 = vunpack.c.l.b16 %v706
  %v2910 = vunpack.c.h.b16 %v706
  %v2911 = vunpack.c.l.b16 %v707
  %v2912 = vunpack.c.h.b16 %v707
  %v2913 = vunpack.c.l.b16 %v708
  %v2914 = vunpack.c.h.b16 %v708
  %v2915 = vunpack.c.l.b16 %v709
  %v2916 = vunpack.c.h.b16 %v709
  %v2917 = vunpack.c.l.b16 %v710
  %v2918 = vunpack.c.h.b16 %v710
  %v2919 = vunpack.c.l.b16 %v711
  %v2920 = vunpack.c.h.b16 %v711
  %v2921 = vunpack.c.l.b16 %v712
  %v2922 = vunpack.c.h.b16 %v712
  %v2923 = vunpack.c.l.b16 %v713
  %v2924 = vunpack.c.h.b16 %v713
  %v2925 = vunpack.c.l.b16 %v714
  %v2926 = vunpack.c.h.b16 %v714
  %v2927 = vunpack.c.l.b16 %v715
  %v2928 = vunpack.c.h.b16 %v715
  %v2929 = vunpack.c.l.b16 %v716
  %v2930 = vunpack.c.h.b16 %v716
  %v2931 = vunpack.c.l.b16 %v717
  %v2932 = vunpack.c.h.b16 %v717
  %v2933 = vunpack.c.l.b16 %v718
  %v2934 = vunpack.c.h.b16 %v718
  %v2935 = vunpack.c.l.b16 %v719
  %v2936 = vunpack.c.h.b16 %v719
  %v2937 = vunpack.c.l.b16 %v720
  %v2938 = vunpack.c.h.b16 %v720
  %v2939 = vunpack.c.l.b16 %v721
  %v2940 = vunpack.c.h.b16 %v721
  %v2941 = vunpack.c.l.b16 %v722
  %v2942 = vunpack.c.h.b16 %v722
  %v2943 = vunpack.c.l.b16 %v723
  %v2944 = vunpack.c.h.b16 %v723
  %v2945 = vunpack.c.l.b16 %v724
  %v2946 = vunpack.c.h.b16 %v724
  %v2947 = vunpack.c.l.b16 %v725
  %v2948 = vunpack.c.h.b16 %v725
  %v2949 = vunpack.c.l.b16 %v726
  %v2950 = vunpack.c.h.b16 %v726
  %v2951 = vunpack.c.l.b16 %v727
  %v2952 = vunpack.c.h.b16 %v727
  %v2953 = vunpack.c.l.b16 %v728
  %v2954 = vunpack.c.h.b16 %v728
  %v2955 = vunpack.c.l.b16 %v729
  %v2956 = vunpack.c.h.b16 %v729
  %v2957 = vunpack.c.l.b16 %v730
  %v2958 = vunpack.c.h.b16 %v730
  %v2959 = vunpack.c.l.b16 %v731
  %v2960 = vunpack.c.h.b16 %v731
  %v2961 = vunpack.c.l.b16 %v732
  %v2962 = vunpack.c.h.b16 %v732
  %v2963 = vunpack.c.l.b16 %v733
  %v2964 = vunpack.c.h.b16 %v733
  %v2965 = vunpack.c.l.b16 %v734
  %v2966 = vunpack.c.h.b16 %v734
  %v2967 = vunpack.c.l.b16 %v735
  %v2968 = vunpack.c.h.b16 %v735
  %v2969 = vunpack.c.l.b16 %v736
  %v2970 = vunpack.c.h.b16 %v736
  %v2971 = vunpack.c.l.b16 %v737
  %v2972 = vunpack.c.h.b16 %v737
  %v2973 = vunpack.c.l.b16 %v738
  %v2974 = vunpack.c.h.b16 %v738
  %v2975 = vunpack.c.l.b16 %v739
  %v2976 = vunpack.c.h.b16 %v739
  %v2977 = vunpack.c.l.b16 %v740
  %v2978 = vunpack.c.h.b16 %v740
  %v2979 = vunpack.c.l.b16 %v741
  %v2980 = vunpack.c.h.b16 %v741
  %v2981 = vunpack.c.l.b16 %v742
  %v2982 = vunpack.c.h.b16 %v742
  %v2983 = vunpack.c.l.b16 %v743
  %v2984 = vunpack.c.h.b16 %v743
  %v2985 = vunpack.c.l.b16 %v744
  %v2986 = vunpack.c.h.b16 %v744
  %v2987 = vunpack.c.l.b16 %v745
  %v2988 = vunpack.c.h.b16 %v745
  %v2989 = vunpack.c.l.b16 %v746
  %v2990 = vunpack.c.h.b16 %v746
  %v2991 = vunpack.c.l.b16 %v747
  %v2992 = vunpack.c.h.b16 %v747
  %v2993 = vunpack.c.l.b16 %v748
  %v2994 = vunpack.c.h.b16 %v748
  %v2995 = vunpack.c.l.b16 %v749
  %v2996 = vunpack.c.h.b16 %v749
  %v2997 = vunpack.c.l.b16 %v750
  %v2998 = vunpack.c.h.b16 %v750
  %v2999 = vunpack.c.l.b16 %v751
  %v3000 = vunpack.c.h.b16 %v751
  %v3001 = vunpack.c.l.b16 %v752
  %v3002 = vunpack.c.h.b16 %v752
  %v3003 = vunpack.c.l.b16 %v753
  %v3004 = vunpack.c.h.b16 %v753
  %v3005 = vunpack.c.l.b16 %v754
  %v3006 = vunpack.c.h.b16 %v754
  %v3007 = vunpack.c.l.b16 %v755
  %v3008 = vunpack.c.h.b16 %v755
  %v3009 = vunpack.c.l.b16 %v756
  %v3010 = vunpack.c.h.b16 %v756
  %v3011 = vunpack.c.l.b16 %v757
  %v3012 = vunpack.c.h.b16 %v757
  %v3013 = vunpack.c.l.b16 %v758
  %v3014 = vunpack.c.h.b16 %v758
  %v3015 = vunpack.c.l.b16 %v759
  %v3016 = vunpack.c.h.b16 %v759
  %v3017 = vunpack.c.l.b16 %v760
  %v3018 = vunpack.c.h.b16 %v760
  %v3019 = vunpack.c.l.b16 %v761
  %v3020 = vunpack.c.h.b16 %v761
  %v3021 = vunpack.c.l.b16 %v762
  %v3022 = vunpack.c.h.b16 %v762
  %v3023 = vunpack.c.l.b16 %v763
  %v3024 = vunpack.c.h.b16 %v763
  %v3025 = vunpack.c.l.b16 %v764
  %v3026 = vunpack.c.h.b16 %v764
  %v3027 = vunpack.c.l.b16 %v765
  %v3028 = vunpack.c.h.b16 %v765
  %v3029 = vunpack.c.l.b16 %v766
  %v3030 = vunpack.c.h.b16 %v766
  %v3031 = vunpack.c.l.b16 %v767
  %v3032 = vunpack.c.h.b16 %v767
  %v3033 = vunpack.c.l.b16 %v768
  %v3034 = vunpack.c.h.b16 %v768
  %v3035 = vunpack.c.l.b16 %v769
  %v3036 = vunpack.c.h.b16 %v769
  %v3037 = vunpack.c.l.b16 %v770
  %v3038 = vunpack.c.h.b16 %v770
  %v3039 = vunpack.c.l.b16 %v771
  %v3040 = vunpack.c.h.b16 %v771
  %v3041 = vunpack.c.l.b16 %v772
  %v3042 = vunpack.c.h.b16 %v772
  %v3043 = vunpack.c.l.b16 %v773
  %v3044 = vunpack.c.h.b16 %v773
  %v3045 = vunpack.c.l.b16 %v774
  %v3046 = vunpack.c.h.b16 %v774
  %v3047 = vunpack.c.l.b16 %v775
  %v3048 = vunpack.c.h.b16 %v775
  %v3049 = vunpack.c.l.b16 %v776
  %v3050 = vunpack.c.h.b16 %v776
  %v3051 = vunpack.c.l.b16 %v777
  %v3052 = vunpack.c.h.b16 %v777
  %v3053 = vunpack.c.l.b16 %v778
  %v3054 = vunpack.c.h.b16 %v778
  %v3055 = vunpack.c.l.b16 %v779
  %v3056 = vunpack.c.h.b16 %v779
  %v3057 = vunpack.c.l.b16 %v780
  %v3058 = vunpack.c.h.b16 %v780
  %v3059 = vunpack.c.l.b16 %v781
  %v3060 = vunpack.c.h.b16 %v781
  %v3061 = vunpack.c.l.b16 %v782
  %v3062 = vunpack.c.h.b16 %v782
  %v3063 = vunpack.c.l.b16 %v783
  %v3064 = vunpack.c.h.b16 %v783
  %v3065 = vunpack.c.l.b16 %v784
  %v3066 = vunpack.c.h.b16 %v784
  %v3067 = vunpack.c.l.b16 %v785
  %v3068 = vunpack.c.h.b16 %v785
  %v3069 = vunpack.c.l.b16 %v786
  %v3070 = vunpack.c.h.b16 %v786
  %v3071 = vunpack.c.l.b16 %v787
  %v3072 = vunpack.c.h.b16 %v787
  %v3073 = vunpack.c.l.b16 %v788
  %v3074 = vunpack.c.h.b16 %v788
  %v3075 = vunpack.c.l.b16 %v789
  %v3076 = vunpack.c.h.b16 %v789
  %v3077 = vunpack.c.l.b16 %v790
  %v3078 = vunpack.c.h.b16 %v790
  %v3079 = vunpack.c.l.b16 %v791
  %v3080 = vunpack.c.h.b16 %v791
  %v3081 = vunpack.c.l.b16 %v792
  %v3082 = vunpack.c.h.b16 %v792
  %v3083 = vunpack.c.l.b16 %v793
  %v3084 = vunpack.c.h.b16 %v793
  %v3085 = vunpack.c.l.b16 %v794
  %v3086 = vunpack.c.h.b16 %v794
  %v3087 = vunpack.c.l.b16 %v795
  %v3088 = vunpack.c.h.b16 %v795
  %v3089 = vunpack.c.l.b16 %v796
  %v3090 = vunpack.c.h.b16 %v796
  %v3091 = vunpack.c.l.b16 %v797
  %v3092 = vunpack.c.h.b16 %v797
  %v3093 = vunpack.c.l.b16 %v798
  %v3094 = vunpack.c.h.b16 %v798
  %v3095 = vunpack.c.l.b16 %v799
  %v3096 = vunpack.c.h.b16 %v799
  %v3097 = vunpack.c.l.b16 %v800
  %v3098 = vunpack.c.h.b16 %v800
  %v3099 = vunpack.c.l.b16 %v801
  %v3100 = vunpack.c.h.b16 %v801
  %v3101 = vunpack.c.l.b16 %v802
  %v3102 = vunpack.c.h.b16 %v802
  %v3103 = vunpack.c.l.b16 %v803
  %v3104 = vunpack.c.h.b16 %v803
  %v3105 = vunpack.c.l.b16 %v804
  %v3106 = vunpack.c.h.b16 %v804
  %v3107 = vunpack.c.l.b16 %v805
  %v3108 = vunpack.c.h.b16 %v805
  %v3109 = vunpack.c.l.b16 %v806
  %v3110 = vunpack.c.h.b16 %v806
  %v3111 = vunpack.c.l.b16 %v807
  %v3112 = vunpack.c.h.b16 %v807
  %v3113 = vunpack.c.l.b16 %v808
  %v3114 = vunpack.c.h.b16 %v808
  %v3115 = vunpack.c.l.b16 %v809
  %v3116 = vunpack.c.h.b16 %v809
  %v3117 = vunpack.c.l.b16 %v810
  %v3118 = vunpack.c.h.b16 %v810
  %v3119 = vunpack.c.l.b16 %v811
  %v3120 = vunpack.c.h.b16 %v811
  %v3121 = vunpack.c.l.b16 %v812
  %v3122 = vunpack.c.h.b16 %v812
  %v3123 = vunpack.c.l.b16 %v813
  %v3124 = vunpack.c.h.b16 %v813
  %v3125 = vunpack.c.l.b16 %v814
  %v3126 = vunpack.c.h.b16 %v814
  %v3127 = vunpack.c.l.b16 %v815
  %v3128 = vunpack.c.h.b16 %v815
  %v3129 = vunpack.c.l.b16 %v816
  %v3130 = vunpack.c.h.b16 %v816
  %v3131 = vunpack.c.l.b16 %v817
  %v3132 = vunpack.c.h.b16 %v817
  %v3133 = vunpack.c.l.b16 %v818
  %v3134 = vunpack.c.h.b16 %v818
  %v3135 = vunpack.c.l.b16 %v819
  %v3136 = vunpack.c.h.b16 %v819
  %v3137 = vunpack.c.l.b16 %v820
  %v3138 = vunpack.c.h.b16 %v820
  %v3139 = vunpack.c.l.b16 %v821
  %v3140 = vunpack.c.h.b16 %v821
  %v3141 = vunpack.c.l.b16 %v822
  %v3142 = vunpack.c.h.b16 %v822
  %v3143 = vunpack.c.l.b16 %v823
  %v3144 = vunpack.c.h.b16 %v823
  %v3145 = vunpack.c.l.b16 %v824
  %v3146 = vunpack.c.h.b16 %v824
  %v3147 = vunpack.c.l.b16 %v825
  %v3148 = vunpack.c.h.b16 %v825
  %v3149 = vunpack.c.l.b16 %v826
  %v3150 = vunpack.c.h.b16 %v826
  %v3151 = vunpack.c.l.b16 %v827
  %v3152 = vunpack.c.h.b16 %v827
  %v3153 = vunpack.c.l.b16 %v828
  %v3154 = vunpack.c.h.b16 %v828
  %v3155 = vunpack.c.l.b16 %v829
  %v3156 = vunpack.c.h.b16 %v829
  %v3157 = vunpack.c.l.b16 %v830
  %v3158 = vunpack.c.h.b16 %v830
  %v3159 = vunpack.c.l.b16 %v831
  %v3160 = vunpack.c.h.b16 %v831
  %v3161 = vunpack.c.l.b16 %v832
  %v3162 = vunpack.c.h.b16 %v832
  %v3163 = vunpack.c.l.b16 %v833
  %v3164 = vunpack.c.h.b16 %v833
  %v3165 = vunpack.c.l.b16 %v834
  %v3166 = vunpack.c.h.b16 %v834
  %v3167 = vunpack.c.l.b16 %v835
  %v3168 = vunpack.c.h.b16 %v835
  %v3169 = vunpack.c.l.b16 %v836
  %v3170 = vunpack.c.h.b16 %v836
  %v3171 = vunpack.c.l.b16 %v837
  %v3172 = vunpack.c.h.b16 %v837
  %v3173 = vunpack.c.l.b16 %v838
  %v3174 = vunpack.c.h.b16 %v838
  %v3175 = vunpack.c.l.b16 %v839
  %v3176 = vunpack.c.h.b16 %v839
  %v3177 = vunpack.c.l.b16 %v840
  %v3178 = vunpack.c.h.b16 %v840
  %v3179 = vunpack.c.l.b16 %v841
  %v3180 = vunpack.c.h.b16 %v841
  %v3181 = vunpack.c.l.b16 %v842
  %v3182 = vunpack.c.h.b16 %v842
  %v3183 = vunpack.c.l.b16 %v843
  %v3184 = vunpack.c.h.b16 %v843
  %v3185 = vunpack.c.l.b16 %v844
  %v3186 = vunpack.c.h.b16 %v844
  %v3187 = vunpack.c.l.b16 %v845
  %v3188 = vunpack.c.h.b16 %v845
  %v3189 = vunpack.c.l.b16 %v846
  %v3190 = vunpack.c.h.b16 %v846
  %v3191 = vunpack.c.l.b16 %v847
  %v3192 = vunpack.c.h.b16 %v847
  %v3193 = vunpack.c.l.b16 %v848
  %v3194 = vunpack.c.h.b16 %v848
  %v3195 = vunpack.c.l.b16 %v849
  %v3196 = vunpack.c.h.b16 %v849
  %v3197 = vunpack.c.l.b16 %v850
  %v3198 = vunpack.c.h.b16 %v850
  %v3199 = vunpack.c.l.b16 %v851
  %v3200 = vunpack.c.h.b16 %v851
  %v3201 = vunpack.c.l.b16 %v852
  %v3202 = vunpack.c.h.b16 %v852
  %v3203 = vunpack.c.l.b16 %v853
  %v3204 = vunpack.c.h.b16 %v853
  %v3205 = vunpack.c.l.b16 %v854
  %v3206 = vunpack.c.h.b16 %v854
  %v3207 = vunpack.c.l.b16 %v855
  %v3208 = vunpack.c.h.b16 %v855
  %v3209 = vunpack.c.l.b16 %v856
  %v3210 = vunpack.c.h.b16 %v856
  %v3211 = vunpack.c.l.b16 %v857
  %v3212 = vunpack.c.h.b16 %v857
  %v3213 = vunpack.c.l.b16 %v858
  %v3214 = vunpack.c.h.b16 %v858
  %v3215 = vunpack.c.l.b16 %v859
  %v3216 = vunpack.c.h.b16 %v859
  %v3217 = vunpack.c.l.b16 %v860
  %v3218 = vunpack.c.h.b16 %v860
  %v3219 = vunpack.c.l.b16 %v861
  %v3220 = vunpack.c.h.b16 %v861
  %v3221 = vunpack.c.l.b16 %v862
  %v3222 = vunpack.c.h.b16 %v862
  %v3223 = vunpack.c.l.b16 %v863
  %v3224 = vunpack.c.h.b16 %v863
  %v3225 = vunpack.c.l.b16 %v864
  %v3226 = vunpack.c.h.b16 %v864
  %v3227 = vunpack.c.l.b16 %v865
  %v3228 = vunpack.c.h.b16 %v865
  %v3229 = vunpack.c.l.b16 %v866
  %v3230 = vunpack.c.h.b16 %v866
  %v3231 = vunpack.c.l.b16 %v867
  %v3232 = vunpack.c.h.b16 %v867
  %v3233 = vunpack.c.l.b16 %v868
  %v3234 = vunpack.c.h.b16 %v868
  %v3235 = vunpack.c.l.b16 %v869
  %v3236 = vunpack.c.h.b16 %v869
  %v3237 = vunpack.c.l.b16 %v870
  %v3238 = vunpack.c.h.b16 %v870
  %v3239 = vunpack.c.l.b16 %v871
  %v3240 = vunpack.c.h.b16 %v871
  %v3241 = vunpack.c.l.b16 %v872
  %v3242 = vunpack.c.h.b16 %v872
  %v3243 = vunpack.c.l.b16 %v873
  %v3244 = vunpack.c.h.b16 %v873
  %v3245 = vunpack.c.l.b16 %v874
  %v3246 = vunpack.c.h.b16 %v874
  %v3247 = vunpack.c.l.b16 %v875
  %v3248 = vunpack.c.h.b16 %v875
  %v3249 = vunpack.c.l.b16 %v876
  %v3250 = vunpack.c.h.b16 %v876
  %v3251 = vunpack.c.l.b16 %v877
  %v3252 = vunpack.c.h.b16 %v877
  %v3253 = vunpack.c.l.b16 %v878
  %v3254 = vunpack.c.h.b16 %v878
  %v3255 = vunpack.c.l.b16 %v879
  %v3256 = vunpack.c.h.b16 %v879
  %v3257 = vunpack.c.l.b16 %v880
  %v3258 = vunpack.c.h.b16 %v880
  %v3259 = vunpack.c.l.b16 %v881
  %v3260 = vunpack.c.h.b16 %v881
  %v3261 = vunpack.c.l.b16 %v882
  %v3262 = vunpack.c.h.b16 %v882
  %v3263 = vunpack.c.l.b16 %v883
  %v3264 = vunpack.c.h.b16 %v883
  %v3265 = vunpack.c.l.b16 %v884
  %v3266 = vunpack.c.h.b16 %v884
  %v3267 = vunpack.c.l.b16 %v885
  %v3268 = vunpack.c.h.b16 %v885
  %v3269 = vunpack.c.l.b16 %v886
  %v3270 = vunpack.c.h.b16 %v886
  %v3271 = vunpack.c.l.b16 %v887
  %v3272 = vunpack.c.h.b16 %v887
  %v3273 = vunpack.c.l.b16 %v888
  %v3274 = vunpack.c.h.b16 %v888
  %v3275 = vunpack.c.l.b16 %v889
  %v3276 = vunpack.c.h.b16 %v889
  %v3277 = vunpack.c.l.b16 %v890
  %v3278 = vunpack.c.h.b16 %v890
  %v3279 = vunpack.c.l.b16 %v891
  %v3280 = vunpack.c.h.b16 %v891
  %v3281 = vunpack.c.l.b16 %v892
  %v3282 = vunpack.c.h.b16 %v892
  %v3283 = vunpack.c.l.b16 %v893
  %v3284 = vunpack.c.h.b16 %v893
  %v3285 = vunpack.c.l.b16 %v894
  %v3286 = vunpack.c.h.b16 %v894
  %v3287 = vunpack.c.l.b16 %v895
  %v3288 = vunpack.c.h.b16 %v895
  %v3289 = vunpack.c.l.b16 %v896
  %v3290 = vunpack.c.h.b16 %v896
  %v3291 = vunpack.c.l.b16 %v897
  %v3292 = vunpack.c.h.b16 %v897
  %v3293 = vunpack.c.l.b16 %v898
  %v3294 = vunpack.c.h.b16 %v898
  %v3295 = vunpack.c.l.b16 %v899
  %v3296 = vunpack.c.h.b16 %v899
  %v3297 = vunpack.c.l.b16 %v900
  %v3298 = vunpack.c.h.b16 %v900
  %v3299 = vunpack.c.l.b16 %v901
  %v3300 = vunpack.c.h.b16 %v901
  %v3301 = vunpack.c.l.b16 %v902
  %v3302 = vunpack.c.h.b16 %v902
  %v3303 = vunpack.c.l.b16 %v903
  %v3304 = vunpack.c.h.b16 %v903
  %v3305 = vunpack.c.l.b16 %v904
  %v3306 = vunpack.c.h.b16 %v904
  %v3307 = vunpack.c.l.b16 %v905
  %v3308 = vunpack.c.h.b16 %v905
  %v3309 = vunpack.c.l.b16 %v906
  %v3310 = vunpack.c.h.b16 %v906
  %v3311 = vunpack.c.l.b16 %v907
  %v3312 = vunpack.c.h.b16 %v907
  %v3313 = vunpack.c.l.b16 %v908
  %v3314 = vunpack.c.h.b16 %v908
  %v3315 = vunpack.c.l.b16 %v909
  %v3316 = vunpack.c.h.b16 %v909
  %v3317 = vunpack.c.l.b16 %v910
  %v3318 = vunpack.c.h.b16 %v910
  %v3319 = vunpack.c.l.b16 %v911
  %v3320 = vunpack.c.h.b16 %v911
  %v3321 = vunpack.c.l.b16 %v912
  %v3322 = vunpack.c.h.b16 %v912
  %v3323 = vunpack.c.l.b16 %v913
  %v3324 = vunpack.c.h.b16 %v913
  %v3325 = vunpack.c.l.b16 %v914
  %v3326 = vunpack.c.h.b16 %v914
  %v3327 = vunpack.c.l.b16 %v915
  %v3328 = vunpack.c.h.b16 %v915
  %v3329 = vunpack.c.l.b16 %v916
  %v3330 = vunpack.c.h.b16 %v916
  %v3331 = vunpack.c.l.b16 %v917
  %v3332 = vunpack.c.h.b16 %v917
  %v3333 = vunpack.c.l.b16 %v918
  %v3334 = vunpack.c.h.b16 %v918
  %v3335 = vunpack.c.l.b16 %v919
  %v3336 = vunpack.c.h.b16 %v919
  %v3337 = vunpack.c.l.b16 %v920
  %v3338 = vunpack.c.h.b16 %v920
  %v3339 = vunpack.c.l.b16 %v921
  %v3340 = vunpack.c.h.b16 %v921
  %v3341 = vunpack.c.l.b16 %v922
  %v3342 = vunpack.c.h.b16 %v922
  %v3343 = vunpack.c.l.b16 %v923
  %v3344 = vunpack.c.h.b16 %v923
  %v3345 = vunpack.c.l.b16 %v924
  %v3346 = vunpack.c.h.b16 %v924
  %v3347 = vunpack.c.l.b16 %v925
  %v3348 = vunpack.c.h.b16 %v925
  %v3349 = vunpack.c.l.b16 %v926
  %v3350 = vunpack.c.h.b16 %v926
  %v3351 = vunpack.c.l.b16 %v927
  %v3352 = vunpack.c.h.b16 %v927
  %v3353 = vunpack.c.l.b16 %v928
  %v3354 = vunpack.c.h.b16 %v928
  %v3355 = vunpack.c.l.b16 %v929
  %v3356 = vunpack.c.h.b16 %v929
  %v3357 = vunpack.c.l.b16 %v930
  %v3358 = vunpack.c.h.b16 %v930
  %v3359 = vunpack.c.l.b16 %v931
  %v3360 = vunpack.c.h.b16 %v931
  %v3361 = vunpack.c.l.b16 %v932
  %v3362 = vunpack.c.h.b16 %v932
  %v3363 = vunpack.c.l.b16 %v933
  %v3364 = vunpack.c.h.b16 %v933
  %v3365 = vunpack.c.l.b16 %v934
  %v3366 = vunpack.c.h.b16 %v934
  %v3367 = vunpack.c.l.b16 %v935
  %v3368 = vunpack.c.h.b16 %v935
  %v3369 = vunpack.c.l.b16 %v936
  %v3370 = vunpack.c.h.b16 %v936
  %v3371 = vunpack.c.l.b16 %v937
  %v3372 = vunpack.c.h.b16 %v937
  %v3373 = vunpack.c.l.b16 %v938
  %v3374 = vunpack.c.h.b16 %v938
  %v3375 = vunpack.c.l.b16 %v939
  %v3376 = vunpack.c.h.b16 %v939
  %v3377 = vunpack.c.l.b16 %v940
  %v3378 = vunpack.c.h.b16 %v940
  %v3379 = vunpack.c.l.b16 %v941
  %v3380 = vunpack.c.h.b16 %v941
  %v3381 = vunpack.c.l.b16 %v942
  %v3382 = vunpack.c.h.b16 %v942
  %v3383 = vunpack.c.l.b16 %v943
  %v3384 = vunpack.c.h.b16 %v943
  %v3385 = vunpack.c.l.b16 %v944
  %v3386 = vunpack.c.h.b16 %v944
  %v3387 = vunpack.c.l.b16 %v945
  %v3388 = vunpack.c.h.b16 %v945
  %v3389 = vunpack.c.l.b16 %v946
  %v3390 = vunpack.c.h.b16 %v946
  %v3391 = vunpack.c.l.b16 %v947
  %v3392 = vunpack.c.h.b16 %v947
  %v3393 = vunpack.c.l.b16 %v948
  %v3394 = vunpack.c.h.b16 %v948
  %v3395 = vunpack.c.l.b16 %v949
  %v3396 = vunpack.c.h.b16 %v949
  %v3397 = vunpack.c.l.b16 %v950
  %v3398 = vunpack.c.h.b16 %v950
  %v3399 = vunpack.c.l.b16 %v951
  %v3400 = vunpack.c.h.b16 %v951
  %v3401 = vunpack.c.l.b16 %v952
  %v3402 = vunpack.c.h.b16 %v952
  %v3403 = vunpack.c.l.b16 %v953
  %v3404 = vunpack.c.h.b16 %v953
  %v3405 = vunpack.c.l.b16 %v954
  %v3406 = vunpack.c.h.b16 %v954
  %v3407 = vunpack.c.l.b16 %v955
  %v3408 = vunpack.c.h.b16 %v955
  %v3409 = vunpack.c.l.b16 %v956
  %v3410 = vunpack.c.h.b16 %v956
  %v3411 = vunpack.c.l.b16 %v957
  %v3412 = vunpack.c.h.b16 %v957
  %v3413 = vunpack.c.l.b16 %v958
  %v3414 = vunpack.c.h.b16 %v958
  %v3415 = vunpack.c.l.b16 %v959
  %v3416 = vunpack.c.h.b16 %v959
  %v3417 = vunpack.c.l.b16 %v960
  %v3418 = vunpack.c.h.b16 %v960
  %v3419 = vunpack.c.l.b16 %v961
  %v3420 = vunpack.c.h.b16 %v961
  %v3421 = vunpack.c.l.b16 %v962
  %v3422 = vunpack.c.h.b16 %v962
  %v3423 = vunpack.c.l.b16 %v963
  %v3424 = vunpack.c.h.b16 %v963
  %v3425 = vunpack.c.l.b16 %v964
  %v3426 = vunpack.c.h.b16 %v964
  %v3427 = vunpack.c.l.b16 %v965
  %v3428 = vunpack.c.h.b16 %v965
  %v3429 = vunpack.c.l.b16 %v966
  %v3430 = vunpack.c.h.b16 %v966
  %v3431 = vunpack.c.l.b16 %v967
  %v3432 = vunpack.c.h.b16 %v967
  %v3433 = vunpack.c.l.b16 %v968
  %v3434 = vunpack.c.h.b16 %v968
  %v3435 = vunpack.c.l.b16 %v969
  %v3436 = vunpack.c.h.b16 %v969
  %v3437 = vunpack.c.l.b16 %v970
  %v3438 = vunpack.c.h.b16 %v970
  %v3439 = vunpack.c.l.b16 %v971
  %v3440 = vunpack.c.h.b16 %v971
  %v3441 = vunpack.c.l.b16 %v972
  %v3442 = vunpack.c.h.b16 %v972
  %v3443 = vunpack.c.l.b16 %v973
  %v3444 = vunpack.c.h.b16 %v973
  %v3445 = vunpack.c.l.b16 %v974
  %v3446 = vunpack.c.h.b16 %v974
  %v3447 = vunpack.c.l.b16 %v975
  %v3448 = vunpack.c.h.b16 %v975
  %v3449 = vunpack.c.l.b16 %v976
  %v3450 = vunpack.c.h.b16 %v976
  %v3451 = vunpack.c.l.b16 %v977
  %v3452 = vunpack.c.h.b16 %v977
  %v3453 = vunpack.c.l.b16 %v978
  %v3454 = vunpack.c.h.b16 %v978
  %v3455 = vunpack.c.l.b16 %v979
  %v3456 = vunpack.c.h.b16 %v979
  %v3457 = vunpack.c.l.b16 %v980
  %v3458 = vunpack.c.h.b16 %v980
  %v3459 = vunpack.c.l.b16 %v981
  %v3460 = vunpack.c.h.b16 %v981
  %v3461 = vunpack.c.l.b16 %v982
  %v3462 = vunpack.c.h.b16 %v982
  %v3463 = vunpack.c.l.b16 %v983
  %v3464 = vunpack.c.h.b16 %v983
  %v3465 = vunpack.c.l.b16 %v984
  %v3466 = vunpack.c.h.b16 %v984
  %v3467 = vunpack.c.l.b16 %v985
  %v3468 = vunpack.c.h.b16 %v985
  %v3469 = vunpack.c.l.b16 %v986
  %v3470 = vunpack.c.h.b16 %v986
  %v3471 = vunpack.c.l.b16 %v987
  %v3472 = vunpack.c.h.b16 %v987
  %v3473 = vunpack.c.l.b16 %v988
  %v3474 = vunpack.c.h.b16 %v988
  %v3475 = vunpack.c.l.b16 %v989
  %v3476 = vunpack.c.h.b16 %v989
  %v3477 = vunpack.c.l.b16 %v990
  %v3478 = vunpack.c.h.b16 %v990
  %v3479 = vunpack.c.l.b16 %v991
  %v3480 = vunpack.c.h.b16 %v991
  %v3481 = vunpack.c.l.b16 %v992
  %v3482 = vunpack.c.h.b16 %v992
  %v3483 = vunpack.c.l.b16 %v993
  %v3484 = vunpack.c.h.b16 %v993
  %v3485 = vunpack.c.l.b16 %v994
  %v3486 = vunpack.c.h.b16 %v994
  %v3487 = vunpack.c.l.b16 %v995
  %v3488 = vunpack.c.h.b16 %v995
  %v3489 = vunpack.c.l.b16 %v996
  %v3490 = vunpack.c.h.b16 %v996
  %v3491 = vunpack.c.l.b16 %v997
  %v3492 = vunpack.c.h.b16 %v997
  %v3493 = vunpack.c.l.b16 %v998
  %v3494 = vunpack.c.h.b16 %v998
  %v3495 = vunpack.c.l.b16 %v999
  %v3496 = vunpack.c.h.b16 %v999
  %v3497 = vunpack.c.l.b16 %v1000
  %v3498 = vunpack.c.h.b16 %v1000
  %v3499 = vunpack.c.l.b16 %v1001
  %v3500 = vunpack.c.h.b16 %v1001
  %v3501 = vunpack.c.l.b16 %v1002
  %v3502 = vunpack.c.h.b16 %v1002
  %v3503 = vunpack.c.l.b16 %v1003
  %v3504 = vunpack.c.h.b16 %v1003
  %v3505 = vunpack.c.l.b16 %v1004
  %v3506 = vunpack.c.h.b16 %v1004
  %v3507 = vunpack.c.l.b16 %v1005
  %v3508 = vunpack.c.h.b16 %v1005
  %v3509 = vunpack.c.l.b16 %v1006
  %v3510 = vunpack.c.h.b16 %v1006
  %v3511 = vunpack.c.l.b16 %v1007
  %v3512 = vunpack.c.h.b16 %v1007
  %v3513 = vunpack.c.l.b16 %v1008
  %v3514 = vunpack.c.h.b16 %v1008
  %v3515 = vunpack.c.l.b16 %v1009
  %v3516 = vunpack.c.h.b16 %v1009
  %v3517 = vunpack.c.l.b16 %v1010
  %v3518 = vunpack.c.h.b16 %v1010
  %v3519 = vunpack.c.l.b16 %v1011
  %v3520 = vunpack.c.h.b16 %v1011
  %v3521 = vunpack.c.l.b16 %v1012
  %v3522 = vunpack.c.h.b16 %v1012
  %v3523 = vunpack.c.l.b16 %v1013
  %v3524 = vunpack.c.h.b16 %v1013
  %v3525 = vunpack.c.l.b16 %v1014
  %v3526 = vunpack.c.h.b16 %v1014
  %v3527 = vunpack.c.l.b16 %v1015
  %v3528 = vunpack.c.h.b16 %v1015
  %v3529 = vunpack.c.l.b16 %v1016
  %v3530 = vunpack.c.h.b16 %v1016
  %v3531 = vunpack.c.l.b16 %v1017
  %v3532 = vunpack.c.h.b16 %v1017
  %v3533 = vunpack.c.l.b16 %v1018
  %v3534 = vunpack.c.h.b16 %v1018
  %v3535 = vunpack.c.l.b16 %v1019
  %v3536 = vunpack.c.h.b16 %v1019
  %v3537 = vunpack.c.l.b16 %v1020
  %v3538 = vunpack.c.h.b16 %v1020
  %v3539 = vunpack.c.l.b16 %v1021
  %v3540 = vunpack.c.h.b16 %v1021
  %v3541 = vunpack.c.l.b16 %v1022
  %v3542 = vunpack.c.h.b16 %v1022
  %v3543 = vunpack.c.l.b16 %v1023
  %v3544 = vunpack.c.h.b16 %v1023
  %v3545 = vunpack.c.l.b16 %v1024
  %v3546 = vunpack.c.h.b16 %v1024
  %v3547 = vunpack.c.l.b16 %v1025
  %v3548 = vunpack.c.h.b16 %v1025
  %v3549 = vunpack.c.l.b16 %v1026
  %v3550 = vunpack.c.h.b16 %v1026
  %v3551 = vunpack.c.l.b16 %v1027
  %v3552 = vunpack.c.h.b16 %v1027
  %v3553 = vunpack.c.l.b16 %v1028
  %v3554 = vunpack.c.h.b16 %v1028
  %v3555 = vunpack.c.l.b16 %v1029
  %v3556 = vunpack.c.h.b16 %v1029
  %v3557 = vunpack.c.l.b16 %v1030
  %v3558 = vunpack.c.h.b16 %v1030
  %v3559 = vunpack.c.l.b16 %v1031
  %v3560 = vunpack.c.h.b16 %v1031
  %v3561 = vunpack.c.l.b16 %v1032
  %v3562 = vunpack.c.h.b16 %v1032
  %v3563 = vunpack.c.l.b16 %v1033
  %v3564 = vunpack.c.h.b16 %v1033
  %v3565 = vunpack.c.l.b16 %v1034
  %v3566 = vunpack.c.h.b16 %v1034
  %v3567 = vunpack.c.l.b16 %v1035
  %v3568 = vunpack.c.h.b16 %v1035
  %v3569 = vunpack.c.l.b16 %v1036
  %v3570 = vunpack.c.h.b16 %v1036
  %v3571 = vunpack.c.l.b16 %v1037
  %v3572 = vunpack.c.h.b16 %v1037
  %v3573 = vunpack.c.l.b16 %v1038
  %v3574 = vunpack.c.h.b16 %v1038
  %v3575 = vunpack.c.l.b16 %v1039
  %v3576 = vunpack.c.h.b16 %v1039
  %v3577 = vunpack.c.l.b16 %v1040
  %v3578 = vunpack.c.h.b16 %v1040
  %v3579 = vunpack.c.l.b16 %v1041
  %v3580 = vunpack.c.h.b16 %v1041
  %v3581 = vunpack.c.l.b16 %v1042
  %v3582 = vunpack.c.h.b16 %v1042
  %v3583 = vunpack.c.l.b16 %v1043
  %v3584 = vunpack.c.h.b16 %v1043
  %v3585 = vunpack.c.l.b16 %v1044
  %v3586 = vunpack.c.h.b16 %v1044
  %v3587 = vunpack.c.l.b16 %v1045
  %v3588 = vunpack.c.h.b16 %v1045
  %v3589 = vunpack.c.l.b16 %v1046
  %v3590 = vunpack.c.h.b16 %v1046
  %v3591 = vunpack.c.l.b16 %v1047
  %v3592 = vunpack.c.h.b16 %v1047
  %v3593 = vunpack.c.l.b16 %v1048
  %v3594 = vunpack.c.h.b16 %v1048
  %v3595 = vunpack.c.l.b16 %v1049
  %v3596 = vunpack.c.h.b16 %v1049
  %v3597 = vunpack.c.l.b16 %v1050
  %v3598 = vunpack.c.h.b16 %v1050
  %v3599 = vunpack.c.l.b16 %v1051
  %v3600 = vunpack.c.h.b16 %v1051
  %v3601 = vunpack.c.l.b16 %v1052
  %v3602 = vunpack.c.h.b16 %v1052
  %v3603 = vunpack.c.l.b16 %v1053
  %v3604 = vunpack.c.h.b16 %v1053
  %v3605 = vunpack.c.l.b16 %v1054
  %v3606 = vunpack.c.h.b16 %v1054
  %v3607 = vunpack.c.l.b16 %v1055
  %v3608 = vunpack.c.h.b16 %v1055
  %v3609 = vunpack.c.l.b16 %v1056
  %v3610 = vunpack.c.h.b16 %v1056
  %v3611 = vunpack.c.l.b16 %v1057
  %v3612 = vunpack.c.h.b16 %v1057
  %v3613 = vunpack.c.l.b16 %v1058
  %v3614 = vunpack.c.h.b16 %v1058
  %v3615 = vunpack.c.l.b16 %v1059
  %v3616 = vunpack.c.h.b16 %v1059
  %v3617 = vunpack.c.l.b16 %v1060
  %v3618 = vunpack.c.h.b16 %v1060
  %v3619 = vunpack.c.l.b16 %v1061
  %v3620 = vunpack.c.h.b16 %v1061
  %v3621 = vunpack.c.l.b16 %v1062
  %v3622 = vunpack.c.h.b16 %v1062
  %v3623 = vunpack.c.l.b16 %v1063
  %v3624 = vunpack.c.h.b16 %v1063
  %v3625 = vunpack.c.l.b16 %v1064
  %v3626 = vunpack.c.h.b16 %v1064
  %v3627 = vunpack.c.l.b16 %v1065
  %v3628 = vunpack.c.h.b16 %v1065
  %v3629 = vunpack.c.l.b16 %v1066
  %v3630 = vunpack.c.h.b16 %v1066
  %v3631 = vunpack.c.l.b16 %v1067
  %v3632 = vunpack.c.h.b16 %v1067
  %v3633 = vunpack.c.l.b16 %v1068
  %v3634 = vunpack.c.h.b16 %v1068
  %v3635 = vunpack.c.l.b16 %v1069
  %v3636 = vunpack.c.h.b16 %v1069
  %v3637 = vunpack.c.l.b16 %v1070
  %v3638 = vunpack.c.h.b16 %v1070
  %v3639 = vunpack.c.l.b16 %v1071
  %v3640 = vunpack.c.h.b16 %v1071
  %v3641 = vunpack.c.l.b16 %v1072
  %v3642 = vunpack.c.h.b16 %v1072
  %v3643 = vunpack.c.l.b16 %v1073
  %v3644 = vunpack.c.h.b16 %v1073
  %v3645 = vunpack.c.l.b16 %v1074
  %v3646 = vunpack.c.h.b16 %v1074
  %v3647 = vunpack.c.l.b16 %v1075
  %v3648 = vunpack.c.h.b16 %v1075
  %v3649 = vunpack.c.l.b16 %v1076
  %v3650 = vunpack.c.h.b16 %v1076
  %v3651 = vunpack.c.l.b16 %v1077
  %v3652 = vunpack.c.h.b16 %v1077
  %v3653 = vunpack.c.l.b16 %v1078
  %v3654 = vunpack.c.h.b16 %v1078
  %v3655 = vunpack.c.l.b16 %v1079
  %v3656 = vunpack.c.h.b16 %v1079
  %v3657 = vunpack.c.l.b16 %v1080
  %v3658 = vunpack.c.h.b16 %v1080
  %v3659 = vunpack.c.l.b16 %v1081
  %v3660 = vunpack.c.h.b16 %v1081
  %v3661 = vunpack.c.l.b16 %v1082
  %v3662 = vunpack.c.h.b16 %v1082
  %v3663 = vunpack.c.l.b16 %v1083
  %v3664 = vunpack.c.h.b16 %v1083
  %v3665 = vunpack.c.l.b16 %v1084
  %v3666 = vunpack.c.h.b16 %v1084
  %v3667 = vunpack.c.l.b16 %v1085
  %v3668 = vunpack.c.h.b16 %v1085
  %v3669 = vunpack.c.l.b16 %v1086
  %v3670 = vunpack.c.h.b16 %v1086
  %v3671 = vunpack.c.l.b16 %v1087
  %v3672 = vunpack.c.h.b16 %v1087
  %v3673 = vunpack.c.l.b16 %v1088
  %v3674 = vunpack.c.h.b16 %v1088
  %v3675 = vunpack.c.l.b16 %v1089
  %v3676 = vunpack.c.h.b16 %v1089
  %v3677 = vunpack.c.l.b16 %v1090
  %v3678 = vunpack.c.h.b16 %v1090
  %v3679 = vunpack.c.l.b16 %v1091
  %v3680 = vunpack.c.h.b16 %v1091
  %v3681 = vunpack.c.l.b16 %v1092
  %v3682 = vunpack.c.h.b16 %v1092
  %v3683 = vunpack.c.l.b16 %v1093
  %v3684 = vunpack.c.h.b16 %v1093
  %v3685 = vunpack.c.l.b16 %v1094
  %v3686 = vunpack.c.h.b16 %v1094
  %v3687 = vunpack.c.l.b16 %v1095
  %v3688 = vunpack.c.h.b16 %v1095
  %v3689 = vunpack.c.l.b16 %v1096
  %v3690 = vunpack.c.h.b16 %v1096
  %v3691 = vunpack.c.l.b16 %v1097
  %v3692 = vunpack.c.h.b16 %v1097
  %v3693 = vunpack.c.l.b16 %v1098
  %v3694 = vunpack.c.h.b16 %v1098
  %v3695 = vunpack.c.l.b16 %v1099
  %v3696 = vunpack.c.h.b16 %v1099
  %v3697 = vunpack.c.l.b16 %v1100
  %v3698 = vunpack.c.h.b16 %v1100
  %v3699 = vunpack.c.l.b16 %v1101
  %v3700 = vunpack.c.h.b16 %v1101
  %v3701 = vunpack.c.l.b16 %v1102
  %v3702 = vunpack.c.h.b16 %v1102
  %v3703 = vunpack.c.l.b16 %v1103
  %v3704 = vunpack.c.h.b16 %v1103
  %v3705 = vunpack.c.l.b16 %v1104
  %v3706 = vunpack.c.h.b16 %v1104
  %v3707 = vunpack.c.l.b16 %v1105
  %v3708 = vunpack.c.h.b16 %v1105
  %v3709 = vunpack.c.l.b16 %v1106
  %v3710 = vunpack.c.h.b16 %v1106
  %v3711 = vunpack.c.l.b16 %v1107
  %v3712 = vunpack.c.h.b16 %v1107
  %v3713 = vunpack.c.l.b16 %v1108
  %v3714 = vunpack.c.h.b16 %v1108
  %v3715 = vunpack.c.l.b16 %v1109
  %v3716 = vunpack.c.h.b16 %v1109
  %v3717 = vunpack.c.l.b16 %v1110
  %v3718 = vunpack.c.h.b16 %v1110
  %v3719 = vunpack.c.l.b16 %v1111
  %v3720 = vunpack.c.h.b16 %v1111
  %v3721 = vunpack.c.l.b16 %v1112
  %v3722 = vunpack.c.h.b16 %v1112
  %v3723 = vunpack.c.l.b16 %v1113
  %v3724 = vunpack.c.h.b16 %v1113
  %v3725 = vunpack.c.l.b16 %v1114
  %v3726 = vunpack.c.h.b16 %v1114
  %v3727 = vunpack.c.l.b16 %v1115
  %v3728 = vunpack.c.h.b16 %v1115
  %v3729 = vunpack.c.l.b16 %v1116
  %v3730 = vunpack.c.h.b16 %v1116
  %v3731 = vunpack.c.l.b16 %v1117
  %v3732 = vunpack.c.h.b16 %v1117
  %v3733 = vunpack.c.l.b16 %v1118
  %v3734 = vunpack.c.h.b16 %v1118
  %v3735 = vunpack.c.l.b16 %v1119
  %v3736 = vunpack.c.h.b16 %v1119
  %v3737 = vunpack.c.l.b16 %v1120
  %v3738 = vunpack.c.h.b16 %v1120
  %v3739 = vunpack.c.l.b16 %v1121
  %v3740 = vunpack.c.h.b16 %v1121
  %v3741 = vunpack.c.l.b16 %v1122
  %v3742 = vunpack.c.h.b16 %v1122
  %v3743 = vunpack.c.l.b16 %v1123
  %v3744 = vunpack.c.h.b16 %v1123
  %v3745 = vunpack.c.l.b16 %v1124
  %v3746 = vunpack.c.h.b16 %v1124
  %v3747 = vunpack.c.l.b16 %v1125
  %v3748 = vunpack.c.h.b16 %v1125
  %v3749 = vunpack.c.l.b16 %v1126
  %v3750 = vunpack.c.h.b16 %v1126
  %v3751 = vunpack.c.l.b16 %v1127
  %v3752 = vunpack.c.h.b16 %v1127
  %v3753 = vunpack.c.l.b16 %v1128
  %v3754 = vunpack.c.h.b16 %v1128
  %v3755 = vunpack.c.l.b16 %v1129
  %v3756 = vunpack.c.h.b16 %v1129
  %v3757 = vunpack.c.l.b16 %v1130
  %v3758 = vunpack.c.h.b16 %v1130
  %v3759 = vunpack.c.l.b16 %v1131
  %v3760 = vunpack.c.h.b16 %v1131
  %v3761 = vunpack.c.l.b16 %v1132
  %v3762 = vunpack.c.h.b16 %v1132
  %v3763 = vunpack.c.l.b16 %v1133
  %v3764 = vunpack.c.h.b16 %v1133
  %v3765 = vunpack.c.l.b16 %v1134
  %v3766 = vunpack.c.h.b16 %v1134
  %v3767 = vunpack.c.l.b16 %v1135
  %v3768 = vunpack.c.h.b16 %v1135
  %v3769 = vunpack.c.l.b16 %v1136
  %v3770 = vunpack.c.h.b16 %v1136
  %v3771 = vunpack.c.l.b16 %v1137
  %v3772 = vunpack.c.h.b16 %v1137
  %v3773 = vunpack.c.l.b16 %v1138
  %v3774 = vunpack.c.h.b16 %v1138
  %v3775 = vunpack.c.l.b16 %v1139
  %v3776 = vunpack.c.h.b16 %v1139
  %v3777 = vunpack.c.l.b16 %v1140
  %v3778 = vunpack.c.h.b16 %v1140
  %v3779 = vunpack.c.l.b16 %v1141
  %v3780 = vunpack.c.h.b16 %v1141
  %v3781 = vunpack.c.l.b16 %v1142
  %v3782 = vunpack.c.h.b16 %v1142
  %v3783 = vunpack.c.l.b16 %v1143
  %v3784 = vunpack.c.h.b16 %v1143
  %v3785 = vunpack.c.l.b16 %v1144
  %v3786 = vunpack.c.h.b16 %v1144
  %v3787 = vunpack.c.l.b16 %v1145
  %v3788 = vunpack.c.h.b16 %v1145
  %v3789 = vunpack.c.l.b16 %v1146
  %v3790 = vunpack.c.h.b16 %v1146
  %v3791 = vunpack.c.l.b16 %v1147
  %v3792 = vunpack.c.h.b16 %v1147
  %v3793 = vunpack.c.l.b16 %v1148
  %v3794 = vunpack.c.h.b16 %v1148
  %v3795 = vunpack.c.l.b16 %v1149
  %v3796 = vunpack.c.h.b16 %v1149
  %v3797 = vunpack.c.l.b16 %v1150
  %v3798 = vunpack.c.h.b16 %v1150
  %v3799 = vunpack.c.l.b16 %v1151
  %v3800 = vunpack.c.h.b16 %v1151
  %v3801 = vunpack.c.l.b16 %v1152
  %v3802 = vunpack.c.h.b16 %v1152
  %v3803 = vunpack.c.l.b16 %v1153
  %v3804 = vunpack.c.h.b16 %v1153
  %v3805 = vunpack.c.l.b16 %v1154
  %v3806 = vunpack.c.h.b16 %v1154
  %v3807 = vunpack.c.l.b16 %v1155
  %v3808 = vunpack.c.h.b16 %v1155
  %v3809 = vunpack.c.l.b16 %v1156
  %v3810 = vunpack.c.h.b16 %v1156
  %v3811 = vunpack.c.l.b16 %v1157
  %v3812 = vunpack.c.h.b16 %v1157
  %v3813 = vunpack.c.l.b16 %v1158
  %v3814 = vunpack.c.h.b16 %v1158
  %v3815 = vunpack.c.l.b16 %v1159
  %v3816 = vunpack.c.h.b16 %v1159
  %v3817 = vunpack.c.l.b16 %v1160
  %v3818 = vunpack.c.h.b16 %v1160
  %v3819 = vunpack.c.l.b16 %v1161
  %v3820 = vunpack.c.h.b16 %v1161
  %v3821 = vunpack.c.l.b16 %v1162
  %v3822 = vunpack.c.h.b16 %v1162
  %v3823 = vunpack.c.l.b16 %v1163
  %v3824 = vunpack.c.h.b16 %v1163
  %v3825 = vunpack.c.l.b16 %v1164
  %v3826 = vunpack.c.h.b16 %v1164
  %v3827 = vunpack.c.l.b16 %v1165
  %v3828 = vunpack.c.h.b16 %v1165
  %v3829 = vunpack.c.l.b16 %v1166
  %v3830 = vunpack.c.h.b16 %v1166
  %v3831 = vunpack.c.l.b16 %v1167
  %v3832 = vunpack.c.h.b16 %v1167
  %v3833 = vunpack.c.l.b16 %v1168
  %v3834 = vunpack.c.h.b16 %v1168
  %v3835 = vunpack.c.l.b16 %v1169
  %v3836 = vunpack.c.h.b16 %v1169
  %v3837 = vunpack.c.l.b16 %v1170
  %v3838 = vunpack.c.h.b16 %v1170
  %v3839 = vunpack.c.l.b16 %v1171
  %v3840 = vunpack.c.h.b16 %v1171
  %v3841 = vunpack.c.l.b16 %v1172
  %v3842 = vunpack.c.h.b16 %v1172
  %v3843 = vunpack.c.l.b16 %v1173
  %v3844 = vunpack.c.h.b16 %v1173
  %v3845 = vunpack.c.l.b16 %v1174
  %v3846 = vunpack.c.h.b16 %v1174
  %v3847 = vunpack.c.l.b16 %v1175
  %v3848 = vunpack.c.h.b16 %v1175
  %v3849 = vunpack.c.l.b16 %v1176
  %v3850 = vunpack.c.h.b16 %v1176
  %v3851 = vunpack.c.l.b16 %v1177
  %v3852 = vunpack.c.h.b16 %v1177
  %v3853 = vunpack.c.l.b16 %v1178
  %v3854 = vunpack.c.h.b16 %v1178
  %v3855 = vunpack.c.l.b16 %v1179
  %v3856 = vunpack.c.h.b16 %v1179
  %v3857 = vunpack.c.l.b16 %v1180
  %v3858 = vunpack.c.h.b16 %v1180
  %v3859 = vunpack.c.l.b16 %v1181
  %v3860 = vunpack.c.h.b16 %v1181
  %v3861 = vunpack.c.l.b16 %v1182
  %v3862 = vunpack.c.h.b16 %v1182
  %v3863 = vunpack.c.l.b16 %v1183
  %v3864 = vunpack.c.h.b16 %v1183
  %v3865 = vunpack.c.l.b16 %v1184
  %v3866 = vunpack.c.h.b16 %v1184
  %v3867 = vunpack.c.l.b16 %v1185
  %v3868 = vunpack.c.h.b16 %v1185
  %v3869 = vunpack.c.l.b16 %v1186
  %v3870 = vunpack.c.h.b16 %v1186
  %v3871 = vunpack.c.l.b16 %v1187
  %v3872 = vunpack.c.h.b16 %v1187
  %v3873 = vunpack.c.l.b16 %v1188
  %v3874 = vunpack.c.h.b16 %v1188
  %v3875 = vunpack.c.l.b16 %v1189
  %v3876 = vunpack.c.h.b16 %v1189
  %v3877 = vunpack.c.l.b16 %v1190
  %v3878 = vunpack.c.h.b16 %v1190
  %v3879 = vunpack.c.l.b16 %v1191
  %v3880 = vunpack.c.h.b16 %v1191
  %v3881 = vunpack.c.l.b16 %v1192
  %v3882 = vunpack.c.h.b16 %v1192
  %v3883 = vunpack.c.l.b16 %v1193
  %v3884 = vunpack.c.h.b16 %v1193
  %v3885 = vunpack.c.l.b16 %v1194
  %v3886 = vunpack.c.h.b16 %v1194
  %v3887 = vunpack.c.l.b16 %v1195
  %v3888 = vunpack.c.h.b16 %v1195
  %v3889 = vunpack.c.l.b16 %v1196
  %v3890 = vunpack.c.h.b16 %v1196
  %v3891 = vunpack.c.l.b16 %v1197
  %v3892 = vunpack.c.h.b16 %v1197
  %v3893 = vunpack.c.l.b16 %v1198
  %v3894 = vunpack.c.h.b16 %v1198
  %v3895 = vunpack.c.l.b16 %v1199
  %v3896 = vunpack.c.h.b16 %v1199
  %v3897 = vunpack.c.l.b16 %v1200
  %v3898 = vunpack.c.h.b16 %v1200
  %v3899 = vunpack.c.l.b16 %v1201
  %v3900 = vunpack.c.h.b16 %v1201
  %v3901 = vunpack.c.l.b16 %v1202
  %v3902 = vunpack.c.h.b16 %v1202
  %v3903 = vunpack.c.l.b16 %v1203
  %v3904 = vunpack.c.h.b16 %v1203
  %v3905 = vunpack.c.l.b16 %v1204
  %v3906 = vunpack.c.h.b16 %v1204
  %v3907 = vunpack.c.l.b16 %v1205
  %v3908 = vunpack.c.h.b16 %v1205
  %v3909 = vunpack.c.l.b16 %v1206
  %v3910 = vunpack.c.h.b16 %v1206
  %v3911 = vunpack.c.l.b16 %v1207
  %v3912 = vunpack.c.h.b16 %v1207
  %v3913 = vunpack.c.l.b16 %v1208
  %v3914 = vunpack.c.h.b16 %v1208
  %v3915 = vunpack.c.l.b16 %v1209
  %v3916 = vunpack.c.h.b16 %v1209
  %v3917 = vunpack.c.l.b16 %v1210
  %v3918 = vunpack.c.h.b16 %v1210
  %v3919 = vunpack.c.l.b16 %v1211
  %v3920 = vunpack.c.h.b16 %v1211
  %v3921 = vunpack.c.l.b16 %v1212
  %v3922 = vunpack.c.h.b16 %v1212
  %v3923 = vunpack.c.l.b16 %v1213
  %v3924 = vunpack.c.h.b16 %v1213
  %v3925 = vunpack.c.l.b16 %v1214
  %v3926 = vunpack.c.h.b16 %v1214
  %v3927 = vunpack.c.l.b16 %v1215
  %v3928 = vunpack.c.h.b16 %v1215
  %v3929 = vunpack.c.l.b16 %v1216
  %v3930 = vunpack.c.h.b16 %v1216
  %v3931 = vunpack.c.l.b16 %v1217
  %v3932 = vunpack.c.h.b16 %v1217
  %v3933 = vunpack.c.l.b16 %v1218
  %v3934 = vunpack.c.h.b16 %v1218
  %v3935 = vunpack.c.l.b16 %v1219
  %v3936 = vunpack.c.h.b16 %v1219
  %v3937 = vunpack.c.l.b16 %v1220
  %v3938 = vunpack.c.h.b16 %v1220
  %v3939 = vunpack.c.l.b16 %v1221
  %v3940 = vunpack.c.h.b16 %v1221
  %v3941 = vunpack.c.l.b16 %v1222
  %v3942 = vunpack.c.h.b16 %v1222
  %v3943 = vunpack.c.l.b16 %v1223
  %v3944 = vunpack.c.h.b16 %v1223
  %v3945 = vunpack.c.l.b16 %v1224
  %v3946 = vunpack.c.h.b16 %v1224
  %v3947 = vunpack.c.l.b16 %v1225
  %v3948 = vunpack.c.h.b16 %v1225
  %v3949 = vunpack.c.l.b16 %v1226
  %v3950 = vunpack.c.h.b16 %v1226
  %v3951 = vunpack.c.l.b16 %v1227
  %v3952 = vunpack.c.h.b16 %v1227
  %v3953 = vunpack.c.l.b16 %v1228
  %v3954 = vunpack.c.h.b16 %v1228
  %v3955 = vunpack.c.l.b16 %v1229
  %v3956 = vunpack.c.h.b16 %v1229
  %v3957 = vunpack.c.l.b16 %v1230
  %v3958 = vunpack.c.h.b16 %v1230
  %v3959 = vunpack.c.l.b16 %v1231
  %v3960 = vunpack.c.h.b16 %v1231
  %v3961 = vunpack.c.l.b16 %v1232
  %v3962 = vunpack.c.h.b16 %v1232
  %v3963 = vunpack.c.l.b16 %v1233
  %v3964 = vunpack.c.h.b16 %v1233
  %v3965 = vunpack.c.l.b16 %v1234
  %v3966 = vunpack.c.h.b16 %v1234
  %v3967 = vunpack.c.l.b16 %v1235
  %v3968 = vunpack.c.h.b16 %v1235
  %v3969 = vunpack.c.l.b16 %v1236
  %v3970 = vunpack.c.h.b16 %v1236
  %v3971 = vunpack.c.l.b16 %v1237
  %v3972 = vunpack.c.h.b16 %v1237
  %v3973 = vunpack.c.l.b16 %v1238
  %v3974 = vunpack.c.h.b16 %v1238
  %v3975 = vunpack.c.l.b16 %v1239
  %v3976 = vunpack.c.h.b16 %v1239
  %v3977 = vunpack.c.l.b16 %v1240
  %v3978 = vunpack.c.h.b16 %v1240
  %v3979 = vunpack.c.l.b16 %v1241
  %v3980 = vunpack.c.h.b16 %v1241
  %v3981 = vunpack.c.l.b16 %v1242
  %v3982 = vunpack.c.h.b16 %v1242
  %v3983 = vunpack.c.l.b16 %v1243
  %v3984 = vunpack.c.h.b16 %v1243
  %v3985 = vunpack.c.l.b16 %v1244
  %v3986 = vunpack.c.h.b16 %v1244
  %v3987 = vunpack.c.l.b16 %v1245
  %v3988 = vunpack.c.h.b16 %v1245
  %v3989 = vunpack.c.l.b16 %v1246
  %v3990 = vunpack.c.h.b16 %v1246
  %v3991 = vunpack.c.l.b16 %v1247
  %v3992 = vunpack.c.h.b16 %v1247
  %v3993 = vunpack.c.l.b16 %v1248
  %v3994 = vunpack.c.h.b16 %v1248
  %v3995 = vunpack.c.l.b16 %v1249
  %v3996 = vunpack.c.h.b16 %v1249
  %v3997 = vunpack.c.l.b16 %v1250
  %v3998 = vunpack.c.h.b16 %v1250
  %v3999 = vunpack.c.l.b16 %v1251
  %v4000 = vunpack.c.h.b16 %v1251
  %v4001 = vunpack.c.l.b16 %v1252
  %v4002 = vunpack.c.h.b16 %v1252
  %v4003 = vunpack.c.l.b16 %v1253
  %v4004 = vunpack.c.h.b16 %v1253
  %v4005 = vunpack.c.l.b16 %v1254
  %v4006 = vunpack.c.h.b16 %v1254
  %v4007 = vunpack.c.l.b16 %v1255
  %v4008 = vunpack.c.h.b16 %v1255
  %v4009 = vunpack.c.l.b16 %v1256
  %v4010 = vunpack.c.h.b16 %v1256
  %v4011 = vunpack.c.l.b16 %v1257
  %v4012 = vunpack.c.h.b16 %v1257
  %v4013 = vunpack.c.l.b16 %v1258
  %v4014 = vunpack.c.h.b16 %v1258
  %v4015 = vunpack.c.l.b16 %v1259
  %v4016 = vunpack.c.h.b16 %v1259
  %v4017 = vunpack.c.l.b16 %v1260
  %v4018 = vunpack.c.h.b16 %v1260
  %v4019 = vunpack.c.l.b16 %v1261
  %v4020 = vunpack.c.h.b16 %v1261
  %v4021 = vunpack.c.l.b16 %v1262
  %v4022 = vunpack.c.h.b16 %v1262
  %v4023 = vunpack.c.l.b16 %v1263
  %v4024 = vunpack.c.h.b16 %v1263
  %v4025 = vunpack.c.l.b16 %v1264
  %v4026 = vunpack.c.h.b16 %v1264
  %v4027 = vunpack.c.l.b16 %v1265
  %v4028 = vunpack.c.h.b16 %v1265
  %v4029 = vunpack.c.l.b16 %v1266
  %v4030 = vunpack.c.h.b16 %v1266
  %v4031 = vunpack.c.l.b16 %v1267
  %v4032 = vunpack.c.h.b16 %v1267
  %v4033 = vunpack.c.l.b16 %v1268
  %v4034 = vunpack.c.h.b16 %v1268
  %v4035 = vunpack.c.l.b16 %v1269
  %v4036 = vunpack.c.h.b16 %v1269
  %v4037 = vunpack.c.l.b16 %v1270
  %v4038 = vunpack.c.h.b16 %v1270
  %v4039 = vunpack.c.l.b16 %v1271
  %v4040 = vunpack.c.h.b16 %v1271
  %v4041 = vunpack.c.l.b16 %v1272
  %v4042 = vunpack.c.h.b16 %v1272
  %v4043 = vunpack.c.l.b16 %v1273
  %v4044 = vunpack.c.h.b16 %v1273
  %v4045 = vunpack.c.l.b16 %v1274
  %v4046 = vunpack.c.h.b16 %v1274
  %v4047 = vunpack.c.l.b16 %v1275
  %v4048 = vunpack.c.h.b16 %v1275
  %v4049 = vunpack.c.l.b16 %v1276
  %v4050 = vunpack.c.h.b16 %v1276
  %v4051 = vunpack.c.l.b16 %v1277
  %v4052 = vunpack.c.h.b16 %v1277
  %v4053 = vunpack.c.l.b16 %v1278
  %v4054 = vunpack.c.h.b16 %v1278
  %v4055 = vunpack.c.l.b16 %v1279
  %v4056 = vunpack.c.h.b16 %v1279
  %v4057 = vunpack.c.l.b16 %v1280
  %v4058 = vunpack.c.h.b16 %v1280
  %v4059 = vunpack.c.l.b16 %v1281
  %v4060 = vunpack.c.h.b16 %v1281
  %v4061 = vunpack.c.l.b16 %v1282
  %v4062 = vunpack.c.h.b16 %v1282
  %v4063 = vunpack.c.l.b16 %v1283
  %v4064 = vunpack.c.h.b16 %v1283
  %v4065 = vunpack.c.l.b16 %v1284
  %v4066 = vunpack.c.h.b16 %v1284
  %v4067 = vunpack.c.l.b16 %v1285
  %v4068 = vunpack.c.h.b16 %v1285
  %v4069 = vunpack.c.l.b16 %v1286
  %v4070 = vunpack.c.h.b16 %v1286
  %v4071 = vunpack.c.l.b16 %v1287
  %v4072 = vunpack.c.h.b16 %v1287
  %v4073 = vunpack.c.l.b16 %v1288
  %v4074 = vunpack.c.h.b16 %v1288
  %v4075 = vunpack.c.l.b16 %v1289
  %v4076 = vunpack.c.h.b16 %v1289
  %v4077 = vunpack.c.l.b16 %v1290
  %v4078 = vunpack.c.h.b16 %v1290
  %v4079 = vunpack.c.l.b16 %v1291
  %v4080 = vunpack.c.h.b16 %v1291
  %v4081 = vunpack.c.l.b16 %v1292
  %v4082 = vunpack.c.h.b16 %v1292
  %v4083 = vunpack.c.l.b16 %v1293
  %v4084 = vunpack.c.h.b16 %v1293
  %v4085 = vunpack.c.l.b16 %v1294
  %v4086 = vunpack.c.h.b16 %v1294
  %v4087 = vunpack.c.l.b16 %v1295
  %v4088 = vunpack.c.h.b16 %v1295
  %v4089 = vunpack.c.l.b16 %v1296
  %v4090 = vunpack.c.h.b16 %v1296
  %v4091 = vunpack.c.l.b16 %v1297
  %v4092 = vunpack.c.h.b16 %v1297
  %v4093 = vunpack.c.l.b16 %v1298
  %v4094 = vunpack.c.h.b16 %v1298
  %v4095 = vunpack.c.l.b16 %v1299
  %v4096 = vunpack.c.h.b16 %v1299
  %v4097 = vunpack.c.l.b16 %v1300
  %v4098 = vunpack.c.h.b16 %v1300
  %v4099 = vunpack.c.l.b16 %v1301
  %v4100 = vunpack.c.h.b16 %v1301
  %v4101 = vunpack.c.l.b16 %v1302
  %v4102 = vunpack.c.h.b16 %v1302
  %v4103 = vunpack.c.l.b16 %v1303
  %v4104 = vunpack.c.h.b16 %v1303
  %v4105 = vunpack.c.l.b16 %v1304
  %v4106 = vunpack.c.h.b16 %v1304
  %v4107 = vunpack.c.l.b16 %v1305
  %v4108 = vunpack.c.h.b16 %v1305
  %v4109 = vunpack.c.l.b16 %v1306
  %v4110 = vunpack.c.h.b16 %v1306
  %v4111 = vunpack.c.l.b16 %v1307
  %v4112 = vunpack.c.h.b16 %v1307
  %v4113 = vunpack.c.l.b16 %v1308
  %v4114 = vunpack.c.h.b16 %v1308
  %v4115 = vunpack.c.l.b16 %v1309
  %v4116 = vunpack.c.h.b16 %v1309
  %v4117 = vunpack.c.l.b16 %v1310
  %v4118 = vunpack.c.h.b16 %v1310
  %v4119 = vunpack.c.l.b16 %v1311
  %v4120 = vunpack.c.h.b16 %v1311
  %v4121 = vunpack.c.l.b16 %v1312
  %v4122 = vunpack.c.h.b16 %v1312
  %v4123 = vunpack.c.l.b16 %v1313
  %v4124 = vunpack.c.h.b16 %v1313
  %v4125 = vunpack.c.l.b16 %v1314
  %v4126 = vunpack.c.h.b16 %v1314
  %v4127 = vunpack.c.l.b16 %v1315
  %v4128 = vunpack.c.h.b16 %v1315
  %v4129 = vunpack.c.l.b16 %v1316
  %v4130 = vunpack.c.h.b16 %v1316
  %v4131 = vunpack.c.l.b16 %v1317
  %v4132 = vunpack.c.h.b16 %v1317
  %v4133 = vunpack.c.l.b16 %v1318
  %v4134 = vunpack.c.h.b16 %v1318
  %v4135 = vunpack.c.l.b16 %v1319
  %v4136 = vunpack.c.h.b16 %v1319
  %v4137 = vunpack.c.l.b16 %v1320
  %v4138 = vunpack.c.h.b16 %v1320
  %v4139 = vunpack.c.l.b16 %v1321
  %v4140 = vunpack.c.h.b16 %v1321
  %v4141 = vunpack.c.l.b16 %v1322
  %v4142 = vunpack.c.h.b16 %v1322
  %v4143 = vunpack.c.l.b16 %v1323
  %v4144 = vunpack.c.h.b16 %v1323
  %v4145 = vunpack.c.l.b16 %v1324
  %v4146 = vunpack.c.h.b16 %v1324
  %v4147 = vunpack.c.l.b16 %v1325
  %v4148 = vunpack.c.h.b16 %v1325
  %v4149 = vunpack.c.l.b16 %v1326
  %v4150 = vunpack.c.h.b16 %v1326
  %v4151 = vunpack.c.l.b16 %v1327
  %v4152 = vunpack.c.h.b16 %v1327
  %v4153 = vunpack.c.l.b16 %v1328
  %v4154 = vunpack.c.h.b16 %v1328
  %v4155 = vunpack.c.l.b16 %v1329
  %v4156 = vunpack.c.h.b16 %v1329
  %v4157 = vunpack.c.l.b16 %v1330
  %v4158 = vunpack.c.h.b16 %v1330
  %v4159 = vunpack.c.l.b16 %v1331
  %v4160 = vunpack.c.h.b16 %v1331
  %v4161 = vunpack.c.l.b16 %v1332
  %v4162 = vunpack.c.h.b16 %v1332
  %v4163 = vunpack.c.l.b16 %v1333
  %v4164 = vunpack.c.h.b16 %v1333
  %v4165 = vunpack.c.l.b16 %v1334
  %v4166 = vunpack.c.h.b16 %v1334
  %v4167 = vunpack.c.l.b16 %v1335
  %v4168 = vunpack.c.h.b16 %v1335
  %v4169 = vunpack.c.l.b16 %v1336
  %v4170 = vunpack.c.h.b16 %v1336
  %v4171 = vunpack.c.l.b16 %v1337
  %v4172 = vunpack.c.h.b16 %v1337
  %v4173 = vunpack.c.l.b16 %v1338
  %v4174 = vunpack.c.h.b16 %v1338
  %v4175 = vunpack.c.l.b16 %v1339
  %v4176 = vunpack.c.h.b16 %v1339
  %v4177 = vunpack.c.l.b16 %v1340
  %v4178 = vunpack.c.h.b16 %v1340
  %v4179 = vunpack.c.l.b16 %v1341
  %v4180 = vunpack.c.h.b16 %v1341
  %v4181 = vunpack.c.l.b16 %v1342
  %v4182 = vunpack.c.h.b16 %v1342
  %v4183 = vunpack.c.l.b16 %v1343
  %v4184 = vunpack.c.h.b16 %v1343
  %v4185 = vunpack.c.l.b16 %v1344
  %v4186 = vunpack.c.h.b16 %v1344
  %v4187 = vunpack.c.l.b16 %v1345
  %v4188 = vunpack.c.h.b16 %v1345
  %v4189 = vunpack.c.l.b16 %v1346
  %v4190 = vunpack.c.h.b16 %v1346
  %v4191 = vunpack.c.l.b16 %v1347
  %v4192 = vunpack.c.h.b16 %v1347
  %v4193 = vunpack.c.l.b16 %v1348
  %v4194 = vunpack.c.h.b16 %v1348
  %v4195 = vunpack.c.l.b16 %v1349
  %v4196 = vunpack.c.h.b16 %v1349
  %v4197 = vunpack.c.l.b16 %v1350
  %v4198 = vunpack.c.h.b16 %v1350
  %v4199 = vunpack.c.l.b16 %v1351
  %v4200 = vunpack.c.h.b16 %v1351
  %v4201 = vunpack.c.l.b16 %v1352
  %v4202 = vunpack.c.h.b16 %v1352
  %v4203 = vunpack.c.l.b16 %v1353
  %v4204 = vunpack.c.h.b16 %v1353
  %v4205 = vunpack.c.l.b16 %v1354
  %v4206 = vunpack.c.h.b16 %v1354
  %v4207 = vunpack.c.l.b16 %v1355
  %v4208 = vunpack.c.h.b16 %v1355
  %v4209 = vunpack.c.l.b16 %v1356
  %v4210 = vunpack.c.h.b16 %v1356
  %v4211 = vunpack.c.l.b16 %v1357
  %v4212 = vunpack.c.h.b16 %v1357
  %v4213 = vunpack.c.l.b16 %v1358
  %v4214 = vunpack.c.h.b16 %v1358
  %v4215 = vunpack.c.l.b16 %v1359
  %v4216 = vunpack.c.h.b16 %v1359
  %v4217 = vunpack.c.l.b16 %v1360
  %v4218 = vunpack.c.h.b16 %v1360
  %v4219 = vunpack.c.l.b16 %v1361
  %v4220 = vunpack.c.h.b16 %v1361
  %v4221 = vunpack.c.l.b16 %v1362
  %v4222 = vunpack.c.h.b16 %v1362
  %v4223 = vunpack.c.l.b16 %v1363
  %v4224 = vunpack.c.h.b16 %v1363
  %v4225 = vunpack.c.l.b16 %v1364
  %v4226 = vunpack.c.h.b16 %v1364
  %v4227 = vunpack.c.l.b16 %v1365
  %v4228 = vunpack.c.h.b16 %v1365
  %v4229 = vunpack.c.l.b16 %v1366
  %v4230 = vunpack.c.h.b16 %v1366
  %v4231 = vunpack.c.l.b16 %v1367
  %v4232 = vunpack.c.h.b16 %v1367
  %v4233 = vunpack.c.l.b16 %v1368
  %v4234 = vunpack.c.h.b16 %v1368
  %v4235 = vunpack.c.l.b16 %v1369
  %v4236 = vunpack.c.h.b16 %v1369
  %v4237 = vunpack.c.l.b16 %v1370
  %v4238 = vunpack.c.h.b16 %v1370
  %v4239 = vunpack.c.l.b16 %v1371
  %v4240 = vunpack.c.h.b16 %v1371
  %v4241 = vunpack.c.l.b16 %v1372
  %v4242 = vunpack.c.h.b16 %v1372
  %v4243 = vunpack.c.l.b16 %v1373
  %v4244 = vunpack.c.h.b16 %v1373
  %v4245 = vunpack.c.l.b16 %v1374
  %v4246 = vunpack.c.h.b16 %v1374
  %v4247 = vunpack.c.l.b16 %v1375
  %v4248 = vunpack.c.h.b16 %v1375
  %v4249 = vunpack.c.l.b16 %v1376
  %v4250 = vunpack.c.h.b16 %v1376
  %v4251 = vunpack.c.l.b16 %v1377
  %v4252 = vunpack.c.h.b16 %v1377
  %v4253 = vunpack.c.l.b16 %v1378
  %v4254 = vunpack.c.h.b16 %v1378
  %v4255 = vunpack.c.l.b16 %v1379
  %v4256 = vunpack.c.h.b16 %v1379
  %v4257 = vunpack.c.l.b16 %v1380
  %v4258 = vunpack.c.h.b16 %v1380
  %v4259 = vunpack.c.l.b16 %v1381
  %v4260 = vunpack.c.h.b16 %v1381
  %v4261 = vunpack.c.l.b16 %v1382
  %v4262 = vunpack.c.h.b16 %v1382
  %v4263 = vunpack.c.l.b16 %v1383
  %v4264 = vunpack.c.h.b16 %v1383
  %v4265 = vunpack.c.l.b16 %v1384
  %v4266 = vunpack.c.h.b16 %v1384
  %v4267 = vunpack.c.l.b16 %v1385
  %v4268 = vunpack.c.h.b16 %v1385
  %v4269 = vunpack.c.l.b16 %v1386
  %v4270 = vunpack.c.h.b16 %v1386
  %v4271 = vunpack.c.l.b16 %v1387
  %v4272 = vunpack.c.h.b16 %v1387
  %v4273 = vunpack.c.l.b16 %v1388
  %v4274 = vunpack.c.h.b16 %v1388
  %v4275 = vunpack.c.l.b16 %v1389
  %v4276 = vunpack.c.h.b16 %v1389
  %v4277 = vunpack.c.l.b16 %v1390
  %v4278 = vunpack.c.h.b16 %v1390
  %v4279 = vunpack.c.l.b16 %v1391
  %v4280 = vunpack.c.h.b16 %v1391
  %v4281 = vunpack.c.l.b16 %v1392
  %v4282 = vunpack.c.h.b16 %v1392
  %v4283 = vunpack.c.l.b16 %v1393
  %v4284 = vunpack.c.h.b16 %v1393
  %v4285 = vunpack.c.l.b16 %v1394
  %v4286 = vunpack.c.h.b16 %v1394
  %v4287 = vunpack.c.l.b16 %v1395
  %v4288 = vunpack.c.h.b16 %v1395
  %v4289 = vunpack.c.l.b16 %v1396
  %v4290 = vunpack.c.h.b16 %v1396
  %v4291 = vunpack.c.l.b16 %v1397
  %v4292 = vunpack.c.h.b16 %v1397
  %v4293 = vunpack.c.l.b16 %v1398
  %v4294 = vunpack.c.h.b16 %v1398
  %v4295 = vunpack.c.l.b16 %v1399
  %v4296 = vunpack.c.h.b16 %v1399
  %v4297 = vunpack.c.l.b16 %v1400
  %v4298 = vunpack.c.h.b16 %v1400
  %v4299 = vunpack.c.l.b16 %v1401
  %v4300 = vunpack.c.h.b16 %v1401
  %v4301 = vunpack.c.l.b16 %v1402
  %v4302 = vunpack.c.h.b16 %v1402
  %v4303 = vunpack.c.l.b16 %v1403
  %v4304 = vunpack.c.h.b16 %v1403
  %v4305 = vunpack.c.l.b16 %v1404
  %v4306 = vunpack.c.h.b16 %v1404
  %v4307 = vunpack.c.l.b16 %v1405
  %v4308 = vunpack.c.h.b16 %v1405
  %v4309 = vunpack.c.l.b16 %v1406
  %v4310 = vunpack.c.h.b16 %v1406
  %v4311 = vunpack.c.l.b16 %v1407
  %v4312 = vunpack.c.h.b16 %v1407
  %v4313 = vunpack.c.l.b16 %v1408
  %v4314 = vunpack.c.h.b16 %v1408
  %v4315 = vunpack.c.l.b16 %v1409
  %v4316 = vunpack.c.h.b16 %v1409
  %v4317 = vunpack.c.l.b16 %v1410
  %v4318 = vunpack.c.h.b16 %v1410
  %v4319 = vunpack.c.l.b16 %v1411
  %v4320 = vunpack.c.h.b16 %v1411
  %v4321 = vunpack.c.l.b16 %v1412
  %v4322 = vunpack.c.h.b16 %v1412
  %v4323 = vunpack.c.l.b16 %v1413
  %v4324 = vunpack.c.h.b16 %v1413
  %v4325 = vunpack.c.l.b16 %v1414
  %v4326 = vunpack.c.h.b16 %v1414
  %v4327 = vunpack.c.l.b16 %v1415
  %v4328 = vunpack.c.h.b16 %v1415
  %v4329 = vunpack.c.l.b16 %v1416
  %v4330 = vunpack.c.h.b16 %v1416
  %v4331 = vunpack.c.l.b16 %v1417
  %v4332 = vunpack.c.h.b16 %v1417
  %v4333 = vunpack.c.l.b16 %v1418
  %v4334 = vunpack.c.h.b16 %v1418
  %v4335 = vunpack.c.l.b16 %v1419
  %v4336 = vunpack.c.h.b16 %v1419
  %v4337 = vunpack.c.l.b16 %v1420
  %v4338 = vunpack.c.h.b16 %v1420
  %v4339 = vunpack.c.l.b16 %v1421
  %v4340 = vunpack.c.h.b16 %v1421
  %v4341 = vunpack.c.l.b16 %v1422
  %v4342 = vunpack.c.h.b16 %v1422
  %v4343 = vunpack.c.l.b16 %v1423
  %v4344 = vunpack.c.h.b16 %v1423
  %v4345 = vunpack.c.l.b16 %v1424
  %v4346 = vunpack.c.h.b16 %v1424
  %v4347 = vunpack.c.l.b16 %v1425
  %v4348 = vunpack.c.h.b16 %v1425
  %v4349 = vunpack.c.l.b16 %v1426
  %v4350 = vunpack.c.h.b16 %v1426
  %v4351 = vunpack.c.l.b16 %v1427
  %v4352 = vunpack.c.h.b16 %v1427
  %v4353 = vunpack.c.l.b16 %v1428
  %v4354 = vunpack.c.h.b16 %v1428
  %v4355 = vunpack.c.l.b16 %v1429
  %v4356 = vunpack.c.h.b16 %v1429
  %v4357 = vunpack.c.l.b16 %v1430
  %v4358 = vunpack.c.h.b16 %v1430
  %v4359 = vunpack.c.l.b16 %v1431
  %v4360 = vunpack.c.h.b16 %v1431
  %v4361 = vunpack.c.l.b16 %v1432
  %v4362 = vunpack.c.h.b16 %v1432
  %v4363 = vunpack.c.l.b16 %v1433
  %v4364 = vunpack.c.h.b16 %v1433
  %v4365 = vunpack.c.l.b16 %v1434
  %v4366 = vunpack.c.h.b16 %v1434
  %v4367 = vunpack.c.l.b16 %v1435
  %v4368 = vunpack.c.h.b16 %v1435
  %v4369 = vunpack.c.l.b16 %v1436
  %v4370 = vunpack.c.h.b16 %v1436
  %v4371 = vunpack.c.l.b16 %v1437
  %v4372 = vunpack.c.h.b16 %v1437
  %v4373 = vunpack.c.l.b16 %v1438
  %v4374 = vunpack.c.h.b16 %v1438
  %v4375 = vunpack.c.l.b16 %v1439
  %v4376 = vunpack.c.h.b16 %v1439
  %v4377 = vunpack.c.l.b16 %v1440
  %v4378 = vunpack.c.h.b16 %v1440
  %v4379 = vunpack.c.l.b16 %v1441
  %v4380 = vunpack.c.h.b16 %v1441
  %v4381 = vunpack.c.l.b16 %v1442
  %v4382 = vunpack.c.h.b16 %v1442
  %v4383 = vunpack.c.l.b16 %v1443
  %v4384 = vunpack.c.h.b16 %v1443
  %v4385 = vunpack.c.l.b16 %v1444
  %v4386 = vunpack.c.h.b16 %v1444
  %v4387 = vunpack.c.l.b16 %v1445
  %v4388 = vunpack.c.h.b16 %v1445
  %v4389 = vunpack.c.l.b16 %v1446
  %v4390 = vunpack.c.h.b16 %v1446
  %v4391 = vunpack.c.l.b16 %v1447
  %v4392 = vunpack.c.h.b16 %v1447
  %v4393 = vunpack.c.l.b16 %v1448
  %v4394 = vunpack.c.h.b16 %v1448
  %v4395 = vunpack.c.l.b16 %v1449
  %v4396 = vunpack.c.h.b16 %v1449
  %v4397 = vunpack.c.l.b16 %v1450
  %v4398 = vunpack.c.h.b16 %v1450
  %v4399 = vunpack.c.l.b16 %v1451
  %v4400 = vunpack.c.h.b16 %v1451
  %v4401 = vunpack.c.l.b16 %v1452
  %v4402 = vunpack.c.h.b16 %v1452
  %v4403 = vunpack.c.l.b16 %v1453
  %v4404 = vunpack.c.h.b16 %v1453
  %v4405 = vunpack.c.l.b16 %v1454
  %v4406 = vunpack.c.h.b16 %v1454
  %v4407 = vunpack.c.l.b16 %v1455
  %v4408 = vunpack.c.h.b16 %v1455
  %v4409 = vunpack.c.l.b16 %v1456
  %v4410 = vunpack.c.h.b16 %v1456
  %v4411 = vunpack.c.l.b16 %v1457
  %v4412 = vunpack.c.h.b16 %v1457
  %v4413 = vunpack.c.l.b16 %v1458
  %v4414 = vunpack.c.h.b16 %v1458
  %v4415 = vunpack.c.l.b16 %v1459
  %v4416 = vunpack.c.h.b16 %v1459
  %v4417 = vunpack.c.l.b16 %v1460
  %v4418 = vunpack.c.h.b16 %v1460
  %v4419 = vunpack.c.l.b16 %v1461
  %v4420 = vunpack.c.h.b16 %v1461
  %v4421 = vunpack.c.l.b16 %v1462
  %v4422 = vunpack.c.h.b16 %v1462
  %v4423 = vunpack.c.l.b16 %v1463
  %v4424 = vunpack.c.h.b16 %v1463
  %v4425 = vunpack.c.l.b16 %v1464
  %v4426 = vunpack.c.h.b16 %v1464
  %v4427 = vunpack.c.l.b16 %v1465
  %v4428 = vunpack.c.h.b16 %v1465
  %v4429 = vunpack.c.l.b16 %v1466
  %v4430 = vunpack.c.h.b16 %v1466
  %v4431 = vunpack.c.l.b16 %v1467
  %v4432 = vunpack.c.h.b16 %v1467
  %v4433 = vunpack.c.l.b16 %v1468
  %v4434 = vunpack.c.h.b16 %v1468
  %v4435 = vunpack.c.l.b16 %v1469
  %v4436 = vunpack.c.h.b16 %v1469
  %v4437 = vunpack.c.l.b16 %v1470
  %v4438 = vunpack.c.h.b16 %v1470
  %v4439 = vunpack.c.l.b16 %v1471
  %v4440 = vunpack.c.h.b16 %v1471
  %v4441 = vunpack.c.l.b16 %v1472
  %v4442 = vunpack.c.h.b16 %v1472
  %v4443 = vunpack.c.l.b16 %v1473
  %v4444 = vunpack.c.h.b16 %v1473
  %v4445 = vunpack.c.l.b16 %v1474
  %v4446 = vunpack.c.h.b16 %v1474
  %v4447 = vunpack.c.l.b16 %v1475
  %v4448 = vunpack.c.h.b16 %v1475
  %v4449 = vunpack.c.l.b16 %v1476
  %v4450 = vunpack.c.h.b16 %v1476
  %v4451 = vunpack.c.l.b16 %v1477
  %v4452 = vunpack.c.h.b16 %v1477
  %v4453 = vunpack.c.l.b16 %v1478
  %v4454 = vunpack.c.h.b16 %v1478
  %v4455 = vunpack.c.l.b16 %v1479
  %v4456 = vunpack.c.h.b16 %v1479
  %v4457 = vunpack.c.l.b16 %v1480
  %v4458 = vunpack.c.h.b16 %v1480
  %v4459 = vunpack.c.l.b16 %v1481
  %v4460 = vunpack.c.h.b16 %v1481
  %v4461 = vunpack.c.l.b16 %v1482
  %v4462 = vunpack.c.h.b16 %v1482
  %v4463 = vunpack.c.l.b16 %v1483
  %v4464 = vunpack.c.h.b16 %v1483
  %v4465 = vunpack.c.l.b16 %v1484
  %v4466 = vunpack.c.h.b16 %v1484
  %v4467 = vunpack.c.l.b16 %v1485
  %v4468 = vunpack.c.h.b16 %v1485
  %v4469 = vunpack.c.l.b16 %v1486
  %v4470 = vunpack.c.h.b16 %v1486
  %v4471 = vunpack.c.l.b16 %v1487
  %v4472 = vunpack.c.h.b16 %v1487
  %v4473 = vunpack.c.l.b16 %v1488
  %v4474 = vunpack.c.h.b16 %v1488
  %v4475 = vunpack.c.l.b16 %v1489
  %v4476 = vunpack.c.h.b16 %v1489
  %v4477 = vunpack.c.l.b16 %v1490
  %v4478 = vunpack.c.h.b16 %v1490
  %v4479 = vunpack.c.l.b16 %v1491
  %v4480 = vunpack.c.h.b16 %v1491
  %v4481 = vunpack.c.l.b16 %v1492
  %v4482 = vunpack.c.h.b16 %v1492
  %v4483 = vunpack.c.l.b16 %v1493
  %v4484 = vunpack.c.h.b16 %v1493
  %v4485 = vunpack.c.l.b16 %v1494
  %v4486 = vunpack.c.h.b16 %v1494
  %v4487 = vunpack.c.l.b16 %v1495
  %v4488 = vunpack.c.h.b16 %v1495
  %v4489 = vunpack.c.l.b16 %v1496
  %v4490 = vunpack.c.h.b16 %v1496
  %v4491 = vunpack.c.l.b16 %v1497
  %v4492 = vunpack.c.h.b16 %v1497
  %v4493 = vunpack.c.l.b16 %v1498
  %v4494 = vunpack.c.h.b16 %v1498
  %v4495 = vunpack.c.l.b16 %v1499
  %v4496 = vunpack.c.h.b16 %v1499
  %v4497 = vunpack.c.l.b16 %v1500
  %v4498 = vunpack.c.h.b16 %v1500
  %v4499 = vunpack.c.l.b16 %v1501
  %v4500 = vunpack.c.h.b16 %v1501
  %v4501 = vunpack.c.l.b16 %v1502
  %v4502 = vunpack.c.h.b16 %v1502
  %v4503 = vunpack.c.l.b16 %v1503
  %v4504 = vunpack.c.h.b16 %v1503
  %v4505 = vunpack.c.l.b16 %v1504
  %v4506 = vunpack.c.h.b16 %v1504
  %v4507 = vunpack.c.l.b16 %v1505
  %v4508 = vunpack.c.h.b16 %v1505
  %v4509 = vunpack.c.l.b16 %v1506
  %v4510 = vunpack.c.h.b16 %v1506
  %v4511 = vunpack.c.l.b16 %v1507
  %v4512 = vunpack.c.h.b16 %v1507
  %v4513 = vunpack.c.l.b16 %v1508
  %v4514 = vunpack.c.h.b16 %v1508
  %v4515 = vunpack.c.l.b16 %v1509
  %v4516 = vunpack.c.h.b16 %v1509
  %v4517 = vunpack.c.l.b16 %v1510
  %v4518 = vunpack.c.h.b16 %v1510
  %v4519 = vunpack.c.l.b16 %v1511
  %v4520 = vunpack.c.h.b16 %v1511
  %v4521 = vunpack.c.l.b16 %v1512
  %v4522 = vunpack.c.h.b16 %v1512
  %v4523 = vunpack.c.l.b16 %v1513
  %v4524 = vunpack.c.h.b16 %v1513
  %v4525 = vunpack.c.l.b16 %v1514
  %v4526 = vunpack.c.h.b16 %v1514
  %v4527 = vunpack.c.l.b16 %v1515
  %v4528 = vunpack.c.h.b16 %v1515
  %v4529 = vunpack.c.l.b16 %v1516
  %v4530 = vunpack.c.h.b16 %v1516
  %v4531 = vunpack.c.l.b16 %v1517
  %v4532 = vunpack.c.h.b16 %v1517
  %v4533 = vunpack.c.l.b16 %v1518
  %v4534 = vunpack.c.h.b16 %v1518
  %v4535 = vunpack.c.l.b16 %v1519
  %v4536 = vunpack.c.h.b16 %v1519
  %v4537 = vunpack.c.l.b16 %v1520
  %v4538 = vunpack.c.h.b16 %v1520
  %v4539 = vunpack.c.l.b16 %v1521
  %v4540 = vunpack.c.h.b16 %v1521
  %v4541 = vunpack.c.l.b16 %v1522
  %v4542 = vunpack.c.h.b16 %v1522
  %v4543 = vunpack.c.l.b16 %v1523
  %v4544 = vunpack.c.h.b16 %v1523
  %v4545 = vunpack.c.l.b16 %v1524
  %v4546 = vunpack.c.h.b16 %v1524
  %v4547 = vunpack.c.l.b16 %v1525
  %v4548 = vunpack.c.h.b16 %v1525
  %v4549 = vunpack.c.l.b16 %v1526
  %v4550 = vunpack.c.h.b16 %v1526
  %v4551 = vunpack.c.l.b16 %v1527
  %v4552 = vunpack.c.h.b16 %v1527
  %v4553 = vunpack.c.l.b16 %v1528
  %v4554 = vunpack.c.h.b16 %v1528
  %v4555 = vunpack.c.l.b16 %v1529
  %v4556 = vunpack.c.h.b16 %v1529
  %v4557 = vunpack.c.l.b16 %v1530
  %v4558 = vunpack.c.h.b16 %v1530
  %v4559 = vunpack.c.l.b16 %v1531
  %v4560 = vunpack.c.h.b16 %v1531
  %v4561 = vunpack.c.l.b16 %v1532
  %v4562 = vunpack.c.h.b16 %v1532
  %v4563 = vunpack.c.l.b16 %v1533
  %v4564 = vunpack.c.h.b16 %v1533
  %v4565 = vunpack.c.l.b16 %v1534
  %v4566 = vunpack.c.h.b16 %v1534
  %v4567 = vunpack.c.l.b16 %v1535
  %v4568 = vunpack.c.h.b16 %v1535
  %v4569 = vunpack.c.l.b16 %v1536
  %v4570 = vunpack.c.h.b16 %v1536
  %v4571 = vunpack.c.l.b16 %v1537
  %v4572 = vunpack.c.h.b16 %v1537
  %v4573 = vunpack.c.l.b16 %v1538
  %v4574 = vunpack.c.h.b16 %v1538
  %v4575 = vunpack.c.l.b16 %v1539
  %v4576 = vunpack.c.h.b16 %v1539
  %v4577 = vunpack.c.l.b16 %v1540
  %v4578 = vunpack.c.h.b16 %v1540
  %v4579 = vunpack.c.l.b16 %v1541
  %v4580 = vunpack.c.h.b16 %v1541
  %v4581 = vunpack.c.l.b16 %v1542
  %v4582 = vunpack.c.h.b16 %v1542
  %v4583 = vunpack.c.l.b16 %v1543
  %v4584 = vunpack.c.h.b16 %v1543
  %v4585 = vunpack.c.l.b16 %v1544
  %v4586 = vunpack.c.h.b16 %v1544
  %v4587 = vunpack.c.l.b16 %v1545
  %v4588 = vunpack.c.h.b16 %v1545
  %v4589 = vunpack.c.l.b16 %v1546
  %v4590 = vunpack.c.h.b16 %v1546
  %v4591 = vunpack.c.l.b16 %v1547
  %v4592 = vunpack.c.h.b16 %v1547
  %v4593 = vunpack.c.l.b16 %v1548
  %v4594 = vunpack.c.h.b16 %v1548
  %v4595 = vunpack.c.l.b16 %v1549
  %v4596 = vunpack.c.h.b16 %v1549
  %v4597 = vunpack.c.l.b16 %v1550
  %v4598 = vunpack.c.h.b16 %v1550
  %v4599 = vunpack.c.l.b16 %v1551
  %v4600 = vunpack.c.h.b16 %v1551
  %v4601 = vunpack.c.l.b16 %v1552
  %v4602 = vunpack.c.h.b16 %v1552
  %v4603 = vunpack.c.l.b16 %v1553
  %v4604 = vunpack.c.h.b16 %v1553
  %v4605 = vunpack.c.l.b16 %v1554
  %v4606 = vunpack.c.h.b16 %v1554
  %v4607 = vunpack.c.l.b16 %v1555
  %v4608 = vunpack.c.h.b16 %v1555
  %v4609 = vunpack.c.l.b16 %v1556
  %v4610 = vunpack.c.h.b16 %v1556
  %v4611 = vunpack.c.l.b16 %v1557
  %v4612 = vunpack.c.h.b16 %v1557
  %v4613 = vunpack.c.l.b16 %v1558
  %v4614 = vunpack.c.h.b16 %v1558
  %v4615 = vunpack.c.l.b16 %v1559
  %v4616 = vunpack.c.h.b16 %v1559
  %v4617 = vunpack.c.l.b16 %v1560
  %v4618 = vunpack.c.h.b16 %v1560
  %v4619 = vunpack.c.l.b16 %v1561
  %v4620 = vunpack.c.h.b16 %v1561
  %v4621 = vunpack.c.l.b16 %v1562
  %v4622 = vunpack.c.h.b16 %v1562
  %v4623 = vunpack.c.l.b16 %v1563
  %v4624 = vunpack.c.h.b16 %v1563
  %v4625 = vunpack.c.l.b16 %v1564
  %v4626 = vunpack.c.h.b16 %v1564
  %v4627 = vunpack.c.l.b16 %v1565
  %v4628 = vunpack.c.h.b16 %v1565
  %v4629 = vunpack.c.l.b16 %v1566
  %v4630 = vunpack.c.h.b16 %v1566
  %v4631 = vunpack.c.l.b16 %v1567
  %v4632 = vunpack.c.h.b16 %v1567
  %v4633 = vunpack.c.l.b16 %v1568
  %v4634 = vunpack.c.h.b16 %v1568
  %v4635 = vunpack.c.l.b16 %v1569
  %v4636 = vunpack.c.h.b16 %v1569
  %v4637 = vunpack.c.l.b16 %v1570
  %v4638 = vunpack.c.h.b16 %v1570
  %v4639 = vunpack.c.l.b16 %v1571
  %v4640 = vunpack.c.h.b16 %v1571
  %v4641 = vunpack.c.l.b16 %v1572
  %v4642 = vunpack.c.h.b16 %v1572
  %v4643 = vunpack.c.l.b16 %v1573
  %v4644 = vunpack.c.h.b16 %v1573
  %v4645 = vunpack.c.l.b16 %v1574
  %v4646 = vunpack.c.h.b16 %v1574
  %v4647 = vunpack.c.l.b16 %v1575
  %v4648 = vunpack.c.h.b16 %v1575
  %v4649 = vunpack.c.l.b16 %v1576
  %v4650 = vunpack.c.h.b16 %v1576
  %v4651 = vunpack.c.l.b16 %v1577
  %v4652 = vunpack.c.h.b16 %v1577
  %v4653 = vunpack.c.l.b16 %v1578
  %v4654 = vunpack.c.h.b16 %v1578
  %v4655 = vunpack.c.l.b16 %v1579
  %v4656 = vunpack.c.h.b16 %v1579
  %v4657 = vunpack.c.l.b16 %v1580
  %v4658 = vunpack.c.h.b16 %v1580
  %v4659 = vunpack.c.l.b16 %v1581
  %v4660 = vunpack.c.h.b16 %v1581
  %v4661 = vunpack.c.l.b16 %v1582
  %v4662 = vunpack.c.h.b16 %v1582
  %v4663 = vunpack.c.l.b16 %v1583
  %v4664 = vunpack.c.h.b16 %v1583
  %v4665 = vunpack.c.l.b16 %v1584
  %v4666 = vunpack.c.h.b16 %v1584
  %v4667 = vunpack.c.l.b16 %v1585
  %v4668 = vunpack.c.h.b16 %v1585
  %v4669 = vunpack.c.l.b16 %v1586
  %v4670 = vunpack.c.h.b16 %v1586
  %v4671 = vunpack.c.l.b16 %v1587
  %v4672 = vunpack.c.h.b16 %v1587
  %v4673 = vunpack.c.l.b16 %v1588
  %v4674 = vunpack.c.h.b16 %v1588
  %v4675 = vunpack.c.l.b16 %v1589
  %v4676 = vunpack.c.h.b16 %v1589
  %v4677 = vunpack.c.l.b16 %v1590
  %v4678 = vunpack.c.h.b16 %v1590
  %v4679 = vunpack.c.l.b16 %v1591
  %v4680 = vunpack.c.h.b16 %v1591
  %v4681 = vunpack.c.l.b16 %v1592
  %v4682 = vunpack.c.h.b16 %v1592
  %v4683 = vunpack.c.l.b16 %v1593
  %v4684 = vunpack.c.h.b16 %v1593
  %v4685 = vunpack.c.l.b16 %v1594
  %v4686 = vunpack.c.h.b16 %v1594
  %v4687 = vunpack.c.l.b16 %v1595
  %v4688 = vunpack.c.h.b16 %v1595
  %v4689 = vunpack.c.l.b16 %v1596
  %v4690 = vunpack.c.h.b16 %v1596
  %v4691 = vunpack.c.l.b16 %v1597
  %v4692 = vunpack.c.h.b16 %v1597
  %v4693 = vunpack.c.l.b16 %v1598
  %v4694 = vunpack.c.h.b16 %v1598
  %v4695 = vunpack.c.l.b16 %v1599
  %v4696 = vunpack.c.h.b16 %v1599
  %v4697 = vunpack.c.l.b16 %v1600
  %v4698 = vunpack.c.h.b16 %v1600
  %v4699 = vunpack.c.l.b16 %v1601
  %v4700 = vunpack.c.h.b16 %v1601
  %v4701 = vunpack.c.l.b16 %v1602
  %v4702 = vunpack.c.h.b16 %v1602
  %v4703 = vunpack.c.l.b16 %v1603
  %v4704 = vunpack.c.h.b16 %v1603
  %v4705 = vunpack.c.l.b16 %v1604
  %v4706 = vunpack.c.h.b16 %v1604
  %v4707 = vunpack.c.l.b16 %v1605
  %v4708 = vunpack.c.h.b16 %v1605
  %v4709 = vunpack.c.l.b16 %v1606
  %v4710 = vunpack.c.h.b16 %v1606
  %v4711 = vunpack.c.l.b16 %v1607
  %v4712 = vunpack.c.h.b16 %v1607
  %v4713 = vunpack.c.l.b16 %v1608
  %v4714 = vunpack.c.h.b16 %v1608
  %v4715 = vunpack.c.l.b16 %v1609
  %v4716 = vunpack.c.h.b16 %v1609
  %v4717 = vunpack.c.l.b16 %v1610
  %v4718 = vunpack.c.h.b16 %v1610
  %v4719 = vunpack.c.l.b16 %v1611
  %v4720 = vunpack.c.h.b16 %v1611
  %v4721 = vunpack.c.l.b16 %v1612
  %v4722 = vunpack.c.h.b16 %v1612
  %v4723 = vunpack.c.l.b16 %v1613
  %v4724 = vunpack.c.h.b16 %v1613
  %v4725 = vunpack.c.l.b16 %v1614
  %v4726 = vunpack.c.h.b16 %v1614
  %v4727 = vunpack.c.l.b16 %v1615
  %v4728 = vunpack.c.h.b16 %v1615
  %v4729 = vunpack.c.l.b16 %v1616
  %v4730 = vunpack.c.h.b16 %v1616
  %v4731 = vunpack.c.l.b16 %v1617
  %v4732 = vunpack.c.h.b16 %v1617
  %v4733 = vunpack.c.l.b16 %v1618
  %v4734 = vunpack.c.h.b16 %v1618
  %v4735 = vunpack.c.l.b16 %v1619
  %v4736 = vunpack.c.h.b16 %v1619
  %v4737 = vunpack.c.l.b16 %v1620
  %v4738 = vunpack.c.h.b16 %v1620
  %v4739 = vunpack.c.l.b16 %v1621
  %v4740 = vunpack.c.h.b16 %v1621
  %v4741 = vunpack.c.l.b16 %v1622
  %v4742 = vunpack.c.h.b16 %v1622
  %v4743 = vunpack.c.l.b16 %v1623
  %v4744 = vunpack.c.h.b16 %v1623
  %v4745 = vunpack.c.l.b16 %v1624
  %v4746 = vunpack.c.h.b16 %v1624
  %v4747 = vunpack.c.l.b16 %v1625
  %v4748 = vunpack.c.h.b16 %v1625
  %v4749 = vunpack.c.l.b16 %v1626
  %v4750 = vunpack.c.h.b16 %v1626
  %v4751 = vunpack.c.l.b16 %v1627
  %v4752 = vunpack.c.h.b16 %v1627
  %v4753 = vunpack.c.l.b16 %v1628
  %v4754 = vunpack.c.h.b16 %v1628
  %v4755 = vunpack.c.l.b16 %v1629
  %v4756 = vunpack.c.h.b16 %v1629
  %v4757 = vunpack.c.l.b16 %v1630
  %v4758 = vunpack.c.h.b16 %v1630
  %v4759 = vunpack.c.l.b16 %v1631
  %v4760 = vunpack.c.h.b16 %v1631
  %v4761 = vunpack.c.l.b16 %v1632
  %v4762 = vunpack.c.h.b16 %v1632
  %v4763 = vunpack.c.l.b16 %v1633
  %v4764 = vunpack.c.h.b16 %v1633
  %v4765 = vunpack.c.l.b16 %v1634
  %v4766 = vunpack.c.h.b16 %v1634
  %v4767 = vunpack.c.l.b16 %v1635
  %v4768 = vunpack.c.h.b16 %v1635
  %v4769 = vunpack.c.l.b16 %v1636
  %v4770 = vunpack.c.h.b16 %v1636
  %v4771 = vunpack.c.l.b16 %v1637
  %v4772 = vunpack.c.h.b16 %v1637
  %v4773 = vunpack.c.l.b16 %v1638
  %v4774 = vunpack.c.h.b16 %v1638
  %v4775 = vunpack.c.l.b16 %v1639
  %v4776 = vunpack.c.h.b16 %v1639
  %v4777 = vunpack.c.l.b16 %v1640
  %v4778 = vunpack.c.h.b16 %v1640
  %v4779 = vunpack.c.l.b16 %v1641
  %v4780 = vunpack.c.h.b16 %v1641
  %v4781 = vunpack.c.l.b16 %v1642
  %v4782 = vunpack.c.h.b16 %v1642
  %v4783 = vunpack.c.l.b16 %v1643
  %v4784 = vunpack.c.h.b16 %v1643
  %v4785 = vunpack.c.l.b16 %v1644
  %v4786 = vunpack.c.h.b16 %v1644
  %v4787 = vunpack.c.l.b16 %v1645
  %v4788 = vunpack.c.h.b16 %v1645
  %v4789 = vunpack.c.l.b16 %v1646
  %v4790 = vunpack.c.h.b16 %v1646
  %v4791 = vunpack.c.l.b16 %v1647
  %v4792 = vunpack.c.h.b16 %v1647
  %v4793 = vunpack.c.l.b16 %v1648
  %v4794 = vunpack.c.h.b16 %v1648
  %v4795 = vunpack.c.l.b16 %v1649
  %v4796 = vunpack.c.h.b16 %v1649
  %v4797 = vunpack.c.l.b16 %v1650
  %v4798 = vunpack.c.h.b16 %v1650
  %v4799 = vunpack.c.l.b16 %v1651
  %v4800 = vunpack.c.h.b16 %v1651
  %v4801 = vunpack.c.l.b16 %v1652
  %v4802 = vunpack.c.h.b16 %v1652
  %v4803 = vunpack.c.l.b16 %v1653
  %v4804 = vunpack.c.h.b16 %v1653
  %v4805 = vunpack.c.l.b16 %v1654
  %v4806 = vunpack.c.h.b16 %v1654
  %v4807 = vunpack.c.l.b16 %v1655
  %v4808 = vunpack.c.h.b16 %v1655
  %v4809 = vunpack.c.l.b16 %v1656
  %v4810 = vunpack.c.h.b16 %v1656
  %v4811 = vunpack.c.l.b16 %v1657
  %v4812 = vunpack.c.h.b16 %v1657
  %v4813 = vunpack.c.l.b16 %v1658
  %v4814 = vunpack.c.h.b16 %v1658
  %v4815 = vpack.c.b16 %v2783, %v2767
  %v4816 = vpack.c.b16 %v2784, %v2768
  %v4817 = vpack.c.b16 %v2785, %v2769
  %v4818 = vpack.c.b16 %v2786, %v2770
  %v4819 = vpack.c.b16 %v2787, %v2771
  %v4820 = vpack.c.b16 %v2788, %v2772
  %v4821 = vpack.c.b16 %v2789, %v2773
  %v4822 = vpack.c.b16 %v2790, %v2774
  %v4823 = vpack.c.b16 %v2791, %v2775
  %v4824 = vpack.c.b16 %v2792, %v2776
  %v4825 = vpack.c.b16 %v2793, %v2777
  %v4826 = vpack.c.b16 %v2794, %v2778
  %v4827 = vpack.c.b16 %v2795, %v2779
  %v4828 = vpack.c.b16 %v2796, %v2780
  %v4829 = vpack.c.b16 %v2797, %v2781
  %v4830 = vpack.c.b16 %v2798, %v2782
  %v4831 = vpack.c.b16 %v2815, %v2799
  %v4832 = vpack.c.b16 %v2816, %v2800
  %v4833 = vpack.c.b16 %v2817, %v2801
  %v4834 = vpack.c.b16 %v2818, %v2802
  %v4835 = vpack.c.b16 %v2819, %v2803
  %v4836 = vpack.c.b16 %v2820, %v2804
  %v4837 = vpack.c.b16 %v2821, %v2805
  %v4838 = vpack.c.b16 %v2822, %v2806
  %v4839 = vpack.c.b16 %v2823, %v2807
  %v4840 = vpack.c.b16 %v2824, %v2808
  %v4841 = vpack.c.b16 %v2825, %v2809
  %v4842 = vpack.c.b16 %v2826, %v2810
  %v4843 = vpack.c.b16 %v2827, %v2811
  %v4844 = vpack.c.b16 %v2828, %v2812
  %v4845 = vpack.c.b16 %v2829, %v2813
  %v4846 = vpack.c.b16 %v2830, %v2814
  %v4847 = vpack.c.b16 %v2847, %v2831
  %v4848 = vpack.c.b16 %v2848, %v2832
  %v4849 = vpack.c.b16 %v2849, %v2833
  %v4850 = vpack.c.b16 %v2850, %v2834
  %v4851 = vpack.c.b16 %v2851, %v2835
  %v4852 = vpack.c.b16 %v2852, %v2836
  %v4853 = vpack.c.b16 %v2853, %v2837
  %v4854 = vpack.c.b16 %v2854, %v2838
  %v4855 = vpack.c.b16 %v2855, %v2839
  %v4856 = vpack.c.b16 %v2856, %v2840
  %v4857 = vpack.c.b16 %v2857, %v2841
  %v4858 = vpack.c.b16 %v2858, %v2842
  %v4859 = vpack.c.b16 %v2859, %v2843
  %v4860 = vpack.c.b16 %v2860, %v2844
  %v4861 = vpack.c.b16 %v2861, %v2845
  %v4862 = vpack.c.b16 %v2862, %v2846
  %v4863 = vpack.c.b16 %v2879, %v2863
  %v4864 = vpack.c.b16 %v2880, %v2864
  %v4865 = vpack.c.b16 %v2881, %v2865
  %v4866 = vpack.c.b16 %v2882, %v2866
  %v4867 = vpack.c.b16 %v2883, %v2867
  %v4868 = vpack.c.b16 %v2884, %v2868
  %v4869 = vpack.c.b16 %v2885, %v2869
  %v4870 = vpack.c.b16 %v2886, %v2870
  %v4871 = vpack.c.b16 %v2887, %v2871
  %v4872 = vpack.c.b16 %v2888, %v2872
  %v4873 = vpack.c.b16 %v2889, %v2873
  %v4874 = vpack.c.b16 %v2890, %v2874
  %v4875 = vpack.c.b16 %v2891, %v2875
  %v4876 = vpack.c.b16 %v2892, %v2876
  %v4877 = vpack.c.b16 %v2893, %v2877
  %v4878 = vpack.c.b16 %v2894, %v2878
  %v4879 = vpack.c.b16 %v2911, %v2895
  %v4880 = vpack.c.b16 %v2912, %v2896
  %v4881 = vpack.c.b16 %v2913, %v2897
  %v4882 = vpack.c.b16 %v2914, %v2898
  %v4883 = vpack.c.b16 %v2915, %v2899
  %v4884 = vpack.c.b16 %v2916, %v2900
  %v4885 = vpack.c.b16 %v2917, %v2901
  %v4886 = vpack.c.b16 %v2918, %v2902
  %v4887 = vpack.c.b16 %v2919, %v2903
  %v4888 = vpack.c.b16 %v2920, %v2904
  %v4889 = vpack.c.b16 %v2921, %v2905
  %v4890 = vpack.c.b16 %v2922, %v2906
  %v4891 = vpack.c.b16 %v2923, %v2907
  %v4892 = vpack.c.b16 %v2924, %v2908
  %v4893 = vpack.c.b16 %v2925, %v2909
  %v4894 = vpack.c.b16 %v2926, %v2910
  %v4895 = vpack.c.b16 %v2943, %v2927
  %v4896 = vpack.c.b16 %v2944, %v2928
  %v4897 = vpack.c.b16 %v2945, %v2929
  %v4898 = vpack.c.b16 %v2946, %v2930
  %v4899 = vpack.c.b16 %v2947, %v2931
  %v4900 = vpack.c.b16 %v2948, %v2932
  %v4901 = vpack.c.b16 %v2949, %v2933
  %v4902 = vpack.c.b16 %v2950, %v2934
  %v4903 = vpack.c.b16 %v2951, %v2935
  %v4904 = vpack.c.b16 %v2952, %v2936
  %v4905 = vpack.c.b16 %v2953, %v2937
  %v4906 = vpack.c.b16 %v2954, %v2938
  %v4907 = vpack.c.b16 %v2955, %v2939
  %v4908 = vpack.c.b16 %v2956, %v2940
  %v4909 = vpack.c.b16 %v2957, %v2941
  %v4910 = vpack.c.b16 %v2958, %v2942
  %v4911 = vpack.c.b16 %v2975, %v2959
  %v4912 = vpack.c.b16 %v2976, %v2960
  %v4913 = vpack.c.b16 %v2977, %v2961
  %v4914 = vpack.c.b16 %v2978, %v2962
  %v4915 = vpack.c.b16 %v2979, %v2963
  %v4916 = vpack.c.b16 %v2980, %v2964
  %v4917 = vpack.c.b16 %v2981, %v2965
  %v4918 = vpack.c.b16 %v2982, %v2966
  %v4919 = vpack.c.b16 %v2983, %v2967
  %v4920 = vpack.c.b16 %v2984, %v2968
  %v4921 = vpack.c.b16 %v2985, %v2969
  %v4922 = vpack.c.b16 %v2986, %v2970
  %v4923 = vpack.c.b16 %v2987, %v2971
  %v4924 = vpack.c.b16 %v2988, %v2972
  %v4925 = vpack.c.b16 %v2989, %v2973
  %v4926 = vpack.c.b16 %v2990, %v2974
  %v4927 = vpack.c.b16 %v3007, %v2991
  %v4928 = vpack.c.b16 %v3008, %v2992
  %v4929 = vpack.c.b16 %v3009, %v2993
  %v4930 = vpack.c.b16 %v3010, %v2994
  %v4931 = vpack.c.b16 %v3011, %v2995
  %v4932 = vpack.c.b16 %v3012, %v2996
  %v4933 = vpack.c.b16 %v3013, %v2997
  %v4934 = vpack.c.b16 %v3014, %v2998
  %v4935 = vpack.c.b16 %v3015, %v2999
  %v4936 = vpack.c.b16 %v3016, %v3000
  %v4937 = vpack.c.b16 %v3017, %v3001
  %v4938 = vpack.c.b16 %v3018, %v3002
  %v4939 = vpack.c.b16 %v3019, %v3003
  %v4940 = vpack.c.b16 %v3020, %v3004
  %v4941 = vpack.c.b16 %v3021, %v3005
  %v4942 = vpack.c.b16 %v3022, %v3006
  %v4943 = vpack.c.b16 %v3039, %v3023
  %v4944 = vpack.c.b16 %v3040, %v3024
  %v4945 = vpack.c.b16 %v3041, %v3025
  %v4946 = vpack.c.b16 %v3042, %v3026
  %v4947 = vpack.c.b16 %v3043, %v3027
  %v4948 = vpack.c.b16 %v3044, %v3028
  %v4949 = vpack.c.b16 %v3045, %v3029
  %v4950 = vpack.c.b16 %v3046, %v3030
  %v4951 = vpack.c.b16 %v3047, %v3031
  %v4952 = vpack.c.b16 %v3048, %v3032
  %v4953 = vpack.c.b16 %v3049, %v3033
  %v4954 = vpack.c.b16 %v3050, %v3034
  %v4955 = vpack.c.b16 %v3051, %v3035
  %v4956 = vpack.c.b16 %v3052, %v3036
  %v4957 = vpack.c.b16 %v3053, %v3037
  %v4958 = vpack.c.b16 %v3054, %v3038
  %v4959 = vpack.c.b16 %v3071, %v3055
  %v4960 = vpack.c.b16 %v3072, %v3056
  %v4961 = vpack.c.b16 %v3073, %v3057
  %v4962 = vpack.c.b16 %v3074, %v3058
  %v4963 = vpack.c.b16 %v3075, %v3059
  %v4964 = vpack.c.b16 %v3076, %v3060
  %v4965 = vpack.c.b16 %v3077, %v3061
  %v4966 = vpack.c.b16 %v3078, %v3062
  %v4967 = vpack.c.b16 %v3079, %v3063
  %v4968 = vpack.c.b16 %v3080, %v3064
  %v4969 = vpack.c.b16 %v3081, %v3065
  %v4970 = vpack.c.b16 %v3082, %v3066
  %v4971 = vpack.c.b16 %v3083, %v3067
  %v4972 = vpack.c.b16 %v3084, %v3068
  %v4973 = vpack.c.b16 %v3085, %v3069
  %v4974 = vpack.c.b16 %v3086, %v3070
  %v4975 = vpack.c.b16 %v3103, %v3087
  %v4976 = vpack.c.b16 %v3104, %v3088
  %v4977 = vpack.c.b16 %v3105, %v3089
  %v4978 = vpack.c.b16 %v3106, %v3090
  %v4979 = vpack.c.b16 %v3107, %v3091
  %v4980 = vpack.c.b16 %v3108, %v3092
  %v4981 = vpack.c.b16 %v3109, %v3093
  %v4982 = vpack.c.b16 %v3110, %v3094
  %v4983 = vpack.c.b16 %v3111, %v3095
  %v4984 = vpack.c.b16 %v3112, %v3096
  %v4985 = vpack.c.b16 %v3113, %v3097
  %v4986 = vpack.c.b16 %v3114, %v3098
  %v4987 = vpack.c.b16 %v3115, %v3099
  %v4988 = vpack.c.b16 %v3116, %v3100
  %v4989 = vpack.c.b16 %v3117, %v3101
  %v4990 = vpack.c.b16 %v3118, %v3102
  %v4991 = vpack.c.b16 %v3135, %v3119
  %v4992 = vpack.c.b16 %v3136, %v3120
  %v4993 = vpack.c.b16 %v3137, %v3121
  %v4994 = vpack.c.b16 %v3138, %v3122
  %v4995 = vpack.c.b16 %v3139, %v3123
  %v4996 = vpack.c.b16 %v3140, %v3124
  %v4997 = vpack.c.b16 %v3141, %v3125
  %v4998 = vpack.c.b16 %v3142, %v3126
  %v4999 = vpack.c.b16 %v3143, %v3127
  %v5000 = vpack.c.b16 %v3144, %v3128
  %v5001 = vpack.c.b16 %v3145, %v3129
  %v5002 = vpack.c.b16 %v3146, %v3130
  %v5003 = vpack.c.b16 %v3147, %v3131
  %v5004 = vpack.c.b16 %v3148, %v3132
  %v5005 = vpack.c.b16 %v3149, %v3133
  %v5006 = vpack.c.b16 %v3150, %v3134
  %v5007 = vpack.c.b16 %v3167, %v3151
  %v5008 = vpack.c.b16 %v3168, %v3152
  %v5009 = vpack.c.b16 %v3169, %v3153
  %v5010 = vpack.c.b16 %v3170, %v3154
  %v5011 = vpack.c.b16 %v3171, %v3155
  %v5012 = vpack.c.b16 %v3172, %v3156
  %v5013 = vpack.c.b16 %v3173, %v3157
  %v5014 = vpack.c.b16 %v3174, %v3158
  %v5015 = vpack.c.b16 %v3175, %v3159
  %v5016 = vpack.c.b16 %v3176, %v3160
  %v5017 = vpack.c.b16 %v3177, %v3161
  %v5018 = vpack.c.b16 %v3178, %v3162
  %v5019 = vpack.c.b16 %v3179, %v3163
  %v5020 = vpack.c.b16 %v3180, %v3164
  %v5021 = vpack.c.b16 %v3181, %v3165
  %v5022 = vpack.c.b16 %v3182, %v3166
  %v5023 = vpack.c.b16 %v3199, %v3183
  %v5024 = vpack.c.b16 %v3200, %v3184
  %v5025 = vpack.c.b16 %v3201, %v3185
  %v5026 = vpack.c.b16 %v3202, %v3186
  %v5027 = vpack.c.b16 %v3203, %v3187
  %v5028 = vpack.c.b16 %v3204, %v3188
  %v5029 = vpack.c.b16 %v3205, %v3189
  %v5030 = vpack.c.b16 %v3206, %v3190
  %v5031 = vpack.c.b16 %v3207, %v3191
  %v5032 = vpack.c.b16 %v3208, %v3192
  %v5033 = vpack.c.b16 %v3209, %v3193
  %v5034 = vpack.c.b16 %v3210, %v3194
  %v5035 = vpack.c.b16 %v3211, %v3195
  %v5036 = vpack.c.b16 %v3212, %v3196
  %v5037 = vpack.c.b16 %v3213, %v3197
  %v5038 = vpack.c.b16 %v3214, %v3198
  %v5039 = vpack.c.b16 %v3231, %v3215
  %v5040 = vpack.c.b16 %v3232, %v3216
  %v5041 = vpack.c.b16 %v3233, %v3217
  %v5042 = vpack.c.b16 %v3234, %v3218
  %v5043 = vpack.c.b16 %v3235, %v3219
  %v5044 = vpack.c.b16 %v3236, %v3220
  %v5045 = vpack.c.b16 %v3237, %v3221
  %v5046 = vpack.c.b16 %v3238, %v3222
  %v5047 = vpack.c.b16 %v3239, %v3223
  %v5048 = vpack.c.b16 %v3240, %v3224
  %v5049 = vpack.c.b16 %v3241, %v3225
  %v5050 = vpack.c.b16 %v3242, %v3226
  %v5051 = vpack.c.b16 %v3243, %v3227
  %v5052 = vpack.c.b16 %v3244, %v3228
  %v5053 = vpack.c.b16 %v3245, %v3229
  %v5054 = vpack.c.b16 %v3246, %v3230
  %v5055 = vpack.c.b16 %v3263, %v3247
  %v5056 = vpack.c.b16 %v3264, %v3248
  %v5057 = vpack.c.b16 %v3265, %v3249
  %v5058 = vpack.c.b16 %v3266, %v3250
  %v5059 = vpack.c.b16 %v3267, %v3251
  %v5060 = vpack.c.b16 %v3268, %v3252
  %v5061 = vpack.c.b16 %v3269, %v3253
  %v5062 = vpack.c.b16 %v3270, %v3254
  %v5063 = vpack.c.b16 %v3271, %v3255
  %v5064 = vpack.c.b16 %v3272, %v3256
  %v5065 = vpack.c.b16 %v3273, %v3257
  %v5066 = vpack.c.b16 %v3274, %v3258
  %v5067 = vpack.c.b16 %v3275, %v3259
  %v5068 = vpack.c.b16 %v3276, %v3260
  %v5069 = vpack.c.b16 %v3277, %v3261
  %v5070 = vpack.c.b16 %v3278, %v3262
  %v5071 = vpack.c.b16 %v3295, %v3279
  %v5072 = vpack.c.b16 %v3296, %v3280
  %v5073 = vpack.c.b16 %v3297, %v3281
  %v5074 = vpack.c.b16 %v3298, %v3282
  %v5075 = vpack.c.b16 %v3299, %v3283
  %v5076 = vpack.c.b16 %v3300, %v3284
  %v5077 = vpack.c.b16 %v3301, %v3285
  %v5078 = vpack.c.b16 %v3302, %v3286
  %v5079 = vpack.c.b16 %v3303, %v3287
  %v5080 = vpack.c.b16 %v3304, %v3288
  %v5081 = vpack.c.b16 %v3305, %v3289
  %v5082 = vpack.c.b16 %v3306, %v3290
  %v5083 = vpack.c.b16 %v3307, %v3291
  %v5084 = vpack.c.b16 %v3308, %v3292
  %v5085 = vpack.c.b16 %v3309, %v3293
  %v5086 = vpack.c.b16 %v3310, %v3294
  %v5087 = vpack.c.b16 %v3327, %v3311
  %v5088 = vpack.c.b16 %v3328, %v3312
  %v5089 = vpack.c.b16 %v3329, %v3313
  %v5090 = vpack.c.b16 %v3330, %v3314
  %v5091 = vpack.c.b16 %v3331, %v3315
  %v5092 = vpack.c.b16 %v3332, %v3316
  %v5093 = vpack.c.b16 %v3333, %v3317
  %v5094 = vpack.c.b16 %v3334, %v3318
  %v5095 = vpack.c.b16 %v3335, %v3319
  %v5096 = vpack.c.b16 %v3336, %v3320
  %v5097 = vpack.c.b16 %v3337, %v3321
  %v5098 = vpack.c.b16 %v3338, %v3322
  %v5099 = vpack.c.b16 %v3339, %v3323
  %v5100 = vpack.c.b16 %v3340, %v3324
  %v5101 = vpack.c.b16 %v3341, %v3325
  %v5102 = vpack.c.b16 %v3342, %v3326
  %v5103 = vpack.c.b16 %v3359, %v3343
  %v5104 = vpack.c.b16 %v3360, %v3344
  %v5105 = vpack.c.b16 %v3361, %v3345
  %v5106 = vpack.c.b16 %v3362, %v3346
  %v5107 = vpack.c.b16 %v3363, %v3347
  %v5108 = vpack.c.b16 %v3364, %v3348
  %v5109 = vpack.c.b16 %v3365, %v3349
  %v5110 = vpack.c.b16 %v3366, %v3350
  %v5111 = vpack.c.b16 %v3367, %v3351
  %v5112 = vpack.c.b16 %v3368, %v3352
  %v5113 = vpack.c.b16 %v3369, %v3353
  %v5114 = vpack.c.b16 %v3370, %v3354
  %v5115 = vpack.c.b16 %v3371, %v3355
  %v5116 = vpack.c.b16 %v3372, %v3356
  %v5117 = vpack.c.b16 %v3373, %v3357
  %v5118 = vpack.c.b16 %v3374, %v3358
  %v5119 = vpack.c.b16 %v3391, %v3375
  %v5120 = vpack.c.b16 %v3392, %v3376
  %v5121 = vpack.c.b16 %v3393, %v3377
  %v5122 = vpack.c.b16 %v3394, %v3378
  %v5123 = vpack.c.b16 %v3395, %v3379
  %v5124 = vpack.c.b16 %v3396, %v3380
  %v5125 = vpack.c.b16 %v3397, %v3381
  %v5126 = vpack.c.b16 %v3398, %v3382
  %v5127 = vpack.c.b16 %v3399, %v3383
  %v5128 = vpack.c.b16 %v3400, %v3384
  %v5129 = vpack.c.b16 %v3401, %v3385
  %v5130 = vpack.c.b16 %v3402, %v3386
  %v5131 = vpack.c.b16 %v3403, %v3387
  %v5132 = vpack.c.b16 %v3404, %v3388
  %v5133 = vpack.c.b16 %v3405, %v3389
  %v5134 = vpack.c.b16 %v3406, %v3390
  %v5135 = vpack.c.b16 %v3423, %v3407
  %v5136 = vpack.c.b16 %v3424, %v3408
  %v5137 = vpack.c.b16 %v3425, %v3409
  %v5138 = vpack.c.b16 %v3426, %v3410
  %v5139 = vpack.c.b16 %v3427, %v3411
  %v5140 = vpack.c.b16 %v3428, %v3412
  %v5141 = vpack.c.b16 %v3429, %v3413
  %v5142 = vpack.c.b16 %v3430, %v3414
  %v5143 = vpack.c.b16 %v3431, %v3415
  %v5144 = vpack.c.b16 %v3432, %v3416
  %v5145 = vpack.c.b16 %v3433, %v3417
  %v5146 = vpack.c.b16 %v3434, %v3418
  %v5147 = vpack.c.b16 %v3435, %v3419
  %v5148 = vpack.c.b16 %v3436, %v3420
  %v5149 = vpack.c.b16 %v3437, %v3421
  %v5150 = vpack.c.b16 %v3438, %v3422
  %v5151 = vpack.c.b16 %v3455, %v3439
  %v5152 = vpack.c.b16 %v3456, %v3440
  %v5153 = vpack.c.b16 %v3457, %v3441
  %v5154 = vpack.c.b16 %v3458, %v3442
  %v5155 = vpack.c.b16 %v3459, %v3443
  %v5156 = vpack.c.b16 %v3460, %v3444
  %v5157 = vpack.c.b16 %v3461, %v3445
  %v5158 = vpack.c.b16 %v3462, %v3446
  %v5159 = vpack.c.b16 %v3463, %v3447
  %v5160 = vpack.c.b16 %v3464, %v3448
  %v5161 = vpack.c.b16 %v3465, %v3449
  %v5162 = vpack.c.b16 %v3466, %v3450
  %v5163 = vpack.c.b16 %v3467, %v3451
  %v5164 = vpack.c.b16 %v3468, %v3452
  %v5165 = vpack.c.b16 %v3469, %v3453
  %v5166 = vpack.c.b16 %v3470, %v3454
  %v5167 = vpack.c.b16 %v3487, %v3471
  %v5168 = vpack.c.b16 %v3488, %v3472
  %v5169 = vpack.c.b16 %v3489, %v3473
  %v5170 = vpack.c.b16 %v3490, %v3474
  %v5171 = vpack.c.b16 %v3491, %v3475
  %v5172 = vpack.c.b16 %v3492, %v3476
  %v5173 = vpack.c.b16 %v3493, %v3477
  %v5174 = vpack.c.b16 %v3494, %v3478
  %v5175 = vpack.c.b16 %v3495, %v3479
  %v5176 = vpack.c.b16 %v3496, %v3480
  %v5177 = vpack.c.b16 %v3497, %v3481
  %v5178 = vpack.c.b16 %v3498, %v3482
  %v5179 = vpack.c.b16 %v3499, %v3483
  %v5180 = vpack.c.b16 %v3500, %v3484
  %v5181 = vpack.c.b16 %v3501, %v3485
  %v5182 = vpack.c.b16 %v3502, %v3486
  %v5183 = vpack.c.b16 %v3519, %v3503
  %v5184 = vpack.c.b16 %v3520, %v3504
  %v5185 = vpack.c.b16 %v3521, %v3505
  %v5186 = vpack.c.b16 %v3522, %v3506
  %v5187 = vpack.c.b16 %v3523, %v3507
  %v5188 = vpack.c.b16 %v3524, %v3508
  %v5189 = vpack.c.b16 %v3525, %v3509
  %v5190 = vpack.c.b16 %v3526, %v3510
  %v5191 = vpack.c.b16 %v3527, %v3511
  %v5192 = vpack.c.b16 %v3528, %v3512
  %v5193 = vpack.c.b16 %v3529, %v3513
  %v5194 = vpack.c.b16 %v3530, %v3514
  %v5195 = vpack.c.b16 %v3531, %v3515
  %v5196 = vpack.c.b16 %v3532, %v3516
  %v5197 = vpack.c.b16 %v3533, %v3517
  %v5198 = vpack.c.b16 %v3534, %v3518
  %v5199 = vpack.c.b16 %v3551, %v3535
  %v5200 = vpack.c.b16 %v3552, %v3536
  %v5201 = vpack.c.b16 %v3553, %v3537
  %v5202 = vpack.c.b16 %v3554, %v3538
  %v5203 = vpack.c.b16 %v3555, %v3539
  %v5204 = vpack.c.b16 %v3556, %v3540
  %v5205 = vpack.c.b16 %v3557, %v3541
  %v5206 = vpack.c.b16 %v3558, %v3542
  %v5207 = vpack.c.b16 %v3559, %v3543
  %v5208 = vpack.c.b16 %v3560, %v3544
  %v5209 = vpack.c.b16 %v3561, %v3545
  %v5210 = vpack.c.b16 %v3562, %v3546
  %v5211 = vpack.c.b16 %v3563, %v3547
  %v5212 = vpack.c.b16 %v3564, %v3548
  %v5213 = vpack.c.b16 %v3565, %v3549
  %v5214 = vpack.c.b16 %v3566, %v3550
  %v5215 = vpack.c.b16 %v3583, %v3567
  %v5216 = vpack.c.b16 %v3584, %v3568
  %v5217 = vpack.c.b16 %v3585, %v3569
  %v5218 = vpack.c.b16 %v3586, %v3570
  %v5219 = vpack.c.b16 %v3587, %v3571
  %v5220 = vpack.c.b16 %v3588, %v3572
  %v5221 = vpack.c.b16 %v3589, %v3573
  %v5222 = vpack.c.b16 %v3590, %v3574
  %v5223 = vpack.c.b16 %v3591, %v3575
  %v5224 = vpack.c.b16 %v3592, %v3576
  %v5225 = vpack.c.b16 %v3593, %v3577
  %v5226 = vpack.c.b16 %v3594, %v3578
  %v5227 = vpack.c.b16 %v3595, %v3579
  %v5228 = vpack.c.b16 %v3596, %v3580
  %v5229 = vpack.c.b16 %v3597, %v3581
  %v5230 = vpack.c.b16 %v3598, %v3582
  %v5231 = vpack.c.b16 %v3615, %v3599
  %v5232 = vpack.c.b16 %v3616, %v3600
  %v5233 = vpack.c.b16 %v3617, %v3601
  %v5234 = vpack.c.b16 %v3618, %v3602
  %v5235 = vpack.c.b16 %v3619, %v3603
  %v5236 = vpack.c.b16 %v3620, %v3604
  %v5237 = vpack.c.b16 %v3621, %v3605
  %v5238 = vpack.c.b16 %v3622, %v3606
  %v5239 = vpack.c.b16 %v3623, %v3607
  %v5240 = vpack.c.b16 %v3624, %v3608
  %v5241 = vpack.c.b16 %v3625, %v3609
  %v5242 = vpack.c.b16 %v3626, %v3610
  %v5243 = vpack.c.b16 %v3627, %v3611
  %v5244 = vpack.c.b16 %v3628, %v3612
  %v5245 = vpack.c.b16 %v3629, %v3613
  %v5246 = vpack.c.b16 %v3630, %v3614
  %v5247 = vpack.c.b16 %v3647, %v3631
  %v5248 = vpack.c.b16 %v3648, %v3632
  %v5249 = vpack.c.b16 %v3649, %v3633
  %v5250 = vpack.c.b16 %v3650, %v3634
  %v5251 = vpack.c.b16 %v3651, %v3635
  %v5252 = vpack.c.b16 %v3652, %v3636
  %v5253 = vpack.c.b16 %v3653, %v3637
  %v5254 = vpack.c.b16 %v3654, %v3638
  %v5255 = vpack.c.b16 %v3655, %v3639
  %v5256 = vpack.c.b16 %v3656, %v3640
  %v5257 = vpack.c.b16 %v3657, %v3641
  %v5258 = vpack.c.b16 %v3658, %v3642
  %v5259 = vpack.c.b16 %v3659, %v3643
  %v5260 = vpack.c.b16 %v3660, %v3644
  %v5261 = vpack.c.b16 %v3661, %v3645
  %v5262 = vpack.c.b16 %v3662, %v3646
  %v5263 = vpack.c.b16 %v3679, %v3663
  %v5264 = vpack.c.b16 %v3680, %v3664
  %v5265 = vpack.c.b16 %v3681, %v3665
  %v5266 = vpack.c.b16 %v3682, %v3666
  %v5267 = vpack.c.b16 %v3683, %v3667
  %v5268 = vpack.c.b16 %v3684, %v3668
  %v5269 = vpack.c.b16 %v3685, %v3669
  %v5270 = vpack.c.b16 %v3686, %v3670
  %v5271 = vpack.c.b16 %v3687, %v3671
  %v5272 = vpack.c.b16 %v3688, %v3672
  %v5273 = vpack.c.b16 %v3689, %v3673
  %v5274 = vpack.c.b16 %v3690, %v3674
  %v5275 = vpack.c.b16 %v3691, %v3675
  %v5276 = vpack.c.b16 %v3692, %v3676
  %v5277 = vpack.c.b16 %v3693, %v3677
  %v5278 = vpack.c.b16 %v3694, %v3678
  %v5279 = vpack.c.b16 %v3711, %v3695
  %v5280 = vpack.c.b16 %v3712, %v3696
  %v5281 = vpack.c.b16 %v3713, %v3697
  %v5282 = vpack.c.b16 %v3714, %v3698
  %v5283 = vpack.c.b16 %v3715, %v3699
  %v5284 = vpack.c.b16 %v3716, %v3700
  %v5285 = vpack.c.b16 %v3717, %v3701
  %v5286 = vpack.c.b16 %v3718, %v3702
  %v5287 = vpack.c.b16 %v3719, %v3703
  %v5288 = vpack.c.b16 %v3720, %v3704
  %v5289 = vpack.c.b16 %v3721, %v3705
  %v5290 = vpack.c.b16 %v3722, %v3706
  %v5291 = vpack.c.b16 %v3723, %v3707
  %v5292 = vpack.c.b16 %v3724, %v3708
  %v5293 = vpack.c.b16 %v3725, %v3709
  %v5294 = vpack.c.b16 %v3726, %v3710
  %v5295 = vpack.c.b16 %v3743, %v3727
  %v5296 = vpack.c.b16 %v3744, %v3728
  %v5297 = vpack.c.b16 %v3745, %v3729
  %v5298 = vpack.c.b16 %v3746, %v3730
  %v5299 = vpack.c.b16 %v3747, %v3731
  %v5300 = vpack.c.b16 %v3748, %v3732
  %v5301 = vpack.c.b16 %v3749, %v3733
  %v5302 = vpack.c.b16 %v3750, %v3734
  %v5303 = vpack.c.b16 %v3751, %v3735
  %v5304 = vpack.c.b16 %v3752, %v3736
  %v5305 = vpack.c.b16 %v3753, %v3737
  %v5306 = vpack.c.b16 %v3754, %v3738
  %v5307 = vpack.c.b16 %v3755, %v3739
  %v5308 = vpack.c.b16 %v3756, %v3740
  %v5309 = vpack.c.b16 %v3757, %v3741
  %v5310 = vpack.c.b16 %v3758, %v3742
  %v5311 = vpack.c.b16 %v3775, %v3759
  %v5312 = vpack.c.b16 %v3776, %v3760
  %v5313 = vpack.c.b16 %v3777, %v3761
  %v5314 = vpack.c.b16 %v3778, %v3762
  %v5315 = vpack.c.b16 %v3779, %v3763
  %v5316 = vpack.c.b16 %v3780, %v3764
  %v5317 = vpack.c.b16 %v3781, %v3765
  %v5318 = vpack.c.b16 %v3782, %v3766
  %v5319 = vpack.c.b16 %v3783, %v3767
  %v5320 = vpack.c.b16 %v3784, %v3768
  %v5321 = vpack.c.b16 %v3785, %v3769
  %v5322 = vpack.c.b16 %v3786, %v3770
  %v5323 = vpack.c.b16 %v3787, %v3771
  %v5324 = vpack.c.b16 %v3788, %v3772
  %v5325 = vpack.c.b16 %v3789, %v3773
  %v5326 = vpack.c.b16 %v3790, %v3774
  %v5327 = vpack.c.b16 %v3807, %v3791
  %v5328 = vpack.c.b16 %v3808, %v3792
  %v5329 = vpack.c.b16 %v3809, %v3793
  %v5330 = vpack.c.b16 %v3810, %v3794
  %v5331 = vpack.c.b16 %v3811, %v3795
  %v5332 = vpack.c.b16 %v3812, %v3796
  %v5333 = vpack.c.b16 %v3813, %v3797
  %v5334 = vpack.c.b16 %v3814, %v3798
  %v5335 = vpack.c.b16 %v3815, %v3799
  %v5336 = vpack.c.b16 %v3816, %v3800
  %v5337 = vpack.c.b16 %v3817, %v3801
  %v5338 = vpack.c.b16 %v3818, %v3802
  %v5339 = vpack.c.b16 %v3819, %v3803
  %v5340 = vpack.c.b16 %v3820, %v3804
  %v5341 = vpack.c.b16 %v3821, %v3805
  %v5342 = vpack.c.b16 %v3822, %v3806
  %v5343 = vpack.c.b16 %v3839, %v3823
  %v5344 = vpack.c.b16 %v3840, %v3824
  %v5345 = vpack.c.b16 %v3841, %v3825
  %v5346 = vpack.c.b16 %v3842, %v3826
  %v5347 = vpack.c.b16 %v3843, %v3827
  %v5348 = vpack.c.b16 %v3844, %v3828
  %v5349 = vpack.c.b16 %v3845, %v3829
  %v5350 = vpack.c.b16 %v3846, %v3830
  %v5351 = vpack.c.b16 %v3847, %v3831
  %v5352 = vpack.c.b16 %v3848, %v3832
  %v5353 = vpack.c.b16 %v3849, %v3833
  %v5354 = vpack.c.b16 %v3850, %v3834
  %v5355 = vpack.c.b16 %v3851, %v3835
  %v5356 = vpack.c.b16 %v3852, %v3836
  %v5357 = vpack.c.b16 %v3853, %v3837
  %v5358 = vpack.c.b16 %v3854, %v3838
  %v5359 = vpack.c.b16 %v3871, %v3855
  %v5360 = vpack.c.b16 %v3872, %v3856
  %v5361 = vpack.c.b16 %v3873, %v3857
  %v5362 = vpack.c.b16 %v3874, %v3858
  %v5363 = vpack.c.b16 %v3875, %v3859
  %v5364 = vpack.c.b16 %v3876, %v3860
  %v5365 = vpack.c.b16 %v3877, %v3861
  %v5366 = vpack.c.b16 %v3878, %v3862
  %v5367 = vpack.c.b16 %v3879, %v3863
  %v5368 = vpack.c.b16 %v3880, %v3864
  %v5369 = vpack.c.b16 %v3881, %v3865
  %v5370 = vpack.c.b16 %v3882, %v3866
  %v5371 = vpack.c.b16 %v3883, %v3867
  %v5372 = vpack.c.b16 %v3884, %v3868
  %v5373 = vpack.c.b16 %v3885, %v3869
  %v5374 = vpack.c.b16 %v3886, %v3870
  %v5375 = vpack.c.b16 %v3903, %v3887
  %v5376 = vpack.c.b16 %v3904, %v3888
  %v5377 = vpack.c.b16 %v3905, %v3889
  %v5378 = vpack.c.b16 %v3906, %v3890
  %v5379 = vpack.c.b16 %v3907, %v3891
  %v5380 = vpack.c.b16 %v3908, %v3892
  %v5381 = vpack.c.b16 %v3909, %v3893
  %v5382 = vpack.c.b16 %v3910, %v3894
  %v5383 = vpack.c.b16 %v3911, %v3895
  %v5384 = vpack.c.b16 %v3912, %v3896
  %v5385 = vpack.c.b16 %v3913, %v3897
  %v5386 = vpack.c.b16 %v3914, %v3898
  %v5387 = vpack.c.b16 %v3915, %v3899
  %v5388 = vpack.c.b16 %v3916, %v3900
  %v5389 = vpack.c.b16 %v3917, %v3901
  %v5390 = vpack.c.b16 %v3918, %v3902
  %v5391 = vpack.c.b16 %v3935, %v3919
  %v5392 = vpack.c.b16 %v3936, %v3920
  %v5393 = vpack.c.b16 %v3937, %v3921
  %v5394 = vpack.c.b16 %v3938, %v3922
  %v5395 = vpack.c.b16 %v3939, %v3923
  %v5396 = vpack.c.b16 %v3940, %v3924
  %v5397 = vpack.c.b16 %v3941, %v3925
  %v5398 = vpack.c.b16 %v3942, %v3926
  %v5399 = vpack.c.b16 %v3943, %v3927
  %v5400 = vpack.c.b16 %v3944, %v3928
  %v5401 = vpack.c.b16 %v3945, %v3929
  %v5402 = vpack.c.b16 %v3946, %v3930
  %v5403 = vpack.c.b16 %v3947, %v3931
  %v5404 = vpack.c.b16 %v3948, %v3932
  %v5405 = vpack.c.b16 %v3949, %v3933
  %v5406 = vpack.c.b16 %v3950, %v3934
  %v5407 = vpack.c.b16 %v3967, %v3951
  %v5408 = vpack.c.b16 %v3968, %v3952
  %v5409 = vpack.c.b16 %v3969, %v3953
  %v5410 = vpack.c.b16 %v3970, %v3954
  %v5411 = vpack.c.b16 %v3971, %v3955
  %v5412 = vpack.c.b16 %v3972, %v3956
  %v5413 = vpack.c.b16 %v3973, %v3957
  %v5414 = vpack.c.b16 %v3974, %v3958
  %v5415 = vpack.c.b16 %v3975, %v3959
  %v5416 = vpack.c.b16 %v3976, %v3960
  %v5417 = vpack.c.b16 %v3977, %v3961
  %v5418 = vpack.c.b16 %v3978, %v3962
  %v5419 = vpack.c.b16 %v3979, %v3963
  %v5420 = vpack.c.b16 %v3980, %v3964
  %v5421 = vpack.c.b16 %v3981, %v3965
  %v5422 = vpack.c.b16 %v3982, %v3966
  %v5423 = vpack.c.b16 %v3999, %v3983
  %v5424 = vpack.c.b16 %v4000, %v3984
  %v5425 = vpack.c.b16 %v4001, %v3985
  %v5426 = vpack.c.b16 %v4002, %v3986
  %v5427 = vpack.c.b16 %v4003, %v3987
  %v5428 = vpack.c.b16 %v4004, %v3988
  %v5429 = vpack.c.b16 %v4005, %v3989
  %v5430 = vpack.c.b16 %v4006, %v3990
  %v5431 = vpack.c.b16 %v4007, %v3991
  %v5432 = vpack.c.b16 %v4008, %v3992
  %v5433 = vpack.c.b16 %v4009, %v3993
  %v5434 = vpack.c.b16 %v4010, %v3994
  %v5435 = vpack.c.b16 %v4011, %v3995
  %v5436 = vpack.c.b16 %v4012, %v3996
  %v5437 = vpack.c.b16 %v4013, %v3997
  %v5438 = vpack.c.b16 %v4014, %v3998
  %v5439 = vpack.c.b16 %v4031, %v4015
  %v5440 = vpack.c.b16 %v4032, %v4016
  %v5441 = vpack.c.b16 %v4033, %v4017
  %v5442 = vpack.c.b16 %v4034, %v4018
  %v5443 = vpack.c.b16 %v4035, %v4019
  %v5444 = vpack.c.b16 %v4036, %v4020
  %v5445 = vpack.c.b16 %v4037, %v4021
  %v5446 = vpack.c.b16 %v4038, %v4022
  %v5447 = vpack.c.b16 %v4039, %v4023
  %v5448 = vpack.c.b16 %v4040, %v4024
  %v5449 = vpack.c.b16 %v4041, %v4025
  %v5450 = vpack.c.b16 %v4042, %v4026
  %v5451 = vpack.c.b16 %v4043, %v4027
  %v5452 = vpack.c.b16 %v4044, %v4028
  %v5453 = vpack.c.b16 %v4045, %v4029
  %v5454 = vpack.c.b16 %v4046, %v4030
  %v5455 = vpack.c.b16 %v4063, %v4047
  %v5456 = vpack.c.b16 %v4064, %v4048
  %v5457 = vpack.c.b16 %v4065, %v4049
  %v5458 = vpack.c.b16 %v4066, %v4050
  %v5459 = vpack.c.b16 %v4067, %v4051
  %v5460 = vpack.c.b16 %v4068, %v4052
  %v5461 = vpack.c.b16 %v4069, %v4053
  %v5462 = vpack.c.b16 %v4070, %v4054
  %v5463 = vpack.c.b16 %v4071, %v4055
  %v5464 = vpack.c.b16 %v4072, %v4056
  %v5465 = vpack.c.b16 %v4073, %v4057
  %v5466 = vpack.c.b16 %v4074, %v4058
  %v5467 = vpack.c.b16 %v4075, %v4059
  %v5468 = vpack.c.b16 %v4076, %v4060
  %v5469 = vpack.c.b16 %v4077, %v4061
  %v5470 = vpack.c.b16 %v4078, %v4062
  %v5471 = vpack.c.b16 %v4095, %v4079
  %v5472 = vpack.c.b16 %v4096, %v4080
  %v5473 = vpack.c.b16 %v4097, %v4081
  %v5474 = vpack.c.b16 %v4098, %v4082
  %v5475 = vpack.c.b16 %v4099, %v4083
  %v5476 = vpack.c.b16 %v4100, %v4084
  %v5477 = vpack.c.b16 %v4101, %v4085
  %v5478 = vpack.c.b16 %v4102, %v4086
  %v5479 = vpack.c.b16 %v4103, %v4087
  %v5480 = vpack.c.b16 %v4104, %v4088
  %v5481 = vpack.c.b16 %v4105, %v4089
  %v5482 = vpack.c.b16 %v4106, %v4090
  %v5483 = vpack.c.b16 %v4107, %v4091
  %v5484 = vpack.c.b16 %v4108, %v4092
  %v5485 = vpack.c.b16 %v4109, %v4093
  %v5486 = vpack.c.b16 %v4110, %v4094
  %v5487 = vpack.c.b16 %v4127, %v4111
  %v5488 = vpack.c.b16 %v4128, %v4112
  %v5489 = vpack.c.b16 %v4129, %v4113
  %v5490 = vpack.c.b16 %v4130, %v4114
  %v5491 = vpack.c.b16 %v4131, %v4115
  %v5492 = vpack.c.b16 %v4132, %v4116
  %v5493 = vpack.c.b16 %v4133, %v4117
  %v5494 = vpack.c.b16 %v4134, %v4118
  %v5495 = vpack.c.b16 %v4135, %v4119
  %v5496 = vpack.c.b16 %v4136, %v4120
  %v5497 = vpack.c.b16 %v4137, %v4121
  %v5498 = vpack.c.b16 %v4138, %v4122
  %v5499 = vpack.c.b16 %v4139, %v4123
  %v5500 = vpack.c.b16 %v4140, %v4124
  %v5501 = vpack.c.b16 %v4141, %v4125
  %v5502 = vpack.c.b16 %v4142, %v4126
  %v5503 = vpack.c.b16 %v4159, %v4143
  %v5504 = vpack.c.b16 %v4160, %v4144
  %v5505 = vpack.c.b16 %v4161, %v4145
  %v5506 = vpack.c.b16 %v4162, %v4146
  %v5507 = vpack.c.b16 %v4163, %v4147
  %v5508 = vpack.c.b16 %v4164, %v4148
  %v5509 = vpack.c.b16 %v4165, %v4149
  %v5510 = vpack.c.b16 %v4166, %v4150
  %v5511 = vpack.c.b16 %v4167, %v4151
  %v5512 = vpack.c.b16 %v4168, %v4152
  %v5513 = vpack.c.b16 %v4169, %v4153
  %v5514 = vpack.c.b16 %v4170, %v4154
  %v5515 = vpack.c.b16 %v4171, %v4155
  %v5516 = vpack.c.b16 %v4172, %v4156
  %v5517 = vpack.c.b16 %v4173, %v4157
  %v5518 = vpack.c.b16 %v4174, %v4158
  %v5519 = vpack.c.b16 %v4191, %v4175
  %v5520 = vpack.c.b16 %v4192, %v4176
  %v5521 = vpack.c.b16 %v4193, %v4177
  %v5522 = vpack.c.b16 %v4194, %v4178
  %v5523 = vpack.c.b16 %v4195, %v4179
  %v5524 = vpack.c.b16 %v4196, %v4180
  %v5525 = vpack.c.b16 %v4197, %v4181
  %v5526 = vpack.c.b16 %v4198, %v4182
  %v5527 = vpack.c.b16 %v4199, %v4183
  %v5528 = vpack.c.b16 %v4200, %v4184
  %v5529 = vpack.c.b16 %v4201, %v4185
  %v5530 = vpack.c.b16 %v4202, %v4186
  %v5531 = vpack.c.b16 %v4203, %v4187
  %v5532 = vpack.c.b16 %v4204, %v4188
  %v5533 = vpack.c.b16 %v4205, %v4189
  %v5534 = vpack.c.b16 %v4206, %v4190
  %v5535 = vpack.c.b16 %v4223, %v4207
  %v5536 = vpack.c.b16 %v4224, %v4208
  %v5537 = vpack.c.b16 %v4225, %v4209
  %v5538 = vpack.c.b16 %v4226, %v4210
  %v5539 = vpack.c.b16 %v4227, %v4211
  %v5540 = vpack.c.b16 %v4228, %v4212
  %v5541 = vpack.c.b16 %v4229, %v4213
  %v5542 = vpack.c.b16 %v4230, %v4214
  %v5543 = vpack.c.b16 %v4231, %v4215
  %v5544 = vpack.c.b16 %v4232, %v4216
  %v5545 = vpack.c.b16 %v4233, %v4217
  %v5546 = vpack.c.b16 %v4234, %v4218
  %v5547 = vpack.c.b16 %v4235, %v4219
  %v5548 = vpack.c.b16 %v4236, %v4220
  %v5549 = vpack.c.b16 %v4237, %v4221
  %v5550 = vpack.c.b16 %v4238, %v4222
  %v5551 = vpack.c.b16 %v4255, %v4239
  %v5552 = vpack.c.b16 %v4256, %v4240
  %v5553 = vpack.c.b16 %v4257, %v4241
  %v5554 = vpack.c.b16 %v4258, %v4242
  %v5555 = vpack.c.b16 %v4259, %v4243
  %v5556 = vpack.c.b16 %v4260, %v4244
  %v5557 = vpack.c.b16 %v4261, %v4245
  %v5558 = vpack.c.b16 %v4262, %v4246
  %v5559 = vpack.c.b16 %v4263, %v4247
  %v5560 = vpack.c.b16 %v4264, %v4248
  %v5561 = vpack.c.b16 %v4265, %v4249
  %v5562 = vpack.c.b16 %v4266, %v4250
  %v5563 = vpack.c.b16 %v4267, %v4251
  %v5564 = vpack.c.b16 %v4268, %v4252
  %v5565 = vpack.c.b16 %v4269, %v4253
  %v5566 = vpack.c.b16 %v4270, %v4254
  %v5567 = vpack.c.b16 %v4287, %v4271
  %v5568 = vpack.c.b16 %v4288, %v4272
  %v5569 = vpack.c.b16 %v4289, %v4273
  %v5570 = vpack.c.b16 %v4290, %v4274
  %v5571 = vpack.c.b16 %v4291, %v4275
  %v5572 = vpack.c.b16 %v4292, %v4276
  %v5573 = vpack.c.b16 %v4293, %v4277
  %v5574 = vpack.c.b16 %v4294, %v4278
  %v5575 = vpack.c.b16 %v4295, %v4279
  %v5576 = vpack.c.b16 %v4296, %v4280
  %v5577 = vpack.c.b16 %v4297, %v4281
  %v5578 = vpack.c.b16 %v4298, %v4282
  %v5579 = vpack.c.b16 %v4299, %v4283
  %v5580 = vpack.c.b16 %v4300, %v4284
  %v5581 = vpack.c.b16 %v4301, %v4285
  %v5582 = vpack.c.b16 %v4302, %v4286
  %v5583 = vpack.c.b16 %v4319, %v4303
  %v5584 = vpack.c.b16 %v4320, %v4304
  %v5585 = vpack.c.b16 %v4321, %v4305
  %v5586 = vpack.c.b16 %v4322, %v4306
  %v5587 = vpack.c.b16 %v4323, %v4307
  %v5588 = vpack.c.b16 %v4324, %v4308
  %v5589 = vpack.c.b16 %v4325, %v4309
  %v5590 = vpack.c.b16 %v4326, %v4310
  %v5591 = vpack.c.b16 %v4327, %v4311
  %v5592 = vpack.c.b16 %v4328, %v4312
  %v5593 = vpack.c.b16 %v4329, %v4313
  %v5594 = vpack.c.b16 %v4330, %v4314
  %v5595 = vpack.c.b16 %v4331, %v4315
  %v5596 = vpack.c.b16 %v4332, %v4316
  %v5597 = vpack.c.b16 %v4333, %v4317
  %v5598 = vpack.c.b16 %v4334, %v4318
  %v5599 = vpack.c.b16 %v4351, %v4335
  %v5600 = vpack.c.b16 %v4352, %v4336
  %v5601 = vpack.c.b16 %v4353, %v4337
  %v5602 = vpack.c.b16 %v4354, %v4338
  %v5603 = vpack.c.b16 %v4355, %v4339
  %v5604 = vpack.c.b16 %v4356, %v4340
  %v5605 = vpack.c.b16 %v4357, %v4341
  %v5606 = vpack.c.b16 %v4358, %v4342
  %v5607 = vpack.c.b16 %v4359, %v4343
  %v5608 = vpack.c.b16 %v4360, %v4344
  %v5609 = vpack.c.b16 %v4361, %v4345
  %v5610 = vpack.c.b16 %v4362, %v4346
  %v5611 = vpack.c.b16 %v4363, %v4347
  %v5612 = vpack.c.b16 %v4364, %v4348
  %v5613 = vpack.c.b16 %v4365, %v4349
  %v5614 = vpack.c.b16 %v4366, %v4350
  %v5615 = vpack.c.b16 %v4383, %v4367
  %v5616 = vpack.c.b16 %v4384, %v4368
  %v5617 = vpack.c.b16 %v4385, %v4369
  %v5618 = vpack.c.b16 %v4386, %v4370
  %v5619 = vpack.c.b16 %v4387, %v4371
  %v5620 = vpack.c.b16 %v4388, %v4372
  %v5621 = vpack.c.b16 %v4389, %v4373
  %v5622 = vpack.c.b16 %v4390, %v4374
  %v5623 = vpack.c.b16 %v4391, %v4375
  %v5624 = vpack.c.b16 %v4392, %v4376
  %v5625 = vpack.c.b16 %v4393, %v4377
  %v5626 = vpack.c.b16 %v4394, %v4378
  %v5627 = vpack.c.b16 %v4395, %v4379
  %v5628 = vpack.c.b16 %v4396, %v4380
  %v5629 = vpack.c.b16 %v4397, %v4381
  %v5630 = vpack.c.b16 %v4398, %v4382
  %v5631 = vpack.c.b16 %v4415, %v4399
  %v5632 = vpack.c.b16 %v4416, %v4400
  %v5633 = vpack.c.b16 %v4417, %v4401
  %v5634 = vpack.c.b16 %v4418, %v4402
  %v5635 = vpack.c.b16 %v4419, %v4403
  %v5636 = vpack.c.b16 %v4420, %v4404
  %v5637 = vpack.c.b16 %v4421, %v4405
  %v5638 = vpack.c.b16 %v4422, %v4406
  %v5639 = vpack.c.b16 %v4423, %v4407
  %v5640 = vpack.c.b16 %v4424, %v4408
  %v5641 = vpack.c.b16 %v4425, %v4409
  %v5642 = vpack.c.b16 %v4426, %v4410
  %v5643 = vpack.c.b16 %v4427, %v4411
  %v5644 = vpack.c.b16 %v4428, %v4412
  %v5645 = vpack.c.b16 %v4429, %v4413
  %v5646 = vpack.c.b16 %v4430, %v4414
  %v5647 = vpack.c.b16 %v4447, %v4431
  %v5648 = vpack.c.b16 %v4448, %v4432
  %v5649 = vpack.c.b16 %v4449, %v4433
  %v5650 = vpack.c.b16 %v4450, %v4434
  %v5651 = vpack.c.b16 %v4451, %v4435
  %v5652 = vpack.c.b16 %v4452, %v4436
  %v5653 = vpack.c.b16 %v4453, %v4437
  %v5654 = vpack.c.b16 %v4454, %v4438
  %v5655 = vpack.c.b16 %v4455, %v4439
  %v5656 = vpack.c.b16 %v4456, %v4440
  %v5657 = vpack.c.b16 %v4457, %v4441
  %v5658 = vpack.c.b16 %v4458, %v4442
  %v5659 = vpack.c.b16 %v4459, %v4443
  %v5660 = vpack.c.b16 %v4460, %v4444
  %v5661 = vpack.c.b16 %v4461, %v4445
  %v5662 = vpack.c.b16 %v4462, %v4446
  %v5663 = vpack.c.b16 %v4479, %v4463
  %v5664 = vpack.c.b16 %v4480, %v4464
  %v5665 = vpack.c.b16 %v4481, %v4465
  %v5666 = vpack.c.b16 %v4482, %v4466
  %v5667 = vpack.c.b16 %v4483, %v4467
  %v5668 = vpack.c.b16 %v4484, %v4468
  %v5669 = vpack.c.b16 %v4485, %v4469
  %v5670 = vpack.c.b16 %v4486, %v4470
  %v5671 = vpack.c.b16 %v4487, %v4471
  %v5672 = vpack.c.b16 %v4488, %v4472
  %v5673 = vpack.c.b16 %v4489, %v4473
  %v5674 = vpack.c.b16 %v4490, %v4474
  %v5675 = vpack.c.b16 %v4491, %v4475
  %v5676 = vpack.c.b16 %v4492, %v4476
  %v5677 = vpack.c.b16 %v4493, %v4477
  %v5678 = vpack.c.b16 %v4494, %v4478
  %v5679 = vpack.c.b16 %v4511, %v4495
  %v5680 = vpack.c.b16 %v4512, %v4496
  %v5681 = vpack.c.b16 %v4513, %v4497
  %v5682 = vpack.c.b16 %v4514, %v4498
  %v5683 = vpack.c.b16 %v4515, %v4499
  %v5684 = vpack.c.b16 %v4516, %v4500
  %v5685 = vpack.c.b16 %v4517, %v4501
  %v5686 = vpack.c.b16 %v4518, %v4502
  %v5687 = vpack.c.b16 %v4519, %v4503
  %v5688 = vpack.c.b16 %v4520, %v4504
  %v5689 = vpack.c.b16 %v4521, %v4505
  %v5690 = vpack.c.b16 %v4522, %v4506
  %v5691 = vpack.c.b16 %v4523, %v4507
  %v5692 = vpack.c.b16 %v4524, %v4508
  %v5693 = vpack.c.b16 %v4525, %v4509
  %v5694 = vpack.c.b16 %v4526, %v4510
  %v5695 = vpack.c.b16 %v4543, %v4527
  %v5696 = vpack.c.b16 %v4544, %v4528
  %v5697 = vpack.c.b16 %v4545, %v4529
  %v5698 = vpack.c.b16 %v4546, %v4530
  %v5699 = vpack.c.b16 %v4547, %v4531
  %v5700 = vpack.c.b16 %v4548, %v4532
  %v5701 = vpack.c.b16 %v4549, %v4533
  %v5702 = vpack.c.b16 %v4550, %v4534
  %v5703 = vpack.c.b16 %v4551, %v4535
  %v5704 = vpack.c.b16 %v4552, %v4536
  %v5705 = vpack.c.b16 %v4553, %v4537
  %v5706 = vpack.c.b16 %v4554, %v4538
  %v5707 = vpack.c.b16 %v4555, %v4539
  %v5708 = vpack.c.b16 %v4556, %v4540
  %v5709 = vpack.c.b16 %v4557, %v4541
  %v5710 = vpack.c.b16 %v4558, %v4542
  %v5711 = vpack.c.b16 %v4575, %v4559
  %v5712 = vpack.c.b16 %v4576, %v4560
  %v5713 = vpack.c.b16 %v4577, %v4561
  %v5714 = vpack.c.b16 %v4578, %v4562
  %v5715 = vpack.c.b16 %v4579, %v4563
  %v5716 = vpack.c.b16 %v4580, %v4564
  %v5717 = vpack.c.b16 %v4581, %v4565
  %v5718 = vpack.c.b16 %v4582, %v4566
  %v5719 = vpack.c.b16 %v4583, %v4567
  %v5720 = vpack.c.b16 %v4584, %v4568
  %v5721 = vpack.c.b16 %v4585, %v4569
  %v5722 = vpack.c.b16 %v4586, %v4570
  %v5723 = vpack.c.b16 %v4587, %v4571
  %v5724 = vpack.c.b16 %v4588, %v4572
  %v5725 = vpack.c.b16 %v4589, %v4573
  %v5726 = vpack.c.b16 %v4590, %v4574
  %v5727 = vpack.c.b16 %v4607, %v4591
  %v5728 = vpack.c.b16 %v4608, %v4592
  %v5729 = vpack.c.b16 %v4609, %v4593
  %v5730 = vpack.c.b16 %v4610, %v4594
  %v5731 = vpack.c.b16 %v4611, %v4595
  %v5732 = vpack.c.b16 %v4612, %v4596
  %v5733 = vpack.c.b16 %v4613, %v4597
  %v5734 = vpack.c.b16 %v4614, %v4598
  %v5735 = vpack.c.b16 %v4615, %v4599
  %v5736 = vpack.c.b16 %v4616, %v4600
  %v5737 = vpack.c.b16 %v4617, %v4601
  %v5738 = vpack.c.b16 %v4618, %v4602
  %v5739 = vpack.c.b16 %v4619, %v4603
  %v5740 = vpack.c.b16 %v4620, %v4604
  %v5741 = vpack.c.b16 %v4621, %v4605
  %v5742 = vpack.c.b16 %v4622, %v4606
  %v5743 = vpack.c.b16 %v4639, %v4623
  %v5744 = vpack.c.b16 %v4640, %v4624
  %v5745 = vpack.c.b16 %v4641, %v4625
  %v5746 = vpack.c.b16 %v4642, %v4626
  %v5747 = vpack.c.b16 %v4643, %v4627
  %v5748 = vpack.c.b16 %v4644, %v4628
  %v5749 = vpack.c.b16 %v4645, %v4629
  %v5750 = vpack.c.b16 %v4646, %v4630
  %v5751 = vpack.c.b16 %v4647, %v4631
  %v5752 = vpack.c.b16 %v4648, %v4632
  %v5753 = vpack.c.b16 %v4649, %v4633
  %v5754 = vpack.c.b16 %v4650, %v4634
  %v5755 = vpack.c.b16 %v4651, %v4635
  %v5756 = vpack.c.b16 %v4652, %v4636
  %v5757 = vpack.c.b16 %v4653, %v4637
  %v5758 = vpack.c.b16 %v4654, %v4638
  %v5759 = vpack.c.b16 %v4671, %v4655
  %v5760 = vpack.c.b16 %v4672, %v4656
  %v5761 = vpack.c.b16 %v4673, %v4657
  %v5762 = vpack.c.b16 %v4674, %v4658
  %v5763 = vpack.c.b16 %v4675, %v4659
  %v5764 = vpack.c.b16 %v4676, %v4660
  %v5765 = vpack.c.b16 %v4677, %v4661
  %v5766 = vpack.c.b16 %v4678, %v4662
  %v5767 = vpack.c.b16 %v4679, %v4663
  %v5768 = vpack.c.b16 %v4680, %v4664
  %v5769 = vpack.c.b16 %v4681, %v4665
  %v5770 = vpack.c.b16 %v4682, %v4666
  %v5771 = vpack.c.b16 %v4683, %v4667
  %v5772 = vpack.c.b16 %v4684, %v4668
  %v5773 = vpack.c.b16 %v4685, %v4669
  %v5774 = vpack.c.b16 %v4686, %v4670
  %v5775 = vpack.c.b16 %v4703, %v4687
  %v5776 = vpack.c.b16 %v4704, %v4688
  %v5777 = vpack.c.b16 %v4705, %v4689
  %v5778 = vpack.c.b16 %v4706, %v4690
  %v5779 = vpack.c.b16 %v4707, %v4691
  %v5780 = vpack.c.b16 %v4708, %v4692
  %v5781 = vpack.c.b16 %v4709, %v4693
  %v5782 = vpack.c.b16 %v4710, %v4694
  %v5783 = vpack.c.b16 %v4711, %v4695
  %v5784 = vpack.c.b16 %v4712, %v4696
  %v5785 = vpack.c.b16 %v4713, %v4697
  %v5786 = vpack.c.b16 %v4714, %v4698
  %v5787 = vpack.c.b16 %v4715, %v4699
  %v5788 = vpack.c.b16 %v4716, %v4700
  %v5789 = vpack.c.b16 %v4717, %v4701
  %v5790 = vpack.c.b16 %v4718, %v4702
  %v5791 = vpack.c.b16 %v4735, %v4719
  %v5792 = vpack.c.b16 %v4736, %v4720
  %v5793 = vpack.c.b16 %v4737, %v4721
  %v5794 = vpack.c.b16 %v4738, %v4722
  %v5795 = vpack.c.b16 %v4739, %v4723
  %v5796 = vpack.c.b16 %v4740, %v4724
  %v5797 = vpack.c.b16 %v4741, %v4725
  %v5798 = vpack.c.b16 %v4742, %v4726
  %v5799 = vpack.c.b16 %v4743, %v4727
  %v5800 = vpack.c.b16 %v4744, %v4728
  %v5801 = vpack.c.b16 %v4745, %v4729
  %v5802 = vpack.c.b16 %v4746, %v4730
  %v5803 = vpack.c.b16 %v4747, %v4731
  %v5804 = vpack.c.b16 %v4748, %v4732
  %v5805 = vpack.c.b16 %v4749, %v4733
  %v5806 = vpack.c.b16 %v4750, %v4734
  %v5807 = vpack.c.b16 %v4767, %v4751
  %v5808 = vpack.c.b16 %v4768, %v4752
  %v5809 = vpack.c.b16 %v4769, %v4753
  %v5810 = vpack.c.b16 %v4770, %v4754
  %v5811 = vpack.c.b16 %v4771, %v4755
  %v5812 = vpack.c.b16 %v4772, %v4756
  %v5813 = vpack.c.b16 %v4773, %v4757
  %v5814 = vpack.c.b16 %v4774, %v4758
  %v5815 = vpack.c.b16 %v4775, %v4759
  %v5816 = vpack.c.b16 %v4776, %v4760
  %v5817 = vpack.c.b16 %v4777, %v4761
  %v5818 = vpack.c.b16 %v4778, %v4762
  %v5819 = vpack.c.b16 %v4779, %v4763
  %v5820 = vpack.c.b16 %v4780, %v4764
  %v5821 = vpack.c.b16 %v4781, %v4765
  %v5822 = vpack.c.b16 %v4782, %v4766
  %v5823 = vpack.c.b16 %v4799, %v4783
  %v5824 = vpack.c.b16 %v4800, %v4784
  %v5825 = vpack.c.b16 %v4801, %v4785
  %v5826 = vpack.c.b16 %v4802, %v4786
  %v5827 = vpack.c.b16 %v4803, %v4787
  %v5828 = vpack.c.b16 %v4804, %v4788
  %v5829 = vpack.c.b16 %v4805, %v4789
  %v5830 = vpack.c.b16 %v4806, %v4790
  %v5831 = vpack.c.b16 %v4807, %v4791
  %v5832 = vpack.c.b16 %v4808, %v4792
  %v5833 = vpack.c.b16 %v4809, %v4793
  %v5834 = vpack.c.b16 %v4810, %v4794
  %v5835 = vpack.c.b16 %v4811, %v4795
  %v5836 = vpack.c.b16 %v4812, %v4796
  %v5837 = vpack.c.b16 %v4813, %v4797
  %v5838 = vpack.c.b16 %v4814, %v4798
  %6863 = vmatprep.subr.bf16.mxu0 %v4816
  %6864 = vmatpush1.bf16.msra.mxu0 %v4815
  %6865 = vmatprep.subr.bf16.mxu0 %v4832
  %6866 = vmatpush1.bf16.msra.mxu0 %v4831
  %6867 = vmatprep.subr.bf16.mxu0 %v4848
  %6868 = vmatpush1.bf16.msra.mxu0 %v4847
  %6869 = vmatprep.subr.bf16.mxu0 %v4864
  %6870 = vmatpush1.bf16.msra.mxu0 %v4863
  %6871 = vmatprep.subr.bf16.mxu0 %v4880
  %6872 = vmatpush1.bf16.msra.mxu0 %v4879
  %6873 = vmatprep.subr.bf16.mxu0 %v4896
  %6874 = vmatpush1.bf16.msra.mxu0 %v4895
  %6875 = vmatprep.subr.bf16.mxu0 %v4912
  %6876 = vmatpush1.bf16.msra.mxu0 %v4911
  %6877 = vmatprep.subr.bf16.mxu0 %v4928
  %6878 = vmatpush1.bf16.msra.mxu0 %v4927
  %6879 = vmatprep.subr.bf16.mxu0 %v4944
  %6880 = vmatpush1.bf16.msra.mxu0 %v4943
  %6881 = vmatprep.subr.bf16.mxu0 %v4960
  %6882 = vmatpush1.bf16.msra.mxu0 %v4959
  %6883 = vmatprep.subr.bf16.mxu0 %v4976
  %6884 = vmatpush1.bf16.msra.mxu0 %v4975
  %6885 = vmatprep.subr.bf16.mxu0 %v4992
  %6886 = vmatpush1.bf16.msra.mxu0 %v4991
  %6887 = vmatprep.subr.bf16.mxu0 %v5008
  %6888 = vmatpush1.bf16.msra.mxu0 %v5007
  %6889 = vmatprep.subr.bf16.mxu0 %v5024
  %6890 = vmatpush1.bf16.msra.mxu0 %v5023
  %6891 = vmatprep.subr.bf16.mxu0 %v5040
  %6892 = vmatpush1.bf16.msra.mxu0 %v5039
  %6893 = vmatprep.subr.bf16.mxu0 %v5056
  %6894 = vmatpush1.bf16.msra.mxu0 %v5055
  %6895 = vmatprep.mubr.bf16.mxu0 %v628
  %6896 = vmatmul.mubr.bf16.gmra.mrb[0].mxu0 %v627
  %v6897 = vpop.f32.mrb[0].mxu0
  %v6898 = vadd.f32 %v1666, %v6897
  %v6899 = vpop.f32.mrb[0].mxu0
  %v6900 = vadd.f32 %v1670, %v6899
  %v6901 = vpop.f32.mrb[0].mxu0
  %v6902 = vpop.f32.mrb[0].mxu0
  %6903 = vdwg.mxu0
  %6904 = vmatprep.subr.bf16.mxu0 %v5072
  %6905 = vmatpush1.bf16.msra.mxu0 %v5071
  %6906 = vmatprep.subr.bf16.mxu0 %v5088
  %6907 = vmatpush1.bf16.msra.mxu0 %v5087
  %6908 = vmatprep.subr.bf16.mxu0 %v5104
  %6909 = vmatpush1.bf16.msra.mxu0 %v5103
  %6910 = vmatprep.subr.bf16.mxu0 %v5120
  %6911 = vmatpush1.bf16.msra.mxu0 %v5119
  %6912 = vmatprep.subr.bf16.mxu0 %v5136
  %6913 = vmatpush1.bf16.msra.mxu0 %v5135
  %6914 = vmatprep.subr.bf16.mxu0 %v5152
  %6915 = vmatpush1.bf16.msra.mxu0 %v5151
  %6916 = vmatprep.subr.bf16.mxu0 %v5168
  %6917 = vmatpush1.bf16.msra.mxu0 %v5167
  %6918 = vmatprep.subr.bf16.mxu0 %v5184
  %6919 = vmatpush1.bf16.msra.mxu0 %v5183
  %6920 = vmatprep.subr.bf16.mxu0 %v5200
  %6921 = vmatpush1.bf16.msra.mxu0 %v5199
  %6922 = vmatprep.subr.bf16.mxu0 %v5216
  %6923 = vmatpush1.bf16.msra.mxu0 %v5215
  %6924 = vmatprep.subr.bf16.mxu0 %v5232
  %6925 = vmatpush1.bf16.msra.mxu0 %v5231
  %6926 = vmatprep.subr.bf16.mxu0 %v5248
  %6927 = vmatpush1.bf16.msra.mxu0 %v5247
  %6928 = vmatprep.subr.bf16.mxu0 %v5264
  %6929 = vmatpush1.bf16.msra.mxu0 %v5263
  %6930 = vmatprep.subr.bf16.mxu0 %v5280
  %6931 = vmatpush1.bf16.msra.mxu0 %v5279
  %6932 = vmatprep.subr.bf16.mxu0 %v5296
  %6933 = vmatpush1.bf16.msra.mxu0 %v5295
  %6934 = vmatprep.subr.bf16.mxu0 %v5312
  %6935 = vmatpush1.bf16.msra.mxu0 %v5311
  %6936 = vmatprep.mubr.bf16.mxu0 %v630
  %6937 = vmatmul.mubr.bf16.gmra.mrb[0].mxu0 %v629
  %v6938 = vpop.f32.mrb[0].mxu0
  %v6939 = vadd.f32 %v6898, %v6938
  %v6940 = vpop.f32.mrb[0].mxu0
  %v6941 = vadd.f32 %v6900, %v6940
  %v6942 = vpop.f32.mrb[0].mxu0
  %v6943 = vpop.f32.mrb[0].mxu0
  %6944 = vdwg.mxu0
  %6945 = vmatprep.subr.bf16.mxu0 %v5328
  %6946 = vmatpush1.bf16.msra.mxu0 %v5327
  %6947 = vmatprep.subr.bf16.mxu0 %v5344
  %6948 = vmatpush1.bf16.msra.mxu0 %v5343
  %6949 = vmatprep.subr.bf16.mxu0 %v5360
  %6950 = vmatpush1.bf16.msra.mxu0 %v5359
  %6951 = vmatprep.subr.bf16.mxu0 %v5376
  %6952 = vmatpush1.bf16.msra.mxu0 %v5375
  %6953 = vmatprep.subr.bf16.mxu0 %v5392
  %6954 = vmatpush1.bf16.msra.mxu0 %v5391
  %6955 = vmatprep.subr.bf16.mxu0 %v5408
  %6956 = vmatpush1.bf16.msra.mxu0 %v5407
  %6957 = vmatprep.subr.bf16.mxu0 %v5424
  %6958 = vmatpush1.bf16.msra.mxu0 %v5423
  %6959 = vmatprep.subr.bf16.mxu0 %v5440
  %6960 = vmatpush1.bf16.msra.mxu0 %v5439
  %6961 = vmatprep.subr.bf16.mxu0 %v5456
  %6962 = vmatpush1.bf16.msra.mxu0 %v5455
  %6963 = vmatprep.subr.bf16.mxu0 %v5472
  %6964 = vmatpush1.bf16.msra.mxu0 %v5471
  %6965 = vmatprep.subr.bf16.mxu0 %v5488
  %6966 = vmatpush1.bf16.msra.mxu0 %v5487
  %6967 = vmatprep.subr.bf16.mxu0 %v5504
  %6968 = vmatpush1.bf16.msra.mxu0 %v5503
  %6969 = vmatprep.subr.bf16.mxu0 %v5520
  %6970 = vmatpush1.bf16.msra.mxu0 %v5519
  %6971 = vmatprep.subr.bf16.mxu0 %v5536
  %6972 = vmatpush1.bf16.msra.mxu0 %v5535
  %6973 = vmatprep.subr.bf16.mxu0 %v5552
  %6974 = vmatpush1.bf16.msra.mxu0 %v5551
  %6975 = vmatprep.subr.bf16.mxu0 %v5568
  %6976 = vmatpush1.bf16.msra.mxu0 %v5567
  %6977 = vmatprep.mubr.bf16.mxu0 %v632
  %6978 = vmatmul.mubr.bf16.gmra.mrb[0].mxu0 %v631
  %v6979 = vpop.f32.mrb[0].mxu0
  %v6980 = vadd.f32 %v6939, %v6979
  %v6981 = vpop.f32.mrb[0].mxu0
  %v6982 = vadd.f32 %v6941, %v6981
  %v6983 = vpop.f32.mrb[0].mxu0
  %v6984 = vpop.f32.mrb[0].mxu0
  %6985 = vdwg.mxu0
  %6986 = vmatprep.subr.bf16.mxu0 %v5584
  %6987 = vmatpush1.bf16.msra.mxu0 %v5583
  %6988 = vmatprep.subr.bf16.mxu0 %v5600
  %6989 = vmatpush1.bf16.msra.mxu0 %v5599
  %6990 = vmatprep.subr.bf16.mxu0 %v5616
  %6991 = vmatpush1.bf16.msra.mxu0 %v5615
  %6992 = vmatprep.subr.bf16.mxu0 %v5632
  %6993 = vmatpush1.bf16.msra.mxu0 %v5631
  %6994 = vmatprep.subr.bf16.mxu0 %v5648
  %6995 = vmatpush1.bf16.msra.mxu0 %v5647
  %6996 = vmatprep.subr.bf16.mxu0 %v5664
  %6997 = vmatpush1.bf16.msra.mxu0 %v5663
  %6998 = vmatprep.subr.bf16.mxu0 %v5680
  %6999 = vmatpush1.bf16.msra.mxu0 %v5679
  %7000 = vmatprep.subr.bf16.mxu0 %v5696
  %7001 = vmatpush1.bf16.msra.mxu0 %v5695
  %7002 = vmatprep.subr.bf16.mxu0 %v5712
  %7003 = vmatpush1.bf16.msra.mxu0 %v5711
  %7004 = vmatprep.subr.bf16.mxu0 %v5728
  %7005 = vmatpush1.bf16.msra.mxu0 %v5727
  %7006 = vmatprep.subr.bf16.mxu0 %v5744
  %7007 = vmatpush1.bf16.msra.mxu0 %v5743
  %7008 = vmatprep.subr.bf16.mxu0 %v5760
  %7009 = vmatpush1.bf16.msra.mxu0 %v5759
  %7010 = vmatprep.subr.bf16.mxu0 %v5776
  %7011 = vmatpush1.bf16.msra.mxu0 %v5775
  %7012 = vmatprep.subr.bf16.mxu0 %v5792
  %7013 = vmatpush1.bf16.msra.mxu0 %v5791
  %7014 = vmatprep.subr.bf16.mxu0 %v5808
  %7015 = vmatpush1.bf16.msra.mxu0 %v5807
  %7016 = vmatprep.subr.bf16.mxu0 %v5824
  %7017 = vmatpush1.bf16.msra.mxu0 %v5823
  %7018 = vmatprep.mubr.bf16.mxu0 %v634
  %7019 = vmatmul.mubr.bf16.gmra.mrb[0].mxu0 %v633
  %v7020 = vpop.f32.mrb[0].mxu0
  %v7021 = vadd.f32 %v6980, %v7020
  %v7022 = vpop.f32.mrb[0].mxu0
  %v7023 = vadd.f32 %v6982, %v7022
  %v7024 = vpop.f32.mrb[0].mxu0
  %v7025 = vpop.f32.mrb[0].mxu0
  %7026 = vdwg.mxu0
  %7027 = vmatprep.subr.bf16.mxu0 %v4818
  %7028 = vmatpush1.bf16.msra.mxu0 %v4817
  %7029 = vmatprep.subr.bf16.mxu0 %v4834
  %7030 = vmatpush1.bf16.msra.mxu0 %v4833
  %7031 = vmatprep.subr.bf16.mxu0 %v4850
  %7032 = vmatpush1.bf16.msra.mxu0 %v4849
  %7033 = vmatprep.subr.bf16.mxu0 %v4866
  %7034 = vmatpush1.bf16.msra.mxu0 %v4865
  %7035 = vmatprep.subr.bf16.mxu0 %v4882
  %7036 = vmatpush1.bf16.msra.mxu0 %v4881
  %7037 = vmatprep.subr.bf16.mxu0 %v4898
  %7038 = vmatpush1.bf16.msra.mxu0 %v4897
  %7039 = vmatprep.subr.bf16.mxu0 %v4914
  %7040 = vmatpush1.bf16.msra.mxu0 %v4913
  %7041 = vmatprep.subr.bf16.mxu0 %v4930
  %7042 = vmatpush1.bf16.msra.mxu0 %v4929
  %7043 = vmatprep.subr.bf16.mxu0 %v4946
  %7044 = vmatpush1.bf16.msra.mxu0 %v4945
  %7045 = vmatprep.subr.bf16.mxu0 %v4962
  %7046 = vmatpush1.bf16.msra.mxu0 %v4961
  %7047 = vmatprep.subr.bf16.mxu0 %v4978
  %7048 = vmatpush1.bf16.msra.mxu0 %v4977
  %7049 = vmatprep.subr.bf16.mxu0 %v4994
  %7050 = vmatpush1.bf16.msra.mxu0 %v4993
  %7051 = vmatprep.subr.bf16.mxu0 %v5010
  %7052 = vmatpush1.bf16.msra.mxu0 %v5009
  %7053 = vmatprep.subr.bf16.mxu0 %v5026
  %7054 = vmatpush1.bf16.msra.mxu0 %v5025
  %7055 = vmatprep.subr.bf16.mxu0 %v5042
  %7056 = vmatpush1.bf16.msra.mxu0 %v5041
  %7057 = vmatprep.subr.bf16.mxu0 %v5058
  %7058 = vmatpush1.bf16.msra.mxu0 %v5057
  %7059 = vmatprep.mubr.bf16.mxu0 %v628
  %7060 = vmatmul.mubr.bf16.gmra.mrb[0].mxu0 %v627
  %v7061 = vpop.f32.mrb[0].mxu0
  %v7062 = vadd.f32 %v1674, %v7061
  %v7063 = vpop.f32.mrb[0].mxu0
  %v7064 = vadd.f32 %v1678, %v7063
  %v7065 = vpop.f32.mrb[0].mxu0
  %v7066 = vpop.f32.mrb[0].mxu0
  %7067 = vdwg.mxu0
  %7068 = vmatprep.subr.bf16.mxu0 %v5074
  %7069 = vmatpush1.bf16.msra.mxu0 %v5073
  %7070 = vmatprep.subr.bf16.mxu0 %v5090
  %7071 = vmatpush1.bf16.msra.mxu0 %v5089
  %7072 = vmatprep.subr.bf16.mxu0 %v5106
  %7073 = vmatpush1.bf16.msra.mxu0 %v5105
  %7074 = vmatprep.subr.bf16.mxu0 %v5122
  %7075 = vmatpush1.bf16.msra.mxu0 %v5121
  %7076 = vmatprep.subr.bf16.mxu0 %v5138
  %7077 = vmatpush1.bf16.msra.mxu0 %v5137
  %7078 = vmatprep.subr.bf16.mxu0 %v5154
  %7079 = vmatpush1.bf16.msra.mxu0 %v5153
  %7080 = vmatprep.subr.bf16.mxu0 %v5170
  %7081 = vmatpush1.bf16.msra.mxu0 %v5169
  %7082 = vmatprep.subr.bf16.mxu0 %v5186
  %7083 = vmatpush1.bf16.msra.mxu0 %v5185
  %7084 = vmatprep.subr.bf16.mxu0 %v5202
  %7085 = vmatpush1.bf16.msra.mxu0 %v5201
  %7086 = vmatprep.subr.bf16.mxu0 %v5218
  %7087 = vmatpush1.bf16.msra.mxu0 %v5217
  %7088 = vmatprep.subr.bf16.mxu0 %v5234
  %7089 = vmatpush1.bf16.msra.mxu0 %v5233
  %7090 = vmatprep.subr.bf16.mxu0 %v5250
  %7091 = vmatpush1.bf16.msra.mxu0 %v5249
  %7092 = vmatprep.subr.bf16.mxu0 %v5266
  %7093 = vmatpush1.bf16.msra.mxu0 %v5265
  %7094 = vmatprep.subr.bf16.mxu0 %v5282
  %7095 = vmatpush1.bf16.msra.mxu0 %v5281
  %7096 = vmatprep.subr.bf16.mxu0 %v5298
  %7097 = vmatpush1.bf16.msra.mxu0 %v5297
  %7098 = vmatprep.subr.bf16.mxu0 %v5314
  %7099 = vmatpush1.bf16.msra.mxu0 %v5313
  %7100 = vmatprep.mubr.bf16.mxu0 %v630
  %7101 = vmatmul.mubr.bf16.gmra.mrb[0].mxu0 %v629
  %v7102 = vpop.f32.mrb[0].mxu0
  %v7103 = vadd.f32 %v7062, %v7102
  %v7104 = vpop.f32.mrb[0].mxu0
  %v7105 = vadd.f32 %v7064, %v7104
  %v7106 = vpop.f32.mrb[0].mxu0
  %v7107 = vpop.f32.mrb[0].mxu0
  %7108 = vdwg.mxu0
  %7109 = vmatprep.subr.bf16.mxu0 %v5330
  %7110 = vmatpush1.bf16.msra.mxu0 %v5329
  %7111 = vmatprep.subr.bf16.mxu0 %v5346
  %7112 = vmatpush1.bf16.msra.mxu0 %v5345
  %7113 = vmatprep.subr.bf16.mxu0 %v5362
  %7114 = vmatpush1.bf16.msra.mxu0 %v5361
  %7115 = vmatprep.subr.bf16.mxu0 %v5378
  %7116 = vmatpush1.bf16.msra.mxu0 %v5377
  %7117 = vmatprep.subr.bf16.mxu0 %v5394
  %7118 = vmatpush1.bf16.msra.mxu0 %v5393
  %7119 = vmatprep.subr.bf16.mxu0 %v5410
  %7120 = vmatpush1.bf16.msra.mxu0 %v5409
  %7121 = vmatprep.subr.bf16.mxu0 %v5426
  %7122 = vmatpush1.bf16.msra.mxu0 %v5425
  %7123 = vmatprep.subr.bf16.mxu0 %v5442
  %7124 = vmatpush1.bf16.msra.mxu0 %v5441
  %7125 = vmatprep.subr.bf16.mxu0 %v5458
  %7126 = vmatpush1.bf16.msra.mxu0 %v5457
  %7127 = vmatprep.subr.bf16.mxu0 %v5474
  %7128 = vmatpush1.bf16.msra.mxu0 %v5473
  %7129 = vmatprep.subr.bf16.mxu0 %v5490
  %7130 = vmatpush1.bf16.msra.mxu0 %v5489
  %7131 = vmatprep.subr.bf16.mxu0 %v5506
  %7132 = vmatpush1.bf16.msra.mxu0 %v5505
  %7133 = vmatprep.subr.bf16.mxu0 %v5522
  %7134 = vmatpush1.bf16.msra.mxu0 %v5521
  %7135 = vmatprep.subr.bf16.mxu0 %v5538
  %7136 = vmatpush1.bf16.msra.mxu0 %v5537
  %7137 = vmatprep.subr.bf16.mxu0 %v5554
  %7138 = vmatpush1.bf16.msra.mxu0 %v5553
  %7139 = vmatprep.subr.bf16.mxu0 %v5570
  %7140 = vmatpush1.bf16.msra.mxu0 %v5569
  %7141 = vmatprep.mubr.bf16.mxu0 %v632
  %7142 = vmatmul.mubr.bf16.gmra.mrb[0].mxu0 %v631
  %v7143 = vpop.f32.mrb[0].mxu0
  %v7144 = vadd.f32 %v7103, %v7143
  %v7145 = vpop.f32.mrb[0].mxu0
  %v7146 = vadd.f32 %v7105, %v7145
  %v7147 = vpop.f32.mrb[0].mxu0
  %v7148 = vpop.f32.mrb[0].mxu0
  %7149 = vdwg.mxu0
  %7150 = vmatprep.subr.bf16.mxu0 %v5586
  %7151 = vmatpush1.bf16.msra.mxu0 %v5585
  %7152 = vmatprep.subr.bf16.mxu0 %v5602
  %7153 = vmatpush1.bf16.msra.mxu0 %v5601
  %7154 = vmatprep.subr.bf16.mxu0 %v5618
  %7155 = vmatpush1.bf16.msra.mxu0 %v5617
  %7156 = vmatprep.subr.bf16.mxu0 %v5634
  %7157 = vmatpush1.bf16.msra.mxu0 %v5633
  %7158 = vmatprep.subr.bf16.mxu0 %v5650
  %7159 = vmatpush1.bf16.msra.mxu0 %v5649
  %7160 = vmatprep.subr.bf16.mxu0 %v5666
  %7161 = vmatpush1.bf16.msra.mxu0 %v5665
  %7162 = vmatprep.subr.bf16.mxu0 %v5682
  %7163 = vmatpush1.bf16.msra.mxu0 %v5681
  %7164 = vmatprep.subr.bf16.mxu0 %v5698
  %7165 = vmatpush1.bf16.msra.mxu0 %v5697
  %7166 = vmatprep.subr.bf16.mxu0 %v5714
  %7167 = vmatpush1.bf16.msra.mxu0 %v5713
  %7168 = vmatprep.subr.bf16.mxu0 %v5730
  %7169 = vmatpush1.bf16.msra.mxu0 %v5729
  %7170 = vmatprep.subr.bf16.mxu0 %v5746
  %7171 = vmatpush1.bf16.msra.mxu0 %v5745
  %7172 = vmatprep.subr.bf16.mxu0 %v5762
  %7173 = vmatpush1.bf16.msra.mxu0 %v5761
  %7174 = vmatprep.subr.bf16.mxu0 %v5778
  %7175 = vmatpush1.bf16.msra.mxu0 %v5777
  %7176 = vmatprep.subr.bf16.mxu0 %v5794
  %7177 = vmatpush1.bf16.msra.mxu0 %v5793
  %7178 = vmatprep.subr.bf16.mxu0 %v5810
  %7179 = vmatpush1.bf16.msra.mxu0 %v5809
  %7180 = vmatprep.subr.bf16.mxu0 %v5826
  %7181 = vmatpush1.bf16.msra.mxu0 %v5825
  %7182 = vmatprep.mubr.bf16.mxu0 %v634
  %7183 = vmatmul.mubr.bf16.gmra.mrb[0].mxu0 %v633
  %v7184 = vpop.f32.mrb[0].mxu0
  %v7185 = vadd.f32 %v7144, %v7184
  %v7186 = vpop.f32.mrb[0].mxu0
  %v7187 = vadd.f32 %v7146, %v7186
  %v7188 = vpop.f32.mrb[0].mxu0
  %v7189 = vpop.f32.mrb[0].mxu0
  %7190 = vdwg.mxu0
  %7191 = vmatprep.subr.bf16.mxu0 %v4820
  %7192 = vmatpush1.bf16.msra.mxu0 %v4819
  %7193 = vmatprep.subr.bf16.mxu0 %v4836
  %7194 = vmatpush1.bf16.msra.mxu0 %v4835
  %7195 = vmatprep.subr.bf16.mxu0 %v4852
  %7196 = vmatpush1.bf16.msra.mxu0 %v4851
  %7197 = vmatprep.subr.bf16.mxu0 %v4868
  %7198 = vmatpush1.bf16.msra.mxu0 %v4867
  %7199 = vmatprep.subr.bf16.mxu0 %v4884
  %7200 = vmatpush1.bf16.msra.mxu0 %v4883
  %7201 = vmatprep.subr.bf16.mxu0 %v4900
  %7202 = vmatpush1.bf16.msra.mxu0 %v4899
  %7203 = vmatprep.subr.bf16.mxu0 %v4916
  %7204 = vmatpush1.bf16.msra.mxu0 %v4915
  %7205 = vmatprep.subr.bf16.mxu0 %v4932
  %7206 = vmatpush1.bf16.msra.mxu0 %v4931
  %7207 = vmatprep.subr.bf16.mxu0 %v4948
  %7208 = vmatpush1.bf16.msra.mxu0 %v4947
  %7209 = vmatprep.subr.bf16.mxu0 %v4964
  %7210 = vmatpush1.bf16.msra.mxu0 %v4963
  %7211 = vmatprep.subr.bf16.mxu0 %v4980
  %7212 = vmatpush1.bf16.msra.mxu0 %v4979
  %7213 = vmatprep.subr.bf16.mxu0 %v4996
  %7214 = vmatpush1.bf16.msra.mxu0 %v4995
  %7215 = vmatprep.subr.bf16.mxu0 %v5012
  %7216 = vmatpush1.bf16.msra.mxu0 %v5011
  %7217 = vmatprep.subr.bf16.mxu0 %v5028
  %7218 = vmatpush1.bf16.msra.mxu0 %v5027
  %7219 = vmatprep.subr.bf16.mxu0 %v5044
  %7220 = vmatpush1.bf16.msra.mxu0 %v5043
  %7221 = vmatprep.subr.bf16.mxu0 %v5060
  %7222 = vmatpush1.bf16.msra.mxu0 %v5059
  %7223 = vmatprep.mubr.bf16.mxu0 %v628
  %7224 = vmatmul.mubr.bf16.gmra.mrb[0].mxu0 %v627
  %v7225 = vpop.f32.mrb[0].mxu0
  %v7226 = vadd.f32 %v1682, %v7225
  %v7227 = vpop.f32.mrb[0].mxu0
  %v7228 = vadd.f32 %v1686, %v7227
  %v7229 = vpop.f32.mrb[0].mxu0
  %v7230 = vpop.f32.mrb[0].mxu0
  %7231 = vdwg.mxu0
  %7232 = vmatprep.subr.bf16.mxu0 %v5076
  %7233 = vmatpush1.bf16.msra.mxu0 %v5075
  %7234 = vmatprep.subr.bf16.mxu0 %v5092
  %7235 = vmatpush1.bf16.msra.mxu0 %v5091
  %7236 = vmatprep.subr.bf16.mxu0 %v5108
  %7237 = vmatpush1.bf16.msra.mxu0 %v5107
  %7238 = vmatprep.subr.bf16.mxu0 %v5124
  %7239 = vmatpush1.bf16.msra.mxu0 %v5123
  %7240 = vmatprep.subr.bf16.mxu0 %v5140
  %7241 = vmatpush1.bf16.msra.mxu0 %v5139
  %7242 = vmatprep.subr.bf16.mxu0 %v5156
  %7243 = vmatpush1.bf16.msra.mxu0 %v5155
  %7244 = vmatprep.subr.bf16.mxu0 %v5172
  %7245 = vmatpush1.bf16.msra.mxu0 %v5171
  %7246 = vmatprep.subr.bf16.mxu0 %v5188
  %7247 = vmatpush1.bf16.msra.mxu0 %v5187
  %7248 = vmatprep.subr.bf16.mxu0 %v5204
  %7249 = vmatpush1.bf16.msra.mxu0 %v5203
  %7250 = vmatprep.subr.bf16.mxu0 %v5220
  %7251 = vmatpush1.bf16.msra.mxu0 %v5219
  %7252 = vmatprep.subr.bf16.mxu0 %v5236
  %7253 = vmatpush1.bf16.msra.mxu0 %v5235
  %7254 = vmatprep.subr.bf16.mxu0 %v5252
  %7255 = vmatpush1.bf16.msra.mxu0 %v5251
  %7256 = vmatprep.subr.bf16.mxu0 %v5268
  %7257 = vmatpush1.bf16.msra.mxu0 %v5267
  %7258 = vmatprep.subr.bf16.mxu0 %v5284
  %7259 = vmatpush1.bf16.msra.mxu0 %v5283
  %7260 = vmatprep.subr.bf16.mxu0 %v5300
  %7261 = vmatpush1.bf16.msra.mxu0 %v5299
  %7262 = vmatprep.subr.bf16.mxu0 %v5316
  %7263 = vmatpush1.bf16.msra.mxu0 %v5315
  %7264 = vmatprep.mubr.bf16.mxu0 %v630
  %7265 = vmatmul.mubr.bf16.gmra.mrb[0].mxu0 %v629
  %v7266 = vpop.f32.mrb[0].mxu0
  %v7267 = vadd.f32 %v7226, %v7266
  %v7268 = vpop.f32.mrb[0].mxu0
  %v7269 = vadd.f32 %v7228, %v7268
  %v7270 = vpop.f32.mrb[0].mxu0
  %v7271 = vpop.f32.mrb[0].mxu0
  %7272 = vdwg.mxu0
  %7273 = vmatprep.subr.bf16.mxu0 %v5332
  %7274 = vmatpush1.bf16.msra.mxu0 %v5331
  %7275 = vmatprep.subr.bf16.mxu0 %v5348
  %7276 = vmatpush1.bf16.msra.mxu0 %v5347
  %7277 = vmatprep.subr.bf16.mxu0 %v5364
  %7278 = vmatpush1.bf16.msra.mxu0 %v5363
  %7279 = vmatprep.subr.bf16.mxu0 %v5380
  %7280 = vmatpush1.bf16.msra.mxu0 %v5379
  %7281 = vmatprep.subr.bf16.mxu0 %v5396
  %7282 = vmatpush1.bf16.msra.mxu0 %v5395
  %7283 = vmatprep.subr.bf16.mxu0 %v5412
  %7284 = vmatpush1.bf16.msra.mxu0 %v5411
  %7285 = vmatprep.subr.bf16.mxu0 %v5428
  %7286 = vmatpush1.bf16.msra.mxu0 %v5427
  %7287 = vmatprep.subr.bf16.mxu0 %v5444
  %7288 = vmatpush1.bf16.msra.mxu0 %v5443
  %7289 = vmatprep.subr.bf16.mxu0 %v5460
  %7290 = vmatpush1.bf16.msra.mxu0 %v5459
  %7291 = vmatprep.subr.bf16.mxu0 %v5476
  %7292 = vmatpush1.bf16.msra.mxu0 %v5475
  %7293 = vmatprep.subr.bf16.mxu0 %v5492
  %7294 = vmatpush1.bf16.msra.mxu0 %v5491
  %7295 = vmatprep.subr.bf16.mxu0 %v5508
  %7296 = vmatpush1.bf16.msra.mxu0 %v5507
  %7297 = vmatprep.subr.bf16.mxu0 %v5524
  %7298 = vmatpush1.bf16.msra.mxu0 %v5523
  %7299 = vmatprep.subr.bf16.mxu0 %v5540
  %7300 = vmatpush1.bf16.msra.mxu0 %v5539
  %7301 = vmatprep.subr.bf16.mxu0 %v5556
  %7302 = vmatpush1.bf16.msra.mxu0 %v5555
  %7303 = vmatprep.subr.bf16.mxu0 %v5572
  %7304 = vmatpush1.bf16.msra.mxu0 %v5571
  %7305 = vmatprep.mubr.bf16.mxu0 %v632
  %7306 = vmatmul.mubr.bf16.gmra.mrb[0].mxu0 %v631
  %v7307 = vpop.f32.mrb[0].mxu0
  %v7308 = vadd.f32 %v7267, %v7307
  %v7309 = vpop.f32.mrb[0].mxu0
  %v7310 = vadd.f32 %v7269, %v7309
  %v7311 = vpop.f32.mrb[0].mxu0
  %v7312 = vpop.f32.mrb[0].mxu0
  %7313 = vdwg.mxu0
  %7314 = vmatprep.subr.bf16.mxu0 %v5588
  %7315 = vmatpush1.bf16.msra.mxu0 %v5587
  %7316 = vmatprep.subr.bf16.mxu0 %v5604
  %7317 = vmatpush1.bf16.msra.mxu0 %v5603
  %7318 = vmatprep.subr.bf16.mxu0 %v5620
  %7319 = vmatpush1.bf16.msra.mxu0 %v5619
  %7320 = vmatprep.subr.bf16.mxu0 %v5636
  %7321 = vmatpush1.bf16.msra.mxu0 %v5635
  %7322 = vmatprep.subr.bf16.mxu0 %v5652
  %7323 = vmatpush1.bf16.msra.mxu0 %v5651
  %7324 = vmatprep.subr.bf16.mxu0 %v5668
  %7325 = vmatpush1.bf16.msra.mxu0 %v5667
  %7326 = vmatprep.subr.bf16.mxu0 %v5684
  %7327 = vmatpush1.bf16.msra.mxu0 %v5683
  %7328 = vmatprep.subr.bf16.mxu0 %v5700
  %7329 = vmatpush1.bf16.msra.mxu0 %v5699
  %7330 = vmatprep.subr.bf16.mxu0 %v5716
  %7331 = vmatpush1.bf16.msra.mxu0 %v5715
  %7332 = vmatprep.subr.bf16.mxu0 %v5732
  %7333 = vmatpush1.bf16.msra.mxu0 %v5731
  %7334 = vmatprep.subr.bf16.mxu0 %v5748
  %7335 = vmatpush1.bf16.msra.mxu0 %v5747
  %7336 = vmatprep.subr.bf16.mxu0 %v5764
  %7337 = vmatpush1.bf16.msra.mxu0 %v5763
  %7338 = vmatprep.subr.bf16.mxu0 %v5780
  %7339 = vmatpush1.bf16.msra.mxu0 %v5779
  %7340 = vmatprep.subr.bf16.mxu0 %v5796
  %7341 = vmatpush1.bf16.msra.mxu0 %v5795
  %7342 = vmatprep.subr.bf16.mxu0 %v5812
  %7343 = vmatpush1.bf16.msra.mxu0 %v5811
  %7344 = vmatprep.subr.bf16.mxu0 %v5828
  %7345 = vmatpush1.bf16.msra.mxu0 %v5827
  %7346 = vmatprep.mubr.bf16.mxu0 %v634
  %7347 = vmatmul.mubr.bf16.gmra.mrb[0].mxu0 %v633
  %v7348 = vpop.f32.mrb[0].mxu0
  %v7349 = vadd.f32 %v7308, %v7348
  %v7350 = vpop.f32.mrb[0].mxu0
  %v7351 = vadd.f32 %v7310, %v7350
  %v7352 = vpop.f32.mrb[0].mxu0
  %v7353 = vpop.f32.mrb[0].mxu0
  %7354 = vdwg.mxu0
  %7355 = vmatprep.subr.bf16.mxu0 %v4822
  %7356 = vmatpush1.bf16.msra.mxu0 %v4821
  %7357 = vmatprep.subr.bf16.mxu0 %v4838
  %7358 = vmatpush1.bf16.msra.mxu0 %v4837
  %7359 = vmatprep.subr.bf16.mxu0 %v4854
  %7360 = vmatpush1.bf16.msra.mxu0 %v4853
  %7361 = vmatprep.subr.bf16.mxu0 %v4870
  %7362 = vmatpush1.bf16.msra.mxu0 %v4869
  %7363 = vmatprep.subr.bf16.mxu0 %v4886
  %7364 = vmatpush1.bf16.msra.mxu0 %v4885
  %7365 = vmatprep.subr.bf16.mxu0 %v4902
  %7366 = vmatpush1.bf16.msra.mxu0 %v4901
  %7367 = vmatprep.subr.bf16.mxu0 %v4918
  %7368 = vmatpush1.bf16.msra.mxu0 %v4917
  %7369 = vmatprep.subr.bf16.mxu0 %v4934
  %7370 = vmatpush1.bf16.msra.mxu0 %v4933
  %7371 = vmatprep.subr.bf16.mxu0 %v4950
  %7372 = vmatpush1.bf16.msra.mxu0 %v4949
  %7373 = vmatprep.subr.bf16.mxu0 %v4966
  %7374 = vmatpush1.bf16.msra.mxu0 %v4965
  %7375 = vmatprep.subr.bf16.mxu0 %v4982
  %7376 = vmatpush1.bf16.msra.mxu0 %v4981
  %7377 = vmatprep.subr.bf16.mxu0 %v4998
  %7378 = vmatpush1.bf16.msra.mxu0 %v4997
  %7379 = vmatprep.subr.bf16.mxu0 %v5014
  %7380 = vmatpush1.bf16.msra.mxu0 %v5013
  %7381 = vmatprep.subr.bf16.mxu0 %v5030
  %7382 = vmatpush1.bf16.msra.mxu0 %v5029
  %7383 = vmatprep.subr.bf16.mxu0 %v5046
  %7384 = vmatpush1.bf16.msra.mxu0 %v5045
  %7385 = vmatprep.subr.bf16.mxu0 %v5062
  %7386 = vmatpush1.bf16.msra.mxu0 %v5061
  %7387 = vmatprep.mubr.bf16.mxu0 %v628
  %7388 = vmatmul.mubr.bf16.gmra.mrb[0].mxu0 %v627
  %v7389 = vpop.f32.mrb[0].mxu0
  %v7390 = vadd.f32 %v1690, %v7389
  %v7391 = vpop.f32.mrb[0].mxu0
  %v7392 = vadd.f32 %v1694, %v7391
  %v7393 = vpop.f32.mrb[0].mxu0
  %v7394 = vpop.f32.mrb[0].mxu0
  %7395 = vdwg.mxu0
  %7396 = vmatprep.subr.bf16.mxu0 %v5078
  %7397 = vmatpush1.bf16.msra.mxu0 %v5077
  %7398 = vmatprep.subr.bf16.mxu0 %v5094
  %7399 = vmatpush1.bf16.msra.mxu0 %v5093
  %7400 = vmatprep.subr.bf16.mxu0 %v5110
  %7401 = vmatpush1.bf16.msra.mxu0 %v5109
  %7402 = vmatprep.subr.bf16.mxu0 %v5126
  %7403 = vmatpush1.bf16.msra.mxu0 %v5125
  %7404 = vmatprep.subr.bf16.mxu0 %v5142
  %7405 = vmatpush1.bf16.msra.mxu0 %v5141
  %7406 = vmatprep.subr.bf16.mxu0 %v5158
  %7407 = vmatpush1.bf16.msra.mxu0 %v5157
  %7408 = vmatprep.subr.bf16.mxu0 %v5174
  %7409 = vmatpush1.bf16.msra.mxu0 %v5173
  %7410 = vmatprep.subr.bf16.mxu0 %v5190
  %7411 = vmatpush1.bf16.msra.mxu0 %v5189
  %7412 = vmatprep.subr.bf16.mxu0 %v5206
  %7413 = vmatpush1.bf16.msra.mxu0 %v5205
  %7414 = vmatprep.subr.bf16.mxu0 %v5222
  %7415 = vmatpush1.bf16.msra.mxu0 %v5221
  %7416 = vmatprep.subr.bf16.mxu0 %v5238
  %7417 = vmatpush1.bf16.msra.mxu0 %v5237
  %7418 = vmatprep.subr.bf16.mxu0 %v5254
  %7419 = vmatpush1.bf16.msra.mxu0 %v5253
  %7420 = vmatprep.subr.bf16.mxu0 %v5270
  %7421 = vmatpush1.bf16.msra.mxu0 %v5269
  %7422 = vmatprep.subr.bf16.mxu0 %v5286
  %7423 = vmatpush1.bf16.msra.mxu0 %v5285
  %7424 = vmatprep.subr.bf16.mxu0 %v5302
  %7425 = vmatpush1.bf16.msra.mxu0 %v5301
  %7426 = vmatprep.subr.bf16.mxu0 %v5318
  %7427 = vmatpush1.bf16.msra.mxu0 %v5317
  %7428 = vmatprep.mubr.bf16.mxu0 %v630
  %7429 = vmatmul.mubr.bf16.gmra.mrb[0].mxu0 %v629
  %v7430 = vpop.f32.mrb[0].mxu0
  %v7431 = vadd.f32 %v7390, %v7430
  %v7432 = vpop.f32.mrb[0].mxu0
  %v7433 = vadd.f32 %v7392, %v7432
  %v7434 = vpop.f32.mrb[0].mxu0
  %v7435 = vpop.f32.mrb[0].mxu0
  %7436 = vdwg.mxu0
  %7437 = vmatprep.subr.bf16.mxu0 %v5334
  %7438 = vmatpush1.bf16.msra.mxu0 %v5333
  %7439 = vmatprep.subr.bf16.mxu0 %v5350
  %7440 = vmatpush1.bf16.msra.mxu0 %v5349
  %7441 = vmatprep.subr.bf16.mxu0 %v5366
  %7442 = vmatpush1.bf16.msra.mxu0 %v5365
  %7443 = vmatprep.subr.bf16.mxu0 %v5382
  %7444 = vmatpush1.bf16.msra.mxu0 %v5381
  %7445 = vmatprep.subr.bf16.mxu0 %v5398
  %7446 = vmatpush1.bf16.msra.mxu0 %v5397
  %7447 = vmatprep.subr.bf16.mxu0 %v5414
  %7448 = vmatpush1.bf16.msra.mxu0 %v5413
  %7449 = vmatprep.subr.bf16.mxu0 %v5430
  %7450 = vmatpush1.bf16.msra.mxu0 %v5429
  %7451 = vmatprep.subr.bf16.mxu0 %v5446
  %7452 = vmatpush1.bf16.msra.mxu0 %v5445
  %7453 = vmatprep.subr.bf16.mxu0 %v5462
  %7454 = vmatpush1.bf16.msra.mxu0 %v5461
  %7455 = vmatprep.subr.bf16.mxu0 %v5478
  %7456 = vmatpush1.bf16.msra.mxu0 %v5477
  %7457 = vmatprep.subr.bf16.mxu0 %v5494
  %7458 = vmatpush1.bf16.msra.mxu0 %v5493
  %7459 = vmatprep.subr.bf16.mxu0 %v5510
  %7460 = vmatpush1.bf16.msra.mxu0 %v5509
  %7461 = vmatprep.subr.bf16.mxu0 %v5526
  %7462 = vmatpush1.bf16.msra.mxu0 %v5525
  %7463 = vmatprep.subr.bf16.mxu0 %v5542
  %7464 = vmatpush1.bf16.msra.mxu0 %v5541
  %7465 = vmatprep.subr.bf16.mxu0 %v5558
  %7466 = vmatpush1.bf16.msra.mxu0 %v5557
  %7467 = vmatprep.subr.bf16.mxu0 %v5574
  %7468 = vmatpush1.bf16.msra.mxu0 %v5573
  %7469 = vmatprep.mubr.bf16.mxu0 %v632
  %7470 = vmatmul.mubr.bf16.gmra.mrb[0].mxu0 %v631
  %v7471 = vpop.f32.mrb[0].mxu0
  %v7472 = vadd.f32 %v7431, %v7471
  %v7473 = vpop.f32.mrb[0].mxu0
  %v7474 = vadd.f32 %v7433, %v7473
  %v7475 = vpop.f32.mrb[0].mxu0
  %v7476 = vpop.f32.mrb[0].mxu0
  %7477 = vdwg.mxu0
  %7478 = vmatprep.subr.bf16.mxu0 %v5590
  %7479 = vmatpush1.bf16.msra.mxu0 %v5589
  %7480 = vmatprep.subr.bf16.mxu0 %v5606
  %7481 = vmatpush1.bf16.msra.mxu0 %v5605
  %7482 = vmatprep.subr.bf16.mxu0 %v5622
  %7483 = vmatpush1.bf16.msra.mxu0 %v5621
  %7484 = vmatprep.subr.bf16.mxu0 %v5638
  %7485 = vmatpush1.bf16.msra.mxu0 %v5637
  %7486 = vmatprep.subr.bf16.mxu0 %v5654
  %7487 = vmatpush1.bf16.msra.mxu0 %v5653
  %7488 = vmatprep.subr.bf16.mxu0 %v5670
  %7489 = vmatpush1.bf16.msra.mxu0 %v5669
  %7490 = vmatprep.subr.bf16.mxu0 %v5686
  %7491 = vmatpush1.bf16.msra.mxu0 %v5685
  %7492 = vmatprep.subr.bf16.mxu0 %v5702
  %7493 = vmatpush1.bf16.msra.mxu0 %v5701
  %7494 = vmatprep.subr.bf16.mxu0 %v5718
  %7495 = vmatpush1.bf16.msra.mxu0 %v5717
  %7496 = vmatprep.subr.bf16.mxu0 %v5734
  %7497 = vmatpush1.bf16.msra.mxu0 %v5733
  %7498 = vmatprep.subr.bf16.mxu0 %v5750
  %7499 = vmatpush1.bf16.msra.mxu0 %v5749
  %7500 = vmatprep.subr.bf16.mxu0 %v5766
  %7501 = vmatpush1.bf16.msra.mxu0 %v5765
  %7502 = vmatprep.subr.bf16.mxu0 %v5782
  %7503 = vmatpush1.bf16.msra.mxu0 %v5781
  %7504 = vmatprep.subr.bf16.mxu0 %v5798
  %7505 = vmatpush1.bf16.msra.mxu0 %v5797
  %7506 = vmatprep.subr.bf16.mxu0 %v5814
  %7507 = vmatpush1.bf16.msra.mxu0 %v5813
  %7508 = vmatprep.subr.bf16.mxu0 %v5830
  %7509 = vmatpush1.bf16.msra.mxu0 %v5829
  %7510 = vmatprep.mubr.bf16.mxu0 %v634
  %7511 = vmatmul.mubr.bf16.gmra.mrb[0].mxu0 %v633
  %v7512 = vpop.f32.mrb[0].mxu0
  %v7513 = vadd.f32 %v7472, %v7512
  %v7514 = vpop.f32.mrb[0].mxu0
  %v7515 = vadd.f32 %v7474, %v7514
  %v7516 = vpop.f32.mrb[0].mxu0
  %v7517 = vpop.f32.mrb[0].mxu0
  %7518 = vdwg.mxu0
  %7519 = vmatprep.subr.bf16.mxu0 %v4824
  %7520 = vmatpush1.bf16.msra.mxu0 %v4823
  %7521 = vmatprep.subr.bf16.mxu0 %v4840
  %7522 = vmatpush1.bf16.msra.mxu0 %v4839
  %7523 = vmatprep.subr.bf16.mxu0 %v4856
  %7524 = vmatpush1.bf16.msra.mxu0 %v4855
  %7525 = vmatprep.subr.bf16.mxu0 %v4872
  %7526 = vmatpush1.bf16.msra.mxu0 %v4871
  %7527 = vmatprep.subr.bf16.mxu0 %v4888
  %7528 = vmatpush1.bf16.msra.mxu0 %v4887
  %7529 = vmatprep.subr.bf16.mxu0 %v4904
  %7530 = vmatpush1.bf16.msra.mxu0 %v4903
  %7531 = vmatprep.subr.bf16.mxu0 %v4920
  %7532 = vmatpush1.bf16.msra.mxu0 %v4919
  %7533 = vmatprep.subr.bf16.mxu0 %v4936
  %7534 = vmatpush1.bf16.msra.mxu0 %v4935
  %7535 = vmatprep.subr.bf16.mxu0 %v4952
  %7536 = vmatpush1.bf16.msra.mxu0 %v4951
  %7537 = vmatprep.subr.bf16.mxu0 %v4968
  %7538 = vmatpush1.bf16.msra.mxu0 %v4967
  %7539 = vmatprep.subr.bf16.mxu0 %v4984
  %7540 = vmatpush1.bf16.msra.mxu0 %v4983
  %7541 = vmatprep.subr.bf16.mxu0 %v5000
  %7542 = vmatpush1.bf16.msra.mxu0 %v4999
  %7543 = vmatprep.subr.bf16.mxu0 %v5016
  %7544 = vmatpush1.bf16.msra.mxu0 %v5015
  %7545 = vmatprep.subr.bf16.mxu0 %v5032
  %7546 = vmatpush1.bf16.msra.mxu0 %v5031
  %7547 = vmatprep.subr.bf16.mxu0 %v5048
  %7548 = vmatpush1.bf16.msra.mxu0 %v5047
  %7549 = vmatprep.subr.bf16.mxu0 %v5064
  %7550 = vmatpush1.bf16.msra.mxu0 %v5063
  %7551 = vmatprep.mubr.bf16.mxu0 %v628
  %7552 = vmatmul.mubr.bf16.gmra.mrb[0].mxu0 %v627
  %v7553 = vpop.f32.mrb[0].mxu0
  %v7554 = vadd.f32 %v1698, %v7553
  %v7555 = vpop.f32.mrb[0].mxu0
  %v7556 = vadd.f32 %v1702, %v7555
  %v7557 = vpop.f32.mrb[0].mxu0
  %v7558 = vpop.f32.mrb[0].mxu0
  %7559 = vdwg.mxu0
  %7560 = vmatprep.subr.bf16.mxu0 %v5080
  %7561 = vmatpush1.bf16.msra.mxu0 %v5079
  %7562 = vmatprep.subr.bf16.mxu0 %v5096
  %7563 = vmatpush1.bf16.msra.mxu0 %v5095
  %7564 = vmatprep.subr.bf16.mxu0 %v5112
  %7565 = vmatpush1.bf16.msra.mxu0 %v5111
  %7566 = vmatprep.subr.bf16.mxu0 %v5128
  %7567 = vmatpush1.bf16.msra.mxu0 %v5127
  %7568 = vmatprep.subr.bf16.mxu0 %v5144
  %7569 = vmatpush1.bf16.msra.mxu0 %v5143
  %7570 = vmatprep.subr.bf16.mxu0 %v5160
  %7571 = vmatpush1.bf16.msra.mxu0 %v5159
  %7572 = vmatprep.subr.bf16.mxu0 %v5176
  %7573 = vmatpush1.bf16.msra.mxu0 %v5175
  %7574 = vmatprep.subr.bf16.mxu0 %v5192
  %7575 = vmatpush1.bf16.msra.mxu0 %v5191
  %7576 = vmatprep.subr.bf16.mxu0 %v5208
  %7577 = vmatpush1.bf16.msra.mxu0 %v5207
  %7578 = vmatprep.subr.bf16.mxu0 %v5224
  %7579 = vmatpush1.bf16.msra.mxu0 %v5223
  %7580 = vmatprep.subr.bf16.mxu0 %v5240
  %7581 = vmatpush1.bf16.msra.mxu0 %v5239
  %7582 = vmatprep.subr.bf16.mxu0 %v5256
  %7583 = vmatpush1.bf16.msra.mxu0 %v5255
  %7584 = vmatprep.subr.bf16.mxu0 %v5272
  %7585 = vmatpush1.bf16.msra.mxu0 %v5271
  %7586 = vmatprep.subr.bf16.mxu0 %v5288
  %7587 = vmatpush1.bf16.msra.mxu0 %v5287
  %7588 = vmatprep.subr.bf16.mxu0 %v5304
  %7589 = vmatpush1.bf16.msra.mxu0 %v5303
  %7590 = vmatprep.subr.bf16.mxu0 %v5320
  %7591 = vmatpush1.bf16.msra.mxu0 %v5319
  %7592 = vmatprep.mubr.bf16.mxu0 %v630
  %7593 = vmatmul.mubr.bf16.gmra.mrb[0].mxu0 %v629
  %v7594 = vpop.f32.mrb[0].mxu0
  %v7595 = vadd.f32 %v7554, %v7594
  %v7596 = vpop.f32.mrb[0].mxu0
  %v7597 = vadd.f32 %v7556, %v7596
  %v7598 = vpop.f32.mrb[0].mxu0
  %v7599 = vpop.f32.mrb[0].mxu0
  %7600 = vdwg.mxu0
  %7601 = vmatprep.subr.bf16.mxu0 %v5336
  %7602 = vmatpush1.bf16.msra.mxu0 %v5335
  %7603 = vmatprep.subr.bf16.mxu0 %v5352
  %7604 = vmatpush1.bf16.msra.mxu0 %v5351
  %7605 = vmatprep.subr.bf16.mxu0 %v5368
  %7606 = vmatpush1.bf16.msra.mxu0 %v5367
  %7607 = vmatprep.subr.bf16.mxu0 %v5384
  %7608 = vmatpush1.bf16.msra.mxu0 %v5383
  %7609 = vmatprep.subr.bf16.mxu0 %v5400
  %7610 = vmatpush1.bf16.msra.mxu0 %v5399
  %7611 = vmatprep.subr.bf16.mxu0 %v5416
  %7612 = vmatpush1.bf16.msra.mxu0 %v5415
  %7613 = vmatprep.subr.bf16.mxu0 %v5432
  %7614 = vmatpush1.bf16.msra.mxu0 %v5431
  %7615 = vmatprep.subr.bf16.mxu0 %v5448
  %7616 = vmatpush1.bf16.msra.mxu0 %v5447
  %7617 = vmatprep.subr.bf16.mxu0 %v5464
  %7618 = vmatpush1.bf16.msra.mxu0 %v5463
  %7619 = vmatprep.subr.bf16.mxu0 %v5480
  %7620 = vmatpush1.bf16.msra.mxu0 %v5479
  %7621 = vmatprep.subr.bf16.mxu0 %v5496
  %7622 = vmatpush1.bf16.msra.mxu0 %v5495
  %7623 = vmatprep.subr.bf16.mxu0 %v5512
  %7624 = vmatpush1.bf16.msra.mxu0 %v5511
  %7625 = vmatprep.subr.bf16.mxu0 %v5528
  %7626 = vmatpush1.bf16.msra.mxu0 %v5527
  %7627 = vmatprep.subr.bf16.mxu0 %v5544
  %7628 = vmatpush1.bf16.msra.mxu0 %v5543
  %7629 = vmatprep.subr.bf16.mxu0 %v5560
  %7630 = vmatpush1.bf16.msra.mxu0 %v5559
  %7631 = vmatprep.subr.bf16.mxu0 %v5576
  %7632 = vmatpush1.bf16.msra.mxu0 %v5575
  %7633 = vmatprep.mubr.bf16.mxu0 %v632
  %7634 = vmatmul.mubr.bf16.gmra.mrb[0].mxu0 %v631
  %v7635 = vpop.f32.mrb[0].mxu0
  %v7636 = vadd.f32 %v7595, %v7635
  %v7637 = vpop.f32.mrb[0].mxu0
  %v7638 = vadd.f32 %v7597, %v7637
  %v7639 = vpop.f32.mrb[0].mxu0
  %v7640 = vpop.f32.mrb[0].mxu0
  %7641 = vdwg.mxu0
  %7642 = vmatprep.subr.bf16.mxu0 %v5592
  %7643 = vmatpush1.bf16.msra.mxu0 %v5591
  %7644 = vmatprep.subr.bf16.mxu0 %v5608
  %7645 = vmatpush1.bf16.msra.mxu0 %v5607
  %7646 = vmatprep.subr.bf16.mxu0 %v5624
  %7647 = vmatpush1.bf16.msra.mxu0 %v5623
  %7648 = vmatprep.subr.bf16.mxu0 %v5640
  %7649 = vmatpush1.bf16.msra.mxu0 %v5639
  %7650 = vmatprep.subr.bf16.mxu0 %v5656
  %7651 = vmatpush1.bf16.msra.mxu0 %v5655
  %7652 = vmatprep.subr.bf16.mxu0 %v5672
  %7653 = vmatpush1.bf16.msra.mxu0 %v5671
  %7654 = vmatprep.subr.bf16.mxu0 %v5688
  %7655 = vmatpush1.bf16.msra.mxu0 %v5687
  %7656 = vmatprep.subr.bf16.mxu0 %v5704
  %7657 = vmatpush1.bf16.msra.mxu0 %v5703
  %7658 = vmatprep.subr.bf16.mxu0 %v5720
  %7659 = vmatpush1.bf16.msra.mxu0 %v5719
  %7660 = vmatprep.subr.bf16.mxu0 %v5736
  %7661 = vmatpush1.bf16.msra.mxu0 %v5735
  %7662 = vmatprep.subr.bf16.mxu0 %v5752
  %7663 = vmatpush1.bf16.msra.mxu0 %v5751
  %7664 = vmatprep.subr.bf16.mxu0 %v5768
  %7665 = vmatpush1.bf16.msra.mxu0 %v5767
  %7666 = vmatprep.subr.bf16.mxu0 %v5784
  %7667 = vmatpush1.bf16.msra.mxu0 %v5783
  %7668 = vmatprep.subr.bf16.mxu0 %v5800
  %7669 = vmatpush1.bf16.msra.mxu0 %v5799
  %7670 = vmatprep.subr.bf16.mxu0 %v5816
  %7671 = vmatpush1.bf16.msra.mxu0 %v5815
  %7672 = vmatprep.subr.bf16.mxu0 %v5832
  %7673 = vmatpush1.bf16.msra.mxu0 %v5831
  %7674 = vmatprep.mubr.bf16.mxu0 %v634
  %7675 = vmatmul.mubr.bf16.gmra.mrb[0].mxu0 %v633
  %v7676 = vpop.f32.mrb[0].mxu0
  %v7677 = vadd.f32 %v7636, %v7676
  %v7678 = vpop.f32.mrb[0].mxu0
  %v7679 = vadd.f32 %v7638, %v7678
  %v7680 = vpop.f32.mrb[0].mxu0
  %v7681 = vpop.f32.mrb[0].mxu0
  %7682 = vdwg.mxu0
  %7683 = vmatprep.subr.bf16.mxu0 %v4826
  %7684 = vmatpush1.bf16.msra.mxu0 %v4825
  %7685 = vmatprep.subr.bf16.mxu0 %v4842
  %7686 = vmatpush1.bf16.msra.mxu0 %v4841
  %7687 = vmatprep.subr.bf16.mxu0 %v4858
  %7688 = vmatpush1.bf16.msra.mxu0 %v4857
  %7689 = vmatprep.subr.bf16.mxu0 %v4874
  %7690 = vmatpush1.bf16.msra.mxu0 %v4873
  %7691 = vmatprep.subr.bf16.mxu0 %v4890
  %7692 = vmatpush1.bf16.msra.mxu0 %v4889
  %7693 = vmatprep.subr.bf16.mxu0 %v4906
  %7694 = vmatpush1.bf16.msra.mxu0 %v4905
  %7695 = vmatprep.subr.bf16.mxu0 %v4922
  %7696 = vmatpush1.bf16.msra.mxu0 %v4921
  %7697 = vmatprep.subr.bf16.mxu0 %v4938
  %7698 = vmatpush1.bf16.msra.mxu0 %v4937
  %7699 = vmatprep.subr.bf16.mxu0 %v4954
  %7700 = vmatpush1.bf16.msra.mxu0 %v4953
  %7701 = vmatprep.subr.bf16.mxu0 %v4970
  %7702 = vmatpush1.bf16.msra.mxu0 %v4969
  %7703 = vmatprep.subr.bf16.mxu0 %v4986
  %7704 = vmatpush1.bf16.msra.mxu0 %v4985
  %7705 = vmatprep.subr.bf16.mxu0 %v5002
  %7706 = vmatpush1.bf16.msra.mxu0 %v5001
  %7707 = vmatprep.subr.bf16.mxu0 %v5018
  %7708 = vmatpush1.bf16.msra.mxu0 %v5017
  %7709 = vmatprep.subr.bf16.mxu0 %v5034
  %7710 = vmatpush1.bf16.msra.mxu0 %v5033
  %7711 = vmatprep.subr.bf16.mxu0 %v5050
  %7712 = vmatpush1.bf16.msra.mxu0 %v5049
  %7713 = vmatprep.subr.bf16.mxu0 %v5066
  %7714 = vmatpush1.bf16.msra.mxu0 %v5065
  %7715 = vmatprep.mubr.bf16.mxu0 %v628
  %7716 = vmatmul.mubr.bf16.gmra.mrb[0].mxu0 %v627
  %v7717 = vpop.f32.mrb[0].mxu0
  %v7718 = vadd.f32 %v1706, %v7717
  %v7719 = vpop.f32.mrb[0].mxu0
  %v7720 = vadd.f32 %v1710, %v7719
  %v7721 = vpop.f32.mrb[0].mxu0
  %v7722 = vpop.f32.mrb[0].mxu0
  %7723 = vdwg.mxu0
  %7724 = vmatprep.subr.bf16.mxu0 %v5082
  %7725 = vmatpush1.bf16.msra.mxu0 %v5081
  %7726 = vmatprep.subr.bf16.mxu0 %v5098
  %7727 = vmatpush1.bf16.msra.mxu0 %v5097
  %7728 = vmatprep.subr.bf16.mxu0 %v5114
  %7729 = vmatpush1.bf16.msra.mxu0 %v5113
  %7730 = vmatprep.subr.bf16.mxu0 %v5130
  %7731 = vmatpush1.bf16.msra.mxu0 %v5129
  %7732 = vmatprep.subr.bf16.mxu0 %v5146
  %7733 = vmatpush1.bf16.msra.mxu0 %v5145
  %7734 = vmatprep.subr.bf16.mxu0 %v5162
  %7735 = vmatpush1.bf16.msra.mxu0 %v5161
  %7736 = vmatprep.subr.bf16.mxu0 %v5178
  %7737 = vmatpush1.bf16.msra.mxu0 %v5177
  %7738 = vmatprep.subr.bf16.mxu0 %v5194
  %7739 = vmatpush1.bf16.msra.mxu0 %v5193
  %7740 = vmatprep.subr.bf16.mxu0 %v5210
  %7741 = vmatpush1.bf16.msra.mxu0 %v5209
  %7742 = vmatprep.subr.bf16.mxu0 %v5226
  %7743 = vmatpush1.bf16.msra.mxu0 %v5225
  %7744 = vmatprep.subr.bf16.mxu0 %v5242
  %7745 = vmatpush1.bf16.msra.mxu0 %v5241
  %7746 = vmatprep.subr.bf16.mxu0 %v5258
  %7747 = vmatpush1.bf16.msra.mxu0 %v5257
  %7748 = vmatprep.subr.bf16.mxu0 %v5274
  %7749 = vmatpush1.bf16.msra.mxu0 %v5273
  %7750 = vmatprep.subr.bf16.mxu0 %v5290
  %7751 = vmatpush1.bf16.msra.mxu0 %v5289
  %7752 = vmatprep.subr.bf16.mxu0 %v5306
  %7753 = vmatpush1.bf16.msra.mxu0 %v5305
  %7754 = vmatprep.subr.bf16.mxu0 %v5322
  %7755 = vmatpush1.bf16.msra.mxu0 %v5321
  %7756 = vmatprep.mubr.bf16.mxu0 %v630
  %7757 = vmatmul.mubr.bf16.gmra.mrb[0].mxu0 %v629
  %v7758 = vpop.f32.mrb[0].mxu0
  %v7759 = vadd.f32 %v7718, %v7758
  %v7760 = vpop.f32.mrb[0].mxu0
  %v7761 = vadd.f32 %v7720, %v7760
  %v7762 = vpop.f32.mrb[0].mxu0
  %v7763 = vpop.f32.mrb[0].mxu0
  %7764 = vdwg.mxu0
  %7765 = vmatprep.subr.bf16.mxu0 %v5338
  %7766 = vmatpush1.bf16.msra.mxu0 %v5337
  %7767 = vmatprep.subr.bf16.mxu0 %v5354
  %7768 = vmatpush1.bf16.msra.mxu0 %v5353
  %7769 = vmatprep.subr.bf16.mxu0 %v5370
  %7770 = vmatpush1.bf16.msra.mxu0 %v5369
  %7771 = vmatprep.subr.bf16.mxu0 %v5386
  %7772 = vmatpush1.bf16.msra.mxu0 %v5385
  %7773 = vmatprep.subr.bf16.mxu0 %v5402
  %7774 = vmatpush1.bf16.msra.mxu0 %v5401
  %7775 = vmatprep.subr.bf16.mxu0 %v5418
  %7776 = vmatpush1.bf16.msra.mxu0 %v5417
  %7777 = vmatprep.subr.bf16.mxu0 %v5434
  %7778 = vmatpush1.bf16.msra.mxu0 %v5433
  %7779 = vmatprep.subr.bf16.mxu0 %v5450
  %7780 = vmatpush1.bf16.msra.mxu0 %v5449
  %7781 = vmatprep.subr.bf16.mxu0 %v5466
  %7782 = vmatpush1.bf16.msra.mxu0 %v5465
  %7783 = vmatprep.subr.bf16.mxu0 %v5482
  %7784 = vmatpush1.bf16.msra.mxu0 %v5481
  %7785 = vmatprep.subr.bf16.mxu0 %v5498
  %7786 = vmatpush1.bf16.msra.mxu0 %v5497
  %7787 = vmatprep.subr.bf16.mxu0 %v5514
  %7788 = vmatpush1.bf16.msra.mxu0 %v5513
  %7789 = vmatprep.subr.bf16.mxu0 %v5530
  %7790 = vmatpush1.bf16.msra.mxu0 %v5529
  %7791 = vmatprep.subr.bf16.mxu0 %v5546
  %7792 = vmatpush1.bf16.msra.mxu0 %v5545
  %7793 = vmatprep.subr.bf16.mxu0 %v5562
  %7794 = vmatpush1.bf16.msra.mxu0 %v5561
  %7795 = vmatprep.subr.bf16.mxu0 %v5578
  %7796 = vmatpush1.bf16.msra.mxu0 %v5577
  %7797 = vmatprep.mubr.bf16.mxu0 %v632
  %7798 = vmatmul.mubr.bf16.gmra.mrb[0].mxu0 %v631
  %v7799 = vpop.f32.mrb[0].mxu0
  %v7800 = vadd.f32 %v7759, %v7799
  %v7801 = vpop.f32.mrb[0].mxu0
  %v7802 = vadd.f32 %v7761, %v7801
  %v7803 = vpop.f32.mrb[0].mxu0
  %v7804 = vpop.f32.mrb[0].mxu0
  %7805 = vdwg.mxu0
  %7806 = vmatprep.subr.bf16.mxu0 %v5594
  %7807 = vmatpush1.bf16.msra.mxu0 %v5593
  %7808 = vmatprep.subr.bf16.mxu0 %v5610
  %7809 = vmatpush1.bf16.msra.mxu0 %v5609
  %7810 = vmatprep.subr.bf16.mxu0 %v5626
  %7811 = vmatpush1.bf16.msra.mxu0 %v5625
  %7812 = vmatprep.subr.bf16.mxu0 %v5642
  %7813 = vmatpush1.bf16.msra.mxu0 %v5641
  %7814 = vmatprep.subr.bf16.mxu0 %v5658
  %7815 = vmatpush1.bf16.msra.mxu0 %v5657
  %7816 = vmatprep.subr.bf16.mxu0 %v5674
  %7817 = vmatpush1.bf16.msra.mxu0 %v5673
  %7818 = vmatprep.subr.bf16.mxu0 %v5690
  %7819 = vmatpush1.bf16.msra.mxu0 %v5689
  %7820 = vmatprep.subr.bf16.mxu0 %v5706
  %7821 = vmatpush1.bf16.msra.mxu0 %v5705
  %7822 = vmatprep.subr.bf16.mxu0 %v5722
  %7823 = vmatpush1.bf16.msra.mxu0 %v5721
  %7824 = vmatprep.subr.bf16.mxu0 %v5738
  %7825 = vmatpush1.bf16.msra.mxu0 %v5737
  %7826 = vmatprep.subr.bf16.mxu0 %v5754
  %7827 = vmatpush1.bf16.msra.mxu0 %v5753
  %7828 = vmatprep.subr.bf16.mxu0 %v5770
  %7829 = vmatpush1.bf16.msra.mxu0 %v5769
  %7830 = vmatprep.subr.bf16.mxu0 %v5786
  %7831 = vmatpush1.bf16.msra.mxu0 %v5785
  %7832 = vmatprep.subr.bf16.mxu0 %v5802
  %7833 = vmatpush1.bf16.msra.mxu0 %v5801
  %7834 = vmatprep.subr.bf16.mxu0 %v5818
  %7835 = vmatpush1.bf16.msra.mxu0 %v5817
  %7836 = vmatprep.subr.bf16.mxu0 %v5834
  %7837 = vmatpush1.bf16.msra.mxu0 %v5833
  %7838 = vmatprep.mubr.bf16.mxu0 %v634
  %7839 = vmatmul.mubr.bf16.gmra.mrb[0].mxu0 %v633
  %v7840 = vpop.f32.mrb[0].mxu0
  %v7841 = vadd.f32 %v7800, %v7840
  %v7842 = vpop.f32.mrb[0].mxu0
  %v7843 = vadd.f32 %v7802, %v7842
  %v7844 = vpop.f32.mrb[0].mxu0
  %v7845 = vpop.f32.mrb[0].mxu0
  %7846 = vdwg.mxu0
  %7847 = vmatprep.subr.bf16.mxu0 %v4828
  %7848 = vmatpush1.bf16.msra.mxu0 %v4827
  %7849 = vmatprep.subr.bf16.mxu0 %v4844
  %7850 = vmatpush1.bf16.msra.mxu0 %v4843
  %7851 = vmatprep.subr.bf16.mxu0 %v4860
  %7852 = vmatpush1.bf16.msra.mxu0 %v4859
  %7853 = vmatprep.subr.bf16.mxu0 %v4876
  %7854 = vmatpush1.bf16.msra.mxu0 %v4875
  %7855 = vmatprep.subr.bf16.mxu0 %v4892
  %7856 = vmatpush1.bf16.msra.mxu0 %v4891
  %7857 = vmatprep.subr.bf16.mxu0 %v4908
  %7858 = vmatpush1.bf16.msra.mxu0 %v4907
  %7859 = vmatprep.subr.bf16.mxu0 %v4924
  %7860 = vmatpush1.bf16.msra.mxu0 %v4923
  %7861 = vmatprep.subr.bf16.mxu0 %v4940
  %7862 = vmatpush1.bf16.msra.mxu0 %v4939
  %7863 = vmatprep.subr.bf16.mxu0 %v4956
  %7864 = vmatpush1.bf16.msra.mxu0 %v4955
  %7865 = vmatprep.subr.bf16.mxu0 %v4972
  %7866 = vmatpush1.bf16.msra.mxu0 %v4971
  %7867 = vmatprep.subr.bf16.mxu0 %v4988
  %7868 = vmatpush1.bf16.msra.mxu0 %v4987
  %7869 = vmatprep.subr.bf16.mxu0 %v5004
  %7870 = vmatpush1.bf16.msra.mxu0 %v5003
  %7871 = vmatprep.subr.bf16.mxu0 %v5020
  %7872 = vmatpush1.bf16.msra.mxu0 %v5019
  %7873 = vmatprep.subr.bf16.mxu0 %v5036
  %7874 = vmatpush1.bf16.msra.mxu0 %v5035
  %7875 = vmatprep.subr.bf16.mxu0 %v5052
  %7876 = vmatpush1.bf16.msra.mxu0 %v5051
  %7877 = vmatprep.subr.bf16.mxu0 %v5068
  %7878 = vmatpush1.bf16.msra.mxu0 %v5067
  %7879 = vmatprep.mubr.bf16.mxu0 %v628
  %7880 = vmatmul.mubr.bf16.gmra.mrb[0].mxu0 %v627
  %v7881 = vpop.f32.mrb[0].mxu0
  %v7882 = vadd.f32 %v1714, %v7881
  %v7883 = vpop.f32.mrb[0].mxu0
  %v7884 = vadd.f32 %v1718, %v7883
  %v7885 = vpop.f32.mrb[0].mxu0
  %v7886 = vpop.f32.mrb[0].mxu0
  %7887 = vdwg.mxu0
  %7888 = vmatprep.subr.bf16.mxu0 %v5084
  %7889 = vmatpush1.bf16.msra.mxu0 %v5083
  %7890 = vmatprep.subr.bf16.mxu0 %v5100
  %7891 = vmatpush1.bf16.msra.mxu0 %v5099
  %7892 = vmatprep.subr.bf16.mxu0 %v5116
  %7893 = vmatpush1.bf16.msra.mxu0 %v5115
  %7894 = vmatprep.subr.bf16.mxu0 %v5132
  %7895 = vmatpush1.bf16.msra.mxu0 %v5131
  %7896 = vmatprep.subr.bf16.mxu0 %v5148
  %7897 = vmatpush1.bf16.msra.mxu0 %v5147
  %7898 = vmatprep.subr.bf16.mxu0 %v5164
  %7899 = vmatpush1.bf16.msra.mxu0 %v5163
  %7900 = vmatprep.subr.bf16.mxu0 %v5180
  %7901 = vmatpush1.bf16.msra.mxu0 %v5179
  %7902 = vmatprep.subr.bf16.mxu0 %v5196
  %7903 = vmatpush1.bf16.msra.mxu0 %v5195
  %7904 = vmatprep.subr.bf16.mxu0 %v5212
  %7905 = vmatpush1.bf16.msra.mxu0 %v5211
  %7906 = vmatprep.subr.bf16.mxu0 %v5228
  %7907 = vmatpush1.bf16.msra.mxu0 %v5227
  %7908 = vmatprep.subr.bf16.mxu0 %v5244
  %7909 = vmatpush1.bf16.msra.mxu0 %v5243
  %7910 = vmatprep.subr.bf16.mxu0 %v5260
  %7911 = vmatpush1.bf16.msra.mxu0 %v5259
  %7912 = vmatprep.subr.bf16.mxu0 %v5276
  %7913 = vmatpush1.bf16.msra.mxu0 %v5275
  %7914 = vmatprep.subr.bf16.mxu0 %v5292
  %7915 = vmatpush1.bf16.msra.mxu0 %v5291
  %7916 = vmatprep.subr.bf16.mxu0 %v5308
  %7917 = vmatpush1.bf16.msra.mxu0 %v5307
  %7918 = vmatprep.subr.bf16.mxu0 %v5324
  %7919 = vmatpush1.bf16.msra.mxu0 %v5323
  %7920 = vmatprep.mubr.bf16.mxu0 %v630
  %7921 = vmatmul.mubr.bf16.gmra.mrb[0].mxu0 %v629
  %v7922 = vpop.f32.mrb[0].mxu0
  %v7923 = vadd.f32 %v7882, %v7922
  %v7924 = vpop.f32.mrb[0].mxu0
  %v7925 = vadd.f32 %v7884, %v7924
  %v7926 = vpop.f32.mrb[0].mxu0
  %v7927 = vpop.f32.mrb[0].mxu0
  %7928 = vdwg.mxu0
  %7929 = vmatprep.subr.bf16.mxu0 %v5340
  %7930 = vmatpush1.bf16.msra.mxu0 %v5339
  %7931 = vmatprep.subr.bf16.mxu0 %v5356
  %7932 = vmatpush1.bf16.msra.mxu0 %v5355
  %7933 = vmatprep.subr.bf16.mxu0 %v5372
  %7934 = vmatpush1.bf16.msra.mxu0 %v5371
  %7935 = vmatprep.subr.bf16.mxu0 %v5388
  %7936 = vmatpush1.bf16.msra.mxu0 %v5387
  %7937 = vmatprep.subr.bf16.mxu0 %v5404
  %7938 = vmatpush1.bf16.msra.mxu0 %v5403
  %7939 = vmatprep.subr.bf16.mxu0 %v5420
  %7940 = vmatpush1.bf16.msra.mxu0 %v5419
  %7941 = vmatprep.subr.bf16.mxu0 %v5436
  %7942 = vmatpush1.bf16.msra.mxu0 %v5435
  %7943 = vmatprep.subr.bf16.mxu0 %v5452
  %7944 = vmatpush1.bf16.msra.mxu0 %v5451
  %7945 = vmatprep.subr.bf16.mxu0 %v5468
  %7946 = vmatpush1.bf16.msra.mxu0 %v5467
  %7947 = vmatprep.subr.bf16.mxu0 %v5484
  %7948 = vmatpush1.bf16.msra.mxu0 %v5483
  %7949 = vmatprep.subr.bf16.mxu0 %v5500
  %7950 = vmatpush1.bf16.msra.mxu0 %v5499
  %7951 = vmatprep.subr.bf16.mxu0 %v5516
  %7952 = vmatpush1.bf16.msra.mxu0 %v5515
  %7953 = vmatprep.subr.bf16.mxu0 %v5532
  %7954 = vmatpush1.bf16.msra.mxu0 %v5531
  %7955 = vmatprep.subr.bf16.mxu0 %v5548
  %7956 = vmatpush1.bf16.msra.mxu0 %v5547
  %7957 = vmatprep.subr.bf16.mxu0 %v5564
  %7958 = vmatpush1.bf16.msra.mxu0 %v5563
  %7959 = vmatprep.subr.bf16.mxu0 %v5580
  %7960 = vmatpush1.bf16.msra.mxu0 %v5579
  %7961 = vmatprep.mubr.bf16.mxu0 %v632
  %7962 = vmatmul.mubr.bf16.gmra.mrb[0].mxu0 %v631
  %v7963 = vpop.f32.mrb[0].mxu0
  %v7964 = vadd.f32 %v7923, %v7963
  %v7965 = vpop.f32.mrb[0].mxu0
  %v7966 = vadd.f32 %v7925, %v7965
  %v7967 = vpop.f32.mrb[0].mxu0
  %v7968 = vpop.f32.mrb[0].mxu0
  %7969 = vdwg.mxu0
  %7970 = vmatprep.subr.bf16.mxu0 %v5596
  %7971 = vmatpush1.bf16.msra.mxu0 %v5595
  %7972 = vmatprep.subr.bf16.mxu0 %v5612
  %7973 = vmatpush1.bf16.msra.mxu0 %v5611
  %7974 = vmatprep.subr.bf16.mxu0 %v5628
  %7975 = vmatpush1.bf16.msra.mxu0 %v5627
  %7976 = vmatprep.subr.bf16.mxu0 %v5644
  %7977 = vmatpush1.bf16.msra.mxu0 %v5643
  %7978 = vmatprep.subr.bf16.mxu0 %v5660
  %7979 = vmatpush1.bf16.msra.mxu0 %v5659
  %7980 = vmatprep.subr.bf16.mxu0 %v5676
  %7981 = vmatpush1.bf16.msra.mxu0 %v5675
  %7982 = vmatprep.subr.bf16.mxu0 %v5692
  %7983 = vmatpush1.bf16.msra.mxu0 %v5691
  %7984 = vmatprep.subr.bf16.mxu0 %v5708
  %7985 = vmatpush1.bf16.msra.mxu0 %v5707
  %7986 = vmatprep.subr.bf16.mxu0 %v5724
  %7987 = vmatpush1.bf16.msra.mxu0 %v5723
  %7988 = vmatprep.subr.bf16.mxu0 %v5740
  %7989 = vmatpush1.bf16.msra.mxu0 %v5739
  %7990 = vmatprep.subr.bf16.mxu0 %v5756
  %7991 = vmatpush1.bf16.msra.mxu0 %v5755
  %7992 = vmatprep.subr.bf16.mxu0 %v5772
  %7993 = vmatpush1.bf16.msra.mxu0 %v5771
  %7994 = vmatprep.subr.bf16.mxu0 %v5788
  %7995 = vmatpush1.bf16.msra.mxu0 %v5787
  %7996 = vmatprep.subr.bf16.mxu0 %v5804
  %7997 = vmatpush1.bf16.msra.mxu0 %v5803
  %7998 = vmatprep.subr.bf16.mxu0 %v5820
  %7999 = vmatpush1.bf16.msra.mxu0 %v5819
  %8000 = vmatprep.subr.bf16.mxu0 %v5836
  %8001 = vmatpush1.bf16.msra.mxu0 %v5835
  %8002 = vmatprep.mubr.bf16.mxu0 %v634
  %8003 = vmatmul.mubr.bf16.gmra.mrb[0].mxu0 %v633
  %v8004 = vpop.f32.mrb[0].mxu0
  %v8005 = vadd.f32 %v7964, %v8004
  %v8006 = vpop.f32.mrb[0].mxu0
  %v8007 = vadd.f32 %v7966, %v8006
  %v8008 = vpop.f32.mrb[0].mxu0
  %v8009 = vpop.f32.mrb[0].mxu0
  %8010 = vdwg.mxu0
  %8011 = vmatprep.subr.bf16.mxu0 %v4830
  %8012 = vmatpush1.bf16.msra.mxu0 %v4829
  %8013 = vmatprep.subr.bf16.mxu0 %v4846
  %8014 = vmatpush1.bf16.msra.mxu0 %v4845
  %8015 = vmatprep.subr.bf16.mxu0 %v4862
  %8016 = vmatpush1.bf16.msra.mxu0 %v4861
  %8017 = vmatprep.subr.bf16.mxu0 %v4878
  %8018 = vmatpush1.bf16.msra.mxu0 %v4877
  %8019 = vmatprep.subr.bf16.mxu0 %v4894
  %8020 = vmatpush1.bf16.msra.mxu0 %v4893
  %8021 = vmatprep.subr.bf16.mxu0 %v4910
  %8022 = vmatpush1.bf16.msra.mxu0 %v4909
  %8023 = vmatprep.subr.bf16.mxu0 %v4926
  %8024 = vmatpush1.bf16.msra.mxu0 %v4925
  %8025 = vmatprep.subr.bf16.mxu0 %v4942
  %8026 = vmatpush1.bf16.msra.mxu0 %v4941
  %8027 = vmatprep.subr.bf16.mxu0 %v4958
  %8028 = vmatpush1.bf16.msra.mxu0 %v4957
  %8029 = vmatprep.subr.bf16.mxu0 %v4974
  %8030 = vmatpush1.bf16.msra.mxu0 %v4973
  %8031 = vmatprep.subr.bf16.mxu0 %v4990
  %8032 = vmatpush1.bf16.msra.mxu0 %v4989
  %8033 = vmatprep.subr.bf16.mxu0 %v5006
  %8034 = vmatpush1.bf16.msra.mxu0 %v5005
  %8035 = vmatprep.subr.bf16.mxu0 %v5022
  %8036 = vmatpush1.bf16.msra.mxu0 %v5021
  %8037 = vmatprep.subr.bf16.mxu0 %v5038
  %8038 = vmatpush1.bf16.msra.mxu0 %v5037
  %8039 = vmatprep.subr.bf16.mxu0 %v5054
  %8040 = vmatpush1.bf16.msra.mxu0 %v5053
  %8041 = vmatprep.subr.bf16.mxu0 %v5070
  %8042 = vmatpush1.bf16.msra.mxu0 %v5069
  %8043 = vmatprep.mubr.bf16.mxu0 %v628
  %8044 = vmatmul.mubr.bf16.gmra.mrb[0].mxu0 %v627
  %v8045 = vpop.f32.mrb[0].mxu0
  %v8046 = vadd.f32 %v1722, %v8045
  %v8047 = vpop.f32.mrb[0].mxu0
  %v8048 = vadd.f32 %v1726, %v8047
  %v8049 = vpop.f32.mrb[0].mxu0
  %v8050 = vpop.f32.mrb[0].mxu0
  %8051 = vdwg.mxu0
  %8052 = vmatprep.subr.bf16.mxu0 %v5086
  %8053 = vmatpush1.bf16.msra.mxu0 %v5085
  %8054 = vmatprep.subr.bf16.mxu0 %v5102
  %8055 = vmatpush1.bf16.msra.mxu0 %v5101
  %8056 = vmatprep.subr.bf16.mxu0 %v5118
  %8057 = vmatpush1.bf16.msra.mxu0 %v5117
  %8058 = vmatprep.subr.bf16.mxu0 %v5134
  %8059 = vmatpush1.bf16.msra.mxu0 %v5133
  %8060 = vmatprep.subr.bf16.mxu0 %v5150
  %8061 = vmatpush1.bf16.msra.mxu0 %v5149
  %8062 = vmatprep.subr.bf16.mxu0 %v5166
  %8063 = vmatpush1.bf16.msra.mxu0 %v5165
  %8064 = vmatprep.subr.bf16.mxu0 %v5182
  %8065 = vmatpush1.bf16.msra.mxu0 %v5181
  %8066 = vmatprep.subr.bf16.mxu0 %v5198
  %8067 = vmatpush1.bf16.msra.mxu0 %v5197
  %8068 = vmatprep.subr.bf16.mxu0 %v5214
  %8069 = vmatpush1.bf16.msra.mxu0 %v5213
  %8070 = vmatprep.subr.bf16.mxu0 %v5230
  %8071 = vmatpush1.bf16.msra.mxu0 %v5229
  %8072 = vmatprep.subr.bf16.mxu0 %v5246
  %8073 = vmatpush1.bf16.msra.mxu0 %v5245
  %8074 = vmatprep.subr.bf16.mxu0 %v5262
  %8075 = vmatpush1.bf16.msra.mxu0 %v5261
  %8076 = vmatprep.subr.bf16.mxu0 %v5278
  %8077 = vmatpush1.bf16.msra.mxu0 %v5277
  %8078 = vmatprep.subr.bf16.mxu0 %v5294
  %8079 = vmatpush1.bf16.msra.mxu0 %v5293
  %8080 = vmatprep.subr.bf16.mxu0 %v5310
  %8081 = vmatpush1.bf16.msra.mxu0 %v5309
  %8082 = vmatprep.subr.bf16.mxu0 %v5326
  %8083 = vmatpush1.bf16.msra.mxu0 %v5325
  %8084 = vmatprep.mubr.bf16.mxu0 %v630
  %8085 = vmatmul.mubr.bf16.gmra.mrb[0].mxu0 %v629
  %v8086 = vpop.f32.mrb[0].mxu0
  %v8087 = vadd.f32 %v8046, %v8086
  %v8088 = vpop.f32.mrb[0].mxu0
  %v8089 = vadd.f32 %v8048, %v8088
  %v8090 = vpop.f32.mrb[0].mxu0
  %v8091 = vpop.f32.mrb[0].mxu0
  %8092 = vdwg.mxu0
  %8093 = vmatprep.subr.bf16.mxu0 %v5342
  %8094 = vmatpush1.bf16.msra.mxu0 %v5341
  %8095 = vmatprep.subr.bf16.mxu0 %v5358
  %8096 = vmatpush1.bf16.msra.mxu0 %v5357
  %8097 = vmatprep.subr.bf16.mxu0 %v5374
  %8098 = vmatpush1.bf16.msra.mxu0 %v5373
  %8099 = vmatprep.subr.bf16.mxu0 %v5390
  %8100 = vmatpush1.bf16.msra.mxu0 %v5389
  %8101 = vmatprep.subr.bf16.mxu0 %v5406
  %8102 = vmatpush1.bf16.msra.mxu0 %v5405
  %8103 = vmatprep.subr.bf16.mxu0 %v5422
  %8104 = vmatpush1.bf16.msra.mxu0 %v5421
  %8105 = vmatprep.subr.bf16.mxu0 %v5438
  %8106 = vmatpush1.bf16.msra.mxu0 %v5437
  %8107 = vmatprep.subr.bf16.mxu0 %v5454
  %8108 = vmatpush1.bf16.msra.mxu0 %v5453
  %8109 = vmatprep.subr.bf16.mxu0 %v5470
  %8110 = vmatpush1.bf16.msra.mxu0 %v5469
  %8111 = vmatprep.subr.bf16.mxu0 %v5486
  %8112 = vmatpush1.bf16.msra.mxu0 %v5485
  %8113 = vmatprep.subr.bf16.mxu0 %v5502
  %8114 = vmatpush1.bf16.msra.mxu0 %v5501
  %8115 = vmatprep.subr.bf16.mxu0 %v5518
  %8116 = vmatpush1.bf16.msra.mxu0 %v5517
  %8117 = vmatprep.subr.bf16.mxu0 %v5534
  %8118 = vmatpush1.bf16.msra.mxu0 %v5533
  %8119 = vmatprep.subr.bf16.mxu0 %v5550
  %8120 = vmatpush1.bf16.msra.mxu0 %v5549
  %8121 = vmatprep.subr.bf16.mxu0 %v5566
  %8122 = vmatpush1.bf16.msra.mxu0 %v5565
  %8123 = vmatprep.subr.bf16.mxu0 %v5582
  %8124 = vmatpush1.bf16.msra.mxu0 %v5581
  %8125 = vmatprep.mubr.bf16.mxu0 %v632
  %8126 = vmatmul.mubr.bf16.gmra.mrb[0].mxu0 %v631
  %v8127 = vpop.f32.mrb[0].mxu0
  %v8128 = vadd.f32 %v8087, %v8127
  %v8129 = vpop.f32.mrb[0].mxu0
  %v8130 = vadd.f32 %v8089, %v8129
  %v8131 = vpop.f32.mrb[0].mxu0
  %v8132 = vpop.f32.mrb[0].mxu0
  %8133 = vdwg.mxu0
  %8134 = vmatprep.subr.bf16.mxu0 %v5598
  %8135 = vmatpush1.bf16.msra.mxu0 %v5597
  %8136 = vmatprep.subr.bf16.mxu0 %v5614
  %8137 = vmatpush1.bf16.msra.mxu0 %v5613
  %8138 = vmatprep.subr.bf16.mxu0 %v5630
  %8139 = vmatpush1.bf16.msra.mxu0 %v5629
  %8140 = vmatprep.subr.bf16.mxu0 %v5646
  %8141 = vmatpush1.bf16.msra.mxu0 %v5645
  %8142 = vmatprep.subr.bf16.mxu0 %v5662
  %8143 = vmatpush1.bf16.msra.mxu0 %v5661
  %8144 = vmatprep.subr.bf16.mxu0 %v5678
  %8145 = vmatpush1.bf16.msra.mxu0 %v5677
  %8146 = vmatprep.subr.bf16.mxu0 %v5694
  %8147 = vmatpush1.bf16.msra.mxu0 %v5693
  %8148 = vmatprep.subr.bf16.mxu0 %v5710
  %8149 = vmatpush1.bf16.msra.mxu0 %v5709
  %8150 = vmatprep.subr.bf16.mxu0 %v5726
  %8151 = vmatpush1.bf16.msra.mxu0 %v5725
  %8152 = vmatprep.subr.bf16.mxu0 %v5742
  %8153 = vmatpush1.bf16.msra.mxu0 %v5741
  %8154 = vmatprep.subr.bf16.mxu0 %v5758
  %8155 = vmatpush1.bf16.msra.mxu0 %v5757
  %8156 = vmatprep.subr.bf16.mxu0 %v5774
  %8157 = vmatpush1.bf16.msra.mxu0 %v5773
  %8158 = vmatprep.subr.bf16.mxu0 %v5790
  %8159 = vmatpush1.bf16.msra.mxu0 %v5789
  %8160 = vmatprep.subr.bf16.mxu0 %v5806
  %8161 = vmatpush1.bf16.msra.mxu0 %v5805
  %8162 = vmatprep.subr.bf16.mxu0 %v5822
  %8163 = vmatpush1.bf16.msra.mxu0 %v5821
  %8164 = vmatprep.subr.bf16.mxu0 %v5838
  %8165 = vmatpush1.bf16.msra.mxu0 %v5837
  %8166 = vmatprep.mubr.bf16.mxu0 %v634
  %8167 = vmatmul.mubr.bf16.gmra.mrb[0].mxu0 %v633
  %v8168 = vpop.f32.mrb[0].mxu0
  %v8169 = vadd.f32 %v8128, %v8168
  %v8170 = vpop.f32.mrb[0].mxu0
  %v8171 = vadd.f32 %v8130, %v8170
  %v8172 = vpop.f32.mrb[0].mxu0
  %v8173 = vpop.f32.mrb[0].mxu0
  %8174 = vdwg.mxu0
  %v8175 = vmax.f32 %v7021, 0.0
  %v8176 = vmax.f32 %v7023, 0.0
  %v8177 = vmax.f32 %v7185, 0.0
  %v8178 = vmax.f32 %v7187, 0.0
  %v8179 = vmax.f32 %v7349, 0.0
  %v8180 = vmax.f32 %v7351, 0.0
  %v8181 = vmax.f32 %v7513, 0.0
  %v8182 = vmax.f32 %v7515, 0.0
  %v8183 = vmax.f32 %v7677, 0.0
  %v8184 = vmax.f32 %v7679, 0.0
  %v8185 = vmax.f32 %v7841, 0.0
  %v8186 = vmax.f32 %v7843, 0.0
  %v8187 = vmax.f32 %v8005, 0.0
  %v8188 = vmax.f32 %v8007, 0.0
  %v8189 = vmax.f32 %v8169, 0.0
  %v8190 = vmax.f32 %v8171, 0.0
  %v8191 = vpack.c.bf16 %v8175, %v8175
  %v8192 = vpack.c.bf16 %v8176, %v8176
  %v8193 = vpack.c.bf16 %v8177, %v8177
  %v8194 = vpack.c.bf16 %v8178, %v8178
  %v8195 = vpack.c.bf16 %v8179, %v8179
  %v8196 = vpack.c.bf16 %v8180, %v8180
  %v8197 = vpack.c.bf16 %v8181, %v8181
  %v8198 = vpack.c.bf16 %v8182, %v8182
  %v8199 = vpack.c.bf16 %v8183, %v8183
  %v8200 = vpack.c.bf16 %v8184, %v8184
  %v8201 = vpack.c.bf16 %v8185, %v8185
  %v8202 = vpack.c.bf16 %v8186, %v8186
  %v8203 = vpack.c.bf16 %v8187, %v8187
  %v8204 = vpack.c.bf16 %v8188, %v8188
  %v8205 = vpack.c.bf16 %v8189, %v8189
  %v8206 = vpack.c.bf16 %v8190, %v8190
  %v8207 = vld [vmem:[%s5] sm:$0xff]
  %v8208 = vld [vmem:[%s5 + $0x8] sm:$0xff]
  %v8209 = vld [vmem:[%s5 + $0x10] sm:$0xff]
  %v8210 = vld [vmem:[%s5 + $0x18] sm:$0xf]
  %v8211 = vld [vmem:[%s5 + $0x1c] sm:$0xff]
  %v8212 = vld [vmem:[%s5 + $0x24] sm:$0xff]
  %v8213 = vld [vmem:[%s5 + $0x2c] sm:$0xff]
  %v8214 = vld [vmem:[%s5 + $0x34] sm:$0xf]
  %v8215 = vld [vmem:[%s5 + $0x38] sm:$0xff]
  %v8216 = vld [vmem:[%s5 + $0x40] sm:$0xff]
  %v8217 = vld [vmem:[%s5 + $0x48] sm:$0xff]
  %v8218 = vld [vmem:[%s5 + $0x50] sm:$0xf]
  %v8219 = vld [vmem:[%s5 + $0x54] sm:$0xff]
  %v8220 = vld [vmem:[%s5 + $0x5c] sm:$0xff]
  %v8221 = vld [vmem:[%s5 + $0x64] sm:$0xff]
  %v8222 = vld [vmem:[%s5 + $0x6c] sm:$0xf]
  %v8223 = vld [vmem:[%s5 + $0x70] sm:$0xff]
  %v8224 = vld [vmem:[%s5 + $0x78] sm:$0xff]
  %v8225 = vld [vmem:[%s5 + $0x80] sm:$0xff]
  %v8226 = vld [vmem:[%s5 + $0x88] sm:$0xf]
  %v8227 = vld [vmem:[%s5 + $0x8c] sm:$0xff]
  %v8228 = vld [vmem:[%s5 + $0x94] sm:$0xff]
  %v8229 = vld [vmem:[%s5 + $0x9c] sm:$0xff]
  %v8230 = vld [vmem:[%s5 + $0xa4] sm:$0xf]
  %v8231 = vld [vmem:[%s5 + $0xa8] sm:$0xff]
  %v8232 = vld [vmem:[%s5 + $0xb0] sm:$0xff]
  %v8233 = vld [vmem:[%s5 + $0xb8] sm:$0xff]
  %v8234 = vld [vmem:[%s5 + $0xc0] sm:$0xf]
  %v8235 = vld [vmem:[%s5 + $0xc4] sm:$0xff]
  %v8236 = vld [vmem:[%s5 + $0xcc] sm:$0xff]
  %v8237 = vld [vmem:[%s5 + $0xd4] sm:$0xff]
  %v8238 = vld [vmem:[%s5 + $0xdc] sm:$0xf]
  %v8239 = vld [vmem:[%s5 + $0xe0] sm:$0xff]
  %v8240 = vld [vmem:[%s5 + $0xe8] sm:$0xff]
  %v8241 = vld [vmem:[%s5 + $0xf0] sm:$0xff]
  %v8242 = vld [vmem:[%s5 + $0xf8] sm:$0xf]
  %v8243 = vld [vmem:[%s5 + $0xfc] sm:$0xff]
  %v8244 = vld [vmem:[%s5 + $0x104] sm:$0xff]
  %v8245 = vld [vmem:[%s5 + $0x10c] sm:$0xff]
  %v8246 = vld [vmem:[%s5 + $0x114] sm:$0xf]
  %v8247 = vld [vmem:[%s5 + $0x118] sm:$0xff]
  %v8248 = vld [vmem:[%s5 + $0x120] sm:$0xff]
  %v8249 = vld [vmem:[%s5 + $0x128] sm:$0xff]
  %v8250 = vld [vmem:[%s5 + $0x130] sm:$0xf]
  %v8251 = vld [vmem:[%s5 + $0x134] sm:$0xff]
  %v8252 = vld [vmem:[%s5 + $0x13c] sm:$0xff]
  %v8253 = vld [vmem:[%s5 + $0x144] sm:$0xff]
  %v8254 = vld [vmem:[%s5 + $0x14c] sm:$0xf]
  %v8255 = vld [vmem:[%s5 + $0x150] sm:$0xff]
  %v8256 = vld [vmem:[%s5 + $0x158] sm:$0xff]
  %v8257 = vld [vmem:[%s5 + $0x160] sm:$0xff]
  %v8258 = vld [vmem:[%s5 + $0x168] sm:$0xf]
  %v8259 = vld [vmem:[%s5 + $0x16c] sm:$0xff]
  %v8260 = vld [vmem:[%s5 + $0x174] sm:$0xff]
  %v8261 = vld [vmem:[%s5 + $0x17c] sm:$0xff]
  %v8262 = vld [vmem:[%s5 + $0x184] sm:$0xf]
  %v8263 = vld [vmem:[%s5 + $0x188] sm:$0xff]
  %v8264 = vld [vmem:[%s5 + $0x190] sm:$0xff]
  %v8265 = vld [vmem:[%s5 + $0x198] sm:$0xff]
  %v8266 = vld [vmem:[%s5 + $0x1a0] sm:$0xf]
  %v8267 = vld [vmem:[%s5 + $0x1a4] sm:$0xff]
  %v8268 = vld [vmem:[%s5 + $0x1ac] sm:$0xff]
  %v8269 = vld [vmem:[%s5 + $0x1b4] sm:$0xff]
  %v8270 = vld [vmem:[%s5 + $0x1bc] sm:$0xf]
  %v8271 = vld [vmem:[%s5 + $0x1c0] sm:$0xff]
  %v8272 = vld [vmem:[%s5 + $0x1c8] sm:$0xff]
  %v8273 = vld [vmem:[%s5 + $0x1d0] sm:$0xff]
  %v8274 = vld [vmem:[%s5 + $0x1d8] sm:$0xf]
  %v8275 = vld [vmem:[%s5 + $0x1dc] sm:$0xff]
  %v8276 = vld [vmem:[%s5 + $0x1e4] sm:$0xff]
  %v8277 = vld [vmem:[%s5 + $0x1ec] sm:$0xff]
  %v8278 = vld [vmem:[%s5 + $0x1f4] sm:$0xf]
  %v8279 = vld [vmem:[%s5 + $0x1f8] sm:$0xff]
  %v8280 = vld [vmem:[%s5 + $0x200] sm:$0xff]
  %v8281 = vld [vmem:[%s5 + $0x208] sm:$0xff]
  %v8282 = vld [vmem:[%s5 + $0x210] sm:$0xf]
  %v8283 = vld [vmem:[%s5 + $0x214] sm:$0xff]
  %v8284 = vld [vmem:[%s5 + $0x21c] sm:$0xff]
  %v8285 = vld [vmem:[%s5 + $0x224] sm:$0xff]
  %v8286 = vld [vmem:[%s5 + $0x22c] sm:$0xf]
  %v8287 = vld [vmem:[%s5 + $0x230] sm:$0xff]
  %v8288 = vld [vmem:[%s5 + $0x238] sm:$0xff]
  %v8289 = vld [vmem:[%s5 + $0x240] sm:$0xff]
  %v8290 = vld [vmem:[%s5 + $0x248] sm:$0xf]
  %v8291 = vld [vmem:[%s5 + $0x24c] sm:$0xff]
  %v8292 = vld [vmem:[%s5 + $0x254] sm:$0xff]
  %v8293 = vld [vmem:[%s5 + $0x25c] sm:$0xff]
  %v8294 = vld [vmem:[%s5 + $0x264] sm:$0xf]
  %v8295 = vld [vmem:[%s5 + $0x268] sm:$0xff]
  %v8296 = vld [vmem:[%s5 + $0x270] sm:$0xff]
  %v8297 = vld [vmem:[%s5 + $0x278] sm:$0xff]
  %v8298 = vld [vmem:[%s5 + $0x280] sm:$0xf]
  %v8299 = vld [vmem:[%s5 + $0x284] sm:$0xff]
  %v8300 = vld [vmem:[%s5 + $0x28c] sm:$0xff]
  %v8301 = vld [vmem:[%s5 + $0x294] sm:$0xff]
  %v8302 = vld [vmem:[%s5 + $0x29c] sm:$0xf]
  %v8303 = vld [vmem:[%s5 + $0x2a0] sm:$0xff]
  %v8304 = vld [vmem:[%s5 + $0x2a8] sm:$0xff]
  %v8305 = vld [vmem:[%s5 + $0x2b0] sm:$0xff]
  %v8306 = vld [vmem:[%s5 + $0x2b8] sm:$0xf]
  %v8307 = vld [vmem:[%s5 + $0x2bc] sm:$0xff]
  %v8308 = vld [vmem:[%s5 + $0x2c4] sm:$0xff]
  %v8309 = vld [vmem:[%s5 + $0x2cc] sm:$0xff]
  %v8310 = vld [vmem:[%s5 + $0x2d4] sm:$0xf]
  %v8311 = vld [vmem:[%s5 + $0x2d8] sm:$0xff]
  %v8312 = vld [vmem:[%s5 + $0x2e0] sm:$0xff]
  %v8313 = vld [vmem:[%s5 + $0x2e8] sm:$0xff]
  %v8314 = vld [vmem:[%s5 + $0x2f0] sm:$0xf]
  %v8315 = vld [vmem:[%s5 + $0x2f4] sm:$0xff]
  %v8316 = vld [vmem:[%s5 + $0x2fc] sm:$0xff]
  %v8317 = vld [vmem:[%s5 + $0x304] sm:$0xff]
  %v8318 = vld [vmem:[%s5 + $0x30c] sm:$0xf]
  %v8319 = vld [vmem:[%s5 + $0x310] sm:$0xff]
  %v8320 = vld [vmem:[%s5 + $0x318] sm:$0xff]
  %v8321 = vld [vmem:[%s5 + $0x320] sm:$0xff]
  %v8322 = vld [vmem:[%s5 + $0x328] sm:$0xf]
  %v8323 = vld [vmem:[%s5 + $0x32c] sm:$0xff]
  %v8324 = vld [vmem:[%s5 + $0x334] sm:$0xff]
  %v8325 = vld [vmem:[%s5 + $0x33c] sm:$0xff]
  %v8326 = vld [vmem:[%s5 + $0x344] sm:$0xf]
  %v8327 = vld [vmem:[%s5 + $0x348] sm:$0xff]
  %v8328 = vld [vmem:[%s5 + $0x350] sm:$0xff]
  %v8329 = vld [vmem:[%s5 + $0x358] sm:$0xff]
  %v8330 = vld [vmem:[%s5 + $0x360] sm:$0xf]
  %v8331 = vld [vmem:[%s5 + $0x364] sm:$0xff]
  %v8332 = vld [vmem:[%s5 + $0x36c] sm:$0xff]
  %v8333 = vld [vmem:[%s5 + $0x374] sm:$0xff]
  %v8334 = vld [vmem:[%s5 + $0x37c] sm:$0xf]
  %v8335 = vld [vmem:[%s5 + $0x380] sm:$0xff]
  %v8336 = vld [vmem:[%s5 + $0x388] sm:$0xff]
  %v8337 = vld [vmem:[%s5 + $0x390] sm:$0xff]
  %v8338 = vld [vmem:[%s5 + $0x398] sm:$0xf]
  %v8339 = vld [vmem:[%s5 + $0x39c] sm:$0xff]
  %v8340 = vld [vmem:[%s5 + $0x3a4] sm:$0xff]
  %v8341 = vld [vmem:[%s5 + $0x3ac] sm:$0xff]
  %v8342 = vld [vmem:[%s5 + $0x3b4] sm:$0xf]
  %v8343 = vld [vmem:[%s5 + $0x3b8] sm:$0xff]
  %v8344 = vld [vmem:[%s5 + $0x3c0] sm:$0xff]
  %v8345 = vld [vmem:[%s5 + $0x3c8] sm:$0xff]
  %v8346 = vld [vmem:[%s5 + $0x3d0] sm:$0xf]
  %v8347 = vld [vmem:[%s5 + $0x3d4] sm:$0xff]
  %v8348 = vld [vmem:[%s5 + $0x3dc] sm:$0xff]
  %v8349 = vld [vmem:[%s5 + $0x3e4] sm:$0xff]
  %v8350 = vld [vmem:[%s5 + $0x3ec] sm:$0xf]
  %v8351 = vld [vmem:[%s5 + $0x3f0] sm:$0xff]
  %v8352 = vld [vmem:[%s5 + $0x3f8] sm:$0xff]
  %v8353 = vld [vmem:[%s5 + $0x400] sm:$0xff]
  %v8354 = vld [vmem:[%s5 + $0x408] sm:$0xf]
  %v8355 = vld [vmem:[%s5 + $0x40c] sm:$0xff]
  %v8356 = vld [vmem:[%s5 + $0x414] sm:$0xff]
  %v8357 = vld [vmem:[%s5 + $0x41c] sm:$0xff]
  %v8358 = vld [vmem:[%s5 + $0x424] sm:$0xf]
  %v8359 = vld [vmem:[%s5 + $0x428] sm:$0xff]
  %v8360 = vld [vmem:[%s5 + $0x430] sm:$0xff]
  %v8361 = vld [vmem:[%s5 + $0x438] sm:$0xff]
  %v8362 = vld [vmem:[%s5 + $0x440] sm:$0xf]
  %v8363 = vld [vmem:[%s5 + $0x444] sm:$0xff]
  %v8364 = vld [vmem:[%s5 + $0x44c] sm:$0xff]
  %v8365 = vld [vmem:[%s5 + $0x454] sm:$0xff]
  %v8366 = vld [vmem:[%s5 + $0x45c] sm:$0xf]
  %v8367 = vld [vmem:[%s5 + $0x460] sm:$0xff]
  %v8368 = vld [vmem:[%s5 + $0x468] sm:$0xff]
  %v8369 = vld [vmem:[%s5 + $0x470] sm:$0xff]
  %v8370 = vld [vmem:[%s5 + $0x478] sm:$0xf]
  %v8371 = vld [vmem:[%s5 + $0x47c] sm:$0xff]
  %v8372 = vld [vmem:[%s5 + $0x484] sm:$0xff]
  %v8373 = vld [vmem:[%s5 + $0x48c] sm:$0xff]
  %v8374 = vld [vmem:[%s5 + $0x494] sm:$0xf]
  %v8375 = vld [vmem:[%s5 + $0x498] sm:$0xff]
  %v8376 = vld [vmem:[%s5 + $0x4a0] sm:$0xff]
  %v8377 = vld [vmem:[%s5 + $0x4a8] sm:$0xff]
  %v8378 = vld [vmem:[%s5 + $0x4b0] sm:$0xf]
  %v8379 = vld [vmem:[%s5 + $0x4b4] sm:$0xff]
  %v8380 = vld [vmem:[%s5 + $0x4bc] sm:$0xff]
  %v8381 = vld [vmem:[%s5 + $0x4c4] sm:$0xff]
  %v8382 = vld [vmem:[%s5 + $0x4cc] sm:$0xf]
  %v8383 = vld [vmem:[%s5 + $0x4d0] sm:$0xff]
  %v8384 = vld [vmem:[%s5 + $0x4d8] sm:$0xff]
  %v8385 = vld [vmem:[%s5 + $0x4e0] sm:$0xff]
  %v8386 = vld [vmem:[%s5 + $0x4e8] sm:$0xf]
  %v8387 = vld [vmem:[%s5 + $0x4ec] sm:$0xff]
  %v8388 = vld [vmem:[%s5 + $0x4f4] sm:$0xff]
  %v8389 = vld [vmem:[%s5 + $0x4fc] sm:$0xff]
  %v8390 = vld [vmem:[%s5 + $0x504] sm:$0xf]
  %v8391 = vld [vmem:[%s5 + $0x508] sm:$0xff]
  %v8392 = vld [vmem:[%s5 + $0x510] sm:$0xff]
  %v8393 = vld [vmem:[%s5 + $0x518] sm:$0xff]
  %v8394 = vld [vmem:[%s5 + $0x520] sm:$0xf]
  %v8395 = vld [vmem:[%s5 + $0x524] sm:$0xff]
  %v8396 = vld [vmem:[%s5 + $0x52c] sm:$0xff]
  %v8397 = vld [vmem:[%s5 + $0x534] sm:$0xff]
  %v8398 = vld [vmem:[%s5 + $0x53c] sm:$0xf]
  %v8399 = vld [vmem:[%s5 + $0x540] sm:$0xff]
  %v8400 = vld [vmem:[%s5 + $0x548] sm:$0xff]
  %v8401 = vld [vmem:[%s5 + $0x550] sm:$0xff]
  %v8402 = vld [vmem:[%s5 + $0x558] sm:$0xf]
  %v8403 = vld [vmem:[%s5 + $0x55c] sm:$0xff]
  %v8404 = vld [vmem:[%s5 + $0x564] sm:$0xff]
  %v8405 = vld [vmem:[%s5 + $0x56c] sm:$0xff]
  %v8406 = vld [vmem:[%s5 + $0x574] sm:$0xf]
  %v8407 = vld [vmem:[%s5 + $0x578] sm:$0xff]
  %v8408 = vld [vmem:[%s5 + $0x580] sm:$0xff]
  %v8409 = vld [vmem:[%s5 + $0x588] sm:$0xff]
  %v8410 = vld [vmem:[%s5 + $0x590] sm:$0xf]
  %v8411 = vld [vmem:[%s5 + $0x594] sm:$0xff]
  %v8412 = vld [vmem:[%s5 + $0x59c] sm:$0xff]
  %v8413 = vld [vmem:[%s5 + $0x5a4] sm:$0xff]
  %v8414 = vld [vmem:[%s5 + $0x5ac] sm:$0xf]
  %v8415 = vld [vmem:[%s5 + $0x5b0] sm:$0xff]
  %v8416 = vld [vmem:[%s5 + $0x5b8] sm:$0xff]
  %v8417 = vld [vmem:[%s5 + $0x5c0] sm:$0xff]
  %v8418 = vld [vmem:[%s5 + $0x5c8] sm:$0xf]
  %v8419 = vld [vmem:[%s5 + $0x5cc] sm:$0xff]
  %v8420 = vld [vmem:[%s5 + $0x5d4] sm:$0xff]
  %v8421 = vld [vmem:[%s5 + $0x5dc] sm:$0xff]
  %v8422 = vld [vmem:[%s5 + $0x5e4] sm:$0xf]
  %v8423 = vld [vmem:[%s5 + $0x5e8] sm:$0xff]
  %v8424 = vld [vmem:[%s5 + $0x5f0] sm:$0xff]
  %v8425 = vld [vmem:[%s5 + $0x5f8] sm:$0xff]
  %v8426 = vld [vmem:[%s5 + $0x600] sm:$0xf]
  %v8427 = vld [vmem:[%s5 + $0x604] sm:$0xff]
  %v8428 = vld [vmem:[%s5 + $0x60c] sm:$0xff]
  %v8429 = vld [vmem:[%s5 + $0x614] sm:$0xff]
  %v8430 = vld [vmem:[%s5 + $0x61c] sm:$0xf]
  %v8431 = vld [vmem:[%s5 + $0x620] sm:$0xff]
  %v8432 = vld [vmem:[%s5 + $0x628] sm:$0xff]
  %v8433 = vld [vmem:[%s5 + $0x630] sm:$0xff]
  %v8434 = vld [vmem:[%s5 + $0x638] sm:$0xf]
  %v8435 = vld [vmem:[%s5 + $0x63c] sm:$0xff]
  %v8436 = vld [vmem:[%s5 + $0x644] sm:$0xff]
  %v8437 = vld [vmem:[%s5 + $0x64c] sm:$0xff]
  %v8438 = vld [vmem:[%s5 + $0x654] sm:$0xf]
  %v8439 = vld [vmem:[%s5 + $0x658] sm:$0xff]
  %v8440 = vld [vmem:[%s5 + $0x660] sm:$0xff]
  %v8441 = vld [vmem:[%s5 + $0x668] sm:$0xff]
  %v8442 = vld [vmem:[%s5 + $0x670] sm:$0xf]
  %v8443 = vld [vmem:[%s5 + $0x674] sm:$0xff]
  %v8444 = vld [vmem:[%s5 + $0x67c] sm:$0xff]
  %v8445 = vld [vmem:[%s5 + $0x684] sm:$0xff]
  %v8446 = vld [vmem:[%s5 + $0x68c] sm:$0xf]
  %v8447 = vld [vmem:[%s5 + $0x690] sm:$0xff]
  %v8448 = vld [vmem:[%s5 + $0x698] sm:$0xff]
  %v8449 = vld [vmem:[%s5 + $0x6a0] sm:$0xff]
  %v8450 = vld [vmem:[%s5 + $0x6a8] sm:$0xf]
  %v8451 = vld [vmem:[%s5 + $0x6ac] sm:$0xff]
  %v8452 = vld [vmem:[%s5 + $0x6b4] sm:$0xff]
  %v8453 = vld [vmem:[%s5 + $0x6bc] sm:$0xff]
  %v8454 = vld [vmem:[%s5 + $0x6c4] sm:$0xf]
  %v8455 = vld [vmem:[%s5 + $0x6c8] sm:$0xff]
  %v8456 = vld [vmem:[%s5 + $0x6d0] sm:$0xff]
  %v8457 = vld [vmem:[%s5 + $0x6d8] sm:$0xff]
  %v8458 = vld [vmem:[%s5 + $0x6e0] sm:$0xf]
  %v8459 = vld [vmem:[%s5 + $0x6e4] sm:$0xff]
  %v8460 = vld [vmem:[%s5 + $0x6ec] sm:$0xff]
  %v8461 = vld [vmem:[%s5 + $0x6f4] sm:$0xff]
  %v8462 = vld [vmem:[%s5 + $0x6fc] sm:$0xf]
  %v8463 = vld [vmem:[%s5 + $0x700] sm:$0xff]
  %v8464 = vld [vmem:[%s5 + $0x708] sm:$0xff]
  %v8465 = vld [vmem:[%s5 + $0x710] sm:$0xff]
  %v8466 = vld [vmem:[%s5 + $0x718] sm:$0xf]
  %v8467 = vld [vmem:[%s5 + $0x71c] sm:$0xff]
  %v8468 = vld [vmem:[%s5 + $0x724] sm:$0xff]
  %v8469 = vld [vmem:[%s5 + $0x72c] sm:$0xff]
  %v8470 = vld [vmem:[%s5 + $0x734] sm:$0xf]
  %v8471 = vld [vmem:[%s5 + $0x738] sm:$0xff]
  %v8472 = vld [vmem:[%s5 + $0x740] sm:$0xff]
  %v8473 = vld [vmem:[%s5 + $0x748] sm:$0xff]
  %v8474 = vld [vmem:[%s5 + $0x750] sm:$0xf]
  %v8475 = vld [vmem:[%s5 + $0x754] sm:$0xff]
  %v8476 = vld [vmem:[%s5 + $0x75c] sm:$0xff]
  %v8477 = vld [vmem:[%s5 + $0x764] sm:$0xff]
  %v8478 = vld [vmem:[%s5 + $0x76c] sm:$0xf]
  %v8479 = vld [vmem:[%s5 + $0x770] sm:$0xff]
  %v8480 = vld [vmem:[%s5 + $0x778] sm:$0xff]
  %v8481 = vld [vmem:[%s5 + $0x780] sm:$0xff]
  %v8482 = vld [vmem:[%s5 + $0x788] sm:$0xf]
  %v8483 = vld [vmem:[%s5 + $0x78c] sm:$0xff]
  %v8484 = vld [vmem:[%s5 + $0x794] sm:$0xff]
  %v8485 = vld [vmem:[%s5 + $0x79c] sm:$0xff]
  %v8486 = vld [vmem:[%s5 + $0x7a4] sm:$0xf]
  %v8487 = vld [vmem:[%s5 + $0x7a8] sm:$0xff]
  %v8488 = vld [vmem:[%s5 + $0x7b0] sm:$0xff]
  %v8489 = vld [vmem:[%s5 + $0x7b8] sm:$0xff]
  %v8490 = vld [vmem:[%s5 + $0x7c0] sm:$0xf]
  %v8491 = vld [vmem:[%s5 + $0x7c4] sm:$0xff]
  %v8492 = vld [vmem:[%s5 + $0x7cc] sm:$0xff]
  %v8493 = vld [vmem:[%s5 + $0x7d4] sm:$0xff]
  %v8494 = vld [vmem:[%s5 + $0x7dc] sm:$0xf]
  %v8495 = vld [vmem:[%s5 + $0x7e0] sm:$0xff]
  %v8496 = vld [vmem:[%s5 + $0x7e8] sm:$0xff]
  %v8497 = vld [vmem:[%s5 + $0x7f0] sm:$0xff]
  %v8498 = vld [vmem:[%s5 + $0x7f8] sm:$0xf]
  %v8499 = vld [vmem:[%s5 + $0x7fc] sm:$0xff]
  %v8500 = vld [vmem:[%s5 + $0x804] sm:$0xff]
  %v8501 = vld [vmem:[%s5 + $0x80c] sm:$0xff]
  %v8502 = vld [vmem:[%s5 + $0x814] sm:$0xf]
  %v8503 = vld [vmem:[%s5 + $0x818] sm:$0xff]
  %v8504 = vld [vmem:[%s5 + $0x820] sm:$0xff]
  %v8505 = vld [vmem:[%s5 + $0x828] sm:$0xff]
  %v8506 = vld [vmem:[%s5 + $0x830] sm:$0xf]
  %v8507 = vld [vmem:[%s5 + $0x834] sm:$0xff]
  %v8508 = vld [vmem:[%s5 + $0x83c] sm:$0xff]
  %v8509 = vld [vmem:[%s5 + $0x844] sm:$0xff]
  %v8510 = vld [vmem:[%s5 + $0x84c] sm:$0xf]
  %v8511 = vld [vmem:[%s5 + $0x850] sm:$0xff]
  %v8512 = vld [vmem:[%s5 + $0x858] sm:$0xff]
  %v8513 = vld [vmem:[%s5 + $0x860] sm:$0xff]
  %v8514 = vld [vmem:[%s5 + $0x868] sm:$0xf]
  %v8515 = vld [vmem:[%s5 + $0x86c] sm:$0xff]
  %v8516 = vld [vmem:[%s5 + $0x874] sm:$0xff]
  %v8517 = vld [vmem:[%s5 + $0x87c] sm:$0xff]
  %v8518 = vld [vmem:[%s5 + $0x884] sm:$0xf]
  %v8519 = vld [vmem:[%s5 + $0x888] sm:$0xff]
  %v8520 = vld [vmem:[%s5 + $0x890] sm:$0xff]
  %v8521 = vld [vmem:[%s5 + $0x898] sm:$0xff]
  %v8522 = vld [vmem:[%s5 + $0x8a0] sm:$0xf]
  %v8523 = vld [vmem:[%s5 + $0x8a4] sm:$0xff]
  %v8524 = vld [vmem:[%s5 + $0x8ac] sm:$0xff]
  %v8525 = vld [vmem:[%s5 + $0x8b4] sm:$0xff]
  %v8526 = vld [vmem:[%s5 + $0x8bc] sm:$0xf]
  %v8527 = vld [vmem:[%s5 + $0x8c0] sm:$0xff]
  %v8528 = vld [vmem:[%s5 + $0x8c8] sm:$0xff]
  %v8529 = vld [vmem:[%s5 + $0x8d0] sm:$0xff]
  %v8530 = vld [vmem:[%s5 + $0x8d8] sm:$0xf]
  %v8531 = vld [vmem:[%s5 + $0x8dc] sm:$0xff]
  %v8532 = vld [vmem:[%s5 + $0x8e4] sm:$0xff]
  %v8533 = vld [vmem:[%s5 + $0x8ec] sm:$0xff]
  %v8534 = vld [vmem:[%s5 + $0x8f4] sm:$0xf]
  %v8535 = vld [vmem:[%s5 + $0x8f8] sm:$0xff]
  %v8536 = vld [vmem:[%s5 + $0x900] sm:$0xff]
  %v8537 = vld [vmem:[%s5 + $0x908] sm:$0xff]
  %v8538 = vld [vmem:[%s5 + $0x910] sm:$0xf]
  %v8539 = vld [vmem:[%s5 + $0x914] sm:$0xff]
  %v8540 = vld [vmem:[%s5 + $0x91c] sm:$0xff]
  %v8541 = vld [vmem:[%s5 + $0x924] sm:$0xff]
  %v8542 = vld [vmem:[%s5 + $0x92c] sm:$0xf]
  %v8543 = vld [vmem:[%s5 + $0x930] sm:$0xff]
  %v8544 = vld [vmem:[%s5 + $0x938] sm:$0xff]
  %v8545 = vld [vmem:[%s5 + $0x940] sm:$0xff]
  %v8546 = vld [vmem:[%s5 + $0x948] sm:$0xf]
  %v8547 = vld [vmem:[%s5 + $0x94c] sm:$0xff]
  %v8548 = vld [vmem:[%s5 + $0x954] sm:$0xff]
  %v8549 = vld [vmem:[%s5 + $0x95c] sm:$0xff]
  %v8550 = vld [vmem:[%s5 + $0x964] sm:$0xf]
  %v8551 = vld [vmem:[%s5 + $0x968] sm:$0xff]
  %v8552 = vld [vmem:[%s5 + $0x970] sm:$0xff]
  %v8553 = vld [vmem:[%s5 + $0x978] sm:$0xff]
  %v8554 = vld [vmem:[%s5 + $0x980] sm:$0xf]
  %v8555 = vld [vmem:[%s5 + $0x984] sm:$0xff]
  %v8556 = vld [vmem:[%s5 + $0x98c] sm:$0xff]
  %v8557 = vld [vmem:[%s5 + $0x994] sm:$0xff]
  %v8558 = vld [vmem:[%s5 + $0x99c] sm:$0xf]
  %v8559 = vld [vmem:[%s5 + $0x9a0] sm:$0xff]
  %v8560 = vld [vmem:[%s5 + $0x9a8] sm:$0xff]
  %v8561 = vld [vmem:[%s5 + $0x9b0] sm:$0xff]
  %v8562 = vld [vmem:[%s5 + $0x9b8] sm:$0xf]
  %v8563 = vld [vmem:[%s5 + $0x9bc] sm:$0xff]
  %v8564 = vld [vmem:[%s5 + $0x9c4] sm:$0xff]
  %v8565 = vld [vmem:[%s5 + $0x9cc] sm:$0xff]
  %v8566 = vld [vmem:[%s5 + $0x9d4] sm:$0xf]
  %v8567 = vld [vmem:[%s5 + $0x9d8] sm:$0xff]
  %v8568 = vld [vmem:[%s5 + $0x9e0] sm:$0xff]
  %v8569 = vld [vmem:[%s5 + $0x9e8] sm:$0xff]
  %v8570 = vld [vmem:[%s5 + $0x9f0] sm:$0xf]
  %v8571 = vld [vmem:[%s5 + $0x9f4] sm:$0xff]
  %v8572 = vld [vmem:[%s5 + $0x9fc] sm:$0xff]
  %v8573 = vld [vmem:[%s5 + $0xa04] sm:$0xff]
  %v8574 = vld [vmem:[%s5 + $0xa0c] sm:$0xf]
  %v8575 = vld [vmem:[%s5 + $0xa10] sm:$0xff]
  %v8576 = vld [vmem:[%s5 + $0xa18] sm:$0xff]
  %v8577 = vld [vmem:[%s5 + $0xa20] sm:$0xff]
  %v8578 = vld [vmem:[%s5 + $0xa28] sm:$0xf]
  %v8579 = vld [vmem:[%s5 + $0xa2c] sm:$0xff]
  %v8580 = vld [vmem:[%s5 + $0xa34] sm:$0xff]
  %v8581 = vld [vmem:[%s5 + $0xa3c] sm:$0xff]
  %v8582 = vld [vmem:[%s5 + $0xa44] sm:$0xf]
  %v8583 = vld [vmem:[%s5 + $0xa48] sm:$0xff]
  %v8584 = vld [vmem:[%s5 + $0xa50] sm:$0xff]
  %v8585 = vld [vmem:[%s5 + $0xa58] sm:$0xff]
  %v8586 = vld [vmem:[%s5 + $0xa60] sm:$0xf]
  %v8587 = vld [vmem:[%s5 + $0xa64] sm:$0xff]
  %v8588 = vld [vmem:[%s5 + $0xa6c] sm:$0xff]
  %v8589 = vld [vmem:[%s5 + $0xa74] sm:$0xff]
  %v8590 = vld [vmem:[%s5 + $0xa7c] sm:$0xf]
  %v8591 = vld [vmem:[%s5 + $0xa80] sm:$0xff]
  %v8592 = vld [vmem:[%s5 + $0xa88] sm:$0xff]
  %v8593 = vld [vmem:[%s5 + $0xa90] sm:$0xff]
  %v8594 = vld [vmem:[%s5 + $0xa98] sm:$0xf]
  %v8595 = vld [vmem:[%s5 + $0xa9c] sm:$0xff]
  %v8596 = vld [vmem:[%s5 + $0xaa4] sm:$0xff]
  %v8597 = vld [vmem:[%s5 + $0xaac] sm:$0xff]
  %v8598 = vld [vmem:[%s5 + $0xab4] sm:$0xf]
  %v8599 = vld [vmem:[%s5 + $0xab8] sm:$0xff]
  %v8600 = vld [vmem:[%s5 + $0xac0] sm:$0xff]
  %v8601 = vld [vmem:[%s5 + $0xac8] sm:$0xff]
  %v8602 = vld [vmem:[%s5 + $0xad0] sm:$0xf]
  %v8603 = vld [vmem:[%s5 + $0xad4] sm:$0xff]
  %v8604 = vld [vmem:[%s5 + $0xadc] sm:$0xff]
  %v8605 = vld [vmem:[%s5 + $0xae4] sm:$0xff]
  %v8606 = vld [vmem:[%s5 + $0xaec] sm:$0xf]
  %v8607 = vld [vmem:[%s5 + $0xaf0] sm:$0xff]
  %v8608 = vld [vmem:[%s5 + $0xaf8] sm:$0xff]
  %v8609 = vld [vmem:[%s5 + $0xb00] sm:$0xff]
  %v8610 = vld [vmem:[%s5 + $0xb08] sm:$0xf]
  %v8611 = vld [vmem:[%s5 + $0xb0c] sm:$0xff]
  %v8612 = vld [vmem:[%s5 + $0xb14] sm:$0xff]
  %v8613 = vld [vmem:[%s5 + $0xb1c] sm:$0xff]
  %v8614 = vld [vmem:[%s5 + $0xb24] sm:$0xf]
  %v8615 = vld [vmem:[%s5 + $0xb28] sm:$0xff]
  %v8616 = vld [vmem:[%s5 + $0xb30] sm:$0xff]
  %v8617 = vld [vmem:[%s5 + $0xb38] sm:$0xff]
  %v8618 = vld [vmem:[%s5 + $0xb40] sm:$0xf]
  %v8619 = vld [vmem:[%s5 + $0xb44] sm:$0xff]
  %v8620 = vld [vmem:[%s5 + $0xb4c] sm:$0xff]
  %v8621 = vld [vmem:[%s5 + $0xb54] sm:$0xff]
  %v8622 = vld [vmem:[%s5 + $0xb5c] sm:$0xf]
  %v8623 = vld [vmem:[%s5 + $0xb60] sm:$0xff]
  %v8624 = vld [vmem:[%s5 + $0xb68] sm:$0xff]
  %v8625 = vld [vmem:[%s5 + $0xb70] sm:$0xff]
  %v8626 = vld [vmem:[%s5 + $0xb78] sm:$0xf]
  %v8627 = vld [vmem:[%s5 + $0xb7c] sm:$0xff]
  %v8628 = vld [vmem:[%s5 + $0xb84] sm:$0xff]
  %v8629 = vld [vmem:[%s5 + $0xb8c] sm:$0xff]
  %v8630 = vld [vmem:[%s5 + $0xb94] sm:$0xf]
  %v8631 = vld [vmem:[%s5 + $0xb98] sm:$0xff]
  %v8632 = vld [vmem:[%s5 + $0xba0] sm:$0xff]
  %v8633 = vld [vmem:[%s5 + $0xba8] sm:$0xff]
  %v8634 = vld [vmem:[%s5 + $0xbb0] sm:$0xf]
  %v8635 = vld [vmem:[%s5 + $0xbb4] sm:$0xff]
  %v8636 = vld [vmem:[%s5 + $0xbbc] sm:$0xff]
  %v8637 = vld [vmem:[%s5 + $0xbc4] sm:$0xff]
  %v8638 = vld [vmem:[%s5 + $0xbcc] sm:$0xf]
  %v8639 = vld [vmem:[%s5 + $0xbd0] sm:$0xff]
  %v8640 = vld [vmem:[%s5 + $0xbd8] sm:$0xff]
  %v8641 = vld [vmem:[%s5 + $0xbe0] sm:$0xff]
  %v8642 = vld [vmem:[%s5 + $0xbe8] sm:$0xf]
  %v8643 = vld [vmem:[%s5 + $0xbec] sm:$0xff]
  %v8644 = vld [vmem:[%s5 + $0xbf4] sm:$0xff]
  %v8645 = vld [vmem:[%s5 + $0xbfc] sm:$0xff]
  %v8646 = vld [vmem:[%s5 + $0xc04] sm:$0xf]
  %v8647 = vld [vmem:[%s5 + $0xc08] sm:$0xff]
  %v8648 = vld [vmem:[%s5 + $0xc10] sm:$0xff]
  %v8649 = vld [vmem:[%s5 + $0xc18] sm:$0xff]
  %v8650 = vld [vmem:[%s5 + $0xc20] sm:$0xf]
  %v8651 = vld [vmem:[%s5 + $0xc24] sm:$0xff]
  %v8652 = vld [vmem:[%s5 + $0xc2c] sm:$0xff]
  %v8653 = vld [vmem:[%s5 + $0xc34] sm:$0xff]
  %v8654 = vld [vmem:[%s5 + $0xc3c] sm:$0xf]
  %v8655 = vld [vmem:[%s5 + $0xc40] sm:$0xff]
  %v8656 = vld [vmem:[%s5 + $0xc48] sm:$0xff]
  %v8657 = vld [vmem:[%s5 + $0xc50] sm:$0xff]
  %v8658 = vld [vmem:[%s5 + $0xc58] sm:$0xf]
  %v8659 = vld [vmem:[%s5 + $0xc5c] sm:$0xff]
  %v8660 = vld [vmem:[%s5 + $0xc64] sm:$0xff]
  %v8661 = vld [vmem:[%s5 + $0xc6c] sm:$0xff]
  %v8662 = vld [vmem:[%s5 + $0xc74] sm:$0xf]
  %v8663 = vld [vmem:[%s5 + $0xc78] sm:$0xff]
  %v8664 = vld [vmem:[%s5 + $0xc80] sm:$0xff]
  %v8665 = vld [vmem:[%s5 + $0xc88] sm:$0xff]
  %v8666 = vld [vmem:[%s5 + $0xc90] sm:$0xf]
  %v8667 = vld [vmem:[%s5 + $0xc94] sm:$0xff]
  %v8668 = vld [vmem:[%s5 + $0xc9c] sm:$0xff]
  %v8669 = vld [vmem:[%s5 + $0xca4] sm:$0xff]
  %v8670 = vld [vmem:[%s5 + $0xcac] sm:$0xf]
  %v8671 = vld [vmem:[%s5 + $0xcb0] sm:$0xff]
  %v8672 = vld [vmem:[%s5 + $0xcb8] sm:$0xff]
  %v8673 = vld [vmem:[%s5 + $0xcc0] sm:$0xff]
  %v8674 = vld [vmem:[%s5 + $0xcc8] sm:$0xf]
  %v8675 = vld [vmem:[%s5 + $0xccc] sm:$0xff]
  %v8676 = vld [vmem:[%s5 + $0xcd4] sm:$0xff]
  %v8677 = vld [vmem:[%s5 + $0xcdc] sm:$0xff]
  %v8678 = vld [vmem:[%s5 + $0xce4] sm:$0xf]
  %v8679 = vld [vmem:[%s5 + $0xce8] sm:$0xff]
  %v8680 = vld [vmem:[%s5 + $0xcf0] sm:$0xff]
  %v8681 = vld [vmem:[%s5 + $0xcf8] sm:$0xff]
  %v8682 = vld [vmem:[%s5 + $0xd00] sm:$0xf]
  %v8683 = vld [vmem:[%s5 + $0xd04] sm:$0xff]
  %v8684 = vld [vmem:[%s5 + $0xd0c] sm:$0xff]
  %v8685 = vld [vmem:[%s5 + $0xd14] sm:$0xff]
  %v8686 = vld [vmem:[%s5 + $0xd1c] sm:$0xf]
  %v8687 = vld [vmem:[%s5 + $0xd20] sm:$0xff]
  %v8688 = vld [vmem:[%s5 + $0xd28] sm:$0xff]
  %v8689 = vld [vmem:[%s5 + $0xd30] sm:$0xff]
  %v8690 = vld [vmem:[%s5 + $0xd38] sm:$0xf]
  %v8691 = vld [vmem:[%s5 + $0xd3c] sm:$0xff]
  %v8692 = vld [vmem:[%s5 + $0xd44] sm:$0xff]
  %v8693 = vld [vmem:[%s5 + $0xd4c] sm:$0xff]
  %v8694 = vld [vmem:[%s5 + $0xd54] sm:$0xf]
  %v8695 = vld [vmem:[%s5 + $0xd58] sm:$0xff]
  %v8696 = vld [vmem:[%s5 + $0xd60] sm:$0xff]
  %v8697 = vld [vmem:[%s5 + $0xd68] sm:$0xff]
  %v8698 = vld [vmem:[%s5 + $0xd70] sm:$0xf]
  %v8699 = vld [vmem:[%s5 + $0xd74] sm:$0xff]
  %v8700 = vld [vmem:[%s5 + $0xd7c] sm:$0xff]
  %v8701 = vld [vmem:[%s5 + $0xd84] sm:$0xff]
  %v8702 = vld [vmem:[%s5 + $0xd8c] sm:$0xf]
  %v8703 = vld [vmem:[%s5 + $0xd90] sm:$0xff]
  %v8704 = vld [vmem:[%s5 + $0xd98] sm:$0xff]
  %v8705 = vld [vmem:[%s5 + $0xda0] sm:$0xff]
  %v8706 = vld [vmem:[%s5 + $0xda8] sm:$0xf]
  %v8707 = vld [vmem:[%s5 + $0xdac] sm:$0xff]
  %v8708 = vld [vmem:[%s5 + $0xdb4] sm:$0xff]
  %v8709 = vld [vmem:[%s5 + $0xdbc] sm:$0xff]
  %v8710 = vld [vmem:[%s5 + $0xdc4] sm:$0xf]
  %v8711 = vld [vmem:[%s5 + $0xdc8] sm:$0xff]
  %v8712 = vld [vmem:[%s5 + $0xdd0] sm:$0xff]
  %v8713 = vld [vmem:[%s5 + $0xdd8] sm:$0xff]
  %v8714 = vld [vmem:[%s5 + $0xde0] sm:$0xf]
  %v8715 = vld [vmem:[%s5 + $0xde4] sm:$0xff]
  %v8716 = vld [vmem:[%s5 + $0xdec] sm:$0xff]
  %v8717 = vld [vmem:[%s5 + $0xdf4] sm:$0xff]
  %v8718 = vld [vmem:[%s5 + $0xdfc] sm:$0xf]
  %v8719 = vld [vmem:[%s5 + $0xe00] sm:$0xff]
  %v8720 = vld [vmem:[%s5 + $0xe08] sm:$0xff]
  %v8721 = vld [vmem:[%s5 + $0xe10] sm:$0xff]
  %v8722 = vld [vmem:[%s5 + $0xe18] sm:$0xf]
  %v8723 = vld [vmem:[%s5 + $0xe1c] sm:$0xff]
  %v8724 = vld [vmem:[%s5 + $0xe24] sm:$0xff]
  %v8725 = vld [vmem:[%s5 + $0xe2c] sm:$0xff]
  %v8726 = vld [vmem:[%s5 + $0xe34] sm:$0xf]
  %v8727 = vld [vmem:[%s5 + $0xe38] sm:$0xff]
  %v8728 = vld [vmem:[%s5 + $0xe40] sm:$0xff]
  %v8729 = vld [vmem:[%s5 + $0xe48] sm:$0xff]
  %v8730 = vld [vmem:[%s5 + $0xe50] sm:$0xf]
  %v8731 = vld [vmem:[%s5 + $0xe54] sm:$0xff]
  %v8732 = vld [vmem:[%s5 + $0xe5c] sm:$0xff]
  %v8733 = vld [vmem:[%s5 + $0xe64] sm:$0xff]
  %v8734 = vld [vmem:[%s5 + $0xe6c] sm:$0xf]
  %v8735 = vld [vmem:[%s5 + $0xe70] sm:$0xff]
  %v8736 = vld [vmem:[%s5 + $0xe78] sm:$0xff]
  %v8737 = vld [vmem:[%s5 + $0xe80] sm:$0xff]
  %v8738 = vld [vmem:[%s5 + $0xe88] sm:$0xf]
  %v8739 = vld [vmem:[%s5 + $0xe8c] sm:$0xff]
  %v8740 = vld [vmem:[%s5 + $0xe94] sm:$0xff]
  %v8741 = vld [vmem:[%s5 + $0xe9c] sm:$0xff]
  %v8742 = vld [vmem:[%s5 + $0xea4] sm:$0xf]
  %v8743 = vld [vmem:[%s5 + $0xea8] sm:$0xff]
  %v8744 = vld [vmem:[%s5 + $0xeb0] sm:$0xff]
  %v8745 = vld [vmem:[%s5 + $0xeb8] sm:$0xff]
  %v8746 = vld [vmem:[%s5 + $0xec0] sm:$0xf]
  %v8747 = vld [vmem:[%s5 + $0xec4] sm:$0xff]
  %v8748 = vld [vmem:[%s5 + $0xecc] sm:$0xff]
  %v8749 = vld [vmem:[%s5 + $0xed4] sm:$0xff]
  %v8750 = vld [vmem:[%s5 + $0xedc] sm:$0xf]
  %v8751 = vld [vmem:[%s5 + $0xee0] sm:$0xff]
  %v8752 = vld [vmem:[%s5 + $0xee8] sm:$0xff]
  %v8753 = vld [vmem:[%s5 + $0xef0] sm:$0xff]
  %v8754 = vld [vmem:[%s5 + $0xef8] sm:$0xf]
  %v8755 = vld [vmem:[%s5 + $0xefc] sm:$0xff]
  %v8756 = vld [vmem:[%s5 + $0xf04] sm:$0xff]
  %v8757 = vld [vmem:[%s5 + $0xf0c] sm:$0xff]
  %v8758 = vld [vmem:[%s5 + $0xf14] sm:$0xf]
  %v8759 = vld [vmem:[%s5 + $0xf18] sm:$0xff]
  %v8760 = vld [vmem:[%s5 + $0xf20] sm:$0xff]
  %v8761 = vld [vmem:[%s5 + $0xf28] sm:$0xff]
  %v8762 = vld [vmem:[%s5 + $0xf30] sm:$0xf]
  %v8763 = vld [vmem:[%s5 + $0xf34] sm:$0xff]
  %v8764 = vld [vmem:[%s5 + $0xf3c] sm:$0xff]
  %v8765 = vld [vmem:[%s5 + $0xf44] sm:$0xff]
  %v8766 = vld [vmem:[%s5 + $0xf4c] sm:$0xf]
  %v8767 = vld [vmem:[%s5 + $0xf50] sm:$0xff]
  %v8768 = vld [vmem:[%s5 + $0xf58] sm:$0xff]
  %v8769 = vld [vmem:[%s5 + $0xf60] sm:$0xff]
  %v8770 = vld [vmem:[%s5 + $0xf68] sm:$0xf]
  %v8771 = vld [vmem:[%s5 + $0xf6c] sm:$0xff]
  %v8772 = vld [vmem:[%s5 + $0xf74] sm:$0xff]
  %v8773 = vld [vmem:[%s5 + $0xf7c] sm:$0xff]
  %v8774 = vld [vmem:[%s5 + $0xf84] sm:$0xf]
  %v8775 = vld [vmem:[%s5 + $0xf88] sm:$0xff]
  %v8776 = vld [vmem:[%s5 + $0xf90] sm:$0xff]
  %v8777 = vld [vmem:[%s5 + $0xf98] sm:$0xff]
  %v8778 = vld [vmem:[%s5 + $0xfa0] sm:$0xf]
  %v8779 = vld [vmem:[%s5 + $0xfa4] sm:$0xff]
  %v8780 = vld [vmem:[%s5 + $0xfac] sm:$0xff]
  %v8781 = vld [vmem:[%s5 + $0xfb4] sm:$0xff]
  %v8782 = vld [vmem:[%s5 + $0xfbc] sm:$0xf]
  %v8783 = vld [vmem:[%s5 + $0xfc0] sm:$0xff]
  %v8784 = vld [vmem:[%s5 + $0xfc8] sm:$0xff]
  %v8785 = vld [vmem:[%s5 + $0xfd0] sm:$0xff]
  %v8786 = vld [vmem:[%s5 + $0xfd8] sm:$0xf]
  %v8787 = vld [vmem:[%s5 + $0xfdc] sm:$0xff]
  %v8788 = vld [vmem:[%s5 + $0xfe4] sm:$0xff]
  %v8789 = vld [vmem:[%s5 + $0xfec] sm:$0xff]
  %v8790 = vld [vmem:[%s5 + $0xff4] sm:$0xf]
  %v8791 = vld [vmem:[%s5 + $0xff8] sm:$0xff]
  %v8792 = vld [vmem:[%s5 + $0x1000] sm:$0xff]
  %v8793 = vld [vmem:[%s5 + $0x1008] sm:$0xff]
  %v8794 = vld [vmem:[%s5 + $0x1010] sm:$0xf]
  %v8795 = vld [vmem:[%s5 + $0x1014] sm:$0xff]
  %v8796 = vld [vmem:[%s5 + $0x101c] sm:$0xff]
  %v8797 = vld [vmem:[%s5 + $0x1024] sm:$0xff]
  %v8798 = vld [vmem:[%s5 + $0x102c] sm:$0xf]
  %v8799 = vld [vmem:[%s5 + $0x1030] sm:$0xff]
  %v8800 = vld [vmem:[%s5 + $0x1038] sm:$0xff]
  %v8801 = vld [vmem:[%s5 + $0x1040] sm:$0xff]
  %v8802 = vld [vmem:[%s5 + $0x1048] sm:$0xf]
  %v8803 = vld [vmem:[%s5 + $0x104c] sm:$0xff]
  %v8804 = vld [vmem:[%s5 + $0x1054] sm:$0xff]
  %v8805 = vld [vmem:[%s5 + $0x105c] sm:$0xff]
  %v8806 = vld [vmem:[%s5 + $0x1064] sm:$0xf]
  %v8807 = vld [vmem:[%s5 + $0x1068] sm:$0xff]
  %v8808 = vld [vmem:[%s5 + $0x1070] sm:$0xff]
  %v8809 = vld [vmem:[%s5 + $0x1078] sm:$0xff]
  %v8810 = vld [vmem:[%s5 + $0x1080] sm:$0xf]
  %v8811 = vld [vmem:[%s5 + $0x1084] sm:$0xff]
  %v8812 = vld [vmem:[%s5 + $0x108c] sm:$0xff]
  %v8813 = vld [vmem:[%s5 + $0x1094] sm:$0xff]
  %v8814 = vld [vmem:[%s5 + $0x109c] sm:$0xf]
  %v8815 = vld [vmem:[%s5 + $0x10a0] sm:$0xff]
  %v8816 = vld [vmem:[%s5 + $0x10a8] sm:$0xff]
  %v8817 = vld [vmem:[%s5 + $0x10b0] sm:$0xff]
  %v8818 = vld [vmem:[%s5 + $0x10b8] sm:$0xf]
  %v8819 = vld [vmem:[%s5 + $0x10bc] sm:$0xff]
  %v8820 = vld [vmem:[%s5 + $0x10c4] sm:$0xff]
  %v8821 = vld [vmem:[%s5 + $0x10cc] sm:$0xff]
  %v8822 = vld [vmem:[%s5 + $0x10d4] sm:$0xf]
  %v8823 = vld [vmem:[%s5 + $0x10d8] sm:$0xff]
  %v8824 = vld [vmem:[%s5 + $0x10e0] sm:$0xff]
  %v8825 = vld [vmem:[%s5 + $0x10e8] sm:$0xff]
  %v8826 = vld [vmem:[%s5 + $0x10f0] sm:$0xf]
  %v8827 = vld [vmem:[%s5 + $0x10f4] sm:$0xff]
  %v8828 = vld [vmem:[%s5 + $0x10fc] sm:$0xff]
  %v8829 = vld [vmem:[%s5 + $0x1104] sm:$0xff]
  %v8830 = vld [vmem:[%s5 + $0x110c] sm:$0xf]
  %v8831 = vld [vmem:[%s5 + $0x1110] sm:$0xff]
  %v8832 = vld [vmem:[%s5 + $0x1118] sm:$0xff]
  %v8833 = vld [vmem:[%s5 + $0x1120] sm:$0xff]
  %v8834 = vld [vmem:[%s5 + $0x1128] sm:$0xf]
  %v8835 = vld [vmem:[%s5 + $0x112c] sm:$0xff]
  %v8836 = vld [vmem:[%s5 + $0x1134] sm:$0xff]
  %v8837 = vld [vmem:[%s5 + $0x113c] sm:$0xff]
  %v8838 = vld [vmem:[%s5 + $0x1144] sm:$0xf]
  %v8839 = vld [vmem:[%s5 + $0x1148] sm:$0xff]
  %v8840 = vld [vmem:[%s5 + $0x1150] sm:$0xff]
  %v8841 = vld [vmem:[%s5 + $0x1158] sm:$0xff]
  %v8842 = vld [vmem:[%s5 + $0x1160] sm:$0xf]
  %v8843 = vld [vmem:[%s5 + $0x1164] sm:$0xff]
  %v8844 = vld [vmem:[%s5 + $0x116c] sm:$0xff]
  %v8845 = vld [vmem:[%s5 + $0x1174] sm:$0xff]
  %v8846 = vld [vmem:[%s5 + $0x117c] sm:$0xf]
  %v8847 = vld [vmem:[%s5 + $0x1180] sm:$0xff]
  %v8848 = vld [vmem:[%s5 + $0x1188] sm:$0xff]
  %v8849 = vld [vmem:[%s5 + $0x1190] sm:$0xff]
  %v8850 = vld [vmem:[%s5 + $0x1198] sm:$0xf]
  %v8851 = vld [vmem:[%s5 + $0x119c] sm:$0xff]
  %v8852 = vld [vmem:[%s5 + $0x11a4] sm:$0xff]
  %v8853 = vld [vmem:[%s5 + $0x11ac] sm:$0xff]
  %v8854 = vld [vmem:[%s5 + $0x11b4] sm:$0xf]
  %v8855 = vld [vmem:[%s5 + $0x11b8] sm:$0xff]
  %v8856 = vld [vmem:[%s5 + $0x11c0] sm:$0xff]
  %v8857 = vld [vmem:[%s5 + $0x11c8] sm:$0xff]
  %v8858 = vld [vmem:[%s5 + $0x11d0] sm:$0xf]
  %v8859 = vld [vmem:[%s5 + $0x11d4] sm:$0xff]
  %v8860 = vld [vmem:[%s5 + $0x11dc] sm:$0xff]
  %v8861 = vld [vmem:[%s5 + $0x11e4] sm:$0xff]
  %v8862 = vld [vmem:[%s5 + $0x11ec] sm:$0xf]
  %v8863 = vld [vmem:[%s5 + $0x11f0] sm:$0xff]
  %v8864 = vld [vmem:[%s5 + $0x11f8] sm:$0xff]
  %v8865 = vld [vmem:[%s5 + $0x1200] sm:$0xff]
  %v8866 = vld [vmem:[%s5 + $0x1208] sm:$0xf]
  %v8867 = vld [vmem:[%s5 + $0x120c] sm:$0xff]
  %v8868 = vld [vmem:[%s5 + $0x1214] sm:$0xff]
  %v8869 = vld [vmem:[%s5 + $0x121c] sm:$0xff]
  %v8870 = vld [vmem:[%s5 + $0x1224] sm:$0xf]
  %v8871 = vld [vmem:[%s5 + $0x1228] sm:$0xff]
  %v8872 = vld [vmem:[%s5 + $0x1230] sm:$0xff]
  %v8873 = vld [vmem:[%s5 + $0x1238] sm:$0xff]
  %v8874 = vld [vmem:[%s5 + $0x1240] sm:$0xf]
  %v8875 = vld [vmem:[%s5 + $0x1244] sm:$0xff]
  %v8876 = vld [vmem:[%s5 + $0x124c] sm:$0xff]
  %v8877 = vld [vmem:[%s5 + $0x1254] sm:$0xff]
  %v8878 = vld [vmem:[%s5 + $0x125c] sm:$0xf]
  %v8879 = vld [vmem:[%s5 + $0x1260] sm:$0xff]
  %v8880 = vld [vmem:[%s5 + $0x1268] sm:$0xff]
  %v8881 = vld [vmem:[%s5 + $0x1270] sm:$0xff]
  %v8882 = vld [vmem:[%s5 + $0x1278] sm:$0xf]
  %v8883 = vld [vmem:[%s5 + $0x127c] sm:$0xff]
  %v8884 = vld [vmem:[%s5 + $0x1284] sm:$0xff]
  %v8885 = vld [vmem:[%s5 + $0x128c] sm:$0xff]
  %v8886 = vld [vmem:[%s5 + $0x1294] sm:$0xf]
  %v8887 = vld [vmem:[%s5 + $0x1298] sm:$0xff]
  %v8888 = vld [vmem:[%s5 + $0x12a0] sm:$0xff]
  %v8889 = vld [vmem:[%s5 + $0x12a8] sm:$0xff]
  %v8890 = vld [vmem:[%s5 + $0x12b0] sm:$0xf]
  %v8891 = vld [vmem:[%s5 + $0x12b4] sm:$0xff]
  %v8892 = vld [vmem:[%s5 + $0x12bc] sm:$0xff]
  %v8893 = vld [vmem:[%s5 + $0x12c4] sm:$0xff]
  %v8894 = vld [vmem:[%s5 + $0x12cc] sm:$0xf]
  %v8895 = vld [vmem:[%s5 + $0x12d0] sm:$0xff]
  %v8896 = vld [vmem:[%s5 + $0x12d8] sm:$0xff]
  %v8897 = vld [vmem:[%s5 + $0x12e0] sm:$0xff]
  %v8898 = vld [vmem:[%s5 + $0x12e8] sm:$0xf]
  %v8899 = vld [vmem:[%s5 + $0x12ec] sm:$0xff]
  %v8900 = vld [vmem:[%s5 + $0x12f4] sm:$0xff]
  %v8901 = vld [vmem:[%s5 + $0x12fc] sm:$0xff]
  %v8902 = vld [vmem:[%s5 + $0x1304] sm:$0xf]
  %v8903 = vld [vmem:[%s5 + $0x1308] sm:$0xff]
  %v8904 = vld [vmem:[%s5 + $0x1310] sm:$0xff]
  %v8905 = vld [vmem:[%s5 + $0x1318] sm:$0xff]
  %v8906 = vld [vmem:[%s5 + $0x1320] sm:$0xf]
  %v8907 = vld [vmem:[%s5 + $0x1324] sm:$0xff]
  %v8908 = vld [vmem:[%s5 + $0x132c] sm:$0xff]
  %v8909 = vld [vmem:[%s5 + $0x1334] sm:$0xff]
  %v8910 = vld [vmem:[%s5 + $0x133c] sm:$0xf]
  %v8911 = vld [vmem:[%s5 + $0x1340] sm:$0xff]
  %v8912 = vld [vmem:[%s5 + $0x1348] sm:$0xff]
  %v8913 = vld [vmem:[%s5 + $0x1350] sm:$0xff]
  %v8914 = vld [vmem:[%s5 + $0x1358] sm:$0xf]
  %v8915 = vld [vmem:[%s5 + $0x135c] sm:$0xff]
  %v8916 = vld [vmem:[%s5 + $0x1364] sm:$0xff]
  %v8917 = vld [vmem:[%s5 + $0x136c] sm:$0xff]
  %v8918 = vld [vmem:[%s5 + $0x1374] sm:$0xf]
  %v8919 = vld [vmem:[%s5 + $0x1378] sm:$0xff]
  %v8920 = vld [vmem:[%s5 + $0x1380] sm:$0xff]
  %v8921 = vld [vmem:[%s5 + $0x1388] sm:$0xff]
  %v8922 = vld [vmem:[%s5 + $0x1390] sm:$0xf]
  %v8923 = vld [vmem:[%s5 + $0x1394] sm:$0xff]
  %v8924 = vld [vmem:[%s5 + $0x139c] sm:$0xff]
  %v8925 = vld [vmem:[%s5 + $0x13a4] sm:$0xff]
  %v8926 = vld [vmem:[%s5 + $0x13ac] sm:$0xf]
  %v8927 = vld [vmem:[%s5 + $0x13b0] sm:$0xff]
  %v8928 = vld [vmem:[%s5 + $0x13b8] sm:$0xff]
  %v8929 = vld [vmem:[%s5 + $0x13c0] sm:$0xff]
  %v8930 = vld [vmem:[%s5 + $0x13c8] sm:$0xf]
  %v8931 = vld [vmem:[%s5 + $0x13cc] sm:$0xff]
  %v8932 = vld [vmem:[%s5 + $0x13d4] sm:$0xff]
  %v8933 = vld [vmem:[%s5 + $0x13dc] sm:$0xff]
  %v8934 = vld [vmem:[%s5 + $0x13e4] sm:$0xf]
  %v8935 = vld [vmem:[%s5 + $0x13e8] sm:$0xff]
  %v8936 = vld [vmem:[%s5 + $0x13f0] sm:$0xff]
  %v8937 = vld [vmem:[%s5 + $0x13f8] sm:$0xff]
  %v8938 = vld [vmem:[%s5 + $0x1400] sm:$0xf]
  %v8939 = vld [vmem:[%s5 + $0x1404] sm:$0xff]
  %v8940 = vld [vmem:[%s5 + $0x140c] sm:$0xff]
  %v8941 = vld [vmem:[%s5 + $0x1414] sm:$0xff]
  %v8942 = vld [vmem:[%s5 + $0x141c] sm:$0xf]
  %v8943 = vld [vmem:[%s5 + $0x1420] sm:$0xff]
  %v8944 = vld [vmem:[%s5 + $0x1428] sm:$0xff]
  %v8945 = vld [vmem:[%s5 + $0x1430] sm:$0xff]
  %v8946 = vld [vmem:[%s5 + $0x1438] sm:$0xf]
  %v8947 = vld [vmem:[%s5 + $0x143c] sm:$0xff]
  %v8948 = vld [vmem:[%s5 + $0x1444] sm:$0xff]
  %v8949 = vld [vmem:[%s5 + $0x144c] sm:$0xff]
  %v8950 = vld [vmem:[%s5 + $0x1454] sm:$0xf]
  %v8951 = vld [vmem:[%s5 + $0x1458] sm:$0xff]
  %v8952 = vld [vmem:[%s5 + $0x1460] sm:$0xff]
  %v8953 = vld [vmem:[%s5 + $0x1468] sm:$0xff]
  %v8954 = vld [vmem:[%s5 + $0x1470] sm:$0xf]
  %v8955 = vld [vmem:[%s5 + $0x1474] sm:$0xff]
  %v8956 = vld [vmem:[%s5 + $0x147c] sm:$0xff]
  %v8957 = vld [vmem:[%s5 + $0x1484] sm:$0xff]
  %v8958 = vld [vmem:[%s5 + $0x148c] sm:$0xf]
  %v8959 = vld [vmem:[%s5 + $0x1490] sm:$0xff]
  %v8960 = vld [vmem:[%s5 + $0x1498] sm:$0xff]
  %v8961 = vld [vmem:[%s5 + $0x14a0] sm:$0xff]
  %v8962 = vld [vmem:[%s5 + $0x14a8] sm:$0xf]
  %v8963 = vld [vmem:[%s5 + $0x14ac] sm:$0xff]
  %v8964 = vld [vmem:[%s5 + $0x14b4] sm:$0xff]
  %v8965 = vld [vmem:[%s5 + $0x14bc] sm:$0xff]
  %v8966 = vld [vmem:[%s5 + $0x14c4] sm:$0xf]
  %v8967 = vld [vmem:[%s5 + $0x14c8] sm:$0xff]
  %v8968 = vld [vmem:[%s5 + $0x14d0] sm:$0xff]
  %v8969 = vld [vmem:[%s5 + $0x14d8] sm:$0xff]
  %v8970 = vld [vmem:[%s5 + $0x14e0] sm:$0xf]
  %v8971 = vld [vmem:[%s5 + $0x14e4] sm:$0xff]
  %v8972 = vld [vmem:[%s5 + $0x14ec] sm:$0xff]
  %v8973 = vld [vmem:[%s5 + $0x14f4] sm:$0xff]
  %v8974 = vld [vmem:[%s5 + $0x14fc] sm:$0xf]
  %v8975 = vld [vmem:[%s5 + $0x1500] sm:$0xff]
  %v8976 = vld [vmem:[%s5 + $0x1508] sm:$0xff]
  %v8977 = vld [vmem:[%s5 + $0x1510] sm:$0xff]
  %v8978 = vld [vmem:[%s5 + $0x1518] sm:$0xf]
  %v8979 = vld [vmem:[%s5 + $0x151c] sm:$0xff]
  %v8980 = vld [vmem:[%s5 + $0x1524] sm:$0xff]
  %v8981 = vld [vmem:[%s5 + $0x152c] sm:$0xff]
  %v8982 = vld [vmem:[%s5 + $0x1534] sm:$0xf]
  %v8983 = vld [vmem:[%s5 + $0x1538] sm:$0xff]
  %v8984 = vld [vmem:[%s5 + $0x1540] sm:$0xff]
  %v8985 = vld [vmem:[%s5 + $0x1548] sm:$0xff]
  %v8986 = vld [vmem:[%s5 + $0x1550] sm:$0xf]
  %v8987 = vld [vmem:[%s5 + $0x1554] sm:$0xff]
  %v8988 = vld [vmem:[%s5 + $0x155c] sm:$0xff]
  %v8989 = vld [vmem:[%s5 + $0x1564] sm:$0xff]
  %v8990 = vld [vmem:[%s5 + $0x156c] sm:$0xf]
  %v8991 = vld [vmem:[%s5 + $0x1570] sm:$0xff]
  %v8992 = vld [vmem:[%s5 + $0x1578] sm:$0xff]
  %v8993 = vld [vmem:[%s5 + $0x1580] sm:$0xff]
  %v8994 = vld [vmem:[%s5 + $0x1588] sm:$0xf]
  %v8995 = vld [vmem:[%s5 + $0x158c] sm:$0xff]
  %v8996 = vld [vmem:[%s5 + $0x1594] sm:$0xff]
  %v8997 = vld [vmem:[%s5 + $0x159c] sm:$0xff]
  %v8998 = vld [vmem:[%s5 + $0x15a4] sm:$0xf]
  %v8999 = vld [vmem:[%s5 + $0x15a8] sm:$0xff]
  %v9000 = vld [vmem:[%s5 + $0x15b0] sm:$0xff]
  %v9001 = vld [vmem:[%s5 + $0x15b8] sm:$0xff]
  %v9002 = vld [vmem:[%s5 + $0x15c0] sm:$0xf]
  %v9003 = vld [vmem:[%s5 + $0x15c4] sm:$0xff]
  %v9004 = vld [vmem:[%s5 + $0x15cc] sm:$0xff]
  %v9005 = vld [vmem:[%s5 + $0x15d4] sm:$0xff]
  %v9006 = vld [vmem:[%s5 + $0x15dc] sm:$0xf]
  %v9007 = vld [vmem:[%s5 + $0x15e0] sm:$0xff]
  %v9008 = vld [vmem:[%s5 + $0x15e8] sm:$0xff]
  %v9009 = vld [vmem:[%s5 + $0x15f0] sm:$0xff]
  %v9010 = vld [vmem:[%s5 + $0x15f8] sm:$0xf]
  %v9011 = vld [vmem:[%s5 + $0x15fc] sm:$0xff]
  %v9012 = vld [vmem:[%s5 + $0x1604] sm:$0xff]
  %v9013 = vld [vmem:[%s5 + $0x160c] sm:$0xff]
  %v9014 = vld [vmem:[%s5 + $0x1614] sm:$0xf]
  %v9015 = vld [vmem:[%s5 + $0x1618] sm:$0xff]
  %v9016 = vld [vmem:[%s5 + $0x1620] sm:$0xff]
  %v9017 = vld [vmem:[%s5 + $0x1628] sm:$0xff]
  %v9018 = vld [vmem:[%s5 + $0x1630] sm:$0xf]
  %v9019 = vld [vmem:[%s5 + $0x1634] sm:$0xff]
  %v9020 = vld [vmem:[%s5 + $0x163c] sm:$0xff]
  %v9021 = vld [vmem:[%s5 + $0x1644] sm:$0xff]
  %v9022 = vld [vmem:[%s5 + $0x164c] sm:$0xf]
  %v9023 = vld [vmem:[%s5 + $0x1650] sm:$0xff]
  %v9024 = vld [vmem:[%s5 + $0x1658] sm:$0xff]
  %v9025 = vld [vmem:[%s5 + $0x1660] sm:$0xff]
  %v9026 = vld [vmem:[%s5 + $0x1668] sm:$0xf]
  %v9027 = vld [vmem:[%s5 + $0x166c] sm:$0xff]
  %v9028 = vld [vmem:[%s5 + $0x1674] sm:$0xff]
  %v9029 = vld [vmem:[%s5 + $0x167c] sm:$0xff]
  %v9030 = vld [vmem:[%s5 + $0x1684] sm:$0xf]
  %v9031 = vld [vmem:[%s5 + $0x1688] sm:$0xff]
  %v9032 = vld [vmem:[%s5 + $0x1690] sm:$0xff]
  %v9033 = vld [vmem:[%s5 + $0x1698] sm:$0xff]
  %v9034 = vld [vmem:[%s5 + $0x16a0] sm:$0xf]
  %v9035 = vld [vmem:[%s5 + $0x16a4] sm:$0xff]
  %v9036 = vld [vmem:[%s5 + $0x16ac] sm:$0xff]
  %v9037 = vld [vmem:[%s5 + $0x16b4] sm:$0xff]
  %v9038 = vld [vmem:[%s5 + $0x16bc] sm:$0xf]
  %v9039 = vld [vmem:[%s5 + $0x16c0] sm:$0xff]
  %v9040 = vld [vmem:[%s5 + $0x16c8] sm:$0xff]
  %v9041 = vld [vmem:[%s5 + $0x16d0] sm:$0xff]
  %v9042 = vld [vmem:[%s5 + $0x16d8] sm:$0xf]
  %v9043 = vld [vmem:[%s5 + $0x16dc] sm:$0xff]
  %v9044 = vld [vmem:[%s5 + $0x16e4] sm:$0xff]
  %v9045 = vld [vmem:[%s5 + $0x16ec] sm:$0xff]
  %v9046 = vld [vmem:[%s5 + $0x16f4] sm:$0xf]
  %v9047 = vld [vmem:[%s5 + $0x16f8] sm:$0xff]
  %v9048 = vld [vmem:[%s5 + $0x1700] sm:$0xff]
  %v9049 = vld [vmem:[%s5 + $0x1708] sm:$0xff]
  %v9050 = vld [vmem:[%s5 + $0x1710] sm:$0xf]
  %v9051 = vld [vmem:[%s5 + $0x1714] sm:$0xff]
  %v9052 = vld [vmem:[%s5 + $0x171c] sm:$0xff]
  %v9053 = vld [vmem:[%s5 + $0x1724] sm:$0xff]
  %v9054 = vld [vmem:[%s5 + $0x172c] sm:$0xf]
  %v9055 = vld [vmem:[%s5 + $0x1730] sm:$0xff]
  %v9056 = vld [vmem:[%s5 + $0x1738] sm:$0xff]
  %v9057 = vld [vmem:[%s5 + $0x1740] sm:$0xff]
  %v9058 = vld [vmem:[%s5 + $0x1748] sm:$0xf]
  %v9059 = vld [vmem:[%s5 + $0x174c] sm:$0xff]
  %v9060 = vld [vmem:[%s5 + $0x1754] sm:$0xff]
  %v9061 = vld [vmem:[%s5 + $0x175c] sm:$0xff]
  %v9062 = vld [vmem:[%s5 + $0x1764] sm:$0xf]
  %v9063 = vld [vmem:[%s5 + $0x1768] sm:$0xff]
  %v9064 = vld [vmem:[%s5 + $0x1770] sm:$0xff]
  %v9065 = vld [vmem:[%s5 + $0x1778] sm:$0xff]
  %v9066 = vld [vmem:[%s5 + $0x1780] sm:$0xf]
  %v9067 = vld [vmem:[%s5 + $0x1784] sm:$0xff]
  %v9068 = vld [vmem:[%s5 + $0x178c] sm:$0xff]
  %v9069 = vld [vmem:[%s5 + $0x1794] sm:$0xff]
  %v9070 = vld [vmem:[%s5 + $0x179c] sm:$0xf]
  %v9071 = vld [vmem:[%s5 + $0x17a0] sm:$0xff]
  %v9072 = vld [vmem:[%s5 + $0x17a8] sm:$0xff]
  %v9073 = vld [vmem:[%s5 + $0x17b0] sm:$0xff]
  %v9074 = vld [vmem:[%s5 + $0x17b8] sm:$0xf]
  %v9075 = vld [vmem:[%s5 + $0x17bc] sm:$0xff]
  %v9076 = vld [vmem:[%s5 + $0x17c4] sm:$0xff]
  %v9077 = vld [vmem:[%s5 + $0x17cc] sm:$0xff]
  %v9078 = vld [vmem:[%s5 + $0x17d4] sm:$0xf]
  %v9079 = vld [vmem:[%s5 + $0x17d8] sm:$0xff]
  %v9080 = vld [vmem:[%s5 + $0x17e0] sm:$0xff]
  %v9081 = vld [vmem:[%s5 + $0x17e8] sm:$0xff]
  %v9082 = vld [vmem:[%s5 + $0x17f0] sm:$0xf]
  %v9083 = vld [vmem:[%s5 + $0x17f4] sm:$0xff]
  %v9084 = vld [vmem:[%s5 + $0x17fc] sm:$0xff]
  %v9085 = vld [vmem:[%s5 + $0x1804] sm:$0xff]
  %v9086 = vld [vmem:[%s5 + $0x180c] sm:$0xf]
  %v9087 = vld [vmem:[%s5 + $0x1810] sm:$0xff]
  %v9088 = vld [vmem:[%s5 + $0x1818] sm:$0xff]
  %v9089 = vld [vmem:[%s5 + $0x1820] sm:$0xff]
  %v9090 = vld [vmem:[%s5 + $0x1828] sm:$0xf]
  %v9091 = vld [vmem:[%s5 + $0x182c] sm:$0xff]
  %v9092 = vld [vmem:[%s5 + $0x1834] sm:$0xff]
  %v9093 = vld [vmem:[%s5 + $0x183c] sm:$0xff]
  %v9094 = vld [vmem:[%s5 + $0x1844] sm:$0xf]
  %v9095 = vld [vmem:[%s5 + $0x1848] sm:$0xff]
  %v9096 = vld [vmem:[%s5 + $0x1850] sm:$0xff]
  %v9097 = vld [vmem:[%s5 + $0x1858] sm:$0xff]
  %v9098 = vld [vmem:[%s5 + $0x1860] sm:$0xf]
  %v9099 = vld [vmem:[%s5 + $0x1864] sm:$0xff]
  %v9100 = vld [vmem:[%s5 + $0x186c] sm:$0xff]
  %v9101 = vld [vmem:[%s5 + $0x1874] sm:$0xff]
  %v9102 = vld [vmem:[%s5 + $0x187c] sm:$0xf]
  %v9103 = vld [vmem:[%s5 + $0x1880] sm:$0xff]
  %v9104 = vld [vmem:[%s5 + $0x1888] sm:$0xff]
  %v9105 = vld [vmem:[%s5 + $0x1890] sm:$0xff]
  %v9106 = vld [vmem:[%s5 + $0x1898] sm:$0xf]
  %v9107 = vld [vmem:[%s5 + $0x189c] sm:$0xff]
  %v9108 = vld [vmem:[%s5 + $0x18a4] sm:$0xff]
  %v9109 = vld [vmem:[%s5 + $0x18ac] sm:$0xff]
  %v9110 = vld [vmem:[%s5 + $0x18b4] sm:$0xf]
  %v9111 = vld [vmem:[%s5 + $0x18b8] sm:$0xff]
  %v9112 = vld [vmem:[%s5 + $0x18c0] sm:$0xff]
  %v9113 = vld [vmem:[%s5 + $0x18c8] sm:$0xff]
  %v9114 = vld [vmem:[%s5 + $0x18d0] sm:$0xf]
  %v9115 = vld [vmem:[%s5 + $0x18d4] sm:$0xff]
  %v9116 = vld [vmem:[%s5 + $0x18dc] sm:$0xff]
  %v9117 = vld [vmem:[%s5 + $0x18e4] sm:$0xff]
  %v9118 = vld [vmem:[%s5 + $0x18ec] sm:$0xf]
  %v9119 = vld [vmem:[%s5 + $0x18f0] sm:$0xff]
  %v9120 = vld [vmem:[%s5 + $0x18f8] sm:$0xff]
  %v9121 = vld [vmem:[%s5 + $0x1900] sm:$0xff]
  %v9122 = vld [vmem:[%s5 + $0x1908] sm:$0xf]
  %v9123 = vld [vmem:[%s5 + $0x190c] sm:$0xff]
  %v9124 = vld [vmem:[%s5 + $0x1914] sm:$0xff]
  %v9125 = vld [vmem:[%s5 + $0x191c] sm:$0xff]
  %v9126 = vld [vmem:[%s5 + $0x1924] sm:$0xf]
  %v9127 = vld [vmem:[%s5 + $0x1928] sm:$0xff]
  %v9128 = vld [vmem:[%s5 + $0x1930] sm:$0xff]
  %v9129 = vld [vmem:[%s5 + $0x1938] sm:$0xff]
  %v9130 = vld [vmem:[%s5 + $0x1940] sm:$0xf]
  %v9131 = vld [vmem:[%s5 + $0x1944] sm:$0xff]
  %v9132 = vld [vmem:[%s5 + $0x194c] sm:$0xff]
  %v9133 = vld [vmem:[%s5 + $0x1954] sm:$0xff]
  %v9134 = vld [vmem:[%s5 + $0x195c] sm:$0xf]
  %v9135 = vld [vmem:[%s5 + $0x1960] sm:$0xff]
  %v9136 = vld [vmem:[%s5 + $0x1968] sm:$0xff]
  %v9137 = vld [vmem:[%s5 + $0x1970] sm:$0xff]
  %v9138 = vld [vmem:[%s5 + $0x1978] sm:$0xf]
  %v9139 = vld [vmem:[%s5 + $0x197c] sm:$0xff]
  %v9140 = vld [vmem:[%s5 + $0x1984] sm:$0xff]
  %v9141 = vld [vmem:[%s5 + $0x198c] sm:$0xff]
  %v9142 = vld [vmem:[%s5 + $0x1994] sm:$0xf]
  %v9143 = vld [vmem:[%s5 + $0x1998] sm:$0xff]
  %v9144 = vld [vmem:[%s5 + $0x19a0] sm:$0xff]
  %v9145 = vld [vmem:[%s5 + $0x19a8] sm:$0xff]
  %v9146 = vld [vmem:[%s5 + $0x19b0] sm:$0xf]
  %v9147 = vld [vmem:[%s5 + $0x19b4] sm:$0xff]
  %v9148 = vld [vmem:[%s5 + $0x19bc] sm:$0xff]
  %v9149 = vld [vmem:[%s5 + $0x19c4] sm:$0xff]
  %v9150 = vld [vmem:[%s5 + $0x19cc] sm:$0xf]
  %v9151 = vld [vmem:[%s5 + $0x19d0] sm:$0xff]
  %v9152 = vld [vmem:[%s5 + $0x19d8] sm:$0xff]
  %v9153 = vld [vmem:[%s5 + $0x19e0] sm:$0xff]
  %v9154 = vld [vmem:[%s5 + $0x19e8] sm:$0xf]
  %v9155 = vld [vmem:[%s5 + $0x19ec] sm:$0xff]
  %v9156 = vld [vmem:[%s5 + $0x19f4] sm:$0xff]
  %v9157 = vld [vmem:[%s5 + $0x19fc] sm:$0xff]
  %v9158 = vld [vmem:[%s5 + $0x1a04] sm:$0xf]
  %v9159 = vld [vmem:[%s5 + $0x1a08] sm:$0xff]
  %v9160 = vld [vmem:[%s5 + $0x1a10] sm:$0xff]
  %v9161 = vld [vmem:[%s5 + $0x1a18] sm:$0xff]
  %v9162 = vld [vmem:[%s5 + $0x1a20] sm:$0xf]
  %v9163 = vld [vmem:[%s5 + $0x1a24] sm:$0xff]
  %v9164 = vld [vmem:[%s5 + $0x1a2c] sm:$0xff]
  %v9165 = vld [vmem:[%s5 + $0x1a34] sm:$0xff]
  %v9166 = vld [vmem:[%s5 + $0x1a3c] sm:$0xf]
  %v9167 = vld [vmem:[%s5 + $0x1a40] sm:$0xff]
  %v9168 = vld [vmem:[%s5 + $0x1a48] sm:$0xff]
  %v9169 = vld [vmem:[%s5 + $0x1a50] sm:$0xff]
  %v9170 = vld [vmem:[%s5 + $0x1a58] sm:$0xf]
  %v9171 = vld [vmem:[%s5 + $0x1a5c] sm:$0xff]
  %v9172 = vld [vmem:[%s5 + $0x1a64] sm:$0xff]
  %v9173 = vld [vmem:[%s5 + $0x1a6c] sm:$0xff]
  %v9174 = vld [vmem:[%s5 + $0x1a74] sm:$0xf]
  %v9175 = vld [vmem:[%s5 + $0x1a78] sm:$0xff]
  %v9176 = vld [vmem:[%s5 + $0x1a80] sm:$0xff]
  %v9177 = vld [vmem:[%s5 + $0x1a88] sm:$0xff]
  %v9178 = vld [vmem:[%s5 + $0x1a90] sm:$0xf]
  %v9179 = vld [vmem:[%s5 + $0x1a94] sm:$0xff]
  %v9180 = vld [vmem:[%s5 + $0x1a9c] sm:$0xff]
  %v9181 = vld [vmem:[%s5 + $0x1aa4] sm:$0xff]
  %v9182 = vld [vmem:[%s5 + $0x1aac] sm:$0xf]
  %v9183 = vld [vmem:[%s5 + $0x1ab0] sm:$0xff]
  %v9184 = vld [vmem:[%s5 + $0x1ab8] sm:$0xff]
  %v9185 = vld [vmem:[%s5 + $0x1ac0] sm:$0xff]
  %v9186 = vld [vmem:[%s5 + $0x1ac8] sm:$0xf]
  %v9187 = vld [vmem:[%s5 + $0x1acc] sm:$0xff]
  %v9188 = vld [vmem:[%s5 + $0x1ad4] sm:$0xff]
  %v9189 = vld [vmem:[%s5 + $0x1adc] sm:$0xff]
  %v9190 = vld [vmem:[%s5 + $0x1ae4] sm:$0xf]
  %v9191 = vld [vmem:[%s5 + $0x1ae8] sm:$0xff]
  %v9192 = vld [vmem:[%s5 + $0x1af0] sm:$0xff]
  %v9193 = vld [vmem:[%s5 + $0x1af8] sm:$0xff]
  %v9194 = vld [vmem:[%s5 + $0x1b00] sm:$0xf]
  %v9195 = vld [vmem:[%s5 + $0x1b04] sm:$0xff]
  %v9196 = vld [vmem:[%s5 + $0x1b0c] sm:$0xff]
  %v9197 = vld [vmem:[%s5 + $0x1b14] sm:$0xff]
  %v9198 = vld [vmem:[%s5 + $0x1b1c] sm:$0xf]
  %v9199 = vld [vmem:[%s5 + $0x1b20] sm:$0xff]
  %v9200 = vld [vmem:[%s5 + $0x1b28] sm:$0xff]
  %v9201 = vld [vmem:[%s5 + $0x1b30] sm:$0xff]
  %v9202 = vld [vmem:[%s5 + $0x1b38] sm:$0xf]
  %v9203 = vld [vmem:[%s5 + $0x1b3c] sm:$0xff]
  %v9204 = vld [vmem:[%s5 + $0x1b44] sm:$0xff]
  %v9205 = vld [vmem:[%s5 + $0x1b4c] sm:$0xff]
  %v9206 = vld [vmem:[%s5 + $0x1b54] sm:$0xf]
  %v9207 = vld [vmem:[%s5 + $0x1b58] sm:$0xff]
  %v9208 = vld [vmem:[%s5 + $0x1b60] sm:$0xff]
  %v9209 = vld [vmem:[%s5 + $0x1b68] sm:$0xff]
  %v9210 = vld [vmem:[%s5 + $0x1b70] sm:$0xf]
  %v9211 = vld [vmem:[%s5 + $0x1b74] sm:$0xff]
  %v9212 = vld [vmem:[%s5 + $0x1b7c] sm:$0xff]
  %v9213 = vld [vmem:[%s5 + $0x1b84] sm:$0xff]
  %v9214 = vld [vmem:[%s5 + $0x1b8c] sm:$0xf]
  %v9215 = vld [vmem:[%s5 + $0x1b90] sm:$0xff]
  %v9216 = vld [vmem:[%s5 + $0x1b98] sm:$0xff]
  %v9217 = vld [vmem:[%s5 + $0x1ba0] sm:$0xff]
  %v9218 = vld [vmem:[%s5 + $0x1ba8] sm:$0xf]
  %v9219 = vld [vmem:[%s5 + $0x1bac] sm:$0xff]
  %v9220 = vld [vmem:[%s5 + $0x1bb4] sm:$0xff]
  %v9221 = vld [vmem:[%s5 + $0x1bbc] sm:$0xff]
  %v9222 = vld [vmem:[%s5 + $0x1bc4] sm:$0xf]
  %v9223 = vld [vmem:[%s5 + $0x1bc8] sm:$0xff]
  %v9224 = vld [vmem:[%s5 + $0x1bd0] sm:$0xff]
  %v9225 = vld [vmem:[%s5 + $0x1bd8] sm:$0xff]
  %v9226 = vld [vmem:[%s5 + $0x1be0] sm:$0xf]
  %v9227 = vld [vmem:[%s5 + $0x1be4] sm:$0xff]
  %v9228 = vld [vmem:[%s5 + $0x1bec] sm:$0xff]
  %v9229 = vld [vmem:[%s5 + $0x1bf4] sm:$0xff]
  %v9230 = vld [vmem:[%s5 + $0x1bfc] sm:$0xf]
  %v9231 = vld [vmem:[%s6] sm:$0xff]
  %v9233 = vlaneseq
  %v9234 = vshrl.u32 %v9233, 7
  %v9235 = vsub.s32 0, %v9234
  %v9236 = vrot.slane %v9231, %v9235
  %v9237 = vlaneseq
  %v9238 = vshrl.u32 %v9237, 7
  %v9239 = vsub.s32 1, %v9238
  %v9240 = vrot.slane %v9231, %v9239
  %v9241 = vlaneseq
  %v9242 = vshrl.u32 %v9241, 7
  %v9243 = vsub.s32 2, %v9242
  %v9244 = vrot.slane %v9231, %v9243
  %v9245 = vlaneseq
  %v9246 = vshrl.u32 %v9245, 7
  %v9247 = vsub.s32 3, %v9246
  %v9248 = vrot.slane %v9231, %v9247
  %v9249 = vlaneseq
  %v9250 = vshrl.u32 %v9249, 7
  %v9251 = vsub.s32 4, %v9250
  %v9252 = vrot.slane %v9231, %v9251
  %v9253 = vlaneseq
  %v9254 = vshrl.u32 %v9253, 7
  %v9255 = vsub.s32 5, %v9254
  %v9256 = vrot.slane %v9231, %v9255
  %v9257 = vlaneseq
  %v9258 = vshrl.u32 %v9257, 7
  %v9259 = vsub.s32 6, %v9258
  %v9260 = vrot.slane %v9231, %v9259
  %v10292 = vunpack.c.l.b16 %v8207
  %v10293 = vunpack.c.h.b16 %v8207
  %v10294 = vunpack.c.l.b16 %v8208
  %v10295 = vunpack.c.h.b16 %v8208
  %v10296 = vunpack.c.l.b16 %v8209
  %v10297 = vunpack.c.h.b16 %v8209
  %v10298 = vunpack.c.l.b16 %v8210
  %v10299 = vunpack.c.l.b16 %v8211
  %v10300 = vunpack.c.h.b16 %v8211
  %v10301 = vunpack.c.l.b16 %v8212
  %v10302 = vunpack.c.h.b16 %v8212
  %v10303 = vunpack.c.l.b16 %v8213
  %v10304 = vunpack.c.h.b16 %v8213
  %v10305 = vunpack.c.l.b16 %v8214
  %v10306 = vunpack.c.l.b16 %v8215
  %v10307 = vunpack.c.h.b16 %v8215
  %v10308 = vunpack.c.l.b16 %v8216
  %v10309 = vunpack.c.h.b16 %v8216
  %v10310 = vunpack.c.l.b16 %v8217
  %v10311 = vunpack.c.h.b16 %v8217
  %v10312 = vunpack.c.l.b16 %v8218
  %v10313 = vunpack.c.l.b16 %v8219
  %v10314 = vunpack.c.h.b16 %v8219
  %v10315 = vunpack.c.l.b16 %v8220
  %v10316 = vunpack.c.h.b16 %v8220
  %v10317 = vunpack.c.l.b16 %v8221
  %v10318 = vunpack.c.h.b16 %v8221
  %v10319 = vunpack.c.l.b16 %v8222
  %v10320 = vunpack.c.l.b16 %v8223
  %v10321 = vunpack.c.h.b16 %v8223
  %v10322 = vunpack.c.l.b16 %v8224
  %v10323 = vunpack.c.h.b16 %v8224
  %v10324 = vunpack.c.l.b16 %v8225
  %v10325 = vunpack.c.h.b16 %v8225
  %v10326 = vunpack.c.l.b16 %v8226
  %v10327 = vunpack.c.l.b16 %v8227
  %v10328 = vunpack.c.h.b16 %v8227
  %v10329 = vunpack.c.l.b16 %v8228
  %v10330 = vunpack.c.h.b16 %v8228
  %v10331 = vunpack.c.l.b16 %v8229
  %v10332 = vunpack.c.h.b16 %v8229
  %v10333 = vunpack.c.l.b16 %v8230
  %v10334 = vunpack.c.l.b16 %v8231
  %v10335 = vunpack.c.h.b16 %v8231
  %v10336 = vunpack.c.l.b16 %v8232
  %v10337 = vunpack.c.h.b16 %v8232
  %v10338 = vunpack.c.l.b16 %v8233
  %v10339 = vunpack.c.h.b16 %v8233
  %v10340 = vunpack.c.l.b16 %v8234
  %v10341 = vunpack.c.l.b16 %v8235
  %v10342 = vunpack.c.h.b16 %v8235
  %v10343 = vunpack.c.l.b16 %v8236
  %v10344 = vunpack.c.h.b16 %v8236
  %v10345 = vunpack.c.l.b16 %v8237
  %v10346 = vunpack.c.h.b16 %v8237
  %v10347 = vunpack.c.l.b16 %v8238
  %v10348 = vunpack.c.l.b16 %v8239
  %v10349 = vunpack.c.h.b16 %v8239
  %v10350 = vunpack.c.l.b16 %v8240
  %v10351 = vunpack.c.h.b16 %v8240
  %v10352 = vunpack.c.l.b16 %v8241
  %v10353 = vunpack.c.h.b16 %v8241
  %v10354 = vunpack.c.l.b16 %v8242
  %v10355 = vunpack.c.l.b16 %v8243
  %v10356 = vunpack.c.h.b16 %v8243
  %v10357 = vunpack.c.l.b16 %v8244
  %v10358 = vunpack.c.h.b16 %v8244
  %v10359 = vunpack.c.l.b16 %v8245
  %v10360 = vunpack.c.h.b16 %v8245
  %v10361 = vunpack.c.l.b16 %v8246
  %v10362 = vunpack.c.l.b16 %v8247
  %v10363 = vunpack.c.h.b16 %v8247
  %v10364 = vunpack.c.l.b16 %v8248
  %v10365 = vunpack.c.h.b16 %v8248
  %v10366 = vunpack.c.l.b16 %v8249
  %v10367 = vunpack.c.h.b16 %v8249
  %v10368 = vunpack.c.l.b16 %v8250
  %v10369 = vunpack.c.l.b16 %v8251
  %v10370 = vunpack.c.h.b16 %v8251
  %v10371 = vunpack.c.l.b16 %v8252
  %v10372 = vunpack.c.h.b16 %v8252
  %v10373 = vunpack.c.l.b16 %v8253
  %v10374 = vunpack.c.h.b16 %v8253
  %v10375 = vunpack.c.l.b16 %v8254
  %v10376 = vunpack.c.l.b16 %v8255
  %v10377 = vunpack.c.h.b16 %v8255
  %v10378 = vunpack.c.l.b16 %v8256
  %v10379 = vunpack.c.h.b16 %v8256
  %v10380 = vunpack.c.l.b16 %v8257
  %v10381 = vunpack.c.h.b16 %v8257
  %v10382 = vunpack.c.l.b16 %v8258
  %v10383 = vunpack.c.l.b16 %v8259
  %v10384 = vunpack.c.h.b16 %v8259
  %v10385 = vunpack.c.l.b16 %v8260
  %v10386 = vunpack.c.h.b16 %v8260
  %v10387 = vunpack.c.l.b16 %v8261
  %v10388 = vunpack.c.h.b16 %v8261
  %v10389 = vunpack.c.l.b16 %v8262
  %v10390 = vunpack.c.l.b16 %v8263
  %v10391 = vunpack.c.h.b16 %v8263
  %v10392 = vunpack.c.l.b16 %v8264
  %v10393 = vunpack.c.h.b16 %v8264
  %v10394 = vunpack.c.l.b16 %v8265
  %v10395 = vunpack.c.h.b16 %v8265
  %v10396 = vunpack.c.l.b16 %v8266
  %v10397 = vunpack.c.l.b16 %v8267
  %v10398 = vunpack.c.h.b16 %v8267
  %v10399 = vunpack.c.l.b16 %v8268
  %v10400 = vunpack.c.h.b16 %v8268
  %v10401 = vunpack.c.l.b16 %v8269
  %v10402 = vunpack.c.h.b16 %v8269
  %v10403 = vunpack.c.l.b16 %v8270
  %v10404 = vunpack.c.l.b16 %v8271
  %v10405 = vunpack.c.h.b16 %v8271
  %v10406 = vunpack.c.l.b16 %v8272
  %v10407 = vunpack.c.h.b16 %v8272
  %v10408 = vunpack.c.l.b16 %v8273
  %v10409 = vunpack.c.h.b16 %v8273
  %v10410 = vunpack.c.l.b16 %v8274
  %v10411 = vunpack.c.l.b16 %v8275
  %v10412 = vunpack.c.h.b16 %v8275
  %v10413 = vunpack.c.l.b16 %v8276
  %v10414 = vunpack.c.h.b16 %v8276
  %v10415 = vunpack.c.l.b16 %v8277
  %v10416 = vunpack.c.h.b16 %v8277
  %v10417 = vunpack.c.l.b16 %v8278
  %v10418 = vunpack.c.l.b16 %v8279
  %v10419 = vunpack.c.h.b16 %v8279
  %v10420 = vunpack.c.l.b16 %v8280
  %v10421 = vunpack.c.h.b16 %v8280
  %v10422 = vunpack.c.l.b16 %v8281
  %v10423 = vunpack.c.h.b16 %v8281
  %v10424 = vunpack.c.l.b16 %v8282
  %v10425 = vunpack.c.l.b16 %v8283
  %v10426 = vunpack.c.h.b16 %v8283
  %v10427 = vunpack.c.l.b16 %v8284
  %v10428 = vunpack.c.h.b16 %v8284
  %v10429 = vunpack.c.l.b16 %v8285
  %v10430 = vunpack.c.h.b16 %v8285
  %v10431 = vunpack.c.l.b16 %v8286
  %v10432 = vunpack.c.l.b16 %v8287
  %v10433 = vunpack.c.h.b16 %v8287
  %v10434 = vunpack.c.l.b16 %v8288
  %v10435 = vunpack.c.h.b16 %v8288
  %v10436 = vunpack.c.l.b16 %v8289
  %v10437 = vunpack.c.h.b16 %v8289
  %v10438 = vunpack.c.l.b16 %v8290
  %v10439 = vunpack.c.l.b16 %v8291
  %v10440 = vunpack.c.h.b16 %v8291
  %v10441 = vunpack.c.l.b16 %v8292
  %v10442 = vunpack.c.h.b16 %v8292
  %v10443 = vunpack.c.l.b16 %v8293
  %v10444 = vunpack.c.h.b16 %v8293
  %v10445 = vunpack.c.l.b16 %v8294
  %v10446 = vunpack.c.l.b16 %v8295
  %v10447 = vunpack.c.h.b16 %v8295
  %v10448 = vunpack.c.l.b16 %v8296
  %v10449 = vunpack.c.h.b16 %v8296
  %v10450 = vunpack.c.l.b16 %v8297
  %v10451 = vunpack.c.h.b16 %v8297
  %v10452 = vunpack.c.l.b16 %v8298
  %v10453 = vunpack.c.l.b16 %v8299
  %v10454 = vunpack.c.h.b16 %v8299
  %v10455 = vunpack.c.l.b16 %v8300
  %v10456 = vunpack.c.h.b16 %v8300
  %v10457 = vunpack.c.l.b16 %v8301
  %v10458 = vunpack.c.h.b16 %v8301
  %v10459 = vunpack.c.l.b16 %v8302
  %v10460 = vunpack.c.l.b16 %v8303
  %v10461 = vunpack.c.h.b16 %v8303
  %v10462 = vunpack.c.l.b16 %v8304
  %v10463 = vunpack.c.h.b16 %v8304
  %v10464 = vunpack.c.l.b16 %v8305
  %v10465 = vunpack.c.h.b16 %v8305
  %v10466 = vunpack.c.l.b16 %v8306
  %v10467 = vunpack.c.l.b16 %v8307
  %v10468 = vunpack.c.h.b16 %v8307
  %v10469 = vunpack.c.l.b16 %v8308
  %v10470 = vunpack.c.h.b16 %v8308
  %v10471 = vunpack.c.l.b16 %v8309
  %v10472 = vunpack.c.h.b16 %v8309
  %v10473 = vunpack.c.l.b16 %v8310
  %v10474 = vunpack.c.l.b16 %v8311
  %v10475 = vunpack.c.h.b16 %v8311
  %v10476 = vunpack.c.l.b16 %v8312
  %v10477 = vunpack.c.h.b16 %v8312
  %v10478 = vunpack.c.l.b16 %v8313
  %v10479 = vunpack.c.h.b16 %v8313
  %v10480 = vunpack.c.l.b16 %v8314
  %v10481 = vunpack.c.l.b16 %v8315
  %v10482 = vunpack.c.h.b16 %v8315
  %v10483 = vunpack.c.l.b16 %v8316
  %v10484 = vunpack.c.h.b16 %v8316
  %v10485 = vunpack.c.l.b16 %v8317
  %v10486 = vunpack.c.h.b16 %v8317
  %v10487 = vunpack.c.l.b16 %v8318
  %v10488 = vunpack.c.l.b16 %v8319
  %v10489 = vunpack.c.h.b16 %v8319
  %v10490 = vunpack.c.l.b16 %v8320
  %v10491 = vunpack.c.h.b16 %v8320
  %v10492 = vunpack.c.l.b16 %v8321
  %v10493 = vunpack.c.h.b16 %v8321
  %v10494 = vunpack.c.l.b16 %v8322
  %v10495 = vunpack.c.l.b16 %v8323
  %v10496 = vunpack.c.h.b16 %v8323
  %v10497 = vunpack.c.l.b16 %v8324
  %v10498 = vunpack.c.h.b16 %v8324
  %v10499 = vunpack.c.l.b16 %v8325
  %v10500 = vunpack.c.h.b16 %v8325
  %v10501 = vunpack.c.l.b16 %v8326
  %v10502 = vunpack.c.l.b16 %v8327
  %v10503 = vunpack.c.h.b16 %v8327
  %v10504 = vunpack.c.l.b16 %v8328
  %v10505 = vunpack.c.h.b16 %v8328
  %v10506 = vunpack.c.l.b16 %v8329
  %v10507 = vunpack.c.h.b16 %v8329
  %v10508 = vunpack.c.l.b16 %v8330
  %v10509 = vunpack.c.l.b16 %v8331
  %v10510 = vunpack.c.h.b16 %v8331
  %v10511 = vunpack.c.l.b16 %v8332
  %v10512 = vunpack.c.h.b16 %v8332
  %v10513 = vunpack.c.l.b16 %v8333
  %v10514 = vunpack.c.h.b16 %v8333
  %v10515 = vunpack.c.l.b16 %v8334
  %v10516 = vunpack.c.l.b16 %v8335
  %v10517 = vunpack.c.h.b16 %v8335
  %v10518 = vunpack.c.l.b16 %v8336
  %v10519 = vunpack.c.h.b16 %v8336
  %v10520 = vunpack.c.l.b16 %v8337
  %v10521 = vunpack.c.h.b16 %v8337
  %v10522 = vunpack.c.l.b16 %v8338
  %v10523 = vunpack.c.l.b16 %v8339
  %v10524 = vunpack.c.h.b16 %v8339
  %v10525 = vunpack.c.l.b16 %v8340
  %v10526 = vunpack.c.h.b16 %v8340
  %v10527 = vunpack.c.l.b16 %v8341
  %v10528 = vunpack.c.h.b16 %v8341
  %v10529 = vunpack.c.l.b16 %v8342
  %v10530 = vunpack.c.l.b16 %v8343
  %v10531 = vunpack.c.h.b16 %v8343
  %v10532 = vunpack.c.l.b16 %v8344
  %v10533 = vunpack.c.h.b16 %v8344
  %v10534 = vunpack.c.l.b16 %v8345
  %v10535 = vunpack.c.h.b16 %v8345
  %v10536 = vunpack.c.l.b16 %v8346
  %v10537 = vunpack.c.l.b16 %v8347
  %v10538 = vunpack.c.h.b16 %v8347
  %v10539 = vunpack.c.l.b16 %v8348
  %v10540 = vunpack.c.h.b16 %v8348
  %v10541 = vunpack.c.l.b16 %v8349
  %v10542 = vunpack.c.h.b16 %v8349
  %v10543 = vunpack.c.l.b16 %v8350
  %v10544 = vunpack.c.l.b16 %v8351
  %v10545 = vunpack.c.h.b16 %v8351
  %v10546 = vunpack.c.l.b16 %v8352
  %v10547 = vunpack.c.h.b16 %v8352
  %v10548 = vunpack.c.l.b16 %v8353
  %v10549 = vunpack.c.h.b16 %v8353
  %v10550 = vunpack.c.l.b16 %v8354
  %v10551 = vunpack.c.l.b16 %v8355
  %v10552 = vunpack.c.h.b16 %v8355
  %v10553 = vunpack.c.l.b16 %v8356
  %v10554 = vunpack.c.h.b16 %v8356
  %v10555 = vunpack.c.l.b16 %v8357
  %v10556 = vunpack.c.h.b16 %v8357
  %v10557 = vunpack.c.l.b16 %v8358
  %v10558 = vunpack.c.l.b16 %v8359
  %v10559 = vunpack.c.h.b16 %v8359
  %v10560 = vunpack.c.l.b16 %v8360
  %v10561 = vunpack.c.h.b16 %v8360
  %v10562 = vunpack.c.l.b16 %v8361
  %v10563 = vunpack.c.h.b16 %v8361
  %v10564 = vunpack.c.l.b16 %v8362
  %v10565 = vunpack.c.l.b16 %v8363
  %v10566 = vunpack.c.h.b16 %v8363
  %v10567 = vunpack.c.l.b16 %v8364
  %v10568 = vunpack.c.h.b16 %v8364
  %v10569 = vunpack.c.l.b16 %v8365
  %v10570 = vunpack.c.h.b16 %v8365
  %v10571 = vunpack.c.l.b16 %v8366
  %v10572 = vunpack.c.l.b16 %v8367
  %v10573 = vunpack.c.h.b16 %v8367
  %v10574 = vunpack.c.l.b16 %v8368
  %v10575 = vunpack.c.h.b16 %v8368
  %v10576 = vunpack.c.l.b16 %v8369
  %v10577 = vunpack.c.h.b16 %v8369
  %v10578 = vunpack.c.l.b16 %v8370
  %v10579 = vunpack.c.l.b16 %v8371
  %v10580 = vunpack.c.h.b16 %v8371
  %v10581 = vunpack.c.l.b16 %v8372
  %v10582 = vunpack.c.h.b16 %v8372
  %v10583 = vunpack.c.l.b16 %v8373
  %v10584 = vunpack.c.h.b16 %v8373
  %v10585 = vunpack.c.l.b16 %v8374
  %v10586 = vunpack.c.l.b16 %v8375
  %v10587 = vunpack.c.h.b16 %v8375
  %v10588 = vunpack.c.l.b16 %v8376
  %v10589 = vunpack.c.h.b16 %v8376
  %v10590 = vunpack.c.l.b16 %v8377
  %v10591 = vunpack.c.h.b16 %v8377
  %v10592 = vunpack.c.l.b16 %v8378
  %v10593 = vunpack.c.l.b16 %v8379
  %v10594 = vunpack.c.h.b16 %v8379
  %v10595 = vunpack.c.l.b16 %v8380
  %v10596 = vunpack.c.h.b16 %v8380
  %v10597 = vunpack.c.l.b16 %v8381
  %v10598 = vunpack.c.h.b16 %v8381
  %v10599 = vunpack.c.l.b16 %v8382
  %v10600 = vunpack.c.l.b16 %v8383
  %v10601 = vunpack.c.h.b16 %v8383
  %v10602 = vunpack.c.l.b16 %v8384
  %v10603 = vunpack.c.h.b16 %v8384
  %v10604 = vunpack.c.l.b16 %v8385
  %v10605 = vunpack.c.h.b16 %v8385
  %v10606 = vunpack.c.l.b16 %v8386
  %v10607 = vunpack.c.l.b16 %v8387
  %v10608 = vunpack.c.h.b16 %v8387
  %v10609 = vunpack.c.l.b16 %v8388
  %v10610 = vunpack.c.h.b16 %v8388
  %v10611 = vunpack.c.l.b16 %v8389
  %v10612 = vunpack.c.h.b16 %v8389
  %v10613 = vunpack.c.l.b16 %v8390
  %v10614 = vunpack.c.l.b16 %v8391
  %v10615 = vunpack.c.h.b16 %v8391
  %v10616 = vunpack.c.l.b16 %v8392
  %v10617 = vunpack.c.h.b16 %v8392
  %v10618 = vunpack.c.l.b16 %v8393
  %v10619 = vunpack.c.h.b16 %v8393
  %v10620 = vunpack.c.l.b16 %v8394
  %v10621 = vunpack.c.l.b16 %v8395
  %v10622 = vunpack.c.h.b16 %v8395
  %v10623 = vunpack.c.l.b16 %v8396
  %v10624 = vunpack.c.h.b16 %v8396
  %v10625 = vunpack.c.l.b16 %v8397
  %v10626 = vunpack.c.h.b16 %v8397
  %v10627 = vunpack.c.l.b16 %v8398
  %v10628 = vunpack.c.l.b16 %v8399
  %v10629 = vunpack.c.h.b16 %v8399
  %v10630 = vunpack.c.l.b16 %v8400
  %v10631 = vunpack.c.h.b16 %v8400
  %v10632 = vunpack.c.l.b16 %v8401
  %v10633 = vunpack.c.h.b16 %v8401
  %v10634 = vunpack.c.l.b16 %v8402
  %v10635 = vunpack.c.l.b16 %v8403
  %v10636 = vunpack.c.h.b16 %v8403
  %v10637 = vunpack.c.l.b16 %v8404
  %v10638 = vunpack.c.h.b16 %v8404
  %v10639 = vunpack.c.l.b16 %v8405
  %v10640 = vunpack.c.h.b16 %v8405
  %v10641 = vunpack.c.l.b16 %v8406
  %v10642 = vunpack.c.l.b16 %v8407
  %v10643 = vunpack.c.h.b16 %v8407
  %v10644 = vunpack.c.l.b16 %v8408
  %v10645 = vunpack.c.h.b16 %v8408
  %v10646 = vunpack.c.l.b16 %v8409
  %v10647 = vunpack.c.h.b16 %v8409
  %v10648 = vunpack.c.l.b16 %v8410
  %v10649 = vunpack.c.l.b16 %v8411
  %v10650 = vunpack.c.h.b16 %v8411
  %v10651 = vunpack.c.l.b16 %v8412
  %v10652 = vunpack.c.h.b16 %v8412
  %v10653 = vunpack.c.l.b16 %v8413
  %v10654 = vunpack.c.h.b16 %v8413
  %v10655 = vunpack.c.l.b16 %v8414
  %v10656 = vunpack.c.l.b16 %v8415
  %v10657 = vunpack.c.h.b16 %v8415
  %v10658 = vunpack.c.l.b16 %v8416
  %v10659 = vunpack.c.h.b16 %v8416
  %v10660 = vunpack.c.l.b16 %v8417
  %v10661 = vunpack.c.h.b16 %v8417
  %v10662 = vunpack.c.l.b16 %v8418
  %v10663 = vunpack.c.l.b16 %v8419
  %v10664 = vunpack.c.h.b16 %v8419
  %v10665 = vunpack.c.l.b16 %v8420
  %v10666 = vunpack.c.h.b16 %v8420
  %v10667 = vunpack.c.l.b16 %v8421
  %v10668 = vunpack.c.h.b16 %v8421
  %v10669 = vunpack.c.l.b16 %v8422
  %v10670 = vunpack.c.l.b16 %v8423
  %v10671 = vunpack.c.h.b16 %v8423
  %v10672 = vunpack.c.l.b16 %v8424
  %v10673 = vunpack.c.h.b16 %v8424
  %v10674 = vunpack.c.l.b16 %v8425
  %v10675 = vunpack.c.h.b16 %v8425
  %v10676 = vunpack.c.l.b16 %v8426
  %v10677 = vunpack.c.l.b16 %v8427
  %v10678 = vunpack.c.h.b16 %v8427
  %v10679 = vunpack.c.l.b16 %v8428
  %v10680 = vunpack.c.h.b16 %v8428
  %v10681 = vunpack.c.l.b16 %v8429
  %v10682 = vunpack.c.h.b16 %v8429
  %v10683 = vunpack.c.l.b16 %v8430
  %v10684 = vunpack.c.l.b16 %v8431
  %v10685 = vunpack.c.h.b16 %v8431
  %v10686 = vunpack.c.l.b16 %v8432
  %v10687 = vunpack.c.h.b16 %v8432
  %v10688 = vunpack.c.l.b16 %v8433
  %v10689 = vunpack.c.h.b16 %v8433
  %v10690 = vunpack.c.l.b16 %v8434
  %v10691 = vunpack.c.l.b16 %v8435
  %v10692 = vunpack.c.h.b16 %v8435
  %v10693 = vunpack.c.l.b16 %v8436
  %v10694 = vunpack.c.h.b16 %v8436
  %v10695 = vunpack.c.l.b16 %v8437
  %v10696 = vunpack.c.h.b16 %v8437
  %v10697 = vunpack.c.l.b16 %v8438
  %v10698 = vunpack.c.l.b16 %v8439
  %v10699 = vunpack.c.h.b16 %v8439
  %v10700 = vunpack.c.l.b16 %v8440
  %v10701 = vunpack.c.h.b16 %v8440
  %v10702 = vunpack.c.l.b16 %v8441
  %v10703 = vunpack.c.h.b16 %v8441
  %v10704 = vunpack.c.l.b16 %v8442
  %v10705 = vunpack.c.l.b16 %v8443
  %v10706 = vunpack.c.h.b16 %v8443
  %v10707 = vunpack.c.l.b16 %v8444
  %v10708 = vunpack.c.h.b16 %v8444
  %v10709 = vunpack.c.l.b16 %v8445
  %v10710 = vunpack.c.h.b16 %v8445
  %v10711 = vunpack.c.l.b16 %v8446
  %v10712 = vunpack.c.l.b16 %v8447
  %v10713 = vunpack.c.h.b16 %v8447
  %v10714 = vunpack.c.l.b16 %v8448
  %v10715 = vunpack.c.h.b16 %v8448
  %v10716 = vunpack.c.l.b16 %v8449
  %v10717 = vunpack.c.h.b16 %v8449
  %v10718 = vunpack.c.l.b16 %v8450
  %v10719 = vunpack.c.l.b16 %v8451
  %v10720 = vunpack.c.h.b16 %v8451
  %v10721 = vunpack.c.l.b16 %v8452
  %v10722 = vunpack.c.h.b16 %v8452
  %v10723 = vunpack.c.l.b16 %v8453
  %v10724 = vunpack.c.h.b16 %v8453
  %v10725 = vunpack.c.l.b16 %v8454
  %v10726 = vunpack.c.l.b16 %v8455
  %v10727 = vunpack.c.h.b16 %v8455
  %v10728 = vunpack.c.l.b16 %v8456
  %v10729 = vunpack.c.h.b16 %v8456
  %v10730 = vunpack.c.l.b16 %v8457
  %v10731 = vunpack.c.h.b16 %v8457
  %v10732 = vunpack.c.l.b16 %v8458
  %v10733 = vunpack.c.l.b16 %v8459
  %v10734 = vunpack.c.h.b16 %v8459
  %v10735 = vunpack.c.l.b16 %v8460
  %v10736 = vunpack.c.h.b16 %v8460
  %v10737 = vunpack.c.l.b16 %v8461
  %v10738 = vunpack.c.h.b16 %v8461
  %v10739 = vunpack.c.l.b16 %v8462
  %v10740 = vunpack.c.l.b16 %v8463
  %v10741 = vunpack.c.h.b16 %v8463
  %v10742 = vunpack.c.l.b16 %v8464
  %v10743 = vunpack.c.h.b16 %v8464
  %v10744 = vunpack.c.l.b16 %v8465
  %v10745 = vunpack.c.h.b16 %v8465
  %v10746 = vunpack.c.l.b16 %v8466
  %v10747 = vunpack.c.l.b16 %v8467
  %v10748 = vunpack.c.h.b16 %v8467
  %v10749 = vunpack.c.l.b16 %v8468
  %v10750 = vunpack.c.h.b16 %v8468
  %v10751 = vunpack.c.l.b16 %v8469
  %v10752 = vunpack.c.h.b16 %v8469
  %v10753 = vunpack.c.l.b16 %v8470
  %v10754 = vunpack.c.l.b16 %v8471
  %v10755 = vunpack.c.h.b16 %v8471
  %v10756 = vunpack.c.l.b16 %v8472
  %v10757 = vunpack.c.h.b16 %v8472
  %v10758 = vunpack.c.l.b16 %v8473
  %v10759 = vunpack.c.h.b16 %v8473
  %v10760 = vunpack.c.l.b16 %v8474
  %v10761 = vunpack.c.l.b16 %v8475
  %v10762 = vunpack.c.h.b16 %v8475
  %v10763 = vunpack.c.l.b16 %v8476
  %v10764 = vunpack.c.h.b16 %v8476
  %v10765 = vunpack.c.l.b16 %v8477
  %v10766 = vunpack.c.h.b16 %v8477
  %v10767 = vunpack.c.l.b16 %v8478
  %v10768 = vunpack.c.l.b16 %v8479
  %v10769 = vunpack.c.h.b16 %v8479
  %v10770 = vunpack.c.l.b16 %v8480
  %v10771 = vunpack.c.h.b16 %v8480
  %v10772 = vunpack.c.l.b16 %v8481
  %v10773 = vunpack.c.h.b16 %v8481
  %v10774 = vunpack.c.l.b16 %v8482
  %v10775 = vunpack.c.l.b16 %v8483
  %v10776 = vunpack.c.h.b16 %v8483
  %v10777 = vunpack.c.l.b16 %v8484
  %v10778 = vunpack.c.h.b16 %v8484
  %v10779 = vunpack.c.l.b16 %v8485
  %v10780 = vunpack.c.h.b16 %v8485
  %v10781 = vunpack.c.l.b16 %v8486
  %v10782 = vunpack.c.l.b16 %v8487
  %v10783 = vunpack.c.h.b16 %v8487
  %v10784 = vunpack.c.l.b16 %v8488
  %v10785 = vunpack.c.h.b16 %v8488
  %v10786 = vunpack.c.l.b16 %v8489
  %v10787 = vunpack.c.h.b16 %v8489
  %v10788 = vunpack.c.l.b16 %v8490
  %v10789 = vunpack.c.l.b16 %v8491
  %v10790 = vunpack.c.h.b16 %v8491
  %v10791 = vunpack.c.l.b16 %v8492
  %v10792 = vunpack.c.h.b16 %v8492
  %v10793 = vunpack.c.l.b16 %v8493
  %v10794 = vunpack.c.h.b16 %v8493
  %v10795 = vunpack.c.l.b16 %v8494
  %v10796 = vunpack.c.l.b16 %v8495
  %v10797 = vunpack.c.h.b16 %v8495
  %v10798 = vunpack.c.l.b16 %v8496
  %v10799 = vunpack.c.h.b16 %v8496
  %v10800 = vunpack.c.l.b16 %v8497
  %v10801 = vunpack.c.h.b16 %v8497
  %v10802 = vunpack.c.l.b16 %v8498
  %v10803 = vunpack.c.l.b16 %v8499
  %v10804 = vunpack.c.h.b16 %v8499
  %v10805 = vunpack.c.l.b16 %v8500
  %v10806 = vunpack.c.h.b16 %v8500
  %v10807 = vunpack.c.l.b16 %v8501
  %v10808 = vunpack.c.h.b16 %v8501
  %v10809 = vunpack.c.l.b16 %v8502
  %v10810 = vunpack.c.l.b16 %v8503
  %v10811 = vunpack.c.h.b16 %v8503
  %v10812 = vunpack.c.l.b16 %v8504
  %v10813 = vunpack.c.h.b16 %v8504
  %v10814 = vunpack.c.l.b16 %v8505
  %v10815 = vunpack.c.h.b16 %v8505
  %v10816 = vunpack.c.l.b16 %v8506
  %v10817 = vunpack.c.l.b16 %v8507
  %v10818 = vunpack.c.h.b16 %v8507
  %v10819 = vunpack.c.l.b16 %v8508
  %v10820 = vunpack.c.h.b16 %v8508
  %v10821 = vunpack.c.l.b16 %v8509
  %v10822 = vunpack.c.h.b16 %v8509
  %v10823 = vunpack.c.l.b16 %v8510
  %v10824 = vunpack.c.l.b16 %v8511
  %v10825 = vunpack.c.h.b16 %v8511
  %v10826 = vunpack.c.l.b16 %v8512
  %v10827 = vunpack.c.h.b16 %v8512
  %v10828 = vunpack.c.l.b16 %v8513
  %v10829 = vunpack.c.h.b16 %v8513
  %v10830 = vunpack.c.l.b16 %v8514
  %v10831 = vunpack.c.l.b16 %v8515
  %v10832 = vunpack.c.h.b16 %v8515
  %v10833 = vunpack.c.l.b16 %v8516
  %v10834 = vunpack.c.h.b16 %v8516
  %v10835 = vunpack.c.l.b16 %v8517
  %v10836 = vunpack.c.h.b16 %v8517
  %v10837 = vunpack.c.l.b16 %v8518
  %v10838 = vunpack.c.l.b16 %v8519
  %v10839 = vunpack.c.h.b16 %v8519
  %v10840 = vunpack.c.l.b16 %v8520
  %v10841 = vunpack.c.h.b16 %v8520
  %v10842 = vunpack.c.l.b16 %v8521
  %v10843 = vunpack.c.h.b16 %v8521
  %v10844 = vunpack.c.l.b16 %v8522
  %v10845 = vunpack.c.l.b16 %v8523
  %v10846 = vunpack.c.h.b16 %v8523
  %v10847 = vunpack.c.l.b16 %v8524
  %v10848 = vunpack.c.h.b16 %v8524
  %v10849 = vunpack.c.l.b16 %v8525
  %v10850 = vunpack.c.h.b16 %v8525
  %v10851 = vunpack.c.l.b16 %v8526
  %v10852 = vunpack.c.l.b16 %v8527
  %v10853 = vunpack.c.h.b16 %v8527
  %v10854 = vunpack.c.l.b16 %v8528
  %v10855 = vunpack.c.h.b16 %v8528
  %v10856 = vunpack.c.l.b16 %v8529
  %v10857 = vunpack.c.h.b16 %v8529
  %v10858 = vunpack.c.l.b16 %v8530
  %v10859 = vunpack.c.l.b16 %v8531
  %v10860 = vunpack.c.h.b16 %v8531
  %v10861 = vunpack.c.l.b16 %v8532
  %v10862 = vunpack.c.h.b16 %v8532
  %v10863 = vunpack.c.l.b16 %v8533
  %v10864 = vunpack.c.h.b16 %v8533
  %v10865 = vunpack.c.l.b16 %v8534
  %v10866 = vunpack.c.l.b16 %v8535
  %v10867 = vunpack.c.h.b16 %v8535
  %v10868 = vunpack.c.l.b16 %v8536
  %v10869 = vunpack.c.h.b16 %v8536
  %v10870 = vunpack.c.l.b16 %v8537
  %v10871 = vunpack.c.h.b16 %v8537
  %v10872 = vunpack.c.l.b16 %v8538
  %v10873 = vunpack.c.l.b16 %v8539
  %v10874 = vunpack.c.h.b16 %v8539
  %v10875 = vunpack.c.l.b16 %v8540
  %v10876 = vunpack.c.h.b16 %v8540
  %v10877 = vunpack.c.l.b16 %v8541
  %v10878 = vunpack.c.h.b16 %v8541
  %v10879 = vunpack.c.l.b16 %v8542
  %v10880 = vunpack.c.l.b16 %v8543
  %v10881 = vunpack.c.h.b16 %v8543
  %v10882 = vunpack.c.l.b16 %v8544
  %v10883 = vunpack.c.h.b16 %v8544
  %v10884 = vunpack.c.l.b16 %v8545
  %v10885 = vunpack.c.h.b16 %v8545
  %v10886 = vunpack.c.l.b16 %v8546
  %v10887 = vunpack.c.l.b16 %v8547
  %v10888 = vunpack.c.h.b16 %v8547
  %v10889 = vunpack.c.l.b16 %v8548
  %v10890 = vunpack.c.h.b16 %v8548
  %v10891 = vunpack.c.l.b16 %v8549
  %v10892 = vunpack.c.h.b16 %v8549
  %v10893 = vunpack.c.l.b16 %v8550
  %v10894 = vunpack.c.l.b16 %v8551
  %v10895 = vunpack.c.h.b16 %v8551
  %v10896 = vunpack.c.l.b16 %v8552
  %v10897 = vunpack.c.h.b16 %v8552
  %v10898 = vunpack.c.l.b16 %v8553
  %v10899 = vunpack.c.h.b16 %v8553
  %v10900 = vunpack.c.l.b16 %v8554
  %v10901 = vunpack.c.l.b16 %v8555
  %v10902 = vunpack.c.h.b16 %v8555
  %v10903 = vunpack.c.l.b16 %v8556
  %v10904 = vunpack.c.h.b16 %v8556
  %v10905 = vunpack.c.l.b16 %v8557
  %v10906 = vunpack.c.h.b16 %v8557
  %v10907 = vunpack.c.l.b16 %v8558
  %v10908 = vunpack.c.l.b16 %v8559
  %v10909 = vunpack.c.h.b16 %v8559
  %v10910 = vunpack.c.l.b16 %v8560
  %v10911 = vunpack.c.h.b16 %v8560
  %v10912 = vunpack.c.l.b16 %v8561
  %v10913 = vunpack.c.h.b16 %v8561
  %v10914 = vunpack.c.l.b16 %v8562
  %v10915 = vunpack.c.l.b16 %v8563
  %v10916 = vunpack.c.h.b16 %v8563
  %v10917 = vunpack.c.l.b16 %v8564
  %v10918 = vunpack.c.h.b16 %v8564
  %v10919 = vunpack.c.l.b16 %v8565
  %v10920 = vunpack.c.h.b16 %v8565
  %v10921 = vunpack.c.l.b16 %v8566
  %v10922 = vunpack.c.l.b16 %v8567
  %v10923 = vunpack.c.h.b16 %v8567
  %v10924 = vunpack.c.l.b16 %v8568
  %v10925 = vunpack.c.h.b16 %v8568
  %v10926 = vunpack.c.l.b16 %v8569
  %v10927 = vunpack.c.h.b16 %v8569
  %v10928 = vunpack.c.l.b16 %v8570
  %v10929 = vunpack.c.l.b16 %v8571
  %v10930 = vunpack.c.h.b16 %v8571
  %v10931 = vunpack.c.l.b16 %v8572
  %v10932 = vunpack.c.h.b16 %v8572
  %v10933 = vunpack.c.l.b16 %v8573
  %v10934 = vunpack.c.h.b16 %v8573
  %v10935 = vunpack.c.l.b16 %v8574
  %v10936 = vunpack.c.l.b16 %v8575
  %v10937 = vunpack.c.h.b16 %v8575
  %v10938 = vunpack.c.l.b16 %v8576
  %v10939 = vunpack.c.h.b16 %v8576
  %v10940 = vunpack.c.l.b16 %v8577
  %v10941 = vunpack.c.h.b16 %v8577
  %v10942 = vunpack.c.l.b16 %v8578
  %v10943 = vunpack.c.l.b16 %v8579
  %v10944 = vunpack.c.h.b16 %v8579
  %v10945 = vunpack.c.l.b16 %v8580
  %v10946 = vunpack.c.h.b16 %v8580
  %v10947 = vunpack.c.l.b16 %v8581
  %v10948 = vunpack.c.h.b16 %v8581
  %v10949 = vunpack.c.l.b16 %v8582
  %v10950 = vunpack.c.l.b16 %v8583
  %v10951 = vunpack.c.h.b16 %v8583
  %v10952 = vunpack.c.l.b16 %v8584
  %v10953 = vunpack.c.h.b16 %v8584
  %v10954 = vunpack.c.l.b16 %v8585
  %v10955 = vunpack.c.h.b16 %v8585
  %v10956 = vunpack.c.l.b16 %v8586
  %v10957 = vunpack.c.l.b16 %v8587
  %v10958 = vunpack.c.h.b16 %v8587
  %v10959 = vunpack.c.l.b16 %v8588
  %v10960 = vunpack.c.h.b16 %v8588
  %v10961 = vunpack.c.l.b16 %v8589
  %v10962 = vunpack.c.h.b16 %v8589
  %v10963 = vunpack.c.l.b16 %v8590
  %v10964 = vunpack.c.l.b16 %v8591
  %v10965 = vunpack.c.h.b16 %v8591
  %v10966 = vunpack.c.l.b16 %v8592
  %v10967 = vunpack.c.h.b16 %v8592
  %v10968 = vunpack.c.l.b16 %v8593
  %v10969 = vunpack.c.h.b16 %v8593
  %v10970 = vunpack.c.l.b16 %v8594
  %v10971 = vunpack.c.l.b16 %v8595
  %v10972 = vunpack.c.h.b16 %v8595
  %v10973 = vunpack.c.l.b16 %v8596
  %v10974 = vunpack.c.h.b16 %v8596
  %v10975 = vunpack.c.l.b16 %v8597
  %v10976 = vunpack.c.h.b16 %v8597
  %v10977 = vunpack.c.l.b16 %v8598
  %v10978 = vunpack.c.l.b16 %v8599
  %v10979 = vunpack.c.h.b16 %v8599
  %v10980 = vunpack.c.l.b16 %v8600
  %v10981 = vunpack.c.h.b16 %v8600
  %v10982 = vunpack.c.l.b16 %v8601
  %v10983 = vunpack.c.h.b16 %v8601
  %v10984 = vunpack.c.l.b16 %v8602
  %v10985 = vunpack.c.l.b16 %v8603
  %v10986 = vunpack.c.h.b16 %v8603
  %v10987 = vunpack.c.l.b16 %v8604
  %v10988 = vunpack.c.h.b16 %v8604
  %v10989 = vunpack.c.l.b16 %v8605
  %v10990 = vunpack.c.h.b16 %v8605
  %v10991 = vunpack.c.l.b16 %v8606
  %v10992 = vunpack.c.l.b16 %v8607
  %v10993 = vunpack.c.h.b16 %v8607
  %v10994 = vunpack.c.l.b16 %v8608
  %v10995 = vunpack.c.h.b16 %v8608
  %v10996 = vunpack.c.l.b16 %v8609
  %v10997 = vunpack.c.h.b16 %v8609
  %v10998 = vunpack.c.l.b16 %v8610
  %v10999 = vunpack.c.l.b16 %v8611
  %v11000 = vunpack.c.h.b16 %v8611
  %v11001 = vunpack.c.l.b16 %v8612
  %v11002 = vunpack.c.h.b16 %v8612
  %v11003 = vunpack.c.l.b16 %v8613
  %v11004 = vunpack.c.h.b16 %v8613
  %v11005 = vunpack.c.l.b16 %v8614
  %v11006 = vunpack.c.l.b16 %v8615
  %v11007 = vunpack.c.h.b16 %v8615
  %v11008 = vunpack.c.l.b16 %v8616
  %v11009 = vunpack.c.h.b16 %v8616
  %v11010 = vunpack.c.l.b16 %v8617
  %v11011 = vunpack.c.h.b16 %v8617
  %v11012 = vunpack.c.l.b16 %v8618
  %v11013 = vunpack.c.l.b16 %v8619
  %v11014 = vunpack.c.h.b16 %v8619
  %v11015 = vunpack.c.l.b16 %v8620
  %v11016 = vunpack.c.h.b16 %v8620
  %v11017 = vunpack.c.l.b16 %v8621
  %v11018 = vunpack.c.h.b16 %v8621
  %v11019 = vunpack.c.l.b16 %v8622
  %v11020 = vunpack.c.l.b16 %v8623
  %v11021 = vunpack.c.h.b16 %v8623
  %v11022 = vunpack.c.l.b16 %v8624
  %v11023 = vunpack.c.h.b16 %v8624
  %v11024 = vunpack.c.l.b16 %v8625
  %v11025 = vunpack.c.h.b16 %v8625
  %v11026 = vunpack.c.l.b16 %v8626
  %v11027 = vunpack.c.l.b16 %v8627
  %v11028 = vunpack.c.h.b16 %v8627
  %v11029 = vunpack.c.l.b16 %v8628
  %v11030 = vunpack.c.h.b16 %v8628
  %v11031 = vunpack.c.l.b16 %v8629
  %v11032 = vunpack.c.h.b16 %v8629
  %v11033 = vunpack.c.l.b16 %v8630
  %v11034 = vunpack.c.l.b16 %v8631
  %v11035 = vunpack.c.h.b16 %v8631
  %v11036 = vunpack.c.l.b16 %v8632
  %v11037 = vunpack.c.h.b16 %v8632
  %v11038 = vunpack.c.l.b16 %v8633
  %v11039 = vunpack.c.h.b16 %v8633
  %v11040 = vunpack.c.l.b16 %v8634
  %v11041 = vunpack.c.l.b16 %v8635
  %v11042 = vunpack.c.h.b16 %v8635
  %v11043 = vunpack.c.l.b16 %v8636
  %v11044 = vunpack.c.h.b16 %v8636
  %v11045 = vunpack.c.l.b16 %v8637
  %v11046 = vunpack.c.h.b16 %v8637
  %v11047 = vunpack.c.l.b16 %v8638
  %v11048 = vunpack.c.l.b16 %v8639
  %v11049 = vunpack.c.h.b16 %v8639
  %v11050 = vunpack.c.l.b16 %v8640
  %v11051 = vunpack.c.h.b16 %v8640
  %v11052 = vunpack.c.l.b16 %v8641
  %v11053 = vunpack.c.h.b16 %v8641
  %v11054 = vunpack.c.l.b16 %v8642
  %v11055 = vunpack.c.l.b16 %v8643
  %v11056 = vunpack.c.h.b16 %v8643
  %v11057 = vunpack.c.l.b16 %v8644
  %v11058 = vunpack.c.h.b16 %v8644
  %v11059 = vunpack.c.l.b16 %v8645
  %v11060 = vunpack.c.h.b16 %v8645
  %v11061 = vunpack.c.l.b16 %v8646
  %v11062 = vunpack.c.l.b16 %v8647
  %v11063 = vunpack.c.h.b16 %v8647
  %v11064 = vunpack.c.l.b16 %v8648
  %v11065 = vunpack.c.h.b16 %v8648
  %v11066 = vunpack.c.l.b16 %v8649
  %v11067 = vunpack.c.h.b16 %v8649
  %v11068 = vunpack.c.l.b16 %v8650
  %v11069 = vunpack.c.l.b16 %v8651
  %v11070 = vunpack.c.h.b16 %v8651
  %v11071 = vunpack.c.l.b16 %v8652
  %v11072 = vunpack.c.h.b16 %v8652
  %v11073 = vunpack.c.l.b16 %v8653
  %v11074 = vunpack.c.h.b16 %v8653
  %v11075 = vunpack.c.l.b16 %v8654
  %v11076 = vunpack.c.l.b16 %v8655
  %v11077 = vunpack.c.h.b16 %v8655
  %v11078 = vunpack.c.l.b16 %v8656
  %v11079 = vunpack.c.h.b16 %v8656
  %v11080 = vunpack.c.l.b16 %v8657
  %v11081 = vunpack.c.h.b16 %v8657
  %v11082 = vunpack.c.l.b16 %v8658
  %v11083 = vunpack.c.l.b16 %v8659
  %v11084 = vunpack.c.h.b16 %v8659
  %v11085 = vunpack.c.l.b16 %v8660
  %v11086 = vunpack.c.h.b16 %v8660
  %v11087 = vunpack.c.l.b16 %v8661
  %v11088 = vunpack.c.h.b16 %v8661
  %v11089 = vunpack.c.l.b16 %v8662
  %v11090 = vunpack.c.l.b16 %v8663
  %v11091 = vunpack.c.h.b16 %v8663
  %v11092 = vunpack.c.l.b16 %v8664
  %v11093 = vunpack.c.h.b16 %v8664
  %v11094 = vunpack.c.l.b16 %v8665
  %v11095 = vunpack.c.h.b16 %v8665
  %v11096 = vunpack.c.l.b16 %v8666
  %v11097 = vunpack.c.l.b16 %v8667
  %v11098 = vunpack.c.h.b16 %v8667
  %v11099 = vunpack.c.l.b16 %v8668
  %v11100 = vunpack.c.h.b16 %v8668
  %v11101 = vunpack.c.l.b16 %v8669
  %v11102 = vunpack.c.h.b16 %v8669
  %v11103 = vunpack.c.l.b16 %v8670
  %v11104 = vunpack.c.l.b16 %v8671
  %v11105 = vunpack.c.h.b16 %v8671
  %v11106 = vunpack.c.l.b16 %v8672
  %v11107 = vunpack.c.h.b16 %v8672
  %v11108 = vunpack.c.l.b16 %v8673
  %v11109 = vunpack.c.h.b16 %v8673
  %v11110 = vunpack.c.l.b16 %v8674
  %v11111 = vunpack.c.l.b16 %v8675
  %v11112 = vunpack.c.h.b16 %v8675
  %v11113 = vunpack.c.l.b16 %v8676
  %v11114 = vunpack.c.h.b16 %v8676
  %v11115 = vunpack.c.l.b16 %v8677
  %v11116 = vunpack.c.h.b16 %v8677
  %v11117 = vunpack.c.l.b16 %v8678
  %v11118 = vunpack.c.l.b16 %v8679
  %v11119 = vunpack.c.h.b16 %v8679
  %v11120 = vunpack.c.l.b16 %v8680
  %v11121 = vunpack.c.h.b16 %v8680
  %v11122 = vunpack.c.l.b16 %v8681
  %v11123 = vunpack.c.h.b16 %v8681
  %v11124 = vunpack.c.l.b16 %v8682
  %v11125 = vunpack.c.l.b16 %v8683
  %v11126 = vunpack.c.h.b16 %v8683
  %v11127 = vunpack.c.l.b16 %v8684
  %v11128 = vunpack.c.h.b16 %v8684
  %v11129 = vunpack.c.l.b16 %v8685
  %v11130 = vunpack.c.h.b16 %v8685
  %v11131 = vunpack.c.l.b16 %v8686
  %v11132 = vunpack.c.l.b16 %v8687
  %v11133 = vunpack.c.h.b16 %v8687
  %v11134 = vunpack.c.l.b16 %v8688
  %v11135 = vunpack.c.h.b16 %v8688
  %v11136 = vunpack.c.l.b16 %v8689
  %v11137 = vunpack.c.h.b16 %v8689
  %v11138 = vunpack.c.l.b16 %v8690
  %v11139 = vunpack.c.l.b16 %v8691
  %v11140 = vunpack.c.h.b16 %v8691
  %v11141 = vunpack.c.l.b16 %v8692
  %v11142 = vunpack.c.h.b16 %v8692
  %v11143 = vunpack.c.l.b16 %v8693
  %v11144 = vunpack.c.h.b16 %v8693
  %v11145 = vunpack.c.l.b16 %v8694
  %v11146 = vunpack.c.l.b16 %v8695
  %v11147 = vunpack.c.h.b16 %v8695
  %v11148 = vunpack.c.l.b16 %v8696
  %v11149 = vunpack.c.h.b16 %v8696
  %v11150 = vunpack.c.l.b16 %v8697
  %v11151 = vunpack.c.h.b16 %v8697
  %v11152 = vunpack.c.l.b16 %v8698
  %v11153 = vunpack.c.l.b16 %v8699
  %v11154 = vunpack.c.h.b16 %v8699
  %v11155 = vunpack.c.l.b16 %v8700
  %v11156 = vunpack.c.h.b16 %v8700
  %v11157 = vunpack.c.l.b16 %v8701
  %v11158 = vunpack.c.h.b16 %v8701
  %v11159 = vunpack.c.l.b16 %v8702
  %v11160 = vunpack.c.l.b16 %v8703
  %v11161 = vunpack.c.h.b16 %v8703
  %v11162 = vunpack.c.l.b16 %v8704
  %v11163 = vunpack.c.h.b16 %v8704
  %v11164 = vunpack.c.l.b16 %v8705
  %v11165 = vunpack.c.h.b16 %v8705
  %v11166 = vunpack.c.l.b16 %v8706
  %v11167 = vunpack.c.l.b16 %v8707
  %v11168 = vunpack.c.h.b16 %v8707
  %v11169 = vunpack.c.l.b16 %v8708
  %v11170 = vunpack.c.h.b16 %v8708
  %v11171 = vunpack.c.l.b16 %v8709
  %v11172 = vunpack.c.h.b16 %v8709
  %v11173 = vunpack.c.l.b16 %v8710
  %v11174 = vunpack.c.l.b16 %v8711
  %v11175 = vunpack.c.h.b16 %v8711
  %v11176 = vunpack.c.l.b16 %v8712
  %v11177 = vunpack.c.h.b16 %v8712
  %v11178 = vunpack.c.l.b16 %v8713
  %v11179 = vunpack.c.h.b16 %v8713
  %v11180 = vunpack.c.l.b16 %v8714
  %v11181 = vunpack.c.l.b16 %v8715
  %v11182 = vunpack.c.h.b16 %v8715
  %v11183 = vunpack.c.l.b16 %v8716
  %v11184 = vunpack.c.h.b16 %v8716
  %v11185 = vunpack.c.l.b16 %v8717
  %v11186 = vunpack.c.h.b16 %v8717
  %v11187 = vunpack.c.l.b16 %v8718
  %v11188 = vunpack.c.l.b16 %v8719
  %v11189 = vunpack.c.h.b16 %v8719
  %v11190 = vunpack.c.l.b16 %v8720
  %v11191 = vunpack.c.h.b16 %v8720
  %v11192 = vunpack.c.l.b16 %v8721
  %v11193 = vunpack.c.h.b16 %v8721
  %v11194 = vunpack.c.l.b16 %v8722
  %v11195 = vunpack.c.l.b16 %v8723
  %v11196 = vunpack.c.h.b16 %v8723
  %v11197 = vunpack.c.l.b16 %v8724
  %v11198 = vunpack.c.h.b16 %v8724
  %v11199 = vunpack.c.l.b16 %v8725
  %v11200 = vunpack.c.h.b16 %v8725
  %v11201 = vunpack.c.l.b16 %v8726
  %v11202 = vunpack.c.l.b16 %v8727
  %v11203 = vunpack.c.h.b16 %v8727
  %v11204 = vunpack.c.l.b16 %v8728
  %v11205 = vunpack.c.h.b16 %v8728
  %v11206 = vunpack.c.l.b16 %v8729
  %v11207 = vunpack.c.h.b16 %v8729
  %v11208 = vunpack.c.l.b16 %v8730
  %v11209 = vunpack.c.l.b16 %v8731
  %v11210 = vunpack.c.h.b16 %v8731
  %v11211 = vunpack.c.l.b16 %v8732
  %v11212 = vunpack.c.h.b16 %v8732
  %v11213 = vunpack.c.l.b16 %v8733
  %v11214 = vunpack.c.h.b16 %v8733
  %v11215 = vunpack.c.l.b16 %v8734
  %v11216 = vunpack.c.l.b16 %v8735
  %v11217 = vunpack.c.h.b16 %v8735
  %v11218 = vunpack.c.l.b16 %v8736
  %v11219 = vunpack.c.h.b16 %v8736
  %v11220 = vunpack.c.l.b16 %v8737
  %v11221 = vunpack.c.h.b16 %v8737
  %v11222 = vunpack.c.l.b16 %v8738
  %v11223 = vunpack.c.l.b16 %v8739
  %v11224 = vunpack.c.h.b16 %v8739
  %v11225 = vunpack.c.l.b16 %v8740
  %v11226 = vunpack.c.h.b16 %v8740
  %v11227 = vunpack.c.l.b16 %v8741
  %v11228 = vunpack.c.h.b16 %v8741
  %v11229 = vunpack.c.l.b16 %v8742
  %v11230 = vunpack.c.l.b16 %v8743
  %v11231 = vunpack.c.h.b16 %v8743
  %v11232 = vunpack.c.l.b16 %v8744
  %v11233 = vunpack.c.h.b16 %v8744
  %v11234 = vunpack.c.l.b16 %v8745
  %v11235 = vunpack.c.h.b16 %v8745
  %v11236 = vunpack.c.l.b16 %v8746
  %v11237 = vunpack.c.l.b16 %v8747
  %v11238 = vunpack.c.h.b16 %v8747
  %v11239 = vunpack.c.l.b16 %v8748
  %v11240 = vunpack.c.h.b16 %v8748
  %v11241 = vunpack.c.l.b16 %v8749
  %v11242 = vunpack.c.h.b16 %v8749
  %v11243 = vunpack.c.l.b16 %v8750
  %v11244 = vunpack.c.l.b16 %v8751
  %v11245 = vunpack.c.h.b16 %v8751
  %v11246 = vunpack.c.l.b16 %v8752
  %v11247 = vunpack.c.h.b16 %v8752
  %v11248 = vunpack.c.l.b16 %v8753
  %v11249 = vunpack.c.h.b16 %v8753
  %v11250 = vunpack.c.l.b16 %v8754
  %v11251 = vunpack.c.l.b16 %v8755
  %v11252 = vunpack.c.h.b16 %v8755
  %v11253 = vunpack.c.l.b16 %v8756
  %v11254 = vunpack.c.h.b16 %v8756
  %v11255 = vunpack.c.l.b16 %v8757
  %v11256 = vunpack.c.h.b16 %v8757
  %v11257 = vunpack.c.l.b16 %v8758
  %v11258 = vunpack.c.l.b16 %v8759
  %v11259 = vunpack.c.h.b16 %v8759
  %v11260 = vunpack.c.l.b16 %v8760
  %v11261 = vunpack.c.h.b16 %v8760
  %v11262 = vunpack.c.l.b16 %v8761
  %v11263 = vunpack.c.h.b16 %v8761
  %v11264 = vunpack.c.l.b16 %v8762
  %v11265 = vunpack.c.l.b16 %v8763
  %v11266 = vunpack.c.h.b16 %v8763
  %v11267 = vunpack.c.l.b16 %v8764
  %v11268 = vunpack.c.h.b16 %v8764
  %v11269 = vunpack.c.l.b16 %v8765
  %v11270 = vunpack.c.h.b16 %v8765
  %v11271 = vunpack.c.l.b16 %v8766
  %v11272 = vunpack.c.l.b16 %v8767
  %v11273 = vunpack.c.h.b16 %v8767
  %v11274 = vunpack.c.l.b16 %v8768
  %v11275 = vunpack.c.h.b16 %v8768
  %v11276 = vunpack.c.l.b16 %v8769
  %v11277 = vunpack.c.h.b16 %v8769
  %v11278 = vunpack.c.l.b16 %v8770
  %v11279 = vunpack.c.l.b16 %v8771
  %v11280 = vunpack.c.h.b16 %v8771
  %v11281 = vunpack.c.l.b16 %v8772
  %v11282 = vunpack.c.h.b16 %v8772
  %v11283 = vunpack.c.l.b16 %v8773
  %v11284 = vunpack.c.h.b16 %v8773
  %v11285 = vunpack.c.l.b16 %v8774
  %v11286 = vunpack.c.l.b16 %v8775
  %v11287 = vunpack.c.h.b16 %v8775
  %v11288 = vunpack.c.l.b16 %v8776
  %v11289 = vunpack.c.h.b16 %v8776
  %v11290 = vunpack.c.l.b16 %v8777
  %v11291 = vunpack.c.h.b16 %v8777
  %v11292 = vunpack.c.l.b16 %v8778
  %v11293 = vunpack.c.l.b16 %v8779
  %v11294 = vunpack.c.h.b16 %v8779
  %v11295 = vunpack.c.l.b16 %v8780
  %v11296 = vunpack.c.h.b16 %v8780
  %v11297 = vunpack.c.l.b16 %v8781
  %v11298 = vunpack.c.h.b16 %v8781
  %v11299 = vunpack.c.l.b16 %v8782
  %v11300 = vunpack.c.l.b16 %v8783
  %v11301 = vunpack.c.h.b16 %v8783
  %v11302 = vunpack.c.l.b16 %v8784
  %v11303 = vunpack.c.h.b16 %v8784
  %v11304 = vunpack.c.l.b16 %v8785
  %v11305 = vunpack.c.h.b16 %v8785
  %v11306 = vunpack.c.l.b16 %v8786
  %v11307 = vunpack.c.l.b16 %v8787
  %v11308 = vunpack.c.h.b16 %v8787
  %v11309 = vunpack.c.l.b16 %v8788
  %v11310 = vunpack.c.h.b16 %v8788
  %v11311 = vunpack.c.l.b16 %v8789
  %v11312 = vunpack.c.h.b16 %v8789
  %v11313 = vunpack.c.l.b16 %v8790
  %v11314 = vunpack.c.l.b16 %v8791
  %v11315 = vunpack.c.h.b16 %v8791
  %v11316 = vunpack.c.l.b16 %v8792
  %v11317 = vunpack.c.h.b16 %v8792
  %v11318 = vunpack.c.l.b16 %v8793
  %v11319 = vunpack.c.h.b16 %v8793
  %v11320 = vunpack.c.l.b16 %v8794
  %v11321 = vunpack.c.l.b16 %v8795
  %v11322 = vunpack.c.h.b16 %v8795
  %v11323 = vunpack.c.l.b16 %v8796
  %v11324 = vunpack.c.h.b16 %v8796
  %v11325 = vunpack.c.l.b16 %v8797
  %v11326 = vunpack.c.h.b16 %v8797
  %v11327 = vunpack.c.l.b16 %v8798
  %v11328 = vunpack.c.l.b16 %v8799
  %v11329 = vunpack.c.h.b16 %v8799
  %v11330 = vunpack.c.l.b16 %v8800
  %v11331 = vunpack.c.h.b16 %v8800
  %v11332 = vunpack.c.l.b16 %v8801
  %v11333 = vunpack.c.h.b16 %v8801
  %v11334 = vunpack.c.l.b16 %v8802
  %v11335 = vunpack.c.l.b16 %v8803
  %v11336 = vunpack.c.h.b16 %v8803
  %v11337 = vunpack.c.l.b16 %v8804
  %v11338 = vunpack.c.h.b16 %v8804
  %v11339 = vunpack.c.l.b16 %v8805
  %v11340 = vunpack.c.h.b16 %v8805
  %v11341 = vunpack.c.l.b16 %v8806
  %v11342 = vunpack.c.l.b16 %v8807
  %v11343 = vunpack.c.h.b16 %v8807
  %v11344 = vunpack.c.l.b16 %v8808
  %v11345 = vunpack.c.h.b16 %v8808
  %v11346 = vunpack.c.l.b16 %v8809
  %v11347 = vunpack.c.h.b16 %v8809
  %v11348 = vunpack.c.l.b16 %v8810
  %v11349 = vunpack.c.l.b16 %v8811
  %v11350 = vunpack.c.h.b16 %v8811
  %v11351 = vunpack.c.l.b16 %v8812
  %v11352 = vunpack.c.h.b16 %v8812
  %v11353 = vunpack.c.l.b16 %v8813
  %v11354 = vunpack.c.h.b16 %v8813
  %v11355 = vunpack.c.l.b16 %v8814
  %v11356 = vunpack.c.l.b16 %v8815
  %v11357 = vunpack.c.h.b16 %v8815
  %v11358 = vunpack.c.l.b16 %v8816
  %v11359 = vunpack.c.h.b16 %v8816
  %v11360 = vunpack.c.l.b16 %v8817
  %v11361 = vunpack.c.h.b16 %v8817
  %v11362 = vunpack.c.l.b16 %v8818
  %v11363 = vunpack.c.l.b16 %v8819
  %v11364 = vunpack.c.h.b16 %v8819
  %v11365 = vunpack.c.l.b16 %v8820
  %v11366 = vunpack.c.h.b16 %v8820
  %v11367 = vunpack.c.l.b16 %v8821
  %v11368 = vunpack.c.h.b16 %v8821
  %v11369 = vunpack.c.l.b16 %v8822
  %v11370 = vunpack.c.l.b16 %v8823
  %v11371 = vunpack.c.h.b16 %v8823
  %v11372 = vunpack.c.l.b16 %v8824
  %v11373 = vunpack.c.h.b16 %v8824
  %v11374 = vunpack.c.l.b16 %v8825
  %v11375 = vunpack.c.h.b16 %v8825
  %v11376 = vunpack.c.l.b16 %v8826
  %v11377 = vunpack.c.l.b16 %v8827
  %v11378 = vunpack.c.h.b16 %v8827
  %v11379 = vunpack.c.l.b16 %v8828
  %v11380 = vunpack.c.h.b16 %v8828
  %v11381 = vunpack.c.l.b16 %v8829
  %v11382 = vunpack.c.h.b16 %v8829
  %v11383 = vunpack.c.l.b16 %v8830
  %v11384 = vunpack.c.l.b16 %v8831
  %v11385 = vunpack.c.h.b16 %v8831
  %v11386 = vunpack.c.l.b16 %v8832
  %v11387 = vunpack.c.h.b16 %v8832
  %v11388 = vunpack.c.l.b16 %v8833
  %v11389 = vunpack.c.h.b16 %v8833
  %v11390 = vunpack.c.l.b16 %v8834
  %v11391 = vunpack.c.l.b16 %v8835
  %v11392 = vunpack.c.h.b16 %v8835
  %v11393 = vunpack.c.l.b16 %v8836
  %v11394 = vunpack.c.h.b16 %v8836
  %v11395 = vunpack.c.l.b16 %v8837
  %v11396 = vunpack.c.h.b16 %v8837
  %v11397 = vunpack.c.l.b16 %v8838
  %v11398 = vunpack.c.l.b16 %v8839
  %v11399 = vunpack.c.h.b16 %v8839
  %v11400 = vunpack.c.l.b16 %v8840
  %v11401 = vunpack.c.h.b16 %v8840
  %v11402 = vunpack.c.l.b16 %v8841
  %v11403 = vunpack.c.h.b16 %v8841
  %v11404 = vunpack.c.l.b16 %v8842
  %v11405 = vunpack.c.l.b16 %v8843
  %v11406 = vunpack.c.h.b16 %v8843
  %v11407 = vunpack.c.l.b16 %v8844
  %v11408 = vunpack.c.h.b16 %v8844
  %v11409 = vunpack.c.l.b16 %v8845
  %v11410 = vunpack.c.h.b16 %v8845
  %v11411 = vunpack.c.l.b16 %v8846
  %v11412 = vunpack.c.l.b16 %v8847
  %v11413 = vunpack.c.h.b16 %v8847
  %v11414 = vunpack.c.l.b16 %v8848
  %v11415 = vunpack.c.h.b16 %v8848
  %v11416 = vunpack.c.l.b16 %v8849
  %v11417 = vunpack.c.h.b16 %v8849
  %v11418 = vunpack.c.l.b16 %v8850
  %v11419 = vunpack.c.l.b16 %v8851
  %v11420 = vunpack.c.h.b16 %v8851
  %v11421 = vunpack.c.l.b16 %v8852
  %v11422 = vunpack.c.h.b16 %v8852
  %v11423 = vunpack.c.l.b16 %v8853
  %v11424 = vunpack.c.h.b16 %v8853
  %v11425 = vunpack.c.l.b16 %v8854
  %v11426 = vunpack.c.l.b16 %v8855
  %v11427 = vunpack.c.h.b16 %v8855
  %v11428 = vunpack.c.l.b16 %v8856
  %v11429 = vunpack.c.h.b16 %v8856
  %v11430 = vunpack.c.l.b16 %v8857
  %v11431 = vunpack.c.h.b16 %v8857
  %v11432 = vunpack.c.l.b16 %v8858
  %v11433 = vunpack.c.l.b16 %v8859
  %v11434 = vunpack.c.h.b16 %v8859
  %v11435 = vunpack.c.l.b16 %v8860
  %v11436 = vunpack.c.h.b16 %v8860
  %v11437 = vunpack.c.l.b16 %v8861
  %v11438 = vunpack.c.h.b16 %v8861
  %v11439 = vunpack.c.l.b16 %v8862
  %v11440 = vunpack.c.l.b16 %v8863
  %v11441 = vunpack.c.h.b16 %v8863
  %v11442 = vunpack.c.l.b16 %v8864
  %v11443 = vunpack.c.h.b16 %v8864
  %v11444 = vunpack.c.l.b16 %v8865
  %v11445 = vunpack.c.h.b16 %v8865
  %v11446 = vunpack.c.l.b16 %v8866
  %v11447 = vunpack.c.l.b16 %v8867
  %v11448 = vunpack.c.h.b16 %v8867
  %v11449 = vunpack.c.l.b16 %v8868
  %v11450 = vunpack.c.h.b16 %v8868
  %v11451 = vunpack.c.l.b16 %v8869
  %v11452 = vunpack.c.h.b16 %v8869
  %v11453 = vunpack.c.l.b16 %v8870
  %v11454 = vunpack.c.l.b16 %v8871
  %v11455 = vunpack.c.h.b16 %v8871
  %v11456 = vunpack.c.l.b16 %v8872
  %v11457 = vunpack.c.h.b16 %v8872
  %v11458 = vunpack.c.l.b16 %v8873
  %v11459 = vunpack.c.h.b16 %v8873
  %v11460 = vunpack.c.l.b16 %v8874
  %v11461 = vunpack.c.l.b16 %v8875
  %v11462 = vunpack.c.h.b16 %v8875
  %v11463 = vunpack.c.l.b16 %v8876
  %v11464 = vunpack.c.h.b16 %v8876
  %v11465 = vunpack.c.l.b16 %v8877
  %v11466 = vunpack.c.h.b16 %v8877
  %v11467 = vunpack.c.l.b16 %v8878
  %v11468 = vunpack.c.l.b16 %v8879
  %v11469 = vunpack.c.h.b16 %v8879
  %v11470 = vunpack.c.l.b16 %v8880
  %v11471 = vunpack.c.h.b16 %v8880
  %v11472 = vunpack.c.l.b16 %v8881
  %v11473 = vunpack.c.h.b16 %v8881
  %v11474 = vunpack.c.l.b16 %v8882
  %v11475 = vunpack.c.l.b16 %v8883
  %v11476 = vunpack.c.h.b16 %v8883
  %v11477 = vunpack.c.l.b16 %v8884
  %v11478 = vunpack.c.h.b16 %v8884
  %v11479 = vunpack.c.l.b16 %v8885
  %v11480 = vunpack.c.h.b16 %v8885
  %v11481 = vunpack.c.l.b16 %v8886
  %v11482 = vunpack.c.l.b16 %v8887
  %v11483 = vunpack.c.h.b16 %v8887
  %v11484 = vunpack.c.l.b16 %v8888
  %v11485 = vunpack.c.h.b16 %v8888
  %v11486 = vunpack.c.l.b16 %v8889
  %v11487 = vunpack.c.h.b16 %v8889
  %v11488 = vunpack.c.l.b16 %v8890
  %v11489 = vunpack.c.l.b16 %v8891
  %v11490 = vunpack.c.h.b16 %v8891
  %v11491 = vunpack.c.l.b16 %v8892
  %v11492 = vunpack.c.h.b16 %v8892
  %v11493 = vunpack.c.l.b16 %v8893
  %v11494 = vunpack.c.h.b16 %v8893
  %v11495 = vunpack.c.l.b16 %v8894
  %v11496 = vunpack.c.l.b16 %v8895
  %v11497 = vunpack.c.h.b16 %v8895
  %v11498 = vunpack.c.l.b16 %v8896
  %v11499 = vunpack.c.h.b16 %v8896
  %v11500 = vunpack.c.l.b16 %v8897
  %v11501 = vunpack.c.h.b16 %v8897
  %v11502 = vunpack.c.l.b16 %v8898
  %v11503 = vunpack.c.l.b16 %v8899
  %v11504 = vunpack.c.h.b16 %v8899
  %v11505 = vunpack.c.l.b16 %v8900
  %v11506 = vunpack.c.h.b16 %v8900
  %v11507 = vunpack.c.l.b16 %v8901
  %v11508 = vunpack.c.h.b16 %v8901
  %v11509 = vunpack.c.l.b16 %v8902
  %v11510 = vunpack.c.l.b16 %v8903
  %v11511 = vunpack.c.h.b16 %v8903
  %v11512 = vunpack.c.l.b16 %v8904
  %v11513 = vunpack.c.h.b16 %v8904
  %v11514 = vunpack.c.l.b16 %v8905
  %v11515 = vunpack.c.h.b16 %v8905
  %v11516 = vunpack.c.l.b16 %v8906
  %v11517 = vunpack.c.l.b16 %v8907
  %v11518 = vunpack.c.h.b16 %v8907
  %v11519 = vunpack.c.l.b16 %v8908
  %v11520 = vunpack.c.h.b16 %v8908
  %v11521 = vunpack.c.l.b16 %v8909
  %v11522 = vunpack.c.h.b16 %v8909
  %v11523 = vunpack.c.l.b16 %v8910
  %v11524 = vunpack.c.l.b16 %v8911
  %v11525 = vunpack.c.h.b16 %v8911
  %v11526 = vunpack.c.l.b16 %v8912
  %v11527 = vunpack.c.h.b16 %v8912
  %v11528 = vunpack.c.l.b16 %v8913
  %v11529 = vunpack.c.h.b16 %v8913
  %v11530 = vunpack.c.l.b16 %v8914
  %v11531 = vunpack.c.l.b16 %v8915
  %v11532 = vunpack.c.h.b16 %v8915
  %v11533 = vunpack.c.l.b16 %v8916
  %v11534 = vunpack.c.h.b16 %v8916
  %v11535 = vunpack.c.l.b16 %v8917
  %v11536 = vunpack.c.h.b16 %v8917
  %v11537 = vunpack.c.l.b16 %v8918
  %v11538 = vunpack.c.l.b16 %v8919
  %v11539 = vunpack.c.h.b16 %v8919
  %v11540 = vunpack.c.l.b16 %v8920
  %v11541 = vunpack.c.h.b16 %v8920
  %v11542 = vunpack.c.l.b16 %v8921
  %v11543 = vunpack.c.h.b16 %v8921
  %v11544 = vunpack.c.l.b16 %v8922
  %v11545 = vunpack.c.l.b16 %v8923
  %v11546 = vunpack.c.h.b16 %v8923
  %v11547 = vunpack.c.l.b16 %v8924
  %v11548 = vunpack.c.h.b16 %v8924
  %v11549 = vunpack.c.l.b16 %v8925
  %v11550 = vunpack.c.h.b16 %v8925
  %v11551 = vunpack.c.l.b16 %v8926
  %v11552 = vunpack.c.l.b16 %v8927
  %v11553 = vunpack.c.h.b16 %v8927
  %v11554 = vunpack.c.l.b16 %v8928
  %v11555 = vunpack.c.h.b16 %v8928
  %v11556 = vunpack.c.l.b16 %v8929
  %v11557 = vunpack.c.h.b16 %v8929
  %v11558 = vunpack.c.l.b16 %v8930
  %v11559 = vunpack.c.l.b16 %v8931
  %v11560 = vunpack.c.h.b16 %v8931
  %v11561 = vunpack.c.l.b16 %v8932
  %v11562 = vunpack.c.h.b16 %v8932
  %v11563 = vunpack.c.l.b16 %v8933
  %v11564 = vunpack.c.h.b16 %v8933
  %v11565 = vunpack.c.l.b16 %v8934
  %v11566 = vunpack.c.l.b16 %v8935
  %v11567 = vunpack.c.h.b16 %v8935
  %v11568 = vunpack.c.l.b16 %v8936
  %v11569 = vunpack.c.h.b16 %v8936
  %v11570 = vunpack.c.l.b16 %v8937
  %v11571 = vunpack.c.h.b16 %v8937
  %v11572 = vunpack.c.l.b16 %v8938
  %v11573 = vunpack.c.l.b16 %v8939
  %v11574 = vunpack.c.h.b16 %v8939
  %v11575 = vunpack.c.l.b16 %v8940
  %v11576 = vunpack.c.h.b16 %v8940
  %v11577 = vunpack.c.l.b16 %v8941
  %v11578 = vunpack.c.h.b16 %v8941
  %v11579 = vunpack.c.l.b16 %v8942
  %v11580 = vunpack.c.l.b16 %v8943
  %v11581 = vunpack.c.h.b16 %v8943
  %v11582 = vunpack.c.l.b16 %v8944
  %v11583 = vunpack.c.h.b16 %v8944
  %v11584 = vunpack.c.l.b16 %v8945
  %v11585 = vunpack.c.h.b16 %v8945
  %v11586 = vunpack.c.l.b16 %v8946
  %v11587 = vunpack.c.l.b16 %v8947
  %v11588 = vunpack.c.h.b16 %v8947
  %v11589 = vunpack.c.l.b16 %v8948
  %v11590 = vunpack.c.h.b16 %v8948
  %v11591 = vunpack.c.l.b16 %v8949
  %v11592 = vunpack.c.h.b16 %v8949
  %v11593 = vunpack.c.l.b16 %v8950
  %v11594 = vunpack.c.l.b16 %v8951
  %v11595 = vunpack.c.h.b16 %v8951
  %v11596 = vunpack.c.l.b16 %v8952
  %v11597 = vunpack.c.h.b16 %v8952
  %v11598 = vunpack.c.l.b16 %v8953
  %v11599 = vunpack.c.h.b16 %v8953
  %v11600 = vunpack.c.l.b16 %v8954
  %v11601 = vunpack.c.l.b16 %v8955
  %v11602 = vunpack.c.h.b16 %v8955
  %v11603 = vunpack.c.l.b16 %v8956
  %v11604 = vunpack.c.h.b16 %v8956
  %v11605 = vunpack.c.l.b16 %v8957
  %v11606 = vunpack.c.h.b16 %v8957
  %v11607 = vunpack.c.l.b16 %v8958
  %v11608 = vunpack.c.l.b16 %v8959
  %v11609 = vunpack.c.h.b16 %v8959
  %v11610 = vunpack.c.l.b16 %v8960
  %v11611 = vunpack.c.h.b16 %v8960
  %v11612 = vunpack.c.l.b16 %v8961
  %v11613 = vunpack.c.h.b16 %v8961
  %v11614 = vunpack.c.l.b16 %v8962
  %v11615 = vunpack.c.l.b16 %v8963
  %v11616 = vunpack.c.h.b16 %v8963
  %v11617 = vunpack.c.l.b16 %v8964
  %v11618 = vunpack.c.h.b16 %v8964
  %v11619 = vunpack.c.l.b16 %v8965
  %v11620 = vunpack.c.h.b16 %v8965
  %v11621 = vunpack.c.l.b16 %v8966
  %v11622 = vunpack.c.l.b16 %v8967
  %v11623 = vunpack.c.h.b16 %v8967
  %v11624 = vunpack.c.l.b16 %v8968
  %v11625 = vunpack.c.h.b16 %v8968
  %v11626 = vunpack.c.l.b16 %v8969
  %v11627 = vunpack.c.h.b16 %v8969
  %v11628 = vunpack.c.l.b16 %v8970
  %v11629 = vunpack.c.l.b16 %v8971
  %v11630 = vunpack.c.h.b16 %v8971
  %v11631 = vunpack.c.l.b16 %v8972
  %v11632 = vunpack.c.h.b16 %v8972
  %v11633 = vunpack.c.l.b16 %v8973
  %v11634 = vunpack.c.h.b16 %v8973
  %v11635 = vunpack.c.l.b16 %v8974
  %v11636 = vunpack.c.l.b16 %v8975
  %v11637 = vunpack.c.h.b16 %v8975
  %v11638 = vunpack.c.l.b16 %v8976
  %v11639 = vunpack.c.h.b16 %v8976
  %v11640 = vunpack.c.l.b16 %v8977
  %v11641 = vunpack.c.h.b16 %v8977
  %v11642 = vunpack.c.l.b16 %v8978
  %v11643 = vunpack.c.l.b16 %v8979
  %v11644 = vunpack.c.h.b16 %v8979
  %v11645 = vunpack.c.l.b16 %v8980
  %v11646 = vunpack.c.h.b16 %v8980
  %v11647 = vunpack.c.l.b16 %v8981
  %v11648 = vunpack.c.h.b16 %v8981
  %v11649 = vunpack.c.l.b16 %v8982
  %v11650 = vunpack.c.l.b16 %v8983
  %v11651 = vunpack.c.h.b16 %v8983
  %v11652 = vunpack.c.l.b16 %v8984
  %v11653 = vunpack.c.h.b16 %v8984
  %v11654 = vunpack.c.l.b16 %v8985
  %v11655 = vunpack.c.h.b16 %v8985
  %v11656 = vunpack.c.l.b16 %v8986
  %v11657 = vunpack.c.l.b16 %v8987
  %v11658 = vunpack.c.h.b16 %v8987
  %v11659 = vunpack.c.l.b16 %v8988
  %v11660 = vunpack.c.h.b16 %v8988
  %v11661 = vunpack.c.l.b16 %v8989
  %v11662 = vunpack.c.h.b16 %v8989
  %v11663 = vunpack.c.l.b16 %v8990
  %v11664 = vunpack.c.l.b16 %v8991
  %v11665 = vunpack.c.h.b16 %v8991
  %v11666 = vunpack.c.l.b16 %v8992
  %v11667 = vunpack.c.h.b16 %v8992
  %v11668 = vunpack.c.l.b16 %v8993
  %v11669 = vunpack.c.h.b16 %v8993
  %v11670 = vunpack.c.l.b16 %v8994
  %v11671 = vunpack.c.l.b16 %v8995
  %v11672 = vunpack.c.h.b16 %v8995
  %v11673 = vunpack.c.l.b16 %v8996
  %v11674 = vunpack.c.h.b16 %v8996
  %v11675 = vunpack.c.l.b16 %v8997
  %v11676 = vunpack.c.h.b16 %v8997
  %v11677 = vunpack.c.l.b16 %v8998
  %v11678 = vunpack.c.l.b16 %v8999
  %v11679 = vunpack.c.h.b16 %v8999
  %v11680 = vunpack.c.l.b16 %v9000
  %v11681 = vunpack.c.h.b16 %v9000
  %v11682 = vunpack.c.l.b16 %v9001
  %v11683 = vunpack.c.h.b16 %v9001
  %v11684 = vunpack.c.l.b16 %v9002
  %v11685 = vunpack.c.l.b16 %v9003
  %v11686 = vunpack.c.h.b16 %v9003
  %v11687 = vunpack.c.l.b16 %v9004
  %v11688 = vunpack.c.h.b16 %v9004
  %v11689 = vunpack.c.l.b16 %v9005
  %v11690 = vunpack.c.h.b16 %v9005
  %v11691 = vunpack.c.l.b16 %v9006
  %v11692 = vunpack.c.l.b16 %v9007
  %v11693 = vunpack.c.h.b16 %v9007
  %v11694 = vunpack.c.l.b16 %v9008
  %v11695 = vunpack.c.h.b16 %v9008
  %v11696 = vunpack.c.l.b16 %v9009
  %v11697 = vunpack.c.h.b16 %v9009
  %v11698 = vunpack.c.l.b16 %v9010
  %v11699 = vunpack.c.l.b16 %v9011
  %v11700 = vunpack.c.h.b16 %v9011
  %v11701 = vunpack.c.l.b16 %v9012
  %v11702 = vunpack.c.h.b16 %v9012
  %v11703 = vunpack.c.l.b16 %v9013
  %v11704 = vunpack.c.h.b16 %v9013
  %v11705 = vunpack.c.l.b16 %v9014
  %v11706 = vunpack.c.l.b16 %v9015
  %v11707 = vunpack.c.h.b16 %v9015
  %v11708 = vunpack.c.l.b16 %v9016
  %v11709 = vunpack.c.h.b16 %v9016
  %v11710 = vunpack.c.l.b16 %v9017
  %v11711 = vunpack.c.h.b16 %v9017
  %v11712 = vunpack.c.l.b16 %v9018
  %v11713 = vunpack.c.l.b16 %v9019
  %v11714 = vunpack.c.h.b16 %v9019
  %v11715 = vunpack.c.l.b16 %v9020
  %v11716 = vunpack.c.h.b16 %v9020
  %v11717 = vunpack.c.l.b16 %v9021
  %v11718 = vunpack.c.h.b16 %v9021
  %v11719 = vunpack.c.l.b16 %v9022
  %v11720 = vunpack.c.l.b16 %v9023
  %v11721 = vunpack.c.h.b16 %v9023
  %v11722 = vunpack.c.l.b16 %v9024
  %v11723 = vunpack.c.h.b16 %v9024
  %v11724 = vunpack.c.l.b16 %v9025
  %v11725 = vunpack.c.h.b16 %v9025
  %v11726 = vunpack.c.l.b16 %v9026
  %v11727 = vunpack.c.l.b16 %v9027
  %v11728 = vunpack.c.h.b16 %v9027
  %v11729 = vunpack.c.l.b16 %v9028
  %v11730 = vunpack.c.h.b16 %v9028
  %v11731 = vunpack.c.l.b16 %v9029
  %v11732 = vunpack.c.h.b16 %v9029
  %v11733 = vunpack.c.l.b16 %v9030
  %v11734 = vunpack.c.l.b16 %v9031
  %v11735 = vunpack.c.h.b16 %v9031
  %v11736 = vunpack.c.l.b16 %v9032
  %v11737 = vunpack.c.h.b16 %v9032
  %v11738 = vunpack.c.l.b16 %v9033
  %v11739 = vunpack.c.h.b16 %v9033
  %v11740 = vunpack.c.l.b16 %v9034
  %v11741 = vunpack.c.l.b16 %v9035
  %v11742 = vunpack.c.h.b16 %v9035
  %v11743 = vunpack.c.l.b16 %v9036
  %v11744 = vunpack.c.h.b16 %v9036
  %v11745 = vunpack.c.l.b16 %v9037
  %v11746 = vunpack.c.h.b16 %v9037
  %v11747 = vunpack.c.l.b16 %v9038
  %v11748 = vunpack.c.l.b16 %v9039
  %v11749 = vunpack.c.h.b16 %v9039
  %v11750 = vunpack.c.l.b16 %v9040
  %v11751 = vunpack.c.h.b16 %v9040
  %v11752 = vunpack.c.l.b16 %v9041
  %v11753 = vunpack.c.h.b16 %v9041
  %v11754 = vunpack.c.l.b16 %v9042
  %v11755 = vunpack.c.l.b16 %v9043
  %v11756 = vunpack.c.h.b16 %v9043
  %v11757 = vunpack.c.l.b16 %v9044
  %v11758 = vunpack.c.h.b16 %v9044
  %v11759 = vunpack.c.l.b16 %v9045
  %v11760 = vunpack.c.h.b16 %v9045
  %v11761 = vunpack.c.l.b16 %v9046
  %v11762 = vunpack.c.l.b16 %v9047
  %v11763 = vunpack.c.h.b16 %v9047
  %v11764 = vunpack.c.l.b16 %v9048
  %v11765 = vunpack.c.h.b16 %v9048
  %v11766 = vunpack.c.l.b16 %v9049
  %v11767 = vunpack.c.h.b16 %v9049
  %v11768 = vunpack.c.l.b16 %v9050
  %v11769 = vunpack.c.l.b16 %v9051
  %v11770 = vunpack.c.h.b16 %v9051
  %v11771 = vunpack.c.l.b16 %v9052
  %v11772 = vunpack.c.h.b16 %v9052
  %v11773 = vunpack.c.l.b16 %v9053
  %v11774 = vunpack.c.h.b16 %v9053
  %v11775 = vunpack.c.l.b16 %v9054
  %v11776 = vunpack.c.l.b16 %v9055
  %v11777 = vunpack.c.h.b16 %v9055
  %v11778 = vunpack.c.l.b16 %v9056
  %v11779 = vunpack.c.h.b16 %v9056
  %v11780 = vunpack.c.l.b16 %v9057
  %v11781 = vunpack.c.h.b16 %v9057
  %v11782 = vunpack.c.l.b16 %v9058
  %v11783 = vunpack.c.l.b16 %v9059
  %v11784 = vunpack.c.h.b16 %v9059
  %v11785 = vunpack.c.l.b16 %v9060
  %v11786 = vunpack.c.h.b16 %v9060
  %v11787 = vunpack.c.l.b16 %v9061
  %v11788 = vunpack.c.h.b16 %v9061
  %v11789 = vunpack.c.l.b16 %v9062
  %v11790 = vunpack.c.l.b16 %v9063
  %v11791 = vunpack.c.h.b16 %v9063
  %v11792 = vunpack.c.l.b16 %v9064
  %v11793 = vunpack.c.h.b16 %v9064
  %v11794 = vunpack.c.l.b16 %v9065
  %v11795 = vunpack.c.h.b16 %v9065
  %v11796 = vunpack.c.l.b16 %v9066
  %v11797 = vunpack.c.l.b16 %v9067
  %v11798 = vunpack.c.h.b16 %v9067
  %v11799 = vunpack.c.l.b16 %v9068
  %v11800 = vunpack.c.h.b16 %v9068
  %v11801 = vunpack.c.l.b16 %v9069
  %v11802 = vunpack.c.h.b16 %v9069
  %v11803 = vunpack.c.l.b16 %v9070
  %v11804 = vunpack.c.l.b16 %v9071
  %v11805 = vunpack.c.h.b16 %v9071
  %v11806 = vunpack.c.l.b16 %v9072
  %v11807 = vunpack.c.h.b16 %v9072
  %v11808 = vunpack.c.l.b16 %v9073
  %v11809 = vunpack.c.h.b16 %v9073
  %v11810 = vunpack.c.l.b16 %v9074
  %v11811 = vunpack.c.l.b16 %v9075
  %v11812 = vunpack.c.h.b16 %v9075
  %v11813 = vunpack.c.l.b16 %v9076
  %v11814 = vunpack.c.h.b16 %v9076
  %v11815 = vunpack.c.l.b16 %v9077
  %v11816 = vunpack.c.h.b16 %v9077
  %v11817 = vunpack.c.l.b16 %v9078
  %v11818 = vunpack.c.l.b16 %v9079
  %v11819 = vunpack.c.h.b16 %v9079
  %v11820 = vunpack.c.l.b16 %v9080
  %v11821 = vunpack.c.h.b16 %v9080
  %v11822 = vunpack.c.l.b16 %v9081
  %v11823 = vunpack.c.h.b16 %v9081
  %v11824 = vunpack.c.l.b16 %v9082
  %v11825 = vunpack.c.l.b16 %v9083
  %v11826 = vunpack.c.h.b16 %v9083
  %v11827 = vunpack.c.l.b16 %v9084
  %v11828 = vunpack.c.h.b16 %v9084
  %v11829 = vunpack.c.l.b16 %v9085
  %v11830 = vunpack.c.h.b16 %v9085
  %v11831 = vunpack.c.l.b16 %v9086
  %v11832 = vunpack.c.l.b16 %v9087
  %v11833 = vunpack.c.h.b16 %v9087
  %v11834 = vunpack.c.l.b16 %v9088
  %v11835 = vunpack.c.h.b16 %v9088
  %v11836 = vunpack.c.l.b16 %v9089
  %v11837 = vunpack.c.h.b16 %v9089
  %v11838 = vunpack.c.l.b16 %v9090
  %v11839 = vunpack.c.l.b16 %v9091
  %v11840 = vunpack.c.h.b16 %v9091
  %v11841 = vunpack.c.l.b16 %v9092
  %v11842 = vunpack.c.h.b16 %v9092
  %v11843 = vunpack.c.l.b16 %v9093
  %v11844 = vunpack.c.h.b16 %v9093
  %v11845 = vunpack.c.l.b16 %v9094
  %v11846 = vunpack.c.l.b16 %v9095
  %v11847 = vunpack.c.h.b16 %v9095
  %v11848 = vunpack.c.l.b16 %v9096
  %v11849 = vunpack.c.h.b16 %v9096
  %v11850 = vunpack.c.l.b16 %v9097
  %v11851 = vunpack.c.h.b16 %v9097
  %v11852 = vunpack.c.l.b16 %v9098
  %v11853 = vunpack.c.l.b16 %v9099
  %v11854 = vunpack.c.h.b16 %v9099
  %v11855 = vunpack.c.l.b16 %v9100
  %v11856 = vunpack.c.h.b16 %v9100
  %v11857 = vunpack.c.l.b16 %v9101
  %v11858 = vunpack.c.h.b16 %v9101
  %v11859 = vunpack.c.l.b16 %v9102
  %v11860 = vunpack.c.l.b16 %v9103
  %v11861 = vunpack.c.h.b16 %v9103
  %v11862 = vunpack.c.l.b16 %v9104
  %v11863 = vunpack.c.h.b16 %v9104
  %v11864 = vunpack.c.l.b16 %v9105
  %v11865 = vunpack.c.h.b16 %v9105
  %v11866 = vunpack.c.l.b16 %v9106
  %v11867 = vunpack.c.l.b16 %v9107
  %v11868 = vunpack.c.h.b16 %v9107
  %v11869 = vunpack.c.l.b16 %v9108
  %v11870 = vunpack.c.h.b16 %v9108
  %v11871 = vunpack.c.l.b16 %v9109
  %v11872 = vunpack.c.h.b16 %v9109
  %v11873 = vunpack.c.l.b16 %v9110
  %v11874 = vunpack.c.l.b16 %v9111
  %v11875 = vunpack.c.h.b16 %v9111
  %v11876 = vunpack.c.l.b16 %v9112
  %v11877 = vunpack.c.h.b16 %v9112
  %v11878 = vunpack.c.l.b16 %v9113
  %v11879 = vunpack.c.h.b16 %v9113
  %v11880 = vunpack.c.l.b16 %v9114
  %v11881 = vunpack.c.l.b16 %v9115
  %v11882 = vunpack.c.h.b16 %v9115
  %v11883 = vunpack.c.l.b16 %v9116
  %v11884 = vunpack.c.h.b16 %v9116
  %v11885 = vunpack.c.l.b16 %v9117
  %v11886 = vunpack.c.h.b16 %v9117
  %v11887 = vunpack.c.l.b16 %v9118
  %v11888 = vunpack.c.l.b16 %v9119
  %v11889 = vunpack.c.h.b16 %v9119
  %v11890 = vunpack.c.l.b16 %v9120
  %v11891 = vunpack.c.h.b16 %v9120
  %v11892 = vunpack.c.l.b16 %v9121
  %v11893 = vunpack.c.h.b16 %v9121
  %v11894 = vunpack.c.l.b16 %v9122
  %v11895 = vunpack.c.l.b16 %v9123
  %v11896 = vunpack.c.h.b16 %v9123
  %v11897 = vunpack.c.l.b16 %v9124
  %v11898 = vunpack.c.h.b16 %v9124
  %v11899 = vunpack.c.l.b16 %v9125
  %v11900 = vunpack.c.h.b16 %v9125
  %v11901 = vunpack.c.l.b16 %v9126
  %v11902 = vunpack.c.l.b16 %v9127
  %v11903 = vunpack.c.h.b16 %v9127
  %v11904 = vunpack.c.l.b16 %v9128
  %v11905 = vunpack.c.h.b16 %v9128
  %v11906 = vunpack.c.l.b16 %v9129
  %v11907 = vunpack.c.h.b16 %v9129
  %v11908 = vunpack.c.l.b16 %v9130
  %v11909 = vunpack.c.l.b16 %v9131
  %v11910 = vunpack.c.h.b16 %v9131
  %v11911 = vunpack.c.l.b16 %v9132
  %v11912 = vunpack.c.h.b16 %v9132
  %v11913 = vunpack.c.l.b16 %v9133
  %v11914 = vunpack.c.h.b16 %v9133
  %v11915 = vunpack.c.l.b16 %v9134
  %v11916 = vunpack.c.l.b16 %v9135
  %v11917 = vunpack.c.h.b16 %v9135
  %v11918 = vunpack.c.l.b16 %v9136
  %v11919 = vunpack.c.h.b16 %v9136
  %v11920 = vunpack.c.l.b16 %v9137
  %v11921 = vunpack.c.h.b16 %v9137
  %v11922 = vunpack.c.l.b16 %v9138
  %v11923 = vunpack.c.l.b16 %v9139
  %v11924 = vunpack.c.h.b16 %v9139
  %v11925 = vunpack.c.l.b16 %v9140
  %v11926 = vunpack.c.h.b16 %v9140
  %v11927 = vunpack.c.l.b16 %v9141
  %v11928 = vunpack.c.h.b16 %v9141
  %v11929 = vunpack.c.l.b16 %v9142
  %v11930 = vunpack.c.l.b16 %v9143
  %v11931 = vunpack.c.h.b16 %v9143
  %v11932 = vunpack.c.l.b16 %v9144
  %v11933 = vunpack.c.h.b16 %v9144
  %v11934 = vunpack.c.l.b16 %v9145
  %v11935 = vunpack.c.h.b16 %v9145
  %v11936 = vunpack.c.l.b16 %v9146
  %v11937 = vunpack.c.l.b16 %v9147
  %v11938 = vunpack.c.h.b16 %v9147
  %v11939 = vunpack.c.l.b16 %v9148
  %v11940 = vunpack.c.h.b16 %v9148
  %v11941 = vunpack.c.l.b16 %v9149
  %v11942 = vunpack.c.h.b16 %v9149
  %v11943 = vunpack.c.l.b16 %v9150
  %v11944 = vunpack.c.l.b16 %v9151
  %v11945 = vunpack.c.h.b16 %v9151
  %v11946 = vunpack.c.l.b16 %v9152
  %v11947 = vunpack.c.h.b16 %v9152
  %v11948 = vunpack.c.l.b16 %v9153
  %v11949 = vunpack.c.h.b16 %v9153
  %v11950 = vunpack.c.l.b16 %v9154
  %v11951 = vunpack.c.l.b16 %v9155
  %v11952 = vunpack.c.h.b16 %v9155
  %v11953 = vunpack.c.l.b16 %v9156
  %v11954 = vunpack.c.h.b16 %v9156
  %v11955 = vunpack.c.l.b16 %v9157
  %v11956 = vunpack.c.h.b16 %v9157
  %v11957 = vunpack.c.l.b16 %v9158
  %v11958 = vunpack.c.l.b16 %v9159
  %v11959 = vunpack.c.h.b16 %v9159
  %v11960 = vunpack.c.l.b16 %v9160
  %v11961 = vunpack.c.h.b16 %v9160
  %v11962 = vunpack.c.l.b16 %v9161
  %v11963 = vunpack.c.h.b16 %v9161
  %v11964 = vunpack.c.l.b16 %v9162
  %v11965 = vunpack.c.l.b16 %v9163
  %v11966 = vunpack.c.h.b16 %v9163
  %v11967 = vunpack.c.l.b16 %v9164
  %v11968 = vunpack.c.h.b16 %v9164
  %v11969 = vunpack.c.l.b16 %v9165
  %v11970 = vunpack.c.h.b16 %v9165
  %v11971 = vunpack.c.l.b16 %v9166
  %v11972 = vunpack.c.l.b16 %v9167
  %v11973 = vunpack.c.h.b16 %v9167
  %v11974 = vunpack.c.l.b16 %v9168
  %v11975 = vunpack.c.h.b16 %v9168
  %v11976 = vunpack.c.l.b16 %v9169
  %v11977 = vunpack.c.h.b16 %v9169
  %v11978 = vunpack.c.l.b16 %v9170
  %v11979 = vunpack.c.l.b16 %v9171
  %v11980 = vunpack.c.h.b16 %v9171
  %v11981 = vunpack.c.l.b16 %v9172
  %v11982 = vunpack.c.h.b16 %v9172
  %v11983 = vunpack.c.l.b16 %v9173
  %v11984 = vunpack.c.h.b16 %v9173
  %v11985 = vunpack.c.l.b16 %v9174
  %v11986 = vunpack.c.l.b16 %v9175
  %v11987 = vunpack.c.h.b16 %v9175
  %v11988 = vunpack.c.l.b16 %v9176
  %v11989 = vunpack.c.h.b16 %v9176
  %v11990 = vunpack.c.l.b16 %v9177
  %v11991 = vunpack.c.h.b16 %v9177
  %v11992 = vunpack.c.l.b16 %v9178
  %v11993 = vunpack.c.l.b16 %v9179
  %v11994 = vunpack.c.h.b16 %v9179
  %v11995 = vunpack.c.l.b16 %v9180
  %v11996 = vunpack.c.h.b16 %v9180
  %v11997 = vunpack.c.l.b16 %v9181
  %v11998 = vunpack.c.h.b16 %v9181
  %v11999 = vunpack.c.l.b16 %v9182
  %v12000 = vunpack.c.l.b16 %v9183
  %v12001 = vunpack.c.h.b16 %v9183
  %v12002 = vunpack.c.l.b16 %v9184
  %v12003 = vunpack.c.h.b16 %v9184
  %v12004 = vunpack.c.l.b16 %v9185
  %v12005 = vunpack.c.h.b16 %v9185
  %v12006 = vunpack.c.l.b16 %v9186
  %v12007 = vunpack.c.l.b16 %v9187
  %v12008 = vunpack.c.h.b16 %v9187
  %v12009 = vunpack.c.l.b16 %v9188
  %v12010 = vunpack.c.h.b16 %v9188
  %v12011 = vunpack.c.l.b16 %v9189
  %v12012 = vunpack.c.h.b16 %v9189
  %v12013 = vunpack.c.l.b16 %v9190
  %v12014 = vunpack.c.l.b16 %v9191
  %v12015 = vunpack.c.h.b16 %v9191
  %v12016 = vunpack.c.l.b16 %v9192
  %v12017 = vunpack.c.h.b16 %v9192
  %v12018 = vunpack.c.l.b16 %v9193
  %v12019 = vunpack.c.h.b16 %v9193
  %v12020 = vunpack.c.l.b16 %v9194
  %v12021 = vunpack.c.l.b16 %v9195
  %v12022 = vunpack.c.h.b16 %v9195
  %v12023 = vunpack.c.l.b16 %v9196
  %v12024 = vunpack.c.h.b16 %v9196
  %v12025 = vunpack.c.l.b16 %v9197
  %v12026 = vunpack.c.h.b16 %v9197
  %v12027 = vunpack.c.l.b16 %v9198
  %v12028 = vunpack.c.l.b16 %v9199
  %v12029 = vunpack.c.h.b16 %v9199
  %v12030 = vunpack.c.l.b16 %v9200
  %v12031 = vunpack.c.h.b16 %v9200
  %v12032 = vunpack.c.l.b16 %v9201
  %v12033 = vunpack.c.h.b16 %v9201
  %v12034 = vunpack.c.l.b16 %v9202
  %v12035 = vunpack.c.l.b16 %v9203
  %v12036 = vunpack.c.h.b16 %v9203
  %v12037 = vunpack.c.l.b16 %v9204
  %v12038 = vunpack.c.h.b16 %v9204
  %v12039 = vunpack.c.l.b16 %v9205
  %v12040 = vunpack.c.h.b16 %v9205
  %v12041 = vunpack.c.l.b16 %v9206
  %v12042 = vunpack.c.l.b16 %v9207
  %v12043 = vunpack.c.h.b16 %v9207
  %v12044 = vunpack.c.l.b16 %v9208
  %v12045 = vunpack.c.h.b16 %v9208
  %v12046 = vunpack.c.l.b16 %v9209
  %v12047 = vunpack.c.h.b16 %v9209
  %v12048 = vunpack.c.l.b16 %v9210
  %v12049 = vunpack.c.l.b16 %v9211
  %v12050 = vunpack.c.h.b16 %v9211
  %v12051 = vunpack.c.l.b16 %v9212
  %v12052 = vunpack.c.h.b16 %v9212
  %v12053 = vunpack.c.l.b16 %v9213
  %v12054 = vunpack.c.h.b16 %v9213
  %v12055 = vunpack.c.l.b16 %v9214
  %v12056 = vunpack.c.l.b16 %v9215
  %v12057 = vunpack.c.h.b16 %v9215
  %v12058 = vunpack.c.l.b16 %v9216
  %v12059 = vunpack.c.h.b16 %v9216
  %v12060 = vunpack.c.l.b16 %v9217
  %v12061 = vunpack.c.h.b16 %v9217
  %v12062 = vunpack.c.l.b16 %v9218
  %v12063 = vunpack.c.l.b16 %v9219
  %v12064 = vunpack.c.h.b16 %v9219
  %v12065 = vunpack.c.l.b16 %v9220
  %v12066 = vunpack.c.h.b16 %v9220
  %v12067 = vunpack.c.l.b16 %v9221
  %v12068 = vunpack.c.h.b16 %v9221
  %v12069 = vunpack.c.l.b16 %v9222
  %v12070 = vunpack.c.l.b16 %v9223
  %v12071 = vunpack.c.h.b16 %v9223
  %v12072 = vunpack.c.l.b16 %v9224
  %v12073 = vunpack.c.h.b16 %v9224
  %v12074 = vunpack.c.l.b16 %v9225
  %v12075 = vunpack.c.h.b16 %v9225
  %v12076 = vunpack.c.l.b16 %v9226
  %v12077 = vunpack.c.l.b16 %v9227
  %v12078 = vunpack.c.h.b16 %v9227
  %v12079 = vunpack.c.l.b16 %v9228
  %v12080 = vunpack.c.h.b16 %v9228
  %v12081 = vunpack.c.l.b16 %v9229
  %v12082 = vunpack.c.h.b16 %v9229
  %v12083 = vunpack.c.l.b16 %v9230
  %v12084 = vpack.c.b16 %v10299, %v10292
  %v12085 = vpack.c.b16 %v10300, %v10293
  %v12086 = vpack.c.b16 %v10301, %v10294
  %v12087 = vpack.c.b16 %v10302, %v10295
  %v12088 = vpack.c.b16 %v10303, %v10296
  %v12089 = vpack.c.b16 %v10304, %v10297
  %v12090 = vpack.c.b16 %v10305, %v10298
  %v12091 = vpack.c.b16 %v10313, %v10306
  %v12092 = vpack.c.b16 %v10314, %v10307
  %v12093 = vpack.c.b16 %v10315, %v10308
  %v12094 = vpack.c.b16 %v10316, %v10309
  %v12095 = vpack.c.b16 %v10317, %v10310
  %v12096 = vpack.c.b16 %v10318, %v10311
  %v12097 = vpack.c.b16 %v10319, %v10312
  %v12098 = vpack.c.b16 %v10327, %v10320
  %v12099 = vpack.c.b16 %v10328, %v10321
  %v12100 = vpack.c.b16 %v10329, %v10322
  %v12101 = vpack.c.b16 %v10330, %v10323
  %v12102 = vpack.c.b16 %v10331, %v10324
  %v12103 = vpack.c.b16 %v10332, %v10325
  %v12104 = vpack.c.b16 %v10333, %v10326
  %v12105 = vpack.c.b16 %v10341, %v10334
  %v12106 = vpack.c.b16 %v10342, %v10335
  %v12107 = vpack.c.b16 %v10343, %v10336
  %v12108 = vpack.c.b16 %v10344, %v10337
  %v12109 = vpack.c.b16 %v10345, %v10338
  %v12110 = vpack.c.b16 %v10346, %v10339
  %v12111 = vpack.c.b16 %v10347, %v10340
  %v12112 = vpack.c.b16 %v10355, %v10348
  %v12113 = vpack.c.b16 %v10356, %v10349
  %v12114 = vpack.c.b16 %v10357, %v10350
  %v12115 = vpack.c.b16 %v10358, %v10351
  %v12116 = vpack.c.b16 %v10359, %v10352
  %v12117 = vpack.c.b16 %v10360, %v10353
  %v12118 = vpack.c.b16 %v10361, %v10354
  %v12119 = vpack.c.b16 %v10369, %v10362
  %v12120 = vpack.c.b16 %v10370, %v10363
  %v12121 = vpack.c.b16 %v10371, %v10364
  %v12122 = vpack.c.b16 %v10372, %v10365
  %v12123 = vpack.c.b16 %v10373, %v10366
  %v12124 = vpack.c.b16 %v10374, %v10367
  %v12125 = vpack.c.b16 %v10375, %v10368
  %v12126 = vpack.c.b16 %v10383, %v10376
  %v12127 = vpack.c.b16 %v10384, %v10377
  %v12128 = vpack.c.b16 %v10385, %v10378
  %v12129 = vpack.c.b16 %v10386, %v10379
  %v12130 = vpack.c.b16 %v10387, %v10380
  %v12131 = vpack.c.b16 %v10388, %v10381
  %v12132 = vpack.c.b16 %v10389, %v10382
  %v12133 = vpack.c.b16 %v10397, %v10390
  %v12134 = vpack.c.b16 %v10398, %v10391
  %v12135 = vpack.c.b16 %v10399, %v10392
  %v12136 = vpack.c.b16 %v10400, %v10393
  %v12137 = vpack.c.b16 %v10401, %v10394
  %v12138 = vpack.c.b16 %v10402, %v10395
  %v12139 = vpack.c.b16 %v10403, %v10396
  %v12140 = vpack.c.b16 %v10411, %v10404
  %v12141 = vpack.c.b16 %v10412, %v10405
  %v12142 = vpack.c.b16 %v10413, %v10406
  %v12143 = vpack.c.b16 %v10414, %v10407
  %v12144 = vpack.c.b16 %v10415, %v10408
  %v12145 = vpack.c.b16 %v10416, %v10409
  %v12146 = vpack.c.b16 %v10417, %v10410
  %v12147 = vpack.c.b16 %v10425, %v10418
  %v12148 = vpack.c.b16 %v10426, %v10419
  %v12149 = vpack.c.b16 %v10427, %v10420
  %v12150 = vpack.c.b16 %v10428, %v10421
  %v12151 = vpack.c.b16 %v10429, %v10422
  %v12152 = vpack.c.b16 %v10430, %v10423
  %v12153 = vpack.c.b16 %v10431, %v10424
  %v12154 = vpack.c.b16 %v10439, %v10432
  %v12155 = vpack.c.b16 %v10440, %v10433
  %v12156 = vpack.c.b16 %v10441, %v10434
  %v12157 = vpack.c.b16 %v10442, %v10435
  %v12158 = vpack.c.b16 %v10443, %v10436
  %v12159 = vpack.c.b16 %v10444, %v10437
  %v12160 = vpack.c.b16 %v10445, %v10438
  %v12161 = vpack.c.b16 %v10453, %v10446
  %v12162 = vpack.c.b16 %v10454, %v10447
  %v12163 = vpack.c.b16 %v10455, %v10448
  %v12164 = vpack.c.b16 %v10456, %v10449
  %v12165 = vpack.c.b16 %v10457, %v10450
  %v12166 = vpack.c.b16 %v10458, %v10451
  %v12167 = vpack.c.b16 %v10459, %v10452
  %v12168 = vpack.c.b16 %v10467, %v10460
  %v12169 = vpack.c.b16 %v10468, %v10461
  %v12170 = vpack.c.b16 %v10469, %v10462
  %v12171 = vpack.c.b16 %v10470, %v10463
  %v12172 = vpack.c.b16 %v10471, %v10464
  %v12173 = vpack.c.b16 %v10472, %v10465
  %v12174 = vpack.c.b16 %v10473, %v10466
  %v12175 = vpack.c.b16 %v10481, %v10474
  %v12176 = vpack.c.b16 %v10482, %v10475
  %v12177 = vpack.c.b16 %v10483, %v10476
  %v12178 = vpack.c.b16 %v10484, %v10477
  %v12179 = vpack.c.b16 %v10485, %v10478
  %v12180 = vpack.c.b16 %v10486, %v10479
  %v12181 = vpack.c.b16 %v10487, %v10480
  %v12182 = vpack.c.b16 %v10495, %v10488
  %v12183 = vpack.c.b16 %v10496, %v10489
  %v12184 = vpack.c.b16 %v10497, %v10490
  %v12185 = vpack.c.b16 %v10498, %v10491
  %v12186 = vpack.c.b16 %v10499, %v10492
  %v12187 = vpack.c.b16 %v10500, %v10493
  %v12188 = vpack.c.b16 %v10501, %v10494
  %v12189 = vpack.c.b16 %v10509, %v10502
  %v12190 = vpack.c.b16 %v10510, %v10503
  %v12191 = vpack.c.b16 %v10511, %v10504
  %v12192 = vpack.c.b16 %v10512, %v10505
  %v12193 = vpack.c.b16 %v10513, %v10506
  %v12194 = vpack.c.b16 %v10514, %v10507
  %v12195 = vpack.c.b16 %v10515, %v10508
  %v12196 = vpack.c.b16 %v10523, %v10516
  %v12197 = vpack.c.b16 %v10524, %v10517
  %v12198 = vpack.c.b16 %v10525, %v10518
  %v12199 = vpack.c.b16 %v10526, %v10519
  %v12200 = vpack.c.b16 %v10527, %v10520
  %v12201 = vpack.c.b16 %v10528, %v10521
  %v12202 = vpack.c.b16 %v10529, %v10522
  %v12203 = vpack.c.b16 %v10537, %v10530
  %v12204 = vpack.c.b16 %v10538, %v10531
  %v12205 = vpack.c.b16 %v10539, %v10532
  %v12206 = vpack.c.b16 %v10540, %v10533
  %v12207 = vpack.c.b16 %v10541, %v10534
  %v12208 = vpack.c.b16 %v10542, %v10535
  %v12209 = vpack.c.b16 %v10543, %v10536
  %v12210 = vpack.c.b16 %v10551, %v10544
  %v12211 = vpack.c.b16 %v10552, %v10545
  %v12212 = vpack.c.b16 %v10553, %v10546
  %v12213 = vpack.c.b16 %v10554, %v10547
  %v12214 = vpack.c.b16 %v10555, %v10548
  %v12215 = vpack.c.b16 %v10556, %v10549
  %v12216 = vpack.c.b16 %v10557, %v10550
  %v12217 = vpack.c.b16 %v10565, %v10558
  %v12218 = vpack.c.b16 %v10566, %v10559
  %v12219 = vpack.c.b16 %v10567, %v10560
  %v12220 = vpack.c.b16 %v10568, %v10561
  %v12221 = vpack.c.b16 %v10569, %v10562
  %v12222 = vpack.c.b16 %v10570, %v10563
  %v12223 = vpack.c.b16 %v10571, %v10564
  %v12224 = vpack.c.b16 %v10579, %v10572
  %v12225 = vpack.c.b16 %v10580, %v10573
  %v12226 = vpack.c.b16 %v10581, %v10574
  %v12227 = vpack.c.b16 %v10582, %v10575
  %v12228 = vpack.c.b16 %v10583, %v10576
  %v12229 = vpack.c.b16 %v10584, %v10577
  %v12230 = vpack.c.b16 %v10585, %v10578
  %v12231 = vpack.c.b16 %v10593, %v10586
  %v12232 = vpack.c.b16 %v10594, %v10587
  %v12233 = vpack.c.b16 %v10595, %v10588
  %v12234 = vpack.c.b16 %v10596, %v10589
  %v12235 = vpack.c.b16 %v10597, %v10590
  %v12236 = vpack.c.b16 %v10598, %v10591
  %v12237 = vpack.c.b16 %v10599, %v10592
  %v12238 = vpack.c.b16 %v10607, %v10600
  %v12239 = vpack.c.b16 %v10608, %v10601
  %v12240 = vpack.c.b16 %v10609, %v10602
  %v12241 = vpack.c.b16 %v10610, %v10603
  %v12242 = vpack.c.b16 %v10611, %v10604
  %v12243 = vpack.c.b16 %v10612, %v10605
  %v12244 = vpack.c.b16 %v10613, %v10606
  %v12245 = vpack.c.b16 %v10621, %v10614
  %v12246 = vpack.c.b16 %v10622, %v10615
  %v12247 = vpack.c.b16 %v10623, %v10616
  %v12248 = vpack.c.b16 %v10624, %v10617
  %v12249 = vpack.c.b16 %v10625, %v10618
  %v12250 = vpack.c.b16 %v10626, %v10619
  %v12251 = vpack.c.b16 %v10627, %v10620
  %v12252 = vpack.c.b16 %v10635, %v10628
  %v12253 = vpack.c.b16 %v10636, %v10629
  %v12254 = vpack.c.b16 %v10637, %v10630
  %v12255 = vpack.c.b16 %v10638, %v10631
  %v12256 = vpack.c.b16 %v10639, %v10632
  %v12257 = vpack.c.b16 %v10640, %v10633
  %v12258 = vpack.c.b16 %v10641, %v10634
  %v12259 = vpack.c.b16 %v10649, %v10642
  %v12260 = vpack.c.b16 %v10650, %v10643
  %v12261 = vpack.c.b16 %v10651, %v10644
  %v12262 = vpack.c.b16 %v10652, %v10645
  %v12263 = vpack.c.b16 %v10653, %v10646
  %v12264 = vpack.c.b16 %v10654, %v10647
  %v12265 = vpack.c.b16 %v10655, %v10648
  %v12266 = vpack.c.b16 %v10663, %v10656
  %v12267 = vpack.c.b16 %v10664, %v10657
  %v12268 = vpack.c.b16 %v10665, %v10658
  %v12269 = vpack.c.b16 %v10666, %v10659
  %v12270 = vpack.c.b16 %v10667, %v10660
  %v12271 = vpack.c.b16 %v10668, %v10661
  %v12272 = vpack.c.b16 %v10669, %v10662
  %v12273 = vpack.c.b16 %v10677, %v10670
  %v12274 = vpack.c.b16 %v10678, %v10671
  %v12275 = vpack.c.b16 %v10679, %v10672
  %v12276 = vpack.c.b16 %v10680, %v10673
  %v12277 = vpack.c.b16 %v10681, %v10674
  %v12278 = vpack.c.b16 %v10682, %v10675
  %v12279 = vpack.c.b16 %v10683, %v10676
  %v12280 = vpack.c.b16 %v10691, %v10684
  %v12281 = vpack.c.b16 %v10692, %v10685
  %v12282 = vpack.c.b16 %v10693, %v10686
  %v12283 = vpack.c.b16 %v10694, %v10687
  %v12284 = vpack.c.b16 %v10695, %v10688
  %v12285 = vpack.c.b16 %v10696, %v10689
  %v12286 = vpack.c.b16 %v10697, %v10690
  %v12287 = vpack.c.b16 %v10705, %v10698
  %v12288 = vpack.c.b16 %v10706, %v10699
  %v12289 = vpack.c.b16 %v10707, %v10700
  %v12290 = vpack.c.b16 %v10708, %v10701
  %v12291 = vpack.c.b16 %v10709, %v10702
  %v12292 = vpack.c.b16 %v10710, %v10703
  %v12293 = vpack.c.b16 %v10711, %v10704
  %v12294 = vpack.c.b16 %v10719, %v10712
  %v12295 = vpack.c.b16 %v10720, %v10713
  %v12296 = vpack.c.b16 %v10721, %v10714
  %v12297 = vpack.c.b16 %v10722, %v10715
  %v12298 = vpack.c.b16 %v10723, %v10716
  %v12299 = vpack.c.b16 %v10724, %v10717
  %v12300 = vpack.c.b16 %v10725, %v10718
  %v12301 = vpack.c.b16 %v10733, %v10726
  %v12302 = vpack.c.b16 %v10734, %v10727
  %v12303 = vpack.c.b16 %v10735, %v10728
  %v12304 = vpack.c.b16 %v10736, %v10729
  %v12305 = vpack.c.b16 %v10737, %v10730
  %v12306 = vpack.c.b16 %v10738, %v10731
  %v12307 = vpack.c.b16 %v10739, %v10732
  %v12308 = vpack.c.b16 %v10747, %v10740
  %v12309 = vpack.c.b16 %v10748, %v10741
  %v12310 = vpack.c.b16 %v10749, %v10742
  %v12311 = vpack.c.b16 %v10750, %v10743
  %v12312 = vpack.c.b16 %v10751, %v10744
  %v12313 = vpack.c.b16 %v10752, %v10745
  %v12314 = vpack.c.b16 %v10753, %v10746
  %v12315 = vpack.c.b16 %v10761, %v10754
  %v12316 = vpack.c.b16 %v10762, %v10755
  %v12317 = vpack.c.b16 %v10763, %v10756
  %v12318 = vpack.c.b16 %v10764, %v10757
  %v12319 = vpack.c.b16 %v10765, %v10758
  %v12320 = vpack.c.b16 %v10766, %v10759
  %v12321 = vpack.c.b16 %v10767, %v10760
  %v12322 = vpack.c.b16 %v10775, %v10768
  %v12323 = vpack.c.b16 %v10776, %v10769
  %v12324 = vpack.c.b16 %v10777, %v10770
  %v12325 = vpack.c.b16 %v10778, %v10771
  %v12326 = vpack.c.b16 %v10779, %v10772
  %v12327 = vpack.c.b16 %v10780, %v10773
  %v12328 = vpack.c.b16 %v10781, %v10774
  %v12329 = vpack.c.b16 %v10789, %v10782
  %v12330 = vpack.c.b16 %v10790, %v10783
  %v12331 = vpack.c.b16 %v10791, %v10784
  %v12332 = vpack.c.b16 %v10792, %v10785
  %v12333 = vpack.c.b16 %v10793, %v10786
  %v12334 = vpack.c.b16 %v10794, %v10787
  %v12335 = vpack.c.b16 %v10795, %v10788
  %v12336 = vpack.c.b16 %v10803, %v10796
  %v12337 = vpack.c.b16 %v10804, %v10797
  %v12338 = vpack.c.b16 %v10805, %v10798
  %v12339 = vpack.c.b16 %v10806, %v10799
  %v12340 = vpack.c.b16 %v10807, %v10800
  %v12341 = vpack.c.b16 %v10808, %v10801
  %v12342 = vpack.c.b16 %v10809, %v10802
  %v12343 = vpack.c.b16 %v10817, %v10810
  %v12344 = vpack.c.b16 %v10818, %v10811
  %v12345 = vpack.c.b16 %v10819, %v10812
  %v12346 = vpack.c.b16 %v10820, %v10813
  %v12347 = vpack.c.b16 %v10821, %v10814
  %v12348 = vpack.c.b16 %v10822, %v10815
  %v12349 = vpack.c.b16 %v10823, %v10816
  %v12350 = vpack.c.b16 %v10831, %v10824
  %v12351 = vpack.c.b16 %v10832, %v10825
  %v12352 = vpack.c.b16 %v10833, %v10826
  %v12353 = vpack.c.b16 %v10834, %v10827
  %v12354 = vpack.c.b16 %v10835, %v10828
  %v12355 = vpack.c.b16 %v10836, %v10829
  %v12356 = vpack.c.b16 %v10837, %v10830
  %v12357 = vpack.c.b16 %v10845, %v10838
  %v12358 = vpack.c.b16 %v10846, %v10839
  %v12359 = vpack.c.b16 %v10847, %v10840
  %v12360 = vpack.c.b16 %v10848, %v10841
  %v12361 = vpack.c.b16 %v10849, %v10842
  %v12362 = vpack.c.b16 %v10850, %v10843
  %v12363 = vpack.c.b16 %v10851, %v10844
  %v12364 = vpack.c.b16 %v10859, %v10852
  %v12365 = vpack.c.b16 %v10860, %v10853
  %v12366 = vpack.c.b16 %v10861, %v10854
  %v12367 = vpack.c.b16 %v10862, %v10855
  %v12368 = vpack.c.b16 %v10863, %v10856
  %v12369 = vpack.c.b16 %v10864, %v10857
  %v12370 = vpack.c.b16 %v10865, %v10858
  %v12371 = vpack.c.b16 %v10873, %v10866
  %v12372 = vpack.c.b16 %v10874, %v10867
  %v12373 = vpack.c.b16 %v10875, %v10868
  %v12374 = vpack.c.b16 %v10876, %v10869
  %v12375 = vpack.c.b16 %v10877, %v10870
  %v12376 = vpack.c.b16 %v10878, %v10871
  %v12377 = vpack.c.b16 %v10879, %v10872
  %v12378 = vpack.c.b16 %v10887, %v10880
  %v12379 = vpack.c.b16 %v10888, %v10881
  %v12380 = vpack.c.b16 %v10889, %v10882
  %v12381 = vpack.c.b16 %v10890, %v10883
  %v12382 = vpack.c.b16 %v10891, %v10884
  %v12383 = vpack.c.b16 %v10892, %v10885
  %v12384 = vpack.c.b16 %v10893, %v10886
  %v12385 = vpack.c.b16 %v10901, %v10894
  %v12386 = vpack.c.b16 %v10902, %v10895
  %v12387 = vpack.c.b16 %v10903, %v10896
  %v12388 = vpack.c.b16 %v10904, %v10897
  %v12389 = vpack.c.b16 %v10905, %v10898
  %v12390 = vpack.c.b16 %v10906, %v10899
  %v12391 = vpack.c.b16 %v10907, %v10900
  %v12392 = vpack.c.b16 %v10915, %v10908
  %v12393 = vpack.c.b16 %v10916, %v10909
  %v12394 = vpack.c.b16 %v10917, %v10910
  %v12395 = vpack.c.b16 %v10918, %v10911
  %v12396 = vpack.c.b16 %v10919, %v10912
  %v12397 = vpack.c.b16 %v10920, %v10913
  %v12398 = vpack.c.b16 %v10921, %v10914
  %v12399 = vpack.c.b16 %v10929, %v10922
  %v12400 = vpack.c.b16 %v10930, %v10923
  %v12401 = vpack.c.b16 %v10931, %v10924
  %v12402 = vpack.c.b16 %v10932, %v10925
  %v12403 = vpack.c.b16 %v10933, %v10926
  %v12404 = vpack.c.b16 %v10934, %v10927
  %v12405 = vpack.c.b16 %v10935, %v10928
  %v12406 = vpack.c.b16 %v10943, %v10936
  %v12407 = vpack.c.b16 %v10944, %v10937
  %v12408 = vpack.c.b16 %v10945, %v10938
  %v12409 = vpack.c.b16 %v10946, %v10939
  %v12410 = vpack.c.b16 %v10947, %v10940
  %v12411 = vpack.c.b16 %v10948, %v10941
  %v12412 = vpack.c.b16 %v10949, %v10942
  %v12413 = vpack.c.b16 %v10957, %v10950
  %v12414 = vpack.c.b16 %v10958, %v10951
  %v12415 = vpack.c.b16 %v10959, %v10952
  %v12416 = vpack.c.b16 %v10960, %v10953
  %v12417 = vpack.c.b16 %v10961, %v10954
  %v12418 = vpack.c.b16 %v10962, %v10955
  %v12419 = vpack.c.b16 %v10963, %v10956
  %v12420 = vpack.c.b16 %v10971, %v10964
  %v12421 = vpack.c.b16 %v10972, %v10965
  %v12422 = vpack.c.b16 %v10973, %v10966
  %v12423 = vpack.c.b16 %v10974, %v10967
  %v12424 = vpack.c.b16 %v10975, %v10968
  %v12425 = vpack.c.b16 %v10976, %v10969
  %v12426 = vpack.c.b16 %v10977, %v10970
  %v12427 = vpack.c.b16 %v10985, %v10978
  %v12428 = vpack.c.b16 %v10986, %v10979
  %v12429 = vpack.c.b16 %v10987, %v10980
  %v12430 = vpack.c.b16 %v10988, %v10981
  %v12431 = vpack.c.b16 %v10989, %v10982
  %v12432 = vpack.c.b16 %v10990, %v10983
  %v12433 = vpack.c.b16 %v10991, %v10984
  %v12434 = vpack.c.b16 %v10999, %v10992
  %v12435 = vpack.c.b16 %v11000, %v10993
  %v12436 = vpack.c.b16 %v11001, %v10994
  %v12437 = vpack.c.b16 %v11002, %v10995
  %v12438 = vpack.c.b16 %v11003, %v10996
  %v12439 = vpack.c.b16 %v11004, %v10997
  %v12440 = vpack.c.b16 %v11005, %v10998
  %v12441 = vpack.c.b16 %v11013, %v11006
  %v12442 = vpack.c.b16 %v11014, %v11007
  %v12443 = vpack.c.b16 %v11015, %v11008
  %v12444 = vpack.c.b16 %v11016, %v11009
  %v12445 = vpack.c.b16 %v11017, %v11010
  %v12446 = vpack.c.b16 %v11018, %v11011
  %v12447 = vpack.c.b16 %v11019, %v11012
  %v12448 = vpack.c.b16 %v11027, %v11020
  %v12449 = vpack.c.b16 %v11028, %v11021
  %v12450 = vpack.c.b16 %v11029, %v11022
  %v12451 = vpack.c.b16 %v11030, %v11023
  %v12452 = vpack.c.b16 %v11031, %v11024
  %v12453 = vpack.c.b16 %v11032, %v11025
  %v12454 = vpack.c.b16 %v11033, %v11026
  %v12455 = vpack.c.b16 %v11041, %v11034
  %v12456 = vpack.c.b16 %v11042, %v11035
  %v12457 = vpack.c.b16 %v11043, %v11036
  %v12458 = vpack.c.b16 %v11044, %v11037
  %v12459 = vpack.c.b16 %v11045, %v11038
  %v12460 = vpack.c.b16 %v11046, %v11039
  %v12461 = vpack.c.b16 %v11047, %v11040
  %v12462 = vpack.c.b16 %v11055, %v11048
  %v12463 = vpack.c.b16 %v11056, %v11049
  %v12464 = vpack.c.b16 %v11057, %v11050
  %v12465 = vpack.c.b16 %v11058, %v11051
  %v12466 = vpack.c.b16 %v11059, %v11052
  %v12467 = vpack.c.b16 %v11060, %v11053
  %v12468 = vpack.c.b16 %v11061, %v11054
  %v12469 = vpack.c.b16 %v11069, %v11062
  %v12470 = vpack.c.b16 %v11070, %v11063
  %v12471 = vpack.c.b16 %v11071, %v11064
  %v12472 = vpack.c.b16 %v11072, %v11065
  %v12473 = vpack.c.b16 %v11073, %v11066
  %v12474 = vpack.c.b16 %v11074, %v11067
  %v12475 = vpack.c.b16 %v11075, %v11068
  %v12476 = vpack.c.b16 %v11083, %v11076
  %v12477 = vpack.c.b16 %v11084, %v11077
  %v12478 = vpack.c.b16 %v11085, %v11078
  %v12479 = vpack.c.b16 %v11086, %v11079
  %v12480 = vpack.c.b16 %v11087, %v11080
  %v12481 = vpack.c.b16 %v11088, %v11081
  %v12482 = vpack.c.b16 %v11089, %v11082
  %v12483 = vpack.c.b16 %v11097, %v11090
  %v12484 = vpack.c.b16 %v11098, %v11091
  %v12485 = vpack.c.b16 %v11099, %v11092
  %v12486 = vpack.c.b16 %v11100, %v11093
  %v12487 = vpack.c.b16 %v11101, %v11094
  %v12488 = vpack.c.b16 %v11102, %v11095
  %v12489 = vpack.c.b16 %v11103, %v11096
  %v12490 = vpack.c.b16 %v11111, %v11104
  %v12491 = vpack.c.b16 %v11112, %v11105
  %v12492 = vpack.c.b16 %v11113, %v11106
  %v12493 = vpack.c.b16 %v11114, %v11107
  %v12494 = vpack.c.b16 %v11115, %v11108
  %v12495 = vpack.c.b16 %v11116, %v11109
  %v12496 = vpack.c.b16 %v11117, %v11110
  %v12497 = vpack.c.b16 %v11125, %v11118
  %v12498 = vpack.c.b16 %v11126, %v11119
  %v12499 = vpack.c.b16 %v11127, %v11120
  %v12500 = vpack.c.b16 %v11128, %v11121
  %v12501 = vpack.c.b16 %v11129, %v11122
  %v12502 = vpack.c.b16 %v11130, %v11123
  %v12503 = vpack.c.b16 %v11131, %v11124
  %v12504 = vpack.c.b16 %v11139, %v11132
  %v12505 = vpack.c.b16 %v11140, %v11133
  %v12506 = vpack.c.b16 %v11141, %v11134
  %v12507 = vpack.c.b16 %v11142, %v11135
  %v12508 = vpack.c.b16 %v11143, %v11136
  %v12509 = vpack.c.b16 %v11144, %v11137
  %v12510 = vpack.c.b16 %v11145, %v11138
  %v12511 = vpack.c.b16 %v11153, %v11146
  %v12512 = vpack.c.b16 %v11154, %v11147
  %v12513 = vpack.c.b16 %v11155, %v11148
  %v12514 = vpack.c.b16 %v11156, %v11149
  %v12515 = vpack.c.b16 %v11157, %v11150
  %v12516 = vpack.c.b16 %v11158, %v11151
  %v12517 = vpack.c.b16 %v11159, %v11152
  %v12518 = vpack.c.b16 %v11167, %v11160
  %v12519 = vpack.c.b16 %v11168, %v11161
  %v12520 = vpack.c.b16 %v11169, %v11162
  %v12521 = vpack.c.b16 %v11170, %v11163
  %v12522 = vpack.c.b16 %v11171, %v11164
  %v12523 = vpack.c.b16 %v11172, %v11165
  %v12524 = vpack.c.b16 %v11173, %v11166
  %v12525 = vpack.c.b16 %v11181, %v11174
  %v12526 = vpack.c.b16 %v11182, %v11175
  %v12527 = vpack.c.b16 %v11183, %v11176
  %v12528 = vpack.c.b16 %v11184, %v11177
  %v12529 = vpack.c.b16 %v11185, %v11178
  %v12530 = vpack.c.b16 %v11186, %v11179
  %v12531 = vpack.c.b16 %v11187, %v11180
  %v12532 = vpack.c.b16 %v11195, %v11188
  %v12533 = vpack.c.b16 %v11196, %v11189
  %v12534 = vpack.c.b16 %v11197, %v11190
  %v12535 = vpack.c.b16 %v11198, %v11191
  %v12536 = vpack.c.b16 %v11199, %v11192
  %v12537 = vpack.c.b16 %v11200, %v11193
  %v12538 = vpack.c.b16 %v11201, %v11194
  %v12539 = vpack.c.b16 %v11209, %v11202
  %v12540 = vpack.c.b16 %v11210, %v11203
  %v12541 = vpack.c.b16 %v11211, %v11204
  %v12542 = vpack.c.b16 %v11212, %v11205
  %v12543 = vpack.c.b16 %v11213, %v11206
  %v12544 = vpack.c.b16 %v11214, %v11207
  %v12545 = vpack.c.b16 %v11215, %v11208
  %v12546 = vpack.c.b16 %v11223, %v11216
  %v12547 = vpack.c.b16 %v11224, %v11217
  %v12548 = vpack.c.b16 %v11225, %v11218
  %v12549 = vpack.c.b16 %v11226, %v11219
  %v12550 = vpack.c.b16 %v11227, %v11220
  %v12551 = vpack.c.b16 %v11228, %v11221
  %v12552 = vpack.c.b16 %v11229, %v11222
  %v12553 = vpack.c.b16 %v11237, %v11230
  %v12554 = vpack.c.b16 %v11238, %v11231
  %v12555 = vpack.c.b16 %v11239, %v11232
  %v12556 = vpack.c.b16 %v11240, %v11233
  %v12557 = vpack.c.b16 %v11241, %v11234
  %v12558 = vpack.c.b16 %v11242, %v11235
  %v12559 = vpack.c.b16 %v11243, %v11236
  %v12560 = vpack.c.b16 %v11251, %v11244
  %v12561 = vpack.c.b16 %v11252, %v11245
  %v12562 = vpack.c.b16 %v11253, %v11246
  %v12563 = vpack.c.b16 %v11254, %v11247
  %v12564 = vpack.c.b16 %v11255, %v11248
  %v12565 = vpack.c.b16 %v11256, %v11249
  %v12566 = vpack.c.b16 %v11257, %v11250
  %v12567 = vpack.c.b16 %v11265, %v11258
  %v12568 = vpack.c.b16 %v11266, %v11259
  %v12569 = vpack.c.b16 %v11267, %v11260
  %v12570 = vpack.c.b16 %v11268, %v11261
  %v12571 = vpack.c.b16 %v11269, %v11262
  %v12572 = vpack.c.b16 %v11270, %v11263
  %v12573 = vpack.c.b16 %v11271, %v11264
  %v12574 = vpack.c.b16 %v11279, %v11272
  %v12575 = vpack.c.b16 %v11280, %v11273
  %v12576 = vpack.c.b16 %v11281, %v11274
  %v12577 = vpack.c.b16 %v11282, %v11275
  %v12578 = vpack.c.b16 %v11283, %v11276
  %v12579 = vpack.c.b16 %v11284, %v11277
  %v12580 = vpack.c.b16 %v11285, %v11278
  %v12581 = vpack.c.b16 %v11293, %v11286
  %v12582 = vpack.c.b16 %v11294, %v11287
  %v12583 = vpack.c.b16 %v11295, %v11288
  %v12584 = vpack.c.b16 %v11296, %v11289
  %v12585 = vpack.c.b16 %v11297, %v11290
  %v12586 = vpack.c.b16 %v11298, %v11291
  %v12587 = vpack.c.b16 %v11299, %v11292
  %v12588 = vpack.c.b16 %v11307, %v11300
  %v12589 = vpack.c.b16 %v11308, %v11301
  %v12590 = vpack.c.b16 %v11309, %v11302
  %v12591 = vpack.c.b16 %v11310, %v11303
  %v12592 = vpack.c.b16 %v11311, %v11304
  %v12593 = vpack.c.b16 %v11312, %v11305
  %v12594 = vpack.c.b16 %v11313, %v11306
  %v12595 = vpack.c.b16 %v11321, %v11314
  %v12596 = vpack.c.b16 %v11322, %v11315
  %v12597 = vpack.c.b16 %v11323, %v11316
  %v12598 = vpack.c.b16 %v11324, %v11317
  %v12599 = vpack.c.b16 %v11325, %v11318
  %v12600 = vpack.c.b16 %v11326, %v11319
  %v12601 = vpack.c.b16 %v11327, %v11320
  %v12602 = vpack.c.b16 %v11335, %v11328
  %v12603 = vpack.c.b16 %v11336, %v11329
  %v12604 = vpack.c.b16 %v11337, %v11330
  %v12605 = vpack.c.b16 %v11338, %v11331
  %v12606 = vpack.c.b16 %v11339, %v11332
  %v12607 = vpack.c.b16 %v11340, %v11333
  %v12608 = vpack.c.b16 %v11341, %v11334
  %v12609 = vpack.c.b16 %v11349, %v11342
  %v12610 = vpack.c.b16 %v11350, %v11343
  %v12611 = vpack.c.b16 %v11351, %v11344
  %v12612 = vpack.c.b16 %v11352, %v11345
  %v12613 = vpack.c.b16 %v11353, %v11346
  %v12614 = vpack.c.b16 %v11354, %v11347
  %v12615 = vpack.c.b16 %v11355, %v11348
  %v12616 = vpack.c.b16 %v11363, %v11356
  %v12617 = vpack.c.b16 %v11364, %v11357
  %v12618 = vpack.c.b16 %v11365, %v11358
  %v12619 = vpack.c.b16 %v11366, %v11359
  %v12620 = vpack.c.b16 %v11367, %v11360
  %v12621 = vpack.c.b16 %v11368, %v11361
  %v12622 = vpack.c.b16 %v11369, %v11362
  %v12623 = vpack.c.b16 %v11377, %v11370
  %v12624 = vpack.c.b16 %v11378, %v11371
  %v12625 = vpack.c.b16 %v11379, %v11372
  %v12626 = vpack.c.b16 %v11380, %v11373
  %v12627 = vpack.c.b16 %v11381, %v11374
  %v12628 = vpack.c.b16 %v11382, %v11375
  %v12629 = vpack.c.b16 %v11383, %v11376
  %v12630 = vpack.c.b16 %v11391, %v11384
  %v12631 = vpack.c.b16 %v11392, %v11385
  %v12632 = vpack.c.b16 %v11393, %v11386
  %v12633 = vpack.c.b16 %v11394, %v11387
  %v12634 = vpack.c.b16 %v11395, %v11388
  %v12635 = vpack.c.b16 %v11396, %v11389
  %v12636 = vpack.c.b16 %v11397, %v11390
  %v12637 = vpack.c.b16 %v11405, %v11398
  %v12638 = vpack.c.b16 %v11406, %v11399
  %v12639 = vpack.c.b16 %v11407, %v11400
  %v12640 = vpack.c.b16 %v11408, %v11401
  %v12641 = vpack.c.b16 %v11409, %v11402
  %v12642 = vpack.c.b16 %v11410, %v11403
  %v12643 = vpack.c.b16 %v11411, %v11404
  %v12644 = vpack.c.b16 %v11419, %v11412
  %v12645 = vpack.c.b16 %v11420, %v11413
  %v12646 = vpack.c.b16 %v11421, %v11414
  %v12647 = vpack.c.b16 %v11422, %v11415
  %v12648 = vpack.c.b16 %v11423, %v11416
  %v12649 = vpack.c.b16 %v11424, %v11417
  %v12650 = vpack.c.b16 %v11425, %v11418
  %v12651 = vpack.c.b16 %v11433, %v11426
  %v12652 = vpack.c.b16 %v11434, %v11427
  %v12653 = vpack.c.b16 %v11435, %v11428
  %v12654 = vpack.c.b16 %v11436, %v11429
  %v12655 = vpack.c.b16 %v11437, %v11430
  %v12656 = vpack.c.b16 %v11438, %v11431
  %v12657 = vpack.c.b16 %v11439, %v11432
  %v12658 = vpack.c.b16 %v11447, %v11440
  %v12659 = vpack.c.b16 %v11448, %v11441
  %v12660 = vpack.c.b16 %v11449, %v11442
  %v12661 = vpack.c.b16 %v11450, %v11443
  %v12662 = vpack.c.b16 %v11451, %v11444
  %v12663 = vpack.c.b16 %v11452, %v11445
  %v12664 = vpack.c.b16 %v11453, %v11446
  %v12665 = vpack.c.b16 %v11461, %v11454
  %v12666 = vpack.c.b16 %v11462, %v11455
  %v12667 = vpack.c.b16 %v11463, %v11456
  %v12668 = vpack.c.b16 %v11464, %v11457
  %v12669 = vpack.c.b16 %v11465, %v11458
  %v12670 = vpack.c.b16 %v11466, %v11459
  %v12671 = vpack.c.b16 %v11467, %v11460
  %v12672 = vpack.c.b16 %v11475, %v11468
  %v12673 = vpack.c.b16 %v11476, %v11469
  %v12674 = vpack.c.b16 %v11477, %v11470
  %v12675 = vpack.c.b16 %v11478, %v11471
  %v12676 = vpack.c.b16 %v11479, %v11472
  %v12677 = vpack.c.b16 %v11480, %v11473
  %v12678 = vpack.c.b16 %v11481, %v11474
  %v12679 = vpack.c.b16 %v11489, %v11482
  %v12680 = vpack.c.b16 %v11490, %v11483
  %v12681 = vpack.c.b16 %v11491, %v11484
  %v12682 = vpack.c.b16 %v11492, %v11485
  %v12683 = vpack.c.b16 %v11493, %v11486
  %v12684 = vpack.c.b16 %v11494, %v11487
  %v12685 = vpack.c.b16 %v11495, %v11488
  %v12686 = vpack.c.b16 %v11503, %v11496
  %v12687 = vpack.c.b16 %v11504, %v11497
  %v12688 = vpack.c.b16 %v11505, %v11498
  %v12689 = vpack.c.b16 %v11506, %v11499
  %v12690 = vpack.c.b16 %v11507, %v11500
  %v12691 = vpack.c.b16 %v11508, %v11501
  %v12692 = vpack.c.b16 %v11509, %v11502
  %v12693 = vpack.c.b16 %v11517, %v11510
  %v12694 = vpack.c.b16 %v11518, %v11511
  %v12695 = vpack.c.b16 %v11519, %v11512
  %v12696 = vpack.c.b16 %v11520, %v11513
  %v12697 = vpack.c.b16 %v11521, %v11514
  %v12698 = vpack.c.b16 %v11522, %v11515
  %v12699 = vpack.c.b16 %v11523, %v11516
  %v12700 = vpack.c.b16 %v11531, %v11524
  %v12701 = vpack.c.b16 %v11532, %v11525
  %v12702 = vpack.c.b16 %v11533, %v11526
  %v12703 = vpack.c.b16 %v11534, %v11527
  %v12704 = vpack.c.b16 %v11535, %v11528
  %v12705 = vpack.c.b16 %v11536, %v11529
  %v12706 = vpack.c.b16 %v11537, %v11530
  %v12707 = vpack.c.b16 %v11545, %v11538
  %v12708 = vpack.c.b16 %v11546, %v11539
  %v12709 = vpack.c.b16 %v11547, %v11540
  %v12710 = vpack.c.b16 %v11548, %v11541
  %v12711 = vpack.c.b16 %v11549, %v11542
  %v12712 = vpack.c.b16 %v11550, %v11543
  %v12713 = vpack.c.b16 %v11551, %v11544
  %v12714 = vpack.c.b16 %v11559, %v11552
  %v12715 = vpack.c.b16 %v11560, %v11553
  %v12716 = vpack.c.b16 %v11561, %v11554
  %v12717 = vpack.c.b16 %v11562, %v11555
  %v12718 = vpack.c.b16 %v11563, %v11556
  %v12719 = vpack.c.b16 %v11564, %v11557
  %v12720 = vpack.c.b16 %v11565, %v11558
  %v12721 = vpack.c.b16 %v11573, %v11566
  %v12722 = vpack.c.b16 %v11574, %v11567
  %v12723 = vpack.c.b16 %v11575, %v11568
  %v12724 = vpack.c.b16 %v11576, %v11569
  %v12725 = vpack.c.b16 %v11577, %v11570
  %v12726 = vpack.c.b16 %v11578, %v11571
  %v12727 = vpack.c.b16 %v11579, %v11572
  %v12728 = vpack.c.b16 %v11587, %v11580
  %v12729 = vpack.c.b16 %v11588, %v11581
  %v12730 = vpack.c.b16 %v11589, %v11582
  %v12731 = vpack.c.b16 %v11590, %v11583
  %v12732 = vpack.c.b16 %v11591, %v11584
  %v12733 = vpack.c.b16 %v11592, %v11585
  %v12734 = vpack.c.b16 %v11593, %v11586
  %v12735 = vpack.c.b16 %v11601, %v11594
  %v12736 = vpack.c.b16 %v11602, %v11595
  %v12737 = vpack.c.b16 %v11603, %v11596
  %v12738 = vpack.c.b16 %v11604, %v11597
  %v12739 = vpack.c.b16 %v11605, %v11598
  %v12740 = vpack.c.b16 %v11606, %v11599
  %v12741 = vpack.c.b16 %v11607, %v11600
  %v12742 = vpack.c.b16 %v11615, %v11608
  %v12743 = vpack.c.b16 %v11616, %v11609
  %v12744 = vpack.c.b16 %v11617, %v11610
  %v12745 = vpack.c.b16 %v11618, %v11611
  %v12746 = vpack.c.b16 %v11619, %v11612
  %v12747 = vpack.c.b16 %v11620, %v11613
  %v12748 = vpack.c.b16 %v11621, %v11614
  %v12749 = vpack.c.b16 %v11629, %v11622
  %v12750 = vpack.c.b16 %v11630, %v11623
  %v12751 = vpack.c.b16 %v11631, %v11624
  %v12752 = vpack.c.b16 %v11632, %v11625
  %v12753 = vpack.c.b16 %v11633, %v11626
  %v12754 = vpack.c.b16 %v11634, %v11627
  %v12755 = vpack.c.b16 %v11635, %v11628
  %v12756 = vpack.c.b16 %v11643, %v11636
  %v12757 = vpack.c.b16 %v11644, %v11637
  %v12758 = vpack.c.b16 %v11645, %v11638
  %v12759 = vpack.c.b16 %v11646, %v11639
  %v12760 = vpack.c.b16 %v11647, %v11640
  %v12761 = vpack.c.b16 %v11648, %v11641
  %v12762 = vpack.c.b16 %v11649, %v11642
  %v12763 = vpack.c.b16 %v11657, %v11650
  %v12764 = vpack.c.b16 %v11658, %v11651
  %v12765 = vpack.c.b16 %v11659, %v11652
  %v12766 = vpack.c.b16 %v11660, %v11653
  %v12767 = vpack.c.b16 %v11661, %v11654
  %v12768 = vpack.c.b16 %v11662, %v11655
  %v12769 = vpack.c.b16 %v11663, %v11656
  %v12770 = vpack.c.b16 %v11671, %v11664
  %v12771 = vpack.c.b16 %v11672, %v11665
  %v12772 = vpack.c.b16 %v11673, %v11666
  %v12773 = vpack.c.b16 %v11674, %v11667
  %v12774 = vpack.c.b16 %v11675, %v11668
  %v12775 = vpack.c.b16 %v11676, %v11669
  %v12776 = vpack.c.b16 %v11677, %v11670
  %v12777 = vpack.c.b16 %v11685, %v11678
  %v12778 = vpack.c.b16 %v11686, %v11679
  %v12779 = vpack.c.b16 %v11687, %v11680
  %v12780 = vpack.c.b16 %v11688, %v11681
  %v12781 = vpack.c.b16 %v11689, %v11682
  %v12782 = vpack.c.b16 %v11690, %v11683
  %v12783 = vpack.c.b16 %v11691, %v11684
  %v12784 = vpack.c.b16 %v11699, %v11692
  %v12785 = vpack.c.b16 %v11700, %v11693
  %v12786 = vpack.c.b16 %v11701, %v11694
  %v12787 = vpack.c.b16 %v11702, %v11695
  %v12788 = vpack.c.b16 %v11703, %v11696
  %v12789 = vpack.c.b16 %v11704, %v11697
  %v12790 = vpack.c.b16 %v11705, %v11698
  %v12791 = vpack.c.b16 %v11713, %v11706
  %v12792 = vpack.c.b16 %v11714, %v11707
  %v12793 = vpack.c.b16 %v11715, %v11708
  %v12794 = vpack.c.b16 %v11716, %v11709
  %v12795 = vpack.c.b16 %v11717, %v11710
  %v12796 = vpack.c.b16 %v11718, %v11711
  %v12797 = vpack.c.b16 %v11719, %v11712
  %v12798 = vpack.c.b16 %v11727, %v11720
  %v12799 = vpack.c.b16 %v11728, %v11721
  %v12800 = vpack.c.b16 %v11729, %v11722
  %v12801 = vpack.c.b16 %v11730, %v11723
  %v12802 = vpack.c.b16 %v11731, %v11724
  %v12803 = vpack.c.b16 %v11732, %v11725
  %v12804 = vpack.c.b16 %v11733, %v11726
  %v12805 = vpack.c.b16 %v11741, %v11734
  %v12806 = vpack.c.b16 %v11742, %v11735
  %v12807 = vpack.c.b16 %v11743, %v11736
  %v12808 = vpack.c.b16 %v11744, %v11737
  %v12809 = vpack.c.b16 %v11745, %v11738
  %v12810 = vpack.c.b16 %v11746, %v11739
  %v12811 = vpack.c.b16 %v11747, %v11740
  %v12812 = vpack.c.b16 %v11755, %v11748
  %v12813 = vpack.c.b16 %v11756, %v11749
  %v12814 = vpack.c.b16 %v11757, %v11750
  %v12815 = vpack.c.b16 %v11758, %v11751
  %v12816 = vpack.c.b16 %v11759, %v11752
  %v12817 = vpack.c.b16 %v11760, %v11753
  %v12818 = vpack.c.b16 %v11761, %v11754
  %v12819 = vpack.c.b16 %v11769, %v11762
  %v12820 = vpack.c.b16 %v11770, %v11763
  %v12821 = vpack.c.b16 %v11771, %v11764
  %v12822 = vpack.c.b16 %v11772, %v11765
  %v12823 = vpack.c.b16 %v11773, %v11766
  %v12824 = vpack.c.b16 %v11774, %v11767
  %v12825 = vpack.c.b16 %v11775, %v11768
  %v12826 = vpack.c.b16 %v11783, %v11776
  %v12827 = vpack.c.b16 %v11784, %v11777
  %v12828 = vpack.c.b16 %v11785, %v11778
  %v12829 = vpack.c.b16 %v11786, %v11779
  %v12830 = vpack.c.b16 %v11787, %v11780
  %v12831 = vpack.c.b16 %v11788, %v11781
  %v12832 = vpack.c.b16 %v11789, %v11782
  %v12833 = vpack.c.b16 %v11797, %v11790
  %v12834 = vpack.c.b16 %v11798, %v11791
  %v12835 = vpack.c.b16 %v11799, %v11792
  %v12836 = vpack.c.b16 %v11800, %v11793
  %v12837 = vpack.c.b16 %v11801, %v11794
  %v12838 = vpack.c.b16 %v11802, %v11795
  %v12839 = vpack.c.b16 %v11803, %v11796
  %v12840 = vpack.c.b16 %v11811, %v11804
  %v12841 = vpack.c.b16 %v11812, %v11805
  %v12842 = vpack.c.b16 %v11813, %v11806
  %v12843 = vpack.c.b16 %v11814, %v11807
  %v12844 = vpack.c.b16 %v11815, %v11808
  %v12845 = vpack.c.b16 %v11816, %v11809
  %v12846 = vpack.c.b16 %v11817, %v11810
  %v12847 = vpack.c.b16 %v11825, %v11818
  %v12848 = vpack.c.b16 %v11826, %v11819
  %v12849 = vpack.c.b16 %v11827, %v11820
  %v12850 = vpack.c.b16 %v11828, %v11821
  %v12851 = vpack.c.b16 %v11829, %v11822
  %v12852 = vpack.c.b16 %v11830, %v11823
  %v12853 = vpack.c.b16 %v11831, %v11824
  %v12854 = vpack.c.b16 %v11839, %v11832
  %v12855 = vpack.c.b16 %v11840, %v11833
  %v12856 = vpack.c.b16 %v11841, %v11834
  %v12857 = vpack.c.b16 %v11842, %v11835
  %v12858 = vpack.c.b16 %v11843, %v11836
  %v12859 = vpack.c.b16 %v11844, %v11837
  %v12860 = vpack.c.b16 %v11845, %v11838
  %v12861 = vpack.c.b16 %v11853, %v11846
  %v12862 = vpack.c.b16 %v11854, %v11847
  %v12863 = vpack.c.b16 %v11855, %v11848
  %v12864 = vpack.c.b16 %v11856, %v11849
  %v12865 = vpack.c.b16 %v11857, %v11850
  %v12866 = vpack.c.b16 %v11858, %v11851
  %v12867 = vpack.c.b16 %v11859, %v11852
  %v12868 = vpack.c.b16 %v11867, %v11860
  %v12869 = vpack.c.b16 %v11868, %v11861
  %v12870 = vpack.c.b16 %v11869, %v11862
  %v12871 = vpack.c.b16 %v11870, %v11863
  %v12872 = vpack.c.b16 %v11871, %v11864
  %v12873 = vpack.c.b16 %v11872, %v11865
  %v12874 = vpack.c.b16 %v11873, %v11866
  %v12875 = vpack.c.b16 %v11881, %v11874
  %v12876 = vpack.c.b16 %v11882, %v11875
  %v12877 = vpack.c.b16 %v11883, %v11876
  %v12878 = vpack.c.b16 %v11884, %v11877
  %v12879 = vpack.c.b16 %v11885, %v11878
  %v12880 = vpack.c.b16 %v11886, %v11879
  %v12881 = vpack.c.b16 %v11887, %v11880
  %v12882 = vpack.c.b16 %v11895, %v11888
  %v12883 = vpack.c.b16 %v11896, %v11889
  %v12884 = vpack.c.b16 %v11897, %v11890
  %v12885 = vpack.c.b16 %v11898, %v11891
  %v12886 = vpack.c.b16 %v11899, %v11892
  %v12887 = vpack.c.b16 %v11900, %v11893
  %v12888 = vpack.c.b16 %v11901, %v11894
  %v12889 = vpack.c.b16 %v11909, %v11902
  %v12890 = vpack.c.b16 %v11910, %v11903
  %v12891 = vpack.c.b16 %v11911, %v11904
  %v12892 = vpack.c.b16 %v11912, %v11905
  %v12893 = vpack.c.b16 %v11913, %v11906
  %v12894 = vpack.c.b16 %v11914, %v11907
  %v12895 = vpack.c.b16 %v11915, %v11908
  %v12896 = vpack.c.b16 %v11923, %v11916
  %v12897 = vpack.c.b16 %v11924, %v11917
  %v12898 = vpack.c.b16 %v11925, %v11918
  %v12899 = vpack.c.b16 %v11926, %v11919
  %v12900 = vpack.c.b16 %v11927, %v11920
  %v12901 = vpack.c.b16 %v11928, %v11921
  %v12902 = vpack.c.b16 %v11929, %v11922
  %v12903 = vpack.c.b16 %v11937, %v11930
  %v12904 = vpack.c.b16 %v11938, %v11931
  %v12905 = vpack.c.b16 %v11939, %v11932
  %v12906 = vpack.c.b16 %v11940, %v11933
  %v12907 = vpack.c.b16 %v11941, %v11934
  %v12908 = vpack.c.b16 %v11942, %v11935
  %v12909 = vpack.c.b16 %v11943, %v11936
  %v12910 = vpack.c.b16 %v11951, %v11944
  %v12911 = vpack.c.b16 %v11952, %v11945
  %v12912 = vpack.c.b16 %v11953, %v11946
  %v12913 = vpack.c.b16 %v11954, %v11947
  %v12914 = vpack.c.b16 %v11955, %v11948
  %v12915 = vpack.c.b16 %v11956, %v11949
  %v12916 = vpack.c.b16 %v11957, %v11950
  %v12917 = vpack.c.b16 %v11965, %v11958
  %v12918 = vpack.c.b16 %v11966, %v11959
  %v12919 = vpack.c.b16 %v11967, %v11960
  %v12920 = vpack.c.b16 %v11968, %v11961
  %v12921 = vpack.c.b16 %v11969, %v11962
  %v12922 = vpack.c.b16 %v11970, %v11963
  %v12923 = vpack.c.b16 %v11971, %v11964
  %v12924 = vpack.c.b16 %v11979, %v11972
  %v12925 = vpack.c.b16 %v11980, %v11973
  %v12926 = vpack.c.b16 %v11981, %v11974
  %v12927 = vpack.c.b16 %v11982, %v11975
  %v12928 = vpack.c.b16 %v11983, %v11976
  %v12929 = vpack.c.b16 %v11984, %v11977
  %v12930 = vpack.c.b16 %v11985, %v11978
  %v12931 = vpack.c.b16 %v11993, %v11986
  %v12932 = vpack.c.b16 %v11994, %v11987
  %v12933 = vpack.c.b16 %v11995, %v11988
  %v12934 = vpack.c.b16 %v11996, %v11989
  %v12935 = vpack.c.b16 %v11997, %v11990
  %v12936 = vpack.c.b16 %v11998, %v11991
  %v12937 = vpack.c.b16 %v11999, %v11992
  %v12938 = vpack.c.b16 %v12007, %v12000
  %v12939 = vpack.c.b16 %v12008, %v12001
  %v12940 = vpack.c.b16 %v12009, %v12002
  %v12941 = vpack.c.b16 %v12010, %v12003
  %v12942 = vpack.c.b16 %v12011, %v12004
  %v12943 = vpack.c.b16 %v12012, %v12005
  %v12944 = vpack.c.b16 %v12013, %v12006
  %v12945 = vpack.c.b16 %v12021, %v12014
  %v12946 = vpack.c.b16 %v12022, %v12015
  %v12947 = vpack.c.b16 %v12023, %v12016
  %v12948 = vpack.c.b16 %v12024, %v12017
  %v12949 = vpack.c.b16 %v12025, %v12018
  %v12950 = vpack.c.b16 %v12026, %v12019
  %v12951 = vpack.c.b16 %v12027, %v12020
  %v12952 = vpack.c.b16 %v12035, %v12028
  %v12953 = vpack.c.b16 %v12036, %v12029
  %v12954 = vpack.c.b16 %v12037, %v12030
  %v12955 = vpack.c.b16 %v12038, %v12031
  %v12956 = vpack.c.b16 %v12039, %v12032
  %v12957 = vpack.c.b16 %v12040, %v12033
  %v12958 = vpack.c.b16 %v12041, %v12034
  %v12959 = vpack.c.b16 %v12049, %v12042
  %v12960 = vpack.c.b16 %v12050, %v12043
  %v12961 = vpack.c.b16 %v12051, %v12044
  %v12962 = vpack.c.b16 %v12052, %v12045
  %v12963 = vpack.c.b16 %v12053, %v12046
  %v12964 = vpack.c.b16 %v12054, %v12047
  %v12965 = vpack.c.b16 %v12055, %v12048
  %v12966 = vpack.c.b16 %v12063, %v12056
  %v12967 = vpack.c.b16 %v12064, %v12057
  %v12968 = vpack.c.b16 %v12065, %v12058
  %v12969 = vpack.c.b16 %v12066, %v12059
  %v12970 = vpack.c.b16 %v12067, %v12060
  %v12971 = vpack.c.b16 %v12068, %v12061
  %v12972 = vpack.c.b16 %v12069, %v12062
  %v12973 = vpack.c.b16 %v12077, %v12070
  %v12974 = vpack.c.b16 %v12078, %v12071
  %v12975 = vpack.c.b16 %v12079, %v12072
  %v12976 = vpack.c.b16 %v12080, %v12073
  %v12977 = vpack.c.b16 %v12081, %v12074
  %v12978 = vpack.c.b16 %v12082, %v12075
  %v12979 = vpack.c.b16 %v12083, %v12076
  %13876 = vmatprep.subr.bf16.mxu0 %v12085
  %13877 = vmatpush1.bf16.msra.mxu0 %v12084
  %13878 = vmatprep.subr.bf16.mxu0 %v12092
  %13879 = vmatpush1.bf16.msra.mxu0 %v12091
  %13880 = vmatprep.subr.bf16.mxu0 %v12099
  %13881 = vmatpush1.bf16.msra.mxu0 %v12098
  %13882 = vmatprep.subr.bf16.mxu0 %v12106
  %13883 = vmatpush1.bf16.msra.mxu0 %v12105
  %13884 = vmatprep.subr.bf16.mxu0 %v12113
  %13885 = vmatpush1.bf16.msra.mxu0 %v12112
  %13886 = vmatprep.subr.bf16.mxu0 %v12120
  %13887 = vmatpush1.bf16.msra.mxu0 %v12119
  %13888 = vmatprep.subr.bf16.mxu0 %v12127
  %13889 = vmatpush1.bf16.msra.mxu0 %v12126
  %13890 = vmatprep.subr.bf16.mxu0 %v12134
  %13891 = vmatpush1.bf16.msra.mxu0 %v12133
  %13892 = vmatprep.subr.bf16.mxu0 %v12141
  %13893 = vmatpush1.bf16.msra.mxu0 %v12140
  %13894 = vmatprep.subr.bf16.mxu0 %v12148
  %13895 = vmatpush1.bf16.msra.mxu0 %v12147
  %13896 = vmatprep.subr.bf16.mxu0 %v12155
  %13897 = vmatpush1.bf16.msra.mxu0 %v12154
  %13898 = vmatprep.subr.bf16.mxu0 %v12162
  %13899 = vmatpush1.bf16.msra.mxu0 %v12161
  %13900 = vmatprep.subr.bf16.mxu0 %v12169
  %13901 = vmatpush1.bf16.msra.mxu0 %v12168
  %13902 = vmatprep.subr.bf16.mxu0 %v12176
  %13903 = vmatpush1.bf16.msra.mxu0 %v12175
  %13904 = vmatprep.subr.bf16.mxu0 %v12183
  %13905 = vmatpush1.bf16.msra.mxu0 %v12182
  %13906 = vmatprep.subr.bf16.mxu0 %v12190
  %13907 = vmatpush1.bf16.msra.mxu0 %v12189
  %13908 = vmatprep.mubr.bf16.mxu0 %v8192
  %13909 = vmatmul.mubr.bf16.gmra.mrb[0].mxu0 %v8191
  %v13910 = vpop.f32.mrb[0].mxu0
  %v13911 = vadd.f32 %v9236, %v13910
  %v13912 = vpop.f32.mrb[0].mxu0
  %v13913 = vadd.f32 %v9240, %v13912
  %v13914 = vpop.f32.mrb[0].mxu0
  %v13915 = vpop.f32.mrb[0].mxu0
  %13916 = vdwg.mxu0
  %13917 = vmatprep.subr.bf16.mxu0 %v12197
  %13918 = vmatpush1.bf16.msra.mxu0 %v12196
  %13919 = vmatprep.subr.bf16.mxu0 %v12204
  %13920 = vmatpush1.bf16.msra.mxu0 %v12203
  %13921 = vmatprep.subr.bf16.mxu0 %v12211
  %13922 = vmatpush1.bf16.msra.mxu0 %v12210
  %13923 = vmatprep.subr.bf16.mxu0 %v12218
  %13924 = vmatpush1.bf16.msra.mxu0 %v12217
  %13925 = vmatprep.subr.bf16.mxu0 %v12225
  %13926 = vmatpush1.bf16.msra.mxu0 %v12224
  %13927 = vmatprep.subr.bf16.mxu0 %v12232
  %13928 = vmatpush1.bf16.msra.mxu0 %v12231
  %13929 = vmatprep.subr.bf16.mxu0 %v12239
  %13930 = vmatpush1.bf16.msra.mxu0 %v12238
  %13931 = vmatprep.subr.bf16.mxu0 %v12246
  %13932 = vmatpush1.bf16.msra.mxu0 %v12245
  %13933 = vmatprep.subr.bf16.mxu0 %v12253
  %13934 = vmatpush1.bf16.msra.mxu0 %v12252
  %13935 = vmatprep.subr.bf16.mxu0 %v12260
  %13936 = vmatpush1.bf16.msra.mxu0 %v12259
  %13937 = vmatprep.subr.bf16.mxu0 %v12267
  %13938 = vmatpush1.bf16.msra.mxu0 %v12266
  %13939 = vmatprep.subr.bf16.mxu0 %v12274
  %13940 = vmatpush1.bf16.msra.mxu0 %v12273
  %13941 = vmatprep.subr.bf16.mxu0 %v12281
  %13942 = vmatpush1.bf16.msra.mxu0 %v12280
  %13943 = vmatprep.subr.bf16.mxu0 %v12288
  %13944 = vmatpush1.bf16.msra.mxu0 %v12287
  %13945 = vmatprep.subr.bf16.mxu0 %v12295
  %13946 = vmatpush1.bf16.msra.mxu0 %v12294
  %13947 = vmatprep.subr.bf16.mxu0 %v12302
  %13948 = vmatpush1.bf16.msra.mxu0 %v12301
  %13949 = vmatprep.mubr.bf16.mxu0 %v8194
  %13950 = vmatmul.mubr.bf16.gmra.mrb[0].mxu0 %v8193
  %v13951 = vpop.f32.mrb[0].mxu0
  %v13952 = vadd.f32 %v13911, %v13951
  %v13953 = vpop.f32.mrb[0].mxu0
  %v13954 = vadd.f32 %v13913, %v13953
  %v13955 = vpop.f32.mrb[0].mxu0
  %v13956 = vpop.f32.mrb[0].mxu0
  %13957 = vdwg.mxu0
  %13958 = vmatprep.subr.bf16.mxu0 %v12309
  %13959 = vmatpush1.bf16.msra.mxu0 %v12308
  %13960 = vmatprep.subr.bf16.mxu0 %v12316
  %13961 = vmatpush1.bf16.msra.mxu0 %v12315
  %13962 = vmatprep.subr.bf16.mxu0 %v12323
  %13963 = vmatpush1.bf16.msra.mxu0 %v12322
  %13964 = vmatprep.subr.bf16.mxu0 %v12330
  %13965 = vmatpush1.bf16.msra.mxu0 %v12329
  %13966 = vmatprep.subr.bf16.mxu0 %v12337
  %13967 = vmatpush1.bf16.msra.mxu0 %v12336
  %13968 = vmatprep.subr.bf16.mxu0 %v12344
  %13969 = vmatpush1.bf16.msra.mxu0 %v12343
  %13970 = vmatprep.subr.bf16.mxu0 %v12351
  %13971 = vmatpush1.bf16.msra.mxu0 %v12350
  %13972 = vmatprep.subr.bf16.mxu0 %v12358
  %13973 = vmatpush1.bf16.msra.mxu0 %v12357
  %13974 = vmatprep.subr.bf16.mxu0 %v12365
  %13975 = vmatpush1.bf16.msra.mxu0 %v12364
  %13976 = vmatprep.subr.bf16.mxu0 %v12372
  %13977 = vmatpush1.bf16.msra.mxu0 %v12371
  %13978 = vmatprep.subr.bf16.mxu0 %v12379
  %13979 = vmatpush1.bf16.msra.mxu0 %v12378
  %13980 = vmatprep.subr.bf16.mxu0 %v12386
  %13981 = vmatpush1.bf16.msra.mxu0 %v12385
  %13982 = vmatprep.subr.bf16.mxu0 %v12393
  %13983 = vmatpush1.bf16.msra.mxu0 %v12392
  %13984 = vmatprep.subr.bf16.mxu0 %v12400
  %13985 = vmatpush1.bf16.msra.mxu0 %v12399
  %13986 = vmatprep.subr.bf16.mxu0 %v12407
  %13987 = vmatpush1.bf16.msra.mxu0 %v12406
  %13988 = vmatprep.subr.bf16.mxu0 %v12414
  %13989 = vmatpush1.bf16.msra.mxu0 %v12413
  %13990 = vmatprep.mubr.bf16.mxu0 %v8196
  %13991 = vmatmul.mubr.bf16.gmra.mrb[0].mxu0 %v8195
  %v13992 = vpop.f32.mrb[0].mxu0
  %v13993 = vadd.f32 %v13952, %v13992
  %v13994 = vpop.f32.mrb[0].mxu0
  %v13995 = vadd.f32 %v13954, %v13994
  %v13996 = vpop.f32.mrb[0].mxu0
  %v13997 = vpop.f32.mrb[0].mxu0
  %13998 = vdwg.mxu0
  %13999 = vmatprep.subr.bf16.mxu0 %v12421
  %14000 = vmatpush1.bf16.msra.mxu0 %v12420
  %14001 = vmatprep.subr.bf16.mxu0 %v12428
  %14002 = vmatpush1.bf16.msra.mxu0 %v12427
  %14003 = vmatprep.subr.bf16.mxu0 %v12435
  %14004 = vmatpush1.bf16.msra.mxu0 %v12434
  %14005 = vmatprep.subr.bf16.mxu0 %v12442
  %14006 = vmatpush1.bf16.msra.mxu0 %v12441
  %14007 = vmatprep.subr.bf16.mxu0 %v12449
  %14008 = vmatpush1.bf16.msra.mxu0 %v12448
  %14009 = vmatprep.subr.bf16.mxu0 %v12456
  %14010 = vmatpush1.bf16.msra.mxu0 %v12455
  %14011 = vmatprep.subr.bf16.mxu0 %v12463
  %14012 = vmatpush1.bf16.msra.mxu0 %v12462
  %14013 = vmatprep.subr.bf16.mxu0 %v12470
  %14014 = vmatpush1.bf16.msra.mxu0 %v12469
  %14015 = vmatprep.subr.bf16.mxu0 %v12477
  %14016 = vmatpush1.bf16.msra.mxu0 %v12476
  %14017 = vmatprep.subr.bf16.mxu0 %v12484
  %14018 = vmatpush1.bf16.msra.mxu0 %v12483
  %14019 = vmatprep.subr.bf16.mxu0 %v12491
  %14020 = vmatpush1.bf16.msra.mxu0 %v12490
  %14021 = vmatprep.subr.bf16.mxu0 %v12498
  %14022 = vmatpush1.bf16.msra.mxu0 %v12497
  %14023 = vmatprep.subr.bf16.mxu0 %v12505
  %14024 = vmatpush1.bf16.msra.mxu0 %v12504
  %14025 = vmatprep.subr.bf16.mxu0 %v12512
  %14026 = vmatpush1.bf16.msra.mxu0 %v12511
  %14027 = vmatprep.subr.bf16.mxu0 %v12519
  %14028 = vmatpush1.bf16.msra.mxu0 %v12518
  %14029 = vmatprep.subr.bf16.mxu0 %v12526
  %14030 = vmatpush1.bf16.msra.mxu0 %v12525
  %14031 = vmatprep.mubr.bf16.mxu0 %v8198
  %14032 = vmatmul.mubr.bf16.gmra.mrb[0].mxu0 %v8197
  %v14033 = vpop.f32.mrb[0].mxu0
  %v14034 = vadd.f32 %v13993, %v14033
  %v14035 = vpop.f32.mrb[0].mxu0
  %v14036 = vadd.f32 %v13995, %v14035
  %v14037 = vpop.f32.mrb[0].mxu0
  %v14038 = vpop.f32.mrb[0].mxu0
  %14039 = vdwg.mxu0
  %14040 = vmatprep.subr.bf16.mxu0 %v12533
  %14041 = vmatpush1.bf16.msra.mxu0 %v12532
  %14042 = vmatprep.subr.bf16.mxu0 %v12540
  %14043 = vmatpush1.bf16.msra.mxu0 %v12539
  %14044 = vmatprep.subr.bf16.mxu0 %v12547
  %14045 = vmatpush1.bf16.msra.mxu0 %v12546
  %14046 = vmatprep.subr.bf16.mxu0 %v12554
  %14047 = vmatpush1.bf16.msra.mxu0 %v12553
  %14048 = vmatprep.subr.bf16.mxu0 %v12561
  %14049 = vmatpush1.bf16.msra.mxu0 %v12560
  %14050 = vmatprep.subr.bf16.mxu0 %v12568
  %14051 = vmatpush1.bf16.msra.mxu0 %v12567
  %14052 = vmatprep.subr.bf16.mxu0 %v12575
  %14053 = vmatpush1.bf16.msra.mxu0 %v12574
  %14054 = vmatprep.subr.bf16.mxu0 %v12582
  %14055 = vmatpush1.bf16.msra.mxu0 %v12581
  %14056 = vmatprep.subr.bf16.mxu0 %v12589
  %14057 = vmatpush1.bf16.msra.mxu0 %v12588
  %14058 = vmatprep.subr.bf16.mxu0 %v12596
  %14059 = vmatpush1.bf16.msra.mxu0 %v12595
  %14060 = vmatprep.subr.bf16.mxu0 %v12603
  %14061 = vmatpush1.bf16.msra.mxu0 %v12602
  %14062 = vmatprep.subr.bf16.mxu0 %v12610
  %14063 = vmatpush1.bf16.msra.mxu0 %v12609
  %14064 = vmatprep.subr.bf16.mxu0 %v12617
  %14065 = vmatpush1.bf16.msra.mxu0 %v12616
  %14066 = vmatprep.subr.bf16.mxu0 %v12624
  %14067 = vmatpush1.bf16.msra.mxu0 %v12623
  %14068 = vmatprep.subr.bf16.mxu0 %v12631
  %14069 = vmatpush1.bf16.msra.mxu0 %v12630
  %14070 = vmatprep.subr.bf16.mxu0 %v12638
  %14071 = vmatpush1.bf16.msra.mxu0 %v12637
  %14072 = vmatprep.mubr.bf16.mxu0 %v8200
  %14073 = vmatmul.mubr.bf16.gmra.mrb[0].mxu0 %v8199
  %v14074 = vpop.f32.mrb[0].mxu0
  %v14075 = vadd.f32 %v14034, %v14074
  %v14076 = vpop.f32.mrb[0].mxu0
  %v14077 = vadd.f32 %v14036, %v14076
  %v14078 = vpop.f32.mrb[0].mxu0
  %v14079 = vpop.f32.mrb[0].mxu0
  %14080 = vdwg.mxu0
  %14081 = vmatprep.subr.bf16.mxu0 %v12645
  %14082 = vmatpush1.bf16.msra.mxu0 %v12644
  %14083 = vmatprep.subr.bf16.mxu0 %v12652
  %14084 = vmatpush1.bf16.msra.mxu0 %v12651
  %14085 = vmatprep.subr.bf16.mxu0 %v12659
  %14086 = vmatpush1.bf16.msra.mxu0 %v12658
  %14087 = vmatprep.subr.bf16.mxu0 %v12666
  %14088 = vmatpush1.bf16.msra.mxu0 %v12665
  %14089 = vmatprep.subr.bf16.mxu0 %v12673
  %14090 = vmatpush1.bf16.msra.mxu0 %v12672
  %14091 = vmatprep.subr.bf16.mxu0 %v12680
  %14092 = vmatpush1.bf16.msra.mxu0 %v12679
  %14093 = vmatprep.subr.bf16.mxu0 %v12687
  %14094 = vmatpush1.bf16.msra.mxu0 %v12686
  %14095 = vmatprep.subr.bf16.mxu0 %v12694
  %14096 = vmatpush1.bf16.msra.mxu0 %v12693
  %14097 = vmatprep.subr.bf16.mxu0 %v12701
  %14098 = vmatpush1.bf16.msra.mxu0 %v12700
  %14099 = vmatprep.subr.bf16.mxu0 %v12708
  %14100 = vmatpush1.bf16.msra.mxu0 %v12707
  %14101 = vmatprep.subr.bf16.mxu0 %v12715
  %14102 = vmatpush1.bf16.msra.mxu0 %v12714
  %14103 = vmatprep.subr.bf16.mxu0 %v12722
  %14104 = vmatpush1.bf16.msra.mxu0 %v12721
  %14105 = vmatprep.subr.bf16.mxu0 %v12729
  %14106 = vmatpush1.bf16.msra.mxu0 %v12728
  %14107 = vmatprep.subr.bf16.mxu0 %v12736
  %14108 = vmatpush1.bf16.msra.mxu0 %v12735
  %14109 = vmatprep.subr.bf16.mxu0 %v12743
  %14110 = vmatpush1.bf16.msra.mxu0 %v12742
  %14111 = vmatprep.subr.bf16.mxu0 %v12750
  %14112 = vmatpush1.bf16.msra.mxu0 %v12749
  %14113 = vmatprep.mubr.bf16.mxu0 %v8202
  %14114 = vmatmul.mubr.bf16.gmra.mrb[0].mxu0 %v8201
  %v14115 = vpop.f32.mrb[0].mxu0
  %v14116 = vadd.f32 %v14075, %v14115
  %v14117 = vpop.f32.mrb[0].mxu0
  %v14118 = vadd.f32 %v14077, %v14117
  %v14119 = vpop.f32.mrb[0].mxu0
  %v14120 = vpop.f32.mrb[0].mxu0
  %14121 = vdwg.mxu0
  %14122 = vmatprep.subr.bf16.mxu0 %v12757
  %14123 = vmatpush1.bf16.msra.mxu0 %v12756
  %14124 = vmatprep.subr.bf16.mxu0 %v12764
  %14125 = vmatpush1.bf16.msra.mxu0 %v12763
  %14126 = vmatprep.subr.bf16.mxu0 %v12771
  %14127 = vmatpush1.bf16.msra.mxu0 %v12770
  %14128 = vmatprep.subr.bf16.mxu0 %v12778
  %14129 = vmatpush1.bf16.msra.mxu0 %v12777
  %14130 = vmatprep.subr.bf16.mxu0 %v12785
  %14131 = vmatpush1.bf16.msra.mxu0 %v12784
  %14132 = vmatprep.subr.bf16.mxu0 %v12792
  %14133 = vmatpush1.bf16.msra.mxu0 %v12791
  %14134 = vmatprep.subr.bf16.mxu0 %v12799
  %14135 = vmatpush1.bf16.msra.mxu0 %v12798
  %14136 = vmatprep.subr.bf16.mxu0 %v12806
  %14137 = vmatpush1.bf16.msra.mxu0 %v12805
  %14138 = vmatprep.subr.bf16.mxu0 %v12813
  %14139 = vmatpush1.bf16.msra.mxu0 %v12812
  %14140 = vmatprep.subr.bf16.mxu0 %v12820
  %14141 = vmatpush1.bf16.msra.mxu0 %v12819
  %14142 = vmatprep.subr.bf16.mxu0 %v12827
  %14143 = vmatpush1.bf16.msra.mxu0 %v12826
  %14144 = vmatprep.subr.bf16.mxu0 %v12834
  %14145 = vmatpush1.bf16.msra.mxu0 %v12833
  %14146 = vmatprep.subr.bf16.mxu0 %v12841
  %14147 = vmatpush1.bf16.msra.mxu0 %v12840
  %14148 = vmatprep.subr.bf16.mxu0 %v12848
  %14149 = vmatpush1.bf16.msra.mxu0 %v12847
  %14150 = vmatprep.subr.bf16.mxu0 %v12855
  %14151 = vmatpush1.bf16.msra.mxu0 %v12854
  %14152 = vmatprep.subr.bf16.mxu0 %v12862
  %14153 = vmatpush1.bf16.msra.mxu0 %v12861
  %14154 = vmatprep.mubr.bf16.mxu0 %v8204
  %14155 = vmatmul.mubr.bf16.gmra.mrb[0].mxu0 %v8203
  %v14156 = vpop.f32.mrb[0].mxu0
  %v14157 = vadd.f32 %v14116, %v14156
  %v14158 = vpop.f32.mrb[0].mxu0
  %v14159 = vadd.f32 %v14118, %v14158
  %v14160 = vpop.f32.mrb[0].mxu0
  %v14161 = vpop.f32.mrb[0].mxu0
  %14162 = vdwg.mxu0
  %14163 = vmatprep.subr.bf16.mxu0 %v12869
  %14164 = vmatpush1.bf16.msra.mxu0 %v12868
  %14165 = vmatprep.subr.bf16.mxu0 %v12876
  %14166 = vmatpush1.bf16.msra.mxu0 %v12875
  %14167 = vmatprep.subr.bf16.mxu0 %v12883
  %14168 = vmatpush1.bf16.msra.mxu0 %v12882
  %14169 = vmatprep.subr.bf16.mxu0 %v12890
  %14170 = vmatpush1.bf16.msra.mxu0 %v12889
  %14171 = vmatprep.subr.bf16.mxu0 %v12897
  %14172 = vmatpush1.bf16.msra.mxu0 %v12896
  %14173 = vmatprep.subr.bf16.mxu0 %v12904
  %14174 = vmatpush1.bf16.msra.mxu0 %v12903
  %14175 = vmatprep.subr.bf16.mxu0 %v12911
  %14176 = vmatpush1.bf16.msra.mxu0 %v12910
  %14177 = vmatprep.subr.bf16.mxu0 %v12918
  %14178 = vmatpush1.bf16.msra.mxu0 %v12917
  %14179 = vmatprep.subr.bf16.mxu0 %v12925
  %14180 = vmatpush1.bf16.msra.mxu0 %v12924
  %14181 = vmatprep.subr.bf16.mxu0 %v12932
  %14182 = vmatpush1.bf16.msra.mxu0 %v12931
  %14183 = vmatprep.subr.bf16.mxu0 %v12939
  %14184 = vmatpush1.bf16.msra.mxu0 %v12938
  %14185 = vmatprep.subr.bf16.mxu0 %v12946
  %14186 = vmatpush1.bf16.msra.mxu0 %v12945
  %14187 = vmatprep.subr.bf16.mxu0 %v12953
  %14188 = vmatpush1.bf16.msra.mxu0 %v12952
  %14189 = vmatprep.subr.bf16.mxu0 %v12960
  %14190 = vmatpush1.bf16.msra.mxu0 %v12959
  %14191 = vmatprep.subr.bf16.mxu0 %v12967
  %14192 = vmatpush1.bf16.msra.mxu0 %v12966
  %14193 = vmatprep.subr.bf16.mxu0 %v12974
  %14194 = vmatpush1.bf16.msra.mxu0 %v12973
  %14195 = vmatprep.mubr.bf16.mxu0 %v8206
  %14196 = vmatmul.mubr.bf16.gmra.mrb[0].mxu0 %v8205
  %v14197 = vpop.f32.mrb[0].mxu0
  %v14198 = vadd.f32 %v14157, %v14197
  %v14199 = vpop.f32.mrb[0].mxu0
  %v14200 = vadd.f32 %v14159, %v14199
  %v14201 = vpop.f32.mrb[0].mxu0
  %v14202 = vpop.f32.mrb[0].mxu0
  %14203 = vdwg.mxu0
  %14204 = vmatprep.subr.bf16.mxu0 %v12087
  %14205 = vmatpush1.bf16.msra.mxu0 %v12086
  %14206 = vmatprep.subr.bf16.mxu0 %v12094
  %14207 = vmatpush1.bf16.msra.mxu0 %v12093
  %14208 = vmatprep.subr.bf16.mxu0 %v12101
  %14209 = vmatpush1.bf16.msra.mxu0 %v12100
  %14210 = vmatprep.subr.bf16.mxu0 %v12108
  %14211 = vmatpush1.bf16.msra.mxu0 %v12107
  %14212 = vmatprep.subr.bf16.mxu0 %v12115
  %14213 = vmatpush1.bf16.msra.mxu0 %v12114
  %14214 = vmatprep.subr.bf16.mxu0 %v12122
  %14215 = vmatpush1.bf16.msra.mxu0 %v12121
  %14216 = vmatprep.subr.bf16.mxu0 %v12129
  %14217 = vmatpush1.bf16.msra.mxu0 %v12128
  %14218 = vmatprep.subr.bf16.mxu0 %v12136
  %14219 = vmatpush1.bf16.msra.mxu0 %v12135
  %14220 = vmatprep.subr.bf16.mxu0 %v12143
  %14221 = vmatpush1.bf16.msra.mxu0 %v12142
  %14222 = vmatprep.subr.bf16.mxu0 %v12150
  %14223 = vmatpush1.bf16.msra.mxu0 %v12149
  %14224 = vmatprep.subr.bf16.mxu0 %v12157
  %14225 = vmatpush1.bf16.msra.mxu0 %v12156
  %14226 = vmatprep.subr.bf16.mxu0 %v12164
  %14227 = vmatpush1.bf16.msra.mxu0 %v12163
  %14228 = vmatprep.subr.bf16.mxu0 %v12171
  %14229 = vmatpush1.bf16.msra.mxu0 %v12170
  %14230 = vmatprep.subr.bf16.mxu0 %v12178
  %14231 = vmatpush1.bf16.msra.mxu0 %v12177
  %14232 = vmatprep.subr.bf16.mxu0 %v12185
  %14233 = vmatpush1.bf16.msra.mxu0 %v12184
  %14234 = vmatprep.subr.bf16.mxu0 %v12192
  %14235 = vmatpush1.bf16.msra.mxu0 %v12191
  %14236 = vmatprep.mubr.bf16.mxu0 %v8192
  %14237 = vmatmul.mubr.bf16.gmra.mrb[0].mxu0 %v8191
  %v14238 = vpop.f32.mrb[0].mxu0
  %v14239 = vadd.f32 %v9244, %v14238
  %v14240 = vpop.f32.mrb[0].mxu0
  %v14241 = vadd.f32 %v9248, %v14240
  %v14242 = vpop.f32.mrb[0].mxu0
  %v14243 = vpop.f32.mrb[0].mxu0
  %14244 = vdwg.mxu0
  %14245 = vmatprep.subr.bf16.mxu0 %v12199
  %14246 = vmatpush1.bf16.msra.mxu0 %v12198
  %14247 = vmatprep.subr.bf16.mxu0 %v12206
  %14248 = vmatpush1.bf16.msra.mxu0 %v12205
  %14249 = vmatprep.subr.bf16.mxu0 %v12213
  %14250 = vmatpush1.bf16.msra.mxu0 %v12212
  %14251 = vmatprep.subr.bf16.mxu0 %v12220
  %14252 = vmatpush1.bf16.msra.mxu0 %v12219
  %14253 = vmatprep.subr.bf16.mxu0 %v12227
  %14254 = vmatpush1.bf16.msra.mxu0 %v12226
  %14255 = vmatprep.subr.bf16.mxu0 %v12234
  %14256 = vmatpush1.bf16.msra.mxu0 %v12233
  %14257 = vmatprep.subr.bf16.mxu0 %v12241
  %14258 = vmatpush1.bf16.msra.mxu0 %v12240
  %14259 = vmatprep.subr.bf16.mxu0 %v12248
  %14260 = vmatpush1.bf16.msra.mxu0 %v12247
  %14261 = vmatprep.subr.bf16.mxu0 %v12255
  %14262 = vmatpush1.bf16.msra.mxu0 %v12254
  %14263 = vmatprep.subr.bf16.mxu0 %v12262
  %14264 = vmatpush1.bf16.msra.mxu0 %v12261
  %14265 = vmatprep.subr.bf16.mxu0 %v12269
  %14266 = vmatpush1.bf16.msra.mxu0 %v12268
  %14267 = vmatprep.subr.bf16.mxu0 %v12276
  %14268 = vmatpush1.bf16.msra.mxu0 %v12275
  %14269 = vmatprep.subr.bf16.mxu0 %v12283
  %14270 = vmatpush1.bf16.msra.mxu0 %v12282
  %14271 = vmatprep.subr.bf16.mxu0 %v12290
  %14272 = vmatpush1.bf16.msra.mxu0 %v12289
  %14273 = vmatprep.subr.bf16.mxu0 %v12297
  %14274 = vmatpush1.bf16.msra.mxu0 %v12296
  %14275 = vmatprep.subr.bf16.mxu0 %v12304
  %14276 = vmatpush1.bf16.msra.mxu0 %v12303
  %14277 = vmatprep.mubr.bf16.mxu0 %v8194
  %14278 = vmatmul.mubr.bf16.gmra.mrb[0].mxu0 %v8193
  %v14279 = vpop.f32.mrb[0].mxu0
  %v14280 = vadd.f32 %v14239, %v14279
  %v14281 = vpop.f32.mrb[0].mxu0
  %v14282 = vadd.f32 %v14241, %v14281
  %v14283 = vpop.f32.mrb[0].mxu0
  %v14284 = vpop.f32.mrb[0].mxu0
  %14285 = vdwg.mxu0
  %14286 = vmatprep.subr.bf16.mxu0 %v12311
  %14287 = vmatpush1.bf16.msra.mxu0 %v12310
  %14288 = vmatprep.subr.bf16.mxu0 %v12318
  %14289 = vmatpush1.bf16.msra.mxu0 %v12317
  %14290 = vmatprep.subr.bf16.mxu0 %v12325
  %14291 = vmatpush1.bf16.msra.mxu0 %v12324
  %14292 = vmatprep.subr.bf16.mxu0 %v12332
  %14293 = vmatpush1.bf16.msra.mxu0 %v12331
  %14294 = vmatprep.subr.bf16.mxu0 %v12339
  %14295 = vmatpush1.bf16.msra.mxu0 %v12338
  %14296 = vmatprep.subr.bf16.mxu0 %v12346
  %14297 = vmatpush1.bf16.msra.mxu0 %v12345
  %14298 = vmatprep.subr.bf16.mxu0 %v12353
  %14299 = vmatpush1.bf16.msra.mxu0 %v12352
  %14300 = vmatprep.subr.bf16.mxu0 %v12360
  %14301 = vmatpush1.bf16.msra.mxu0 %v12359
  %14302 = vmatprep.subr.bf16.mxu0 %v12367
  %14303 = vmatpush1.bf16.msra.mxu0 %v12366
  %14304 = vmatprep.subr.bf16.mxu0 %v12374
  %14305 = vmatpush1.bf16.msra.mxu0 %v12373
  %14306 = vmatprep.subr.bf16.mxu0 %v12381
  %14307 = vmatpush1.bf16.msra.mxu0 %v12380
  %14308 = vmatprep.subr.bf16.mxu0 %v12388
  %14309 = vmatpush1.bf16.msra.mxu0 %v12387
  %14310 = vmatprep.subr.bf16.mxu0 %v12395
  %14311 = vmatpush1.bf16.msra.mxu0 %v12394
  %14312 = vmatprep.subr.bf16.mxu0 %v12402
  %14313 = vmatpush1.bf16.msra.mxu0 %v12401
  %14314 = vmatprep.subr.bf16.mxu0 %v12409
  %14315 = vmatpush1.bf16.msra.mxu0 %v12408
  %14316 = vmatprep.subr.bf16.mxu0 %v12416
  %14317 = vmatpush1.bf16.msra.mxu0 %v12415
  %14318 = vmatprep.mubr.bf16.mxu0 %v8196
  %14319 = vmatmul.mubr.bf16.gmra.mrb[0].mxu0 %v8195
  %v14320 = vpop.f32.mrb[0].mxu0
  %v14321 = vadd.f32 %v14280, %v14320
  %v14322 = vpop.f32.mrb[0].mxu0
  %v14323 = vadd.f32 %v14282, %v14322
  %v14324 = vpop.f32.mrb[0].mxu0
  %v14325 = vpop.f32.mrb[0].mxu0
  %14326 = vdwg.mxu0
  %14327 = vmatprep.subr.bf16.mxu0 %v12423
  %14328 = vmatpush1.bf16.msra.mxu0 %v12422
  %14329 = vmatprep.subr.bf16.mxu0 %v12430
  %14330 = vmatpush1.bf16.msra.mxu0 %v12429
  %14331 = vmatprep.subr.bf16.mxu0 %v12437
  %14332 = vmatpush1.bf16.msra.mxu0 %v12436
  %14333 = vmatprep.subr.bf16.mxu0 %v12444
  %14334 = vmatpush1.bf16.msra.mxu0 %v12443
  %14335 = vmatprep.subr.bf16.mxu0 %v12451
  %14336 = vmatpush1.bf16.msra.mxu0 %v12450
  %14337 = vmatprep.subr.bf16.mxu0 %v12458
  %14338 = vmatpush1.bf16.msra.mxu0 %v12457
  %14339 = vmatprep.subr.bf16.mxu0 %v12465
  %14340 = vmatpush1.bf16.msra.mxu0 %v12464
  %14341 = vmatprep.subr.bf16.mxu0 %v12472
  %14342 = vmatpush1.bf16.msra.mxu0 %v12471
  %14343 = vmatprep.subr.bf16.mxu0 %v12479
  %14344 = vmatpush1.bf16.msra.mxu0 %v12478
  %14345 = vmatprep.subr.bf16.mxu0 %v12486
  %14346 = vmatpush1.bf16.msra.mxu0 %v12485
  %14347 = vmatprep.subr.bf16.mxu0 %v12493
  %14348 = vmatpush1.bf16.msra.mxu0 %v12492
  %14349 = vmatprep.subr.bf16.mxu0 %v12500
  %14350 = vmatpush1.bf16.msra.mxu0 %v12499
  %14351 = vmatprep.subr.bf16.mxu0 %v12507
  %14352 = vmatpush1.bf16.msra.mxu0 %v12506
  %14353 = vmatprep.subr.bf16.mxu0 %v12514
  %14354 = vmatpush1.bf16.msra.mxu0 %v12513
  %14355 = vmatprep.subr.bf16.mxu0 %v12521
  %14356 = vmatpush1.bf16.msra.mxu0 %v12520
  %14357 = vmatprep.subr.bf16.mxu0 %v12528
  %14358 = vmatpush1.bf16.msra.mxu0 %v12527
  %14359 = vmatprep.mubr.bf16.mxu0 %v8198
  %14360 = vmatmul.mubr.bf16.gmra.mrb[0].mxu0 %v8197
  %v14361 = vpop.f32.mrb[0].mxu0
  %v14362 = vadd.f32 %v14321, %v14361
  %v14363 = vpop.f32.mrb[0].mxu0
  %v14364 = vadd.f32 %v14323, %v14363
  %v14365 = vpop.f32.mrb[0].mxu0
  %v14366 = vpop.f32.mrb[0].mxu0
  %14367 = vdwg.mxu0
  %14368 = vmatprep.subr.bf16.mxu0 %v12535
  %14369 = vmatpush1.bf16.msra.mxu0 %v12534
  %14370 = vmatprep.subr.bf16.mxu0 %v12542
  %14371 = vmatpush1.bf16.msra.mxu0 %v12541
  %14372 = vmatprep.subr.bf16.mxu0 %v12549
  %14373 = vmatpush1.bf16.msra.mxu0 %v12548
  %14374 = vmatprep.subr.bf16.mxu0 %v12556
  %14375 = vmatpush1.bf16.msra.mxu0 %v12555
  %14376 = vmatprep.subr.bf16.mxu0 %v12563
  %14377 = vmatpush1.bf16.msra.mxu0 %v12562
  %14378 = vmatprep.subr.bf16.mxu0 %v12570
  %14379 = vmatpush1.bf16.msra.mxu0 %v12569
  %14380 = vmatprep.subr.bf16.mxu0 %v12577
  %14381 = vmatpush1.bf16.msra.mxu0 %v12576
  %14382 = vmatprep.subr.bf16.mxu0 %v12584
  %14383 = vmatpush1.bf16.msra.mxu0 %v12583
  %14384 = vmatprep.subr.bf16.mxu0 %v12591
  %14385 = vmatpush1.bf16.msra.mxu0 %v12590
  %14386 = vmatprep.subr.bf16.mxu0 %v12598
  %14387 = vmatpush1.bf16.msra.mxu0 %v12597
  %14388 = vmatprep.subr.bf16.mxu0 %v12605
  %14389 = vmatpush1.bf16.msra.mxu0 %v12604
  %14390 = vmatprep.subr.bf16.mxu0 %v12612
  %14391 = vmatpush1.bf16.msra.mxu0 %v12611
  %14392 = vmatprep.subr.bf16.mxu0 %v12619
  %14393 = vmatpush1.bf16.msra.mxu0 %v12618
  %14394 = vmatprep.subr.bf16.mxu0 %v12626
  %14395 = vmatpush1.bf16.msra.mxu0 %v12625
  %14396 = vmatprep.subr.bf16.mxu0 %v12633
  %14397 = vmatpush1.bf16.msra.mxu0 %v12632
  %14398 = vmatprep.subr.bf16.mxu0 %v12640
  %14399 = vmatpush1.bf16.msra.mxu0 %v12639
  %14400 = vmatprep.mubr.bf16.mxu0 %v8200
  %14401 = vmatmul.mubr.bf16.gmra.mrb[0].mxu0 %v8199
  %v14402 = vpop.f32.mrb[0].mxu0
  %v14403 = vadd.f32 %v14362, %v14402
  %v14404 = vpop.f32.mrb[0].mxu0
  %v14405 = vadd.f32 %v14364, %v14404
  %v14406 = vpop.f32.mrb[0].mxu0
  %v14407 = vpop.f32.mrb[0].mxu0
  %14408 = vdwg.mxu0
  %14409 = vmatprep.subr.bf16.mxu0 %v12647
  %14410 = vmatpush1.bf16.msra.mxu0 %v12646
  %14411 = vmatprep.subr.bf16.mxu0 %v12654
  %14412 = vmatpush1.bf16.msra.mxu0 %v12653
  %14413 = vmatprep.subr.bf16.mxu0 %v12661
  %14414 = vmatpush1.bf16.msra.mxu0 %v12660
  %14415 = vmatprep.subr.bf16.mxu0 %v12668
  %14416 = vmatpush1.bf16.msra.mxu0 %v12667
  %14417 = vmatprep.subr.bf16.mxu0 %v12675
  %14418 = vmatpush1.bf16.msra.mxu0 %v12674
  %14419 = vmatprep.subr.bf16.mxu0 %v12682
  %14420 = vmatpush1.bf16.msra.mxu0 %v12681
  %14421 = vmatprep.subr.bf16.mxu0 %v12689
  %14422 = vmatpush1.bf16.msra.mxu0 %v12688
  %14423 = vmatprep.subr.bf16.mxu0 %v12696
  %14424 = vmatpush1.bf16.msra.mxu0 %v12695
  %14425 = vmatprep.subr.bf16.mxu0 %v12703
  %14426 = vmatpush1.bf16.msra.mxu0 %v12702
  %14427 = vmatprep.subr.bf16.mxu0 %v12710
  %14428 = vmatpush1.bf16.msra.mxu0 %v12709
  %14429 = vmatprep.subr.bf16.mxu0 %v12717
  %14430 = vmatpush1.bf16.msra.mxu0 %v12716
  %14431 = vmatprep.subr.bf16.mxu0 %v12724
  %14432 = vmatpush1.bf16.msra.mxu0 %v12723
  %14433 = vmatprep.subr.bf16.mxu0 %v12731
  %14434 = vmatpush1.bf16.msra.mxu0 %v12730
  %14435 = vmatprep.subr.bf16.mxu0 %v12738
  %14436 = vmatpush1.bf16.msra.mxu0 %v12737
  %14437 = vmatprep.subr.bf16.mxu0 %v12745
  %14438 = vmatpush1.bf16.msra.mxu0 %v12744
  %14439 = vmatprep.subr.bf16.mxu0 %v12752
  %14440 = vmatpush1.bf16.msra.mxu0 %v12751
  %14441 = vmatprep.mubr.bf16.mxu0 %v8202
  %14442 = vmatmul.mubr.bf16.gmra.mrb[0].mxu0 %v8201
  %v14443 = vpop.f32.mrb[0].mxu0
  %v14444 = vadd.f32 %v14403, %v14443
  %v14445 = vpop.f32.mrb[0].mxu0
  %v14446 = vadd.f32 %v14405, %v14445
  %v14447 = vpop.f32.mrb[0].mxu0
  %v14448 = vpop.f32.mrb[0].mxu0
  %14449 = vdwg.mxu0
  %14450 = vmatprep.subr.bf16.mxu0 %v12759
  %14451 = vmatpush1.bf16.msra.mxu0 %v12758
  %14452 = vmatprep.subr.bf16.mxu0 %v12766
  %14453 = vmatpush1.bf16.msra.mxu0 %v12765
  %14454 = vmatprep.subr.bf16.mxu0 %v12773
  %14455 = vmatpush1.bf16.msra.mxu0 %v12772
  %14456 = vmatprep.subr.bf16.mxu0 %v12780
  %14457 = vmatpush1.bf16.msra.mxu0 %v12779
  %14458 = vmatprep.subr.bf16.mxu0 %v12787
  %14459 = vmatpush1.bf16.msra.mxu0 %v12786
  %14460 = vmatprep.subr.bf16.mxu0 %v12794
  %14461 = vmatpush1.bf16.msra.mxu0 %v12793
  %14462 = vmatprep.subr.bf16.mxu0 %v12801
  %14463 = vmatpush1.bf16.msra.mxu0 %v12800
  %14464 = vmatprep.subr.bf16.mxu0 %v12808
  %14465 = vmatpush1.bf16.msra.mxu0 %v12807
  %14466 = vmatprep.subr.bf16.mxu0 %v12815
  %14467 = vmatpush1.bf16.msra.mxu0 %v12814
  %14468 = vmatprep.subr.bf16.mxu0 %v12822
  %14469 = vmatpush1.bf16.msra.mxu0 %v12821
  %14470 = vmatprep.subr.bf16.mxu0 %v12829
  %14471 = vmatpush1.bf16.msra.mxu0 %v12828
  %14472 = vmatprep.subr.bf16.mxu0 %v12836
  %14473 = vmatpush1.bf16.msra.mxu0 %v12835
  %14474 = vmatprep.subr.bf16.mxu0 %v12843
  %14475 = vmatpush1.bf16.msra.mxu0 %v12842
  %14476 = vmatprep.subr.bf16.mxu0 %v12850
  %14477 = vmatpush1.bf16.msra.mxu0 %v12849
  %14478 = vmatprep.subr.bf16.mxu0 %v12857
  %14479 = vmatpush1.bf16.msra.mxu0 %v12856
  %14480 = vmatprep.subr.bf16.mxu0 %v12864
  %14481 = vmatpush1.bf16.msra.mxu0 %v12863
  %14482 = vmatprep.mubr.bf16.mxu0 %v8204
  %14483 = vmatmul.mubr.bf16.gmra.mrb[0].mxu0 %v8203
  %v14484 = vpop.f32.mrb[0].mxu0
  %v14485 = vadd.f32 %v14444, %v14484
  %v14486 = vpop.f32.mrb[0].mxu0
  %v14487 = vadd.f32 %v14446, %v14486
  %v14488 = vpop.f32.mrb[0].mxu0
  %v14489 = vpop.f32.mrb[0].mxu0
  %14490 = vdwg.mxu0
  %14491 = vmatprep.subr.bf16.mxu0 %v12871
  %14492 = vmatpush1.bf16.msra.mxu0 %v12870
  %14493 = vmatprep.subr.bf16.mxu0 %v12878
  %14494 = vmatpush1.bf16.msra.mxu0 %v12877
  %14495 = vmatprep.subr.bf16.mxu0 %v12885
  %14496 = vmatpush1.bf16.msra.mxu0 %v12884
  %14497 = vmatprep.subr.bf16.mxu0 %v12892
  %14498 = vmatpush1.bf16.msra.mxu0 %v12891
  %14499 = vmatprep.subr.bf16.mxu0 %v12899
  %14500 = vmatpush1.bf16.msra.mxu0 %v12898
  %14501 = vmatprep.subr.bf16.mxu0 %v12906
  %14502 = vmatpush1.bf16.msra.mxu0 %v12905
  %14503 = vmatprep.subr.bf16.mxu0 %v12913
  %14504 = vmatpush1.bf16.msra.mxu0 %v12912
  %14505 = vmatprep.subr.bf16.mxu0 %v12920
  %14506 = vmatpush1.bf16.msra.mxu0 %v12919
  %14507 = vmatprep.subr.bf16.mxu0 %v12927
  %14508 = vmatpush1.bf16.msra.mxu0 %v12926
  %14509 = vmatprep.subr.bf16.mxu0 %v12934
  %14510 = vmatpush1.bf16.msra.mxu0 %v12933
  %14511 = vmatprep.subr.bf16.mxu0 %v12941
  %14512 = vmatpush1.bf16.msra.mxu0 %v12940
  %14513 = vmatprep.subr.bf16.mxu0 %v12948
  %14514 = vmatpush1.bf16.msra.mxu0 %v12947
  %14515 = vmatprep.subr.bf16.mxu0 %v12955
  %14516 = vmatpush1.bf16.msra.mxu0 %v12954
  %14517 = vmatprep.subr.bf16.mxu0 %v12962
  %14518 = vmatpush1.bf16.msra.mxu0 %v12961
  %14519 = vmatprep.subr.bf16.mxu0 %v12969
  %14520 = vmatpush1.bf16.msra.mxu0 %v12968
  %14521 = vmatprep.subr.bf16.mxu0 %v12976
  %14522 = vmatpush1.bf16.msra.mxu0 %v12975
  %14523 = vmatprep.mubr.bf16.mxu0 %v8206
  %14524 = vmatmul.mubr.bf16.gmra.mrb[0].mxu0 %v8205
  %v14525 = vpop.f32.mrb[0].mxu0
  %v14526 = vadd.f32 %v14485, %v14525
  %v14527 = vpop.f32.mrb[0].mxu0
  %v14528 = vadd.f32 %v14487, %v14527
  %v14529 = vpop.f32.mrb[0].mxu0
  %v14530 = vpop.f32.mrb[0].mxu0
  %14531 = vdwg.mxu0
  %14532 = vmatprep.subr.bf16.mxu0 %v12089
  %14533 = vmatpush1.bf16.msra.mxu0 %v12088
  %14534 = vmatprep.subr.bf16.mxu0 %v12096
  %14535 = vmatpush1.bf16.msra.mxu0 %v12095
  %14536 = vmatprep.subr.bf16.mxu0 %v12103
  %14537 = vmatpush1.bf16.msra.mxu0 %v12102
  %14538 = vmatprep.subr.bf16.mxu0 %v12110
  %14539 = vmatpush1.bf16.msra.mxu0 %v12109
  %14540 = vmatprep.subr.bf16.mxu0 %v12117
  %14541 = vmatpush1.bf16.msra.mxu0 %v12116
  %14542 = vmatprep.subr.bf16.mxu0 %v12124
  %14543 = vmatpush1.bf16.msra.mxu0 %v12123
  %14544 = vmatprep.subr.bf16.mxu0 %v12131
  %14545 = vmatpush1.bf16.msra.mxu0 %v12130
  %14546 = vmatprep.subr.bf16.mxu0 %v12138
  %14547 = vmatpush1.bf16.msra.mxu0 %v12137
  %14548 = vmatprep.subr.bf16.mxu0 %v12145
  %14549 = vmatpush1.bf16.msra.mxu0 %v12144
  %14550 = vmatprep.subr.bf16.mxu0 %v12152
  %14551 = vmatpush1.bf16.msra.mxu0 %v12151
  %14552 = vmatprep.subr.bf16.mxu0 %v12159
  %14553 = vmatpush1.bf16.msra.mxu0 %v12158
  %14554 = vmatprep.subr.bf16.mxu0 %v12166
  %14555 = vmatpush1.bf16.msra.mxu0 %v12165
  %14556 = vmatprep.subr.bf16.mxu0 %v12173
  %14557 = vmatpush1.bf16.msra.mxu0 %v12172
  %14558 = vmatprep.subr.bf16.mxu0 %v12180
  %14559 = vmatpush1.bf16.msra.mxu0 %v12179
  %14560 = vmatprep.subr.bf16.mxu0 %v12187
  %14561 = vmatpush1.bf16.msra.mxu0 %v12186
  %14562 = vmatprep.subr.bf16.mxu0 %v12194
  %14563 = vmatpush1.bf16.msra.mxu0 %v12193
  %14564 = vmatprep.mubr.bf16.mxu0 %v8192
  %14565 = vmatmul.mubr.bf16.gmra.mrb[0].mxu0 %v8191
  %v14566 = vpop.f32.mrb[0].mxu0
  %v14567 = vadd.f32 %v9252, %v14566
  %v14568 = vpop.f32.mrb[0].mxu0
  %v14569 = vadd.f32 %v9256, %v14568
  %v14570 = vpop.f32.mrb[0].mxu0
  %v14571 = vpop.f32.mrb[0].mxu0
  %14572 = vdwg.mxu0
  %14573 = vmatprep.subr.bf16.mxu0 %v12201
  %14574 = vmatpush1.bf16.msra.mxu0 %v12200
  %14575 = vmatprep.subr.bf16.mxu0 %v12208
  %14576 = vmatpush1.bf16.msra.mxu0 %v12207
  %14577 = vmatprep.subr.bf16.mxu0 %v12215
  %14578 = vmatpush1.bf16.msra.mxu0 %v12214
  %14579 = vmatprep.subr.bf16.mxu0 %v12222
  %14580 = vmatpush1.bf16.msra.mxu0 %v12221
  %14581 = vmatprep.subr.bf16.mxu0 %v12229
  %14582 = vmatpush1.bf16.msra.mxu0 %v12228
  %14583 = vmatprep.subr.bf16.mxu0 %v12236
  %14584 = vmatpush1.bf16.msra.mxu0 %v12235
  %14585 = vmatprep.subr.bf16.mxu0 %v12243
  %14586 = vmatpush1.bf16.msra.mxu0 %v12242
  %14587 = vmatprep.subr.bf16.mxu0 %v12250
  %14588 = vmatpush1.bf16.msra.mxu0 %v12249
  %14589 = vmatprep.subr.bf16.mxu0 %v12257
  %14590 = vmatpush1.bf16.msra.mxu0 %v12256
  %14591 = vmatprep.subr.bf16.mxu0 %v12264
  %14592 = vmatpush1.bf16.msra.mxu0 %v12263
  %14593 = vmatprep.subr.bf16.mxu0 %v12271
  %14594 = vmatpush1.bf16.msra.mxu0 %v12270
  %14595 = vmatprep.subr.bf16.mxu0 %v12278
  %14596 = vmatpush1.bf16.msra.mxu0 %v12277
  %14597 = vmatprep.subr.bf16.mxu0 %v12285
  %14598 = vmatpush1.bf16.msra.mxu0 %v12284
  %14599 = vmatprep.subr.bf16.mxu0 %v12292
  %14600 = vmatpush1.bf16.msra.mxu0 %v12291
  %14601 = vmatprep.subr.bf16.mxu0 %v12299
  %14602 = vmatpush1.bf16.msra.mxu0 %v12298
  %14603 = vmatprep.subr.bf16.mxu0 %v12306
  %14604 = vmatpush1.bf16.msra.mxu0 %v12305
  %14605 = vmatprep.mubr.bf16.mxu0 %v8194
  %14606 = vmatmul.mubr.bf16.gmra.mrb[0].mxu0 %v8193
  %v14607 = vpop.f32.mrb[0].mxu0
  %v14608 = vadd.f32 %v14567, %v14607
  %v14609 = vpop.f32.mrb[0].mxu0
  %v14610 = vadd.f32 %v14569, %v14609
  %v14611 = vpop.f32.mrb[0].mxu0
  %v14612 = vpop.f32.mrb[0].mxu0
  %14613 = vdwg.mxu0
  %14614 = vmatprep.subr.bf16.mxu0 %v12313
  %14615 = vmatpush1.bf16.msra.mxu0 %v12312
  %14616 = vmatprep.subr.bf16.mxu0 %v12320
  %14617 = vmatpush1.bf16.msra.mxu0 %v12319
  %14618 = vmatprep.subr.bf16.mxu0 %v12327
  %14619 = vmatpush1.bf16.msra.mxu0 %v12326
  %14620 = vmatprep.subr.bf16.mxu0 %v12334
  %14621 = vmatpush1.bf16.msra.mxu0 %v12333
  %14622 = vmatprep.subr.bf16.mxu0 %v12341
  %14623 = vmatpush1.bf16.msra.mxu0 %v12340
  %14624 = vmatprep.subr.bf16.mxu0 %v12348
  %14625 = vmatpush1.bf16.msra.mxu0 %v12347
  %14626 = vmatprep.subr.bf16.mxu0 %v12355
  %14627 = vmatpush1.bf16.msra.mxu0 %v12354
  %14628 = vmatprep.subr.bf16.mxu0 %v12362
  %14629 = vmatpush1.bf16.msra.mxu0 %v12361
  %14630 = vmatprep.subr.bf16.mxu0 %v12369
  %14631 = vmatpush1.bf16.msra.mxu0 %v12368
  %14632 = vmatprep.subr.bf16.mxu0 %v12376
  %14633 = vmatpush1.bf16.msra.mxu0 %v12375
  %14634 = vmatprep.subr.bf16.mxu0 %v12383
  %14635 = vmatpush1.bf16.msra.mxu0 %v12382
  %14636 = vmatprep.subr.bf16.mxu0 %v12390
  %14637 = vmatpush1.bf16.msra.mxu0 %v12389
  %14638 = vmatprep.subr.bf16.mxu0 %v12397
  %14639 = vmatpush1.bf16.msra.mxu0 %v12396
  %14640 = vmatprep.subr.bf16.mxu0 %v12404
  %14641 = vmatpush1.bf16.msra.mxu0 %v12403
  %14642 = vmatprep.subr.bf16.mxu0 %v12411
  %14643 = vmatpush1.bf16.msra.mxu0 %v12410
  %14644 = vmatprep.subr.bf16.mxu0 %v12418
  %14645 = vmatpush1.bf16.msra.mxu0 %v12417
  %14646 = vmatprep.mubr.bf16.mxu0 %v8196
  %14647 = vmatmul.mubr.bf16.gmra.mrb[0].mxu0 %v8195
  %v14648 = vpop.f32.mrb[0].mxu0
  %v14649 = vadd.f32 %v14608, %v14648
  %v14650 = vpop.f32.mrb[0].mxu0
  %v14651 = vadd.f32 %v14610, %v14650
  %v14652 = vpop.f32.mrb[0].mxu0
  %v14653 = vpop.f32.mrb[0].mxu0
  %14654 = vdwg.mxu0
  %14655 = vmatprep.subr.bf16.mxu0 %v12425
  %14656 = vmatpush1.bf16.msra.mxu0 %v12424
  %14657 = vmatprep.subr.bf16.mxu0 %v12432
  %14658 = vmatpush1.bf16.msra.mxu0 %v12431
  %14659 = vmatprep.subr.bf16.mxu0 %v12439
  %14660 = vmatpush1.bf16.msra.mxu0 %v12438
  %14661 = vmatprep.subr.bf16.mxu0 %v12446
  %14662 = vmatpush1.bf16.msra.mxu0 %v12445
  %14663 = vmatprep.subr.bf16.mxu0 %v12453
  %14664 = vmatpush1.bf16.msra.mxu0 %v12452
  %14665 = vmatprep.subr.bf16.mxu0 %v12460
  %14666 = vmatpush1.bf16.msra.mxu0 %v12459
  %14667 = vmatprep.subr.bf16.mxu0 %v12467
  %14668 = vmatpush1.bf16.msra.mxu0 %v12466
  %14669 = vmatprep.subr.bf16.mxu0 %v12474
  %14670 = vmatpush1.bf16.msra.mxu0 %v12473
  %14671 = vmatprep.subr.bf16.mxu0 %v12481
  %14672 = vmatpush1.bf16.msra.mxu0 %v12480
  %14673 = vmatprep.subr.bf16.mxu0 %v12488
  %14674 = vmatpush1.bf16.msra.mxu0 %v12487
  %14675 = vmatprep.subr.bf16.mxu0 %v12495
  %14676 = vmatpush1.bf16.msra.mxu0 %v12494
  %14677 = vmatprep.subr.bf16.mxu0 %v12502
  %14678 = vmatpush1.bf16.msra.mxu0 %v12501
  %14679 = vmatprep.subr.bf16.mxu0 %v12509
  %14680 = vmatpush1.bf16.msra.mxu0 %v12508
  %14681 = vmatprep.subr.bf16.mxu0 %v12516
  %14682 = vmatpush1.bf16.msra.mxu0 %v12515
  %14683 = vmatprep.subr.bf16.mxu0 %v12523
  %14684 = vmatpush1.bf16.msra.mxu0 %v12522
  %14685 = vmatprep.subr.bf16.mxu0 %v12530
  %14686 = vmatpush1.bf16.msra.mxu0 %v12529
  %14687 = vmatprep.mubr.bf16.mxu0 %v8198
  %14688 = vmatmul.mubr.bf16.gmra.mrb[0].mxu0 %v8197
  %v14689 = vpop.f32.mrb[0].mxu0
  %v14690 = vadd.f32 %v14649, %v14689
  %v14691 = vpop.f32.mrb[0].mxu0
  %v14692 = vadd.f32 %v14651, %v14691
  %v14693 = vpop.f32.mrb[0].mxu0
  %v14694 = vpop.f32.mrb[0].mxu0
  %14695 = vdwg.mxu0
  %14696 = vmatprep.subr.bf16.mxu0 %v12537
  %14697 = vmatpush1.bf16.msra.mxu0 %v12536
  %14698 = vmatprep.subr.bf16.mxu0 %v12544
  %14699 = vmatpush1.bf16.msra.mxu0 %v12543
  %14700 = vmatprep.subr.bf16.mxu0 %v12551
  %14701 = vmatpush1.bf16.msra.mxu0 %v12550
  %14702 = vmatprep.subr.bf16.mxu0 %v12558
  %14703 = vmatpush1.bf16.msra.mxu0 %v12557
  %14704 = vmatprep.subr.bf16.mxu0 %v12565
  %14705 = vmatpush1.bf16.msra.mxu0 %v12564
  %14706 = vmatprep.subr.bf16.mxu0 %v12572
  %14707 = vmatpush1.bf16.msra.mxu0 %v12571
  %14708 = vmatprep.subr.bf16.mxu0 %v12579
  %14709 = vmatpush1.bf16.msra.mxu0 %v12578
  %14710 = vmatprep.subr.bf16.mxu0 %v12586
  %14711 = vmatpush1.bf16.msra.mxu0 %v12585
  %14712 = vmatprep.subr.bf16.mxu0 %v12593
  %14713 = vmatpush1.bf16.msra.mxu0 %v12592
  %14714 = vmatprep.subr.bf16.mxu0 %v12600
  %14715 = vmatpush1.bf16.msra.mxu0 %v12599
  %14716 = vmatprep.subr.bf16.mxu0 %v12607
  %14717 = vmatpush1.bf16.msra.mxu0 %v12606
  %14718 = vmatprep.subr.bf16.mxu0 %v12614
  %14719 = vmatpush1.bf16.msra.mxu0 %v12613
  %14720 = vmatprep.subr.bf16.mxu0 %v12621
  %14721 = vmatpush1.bf16.msra.mxu0 %v12620
  %14722 = vmatprep.subr.bf16.mxu0 %v12628
  %14723 = vmatpush1.bf16.msra.mxu0 %v12627
  %14724 = vmatprep.subr.bf16.mxu0 %v12635
  %14725 = vmatpush1.bf16.msra.mxu0 %v12634
  %14726 = vmatprep.subr.bf16.mxu0 %v12642
  %14727 = vmatpush1.bf16.msra.mxu0 %v12641
  %14728 = vmatprep.mubr.bf16.mxu0 %v8200
  %14729 = vmatmul.mubr.bf16.gmra.mrb[0].mxu0 %v8199
  %v14730 = vpop.f32.mrb[0].mxu0
  %v14731 = vadd.f32 %v14690, %v14730
  %v14732 = vpop.f32.mrb[0].mxu0
  %v14733 = vadd.f32 %v14692, %v14732
  %v14734 = vpop.f32.mrb[0].mxu0
  %v14735 = vpop.f32.mrb[0].mxu0
  %14736 = vdwg.mxu0
  %14737 = vmatprep.subr.bf16.mxu0 %v12649
  %14738 = vmatpush1.bf16.msra.mxu0 %v12648
  %14739 = vmatprep.subr.bf16.mxu0 %v12656
  %14740 = vmatpush1.bf16.msra.mxu0 %v12655
  %14741 = vmatprep.subr.bf16.mxu0 %v12663
  %14742 = vmatpush1.bf16.msra.mxu0 %v12662
  %14743 = vmatprep.subr.bf16.mxu0 %v12670
  %14744 = vmatpush1.bf16.msra.mxu0 %v12669
  %14745 = vmatprep.subr.bf16.mxu0 %v12677
  %14746 = vmatpush1.bf16.msra.mxu0 %v12676
  %14747 = vmatprep.subr.bf16.mxu0 %v12684
  %14748 = vmatpush1.bf16.msra.mxu0 %v12683
  %14749 = vmatprep.subr.bf16.mxu0 %v12691
  %14750 = vmatpush1.bf16.msra.mxu0 %v12690
  %14751 = vmatprep.subr.bf16.mxu0 %v12698
  %14752 = vmatpush1.bf16.msra.mxu0 %v12697
  %14753 = vmatprep.subr.bf16.mxu0 %v12705
  %14754 = vmatpush1.bf16.msra.mxu0 %v12704
  %14755 = vmatprep.subr.bf16.mxu0 %v12712
  %14756 = vmatpush1.bf16.msra.mxu0 %v12711
  %14757 = vmatprep.subr.bf16.mxu0 %v12719
  %14758 = vmatpush1.bf16.msra.mxu0 %v12718
  %14759 = vmatprep.subr.bf16.mxu0 %v12726
  %14760 = vmatpush1.bf16.msra.mxu0 %v12725
  %14761 = vmatprep.subr.bf16.mxu0 %v12733
  %14762 = vmatpush1.bf16.msra.mxu0 %v12732
  %14763 = vmatprep.subr.bf16.mxu0 %v12740
  %14764 = vmatpush1.bf16.msra.mxu0 %v12739
  %14765 = vmatprep.subr.bf16.mxu0 %v12747
  %14766 = vmatpush1.bf16.msra.mxu0 %v12746
  %14767 = vmatprep.subr.bf16.mxu0 %v12754
  %14768 = vmatpush1.bf16.msra.mxu0 %v12753
  %14769 = vmatprep.mubr.bf16.mxu0 %v8202
  %14770 = vmatmul.mubr.bf16.gmra.mrb[0].mxu0 %v8201
  %v14771 = vpop.f32.mrb[0].mxu0
  %v14772 = vadd.f32 %v14731, %v14771
  %v14773 = vpop.f32.mrb[0].mxu0
  %v14774 = vadd.f32 %v14733, %v14773
  %v14775 = vpop.f32.mrb[0].mxu0
  %v14776 = vpop.f32.mrb[0].mxu0
  %14777 = vdwg.mxu0
  %14778 = vmatprep.subr.bf16.mxu0 %v12761
  %14779 = vmatpush1.bf16.msra.mxu0 %v12760
  %14780 = vmatprep.subr.bf16.mxu0 %v12768
  %14781 = vmatpush1.bf16.msra.mxu0 %v12767
  %14782 = vmatprep.subr.bf16.mxu0 %v12775
  %14783 = vmatpush1.bf16.msra.mxu0 %v12774
  %14784 = vmatprep.subr.bf16.mxu0 %v12782
  %14785 = vmatpush1.bf16.msra.mxu0 %v12781
  %14786 = vmatprep.subr.bf16.mxu0 %v12789
  %14787 = vmatpush1.bf16.msra.mxu0 %v12788
  %14788 = vmatprep.subr.bf16.mxu0 %v12796
  %14789 = vmatpush1.bf16.msra.mxu0 %v12795
  %14790 = vmatprep.subr.bf16.mxu0 %v12803
  %14791 = vmatpush1.bf16.msra.mxu0 %v12802
  %14792 = vmatprep.subr.bf16.mxu0 %v12810
  %14793 = vmatpush1.bf16.msra.mxu0 %v12809
  %14794 = vmatprep.subr.bf16.mxu0 %v12817
  %14795 = vmatpush1.bf16.msra.mxu0 %v12816
  %14796 = vmatprep.subr.bf16.mxu0 %v12824
  %14797 = vmatpush1.bf16.msra.mxu0 %v12823
  %14798 = vmatprep.subr.bf16.mxu0 %v12831
  %14799 = vmatpush1.bf16.msra.mxu0 %v12830
  %14800 = vmatprep.subr.bf16.mxu0 %v12838
  %14801 = vmatpush1.bf16.msra.mxu0 %v12837
  %14802 = vmatprep.subr.bf16.mxu0 %v12845
  %14803 = vmatpush1.bf16.msra.mxu0 %v12844
  %14804 = vmatprep.subr.bf16.mxu0 %v12852
  %14805 = vmatpush1.bf16.msra.mxu0 %v12851
  %14806 = vmatprep.subr.bf16.mxu0 %v12859
  %14807 = vmatpush1.bf16.msra.mxu0 %v12858
  %14808 = vmatprep.subr.bf16.mxu0 %v12866
  %14809 = vmatpush1.bf16.msra.mxu0 %v12865
  %14810 = vmatprep.mubr.bf16.mxu0 %v8204
  %14811 = vmatmul.mubr.bf16.gmra.mrb[0].mxu0 %v8203
  %v14812 = vpop.f32.mrb[0].mxu0
  %v14813 = vadd.f32 %v14772, %v14812
  %v14814 = vpop.f32.mrb[0].mxu0
  %v14815 = vadd.f32 %v14774, %v14814
  %v14816 = vpop.f32.mrb[0].mxu0
  %v14817 = vpop.f32.mrb[0].mxu0
  %14818 = vdwg.mxu0
  %14819 = vmatprep.subr.bf16.mxu0 %v12873
  %14820 = vmatpush1.bf16.msra.mxu0 %v12872
  %14821 = vmatprep.subr.bf16.mxu0 %v12880
  %14822 = vmatpush1.bf16.msra.mxu0 %v12879
  %14823 = vmatprep.subr.bf16.mxu0 %v12887
  %14824 = vmatpush1.bf16.msra.mxu0 %v12886
  %14825 = vmatprep.subr.bf16.mxu0 %v12894
  %14826 = vmatpush1.bf16.msra.mxu0 %v12893
  %14827 = vmatprep.subr.bf16.mxu0 %v12901
  %14828 = vmatpush1.bf16.msra.mxu0 %v12900
  %14829 = vmatprep.subr.bf16.mxu0 %v12908
  %14830 = vmatpush1.bf16.msra.mxu0 %v12907
  %14831 = vmatprep.subr.bf16.mxu0 %v12915
  %14832 = vmatpush1.bf16.msra.mxu0 %v12914
  %14833 = vmatprep.subr.bf16.mxu0 %v12922
  %14834 = vmatpush1.bf16.msra.mxu0 %v12921
  %14835 = vmatprep.subr.bf16.mxu0 %v12929
  %14836 = vmatpush1.bf16.msra.mxu0 %v12928
  %14837 = vmatprep.subr.bf16.mxu0 %v12936
  %14838 = vmatpush1.bf16.msra.mxu0 %v12935
  %14839 = vmatprep.subr.bf16.mxu0 %v12943
  %14840 = vmatpush1.bf16.msra.mxu0 %v12942
  %14841 = vmatprep.subr.bf16.mxu0 %v12950
  %14842 = vmatpush1.bf16.msra.mxu0 %v12949
  %14843 = vmatprep.subr.bf16.mxu0 %v12957
  %14844 = vmatpush1.bf16.msra.mxu0 %v12956
  %14845 = vmatprep.subr.bf16.mxu0 %v12964
  %14846 = vmatpush1.bf16.msra.mxu0 %v12963
  %14847 = vmatprep.subr.bf16.mxu0 %v12971
  %14848 = vmatpush1.bf16.msra.mxu0 %v12970
  %14849 = vmatprep.subr.bf16.mxu0 %v12978
  %14850 = vmatpush1.bf16.msra.mxu0 %v12977
  %14851 = vmatprep.mubr.bf16.mxu0 %v8206
  %14852 = vmatmul.mubr.bf16.gmra.mrb[0].mxu0 %v8205
  %v14853 = vpop.f32.mrb[0].mxu0
  %v14854 = vadd.f32 %v14813, %v14853
  %v14855 = vpop.f32.mrb[0].mxu0
  %v14856 = vadd.f32 %v14815, %v14855
  %v14857 = vpop.f32.mrb[0].mxu0
  %v14858 = vpop.f32.mrb[0].mxu0
  %14859 = vdwg.mxu0
  %14860 = vmatprep.subr.bf16.mxu0 0
  %14861 = vmatpush1.bf16.msra.mxu0 %v12090
  %14862 = vmatprep.subr.bf16.mxu0 0
  %14863 = vmatpush1.bf16.msra.mxu0 %v12097
  %14864 = vmatprep.subr.bf16.mxu0 0
  %14865 = vmatpush1.bf16.msra.mxu0 %v12104
  %14866 = vmatprep.subr.bf16.mxu0 0
  %14867 = vmatpush1.bf16.msra.mxu0 %v12111
  %14868 = vmatprep.subr.bf16.mxu0 0
  %14869 = vmatpush1.bf16.msra.mxu0 %v12118
  %14870 = vmatprep.subr.bf16.mxu0 0
  %14871 = vmatpush1.bf16.msra.mxu0 %v12125
  %14872 = vmatprep.subr.bf16.mxu0 0
  %14873 = vmatpush1.bf16.msra.mxu0 %v12132
  %14874 = vmatprep.subr.bf16.mxu0 0
  %14875 = vmatpush1.bf16.msra.mxu0 %v12139
  %14876 = vmatprep.subr.bf16.mxu0 0
  %14877 = vmatpush1.bf16.msra.mxu0 %v12146
  %14878 = vmatprep.subr.bf16.mxu0 0
  %14879 = vmatpush1.bf16.msra.mxu0 %v12153
  %14880 = vmatprep.subr.bf16.mxu0 0
  %14881 = vmatpush1.bf16.msra.mxu0 %v12160
  %14882 = vmatprep.subr.bf16.mxu0 0
  %14883 = vmatpush1.bf16.msra.mxu0 %v12167
  %14884 = vmatprep.subr.bf16.mxu0 0
  %14885 = vmatpush1.bf16.msra.mxu0 %v12174
  %14886 = vmatprep.subr.bf16.mxu0 0
  %14887 = vmatpush1.bf16.msra.mxu0 %v12181
  %14888 = vmatprep.subr.bf16.mxu0 0
  %14889 = vmatpush1.bf16.msra.mxu0 %v12188
  %14890 = vmatprep.subr.bf16.mxu0 0
  %14891 = vmatpush1.bf16.msra.mxu0 %v12195
  %14892 = vmatprep.mubr.bf16.mxu0 %v8192
  %14893 = vmatmul.mubr.bf16.gmra.mrb[0].mxu0 %v8191
  %v14894 = vpop.f32.mrb[0].mxu0
  %v14895 = vadd.f32 %v9260, %v14894
  %v14896 = vpop.f32.mrb[0].mxu0
  %v14897 = vpop.f32.mrb[0].mxu0
  %v14898 = vpop.f32.mrb[0].mxu0
  %14899 = vdwg.mxu0
  %14900 = vmatprep.subr.bf16.mxu0 0
  %14901 = vmatpush1.bf16.msra.mxu0 %v12202
  %14902 = vmatprep.subr.bf16.mxu0 0
  %14903 = vmatpush1.bf16.msra.mxu0 %v12209
  %14904 = vmatprep.subr.bf16.mxu0 0
  %14905 = vmatpush1.bf16.msra.mxu0 %v12216
  %14906 = vmatprep.subr.bf16.mxu0 0
  %14907 = vmatpush1.bf16.msra.mxu0 %v12223
  %14908 = vmatprep.subr.bf16.mxu0 0
  %14909 = vmatpush1.bf16.msra.mxu0 %v12230
  %14910 = vmatprep.subr.bf16.mxu0 0
  %14911 = vmatpush1.bf16.msra.mxu0 %v12237
  %14912 = vmatprep.subr.bf16.mxu0 0
  %14913 = vmatpush1.bf16.msra.mxu0 %v12244
  %14914 = vmatprep.subr.bf16.mxu0 0
  %14915 = vmatpush1.bf16.msra.mxu0 %v12251
  %14916 = vmatprep.subr.bf16.mxu0 0
  %14917 = vmatpush1.bf16.msra.mxu0 %v12258
  %14918 = vmatprep.subr.bf16.mxu0 0
  %14919 = vmatpush1.bf16.msra.mxu0 %v12265
  %14920 = vmatprep.subr.bf16.mxu0 0
  %14921 = vmatpush1.bf16.msra.mxu0 %v12272
  %14922 = vmatprep.subr.bf16.mxu0 0
  %14923 = vmatpush1.bf16.msra.mxu0 %v12279
  %14924 = vmatprep.subr.bf16.mxu0 0
  %14925 = vmatpush1.bf16.msra.mxu0 %v12286
  %14926 = vmatprep.subr.bf16.mxu0 0
  %14927 = vmatpush1.bf16.msra.mxu0 %v12293
  %14928 = vmatprep.subr.bf16.mxu0 0
  %14929 = vmatpush1.bf16.msra.mxu0 %v12300
  %14930 = vmatprep.subr.bf16.mxu0 0
  %14931 = vmatpush1.bf16.msra.mxu0 %v12307
  %14932 = vmatprep.mubr.bf16.mxu0 %v8194
  %14933 = vmatmul.mubr.bf16.gmra.mrb[0].mxu0 %v8193
  %v14934 = vpop.f32.mrb[0].mxu0
  %v14935 = vadd.f32 %v14895, %v14934
  %v14936 = vpop.f32.mrb[0].mxu0
  %v14937 = vpop.f32.mrb[0].mxu0
  %v14938 = vpop.f32.mrb[0].mxu0
  %14939 = vdwg.mxu0
  %14940 = vmatprep.subr.bf16.mxu0 0
  %14941 = vmatpush1.bf16.msra.mxu0 %v12314
  %14942 = vmatprep.subr.bf16.mxu0 0
  %14943 = vmatpush1.bf16.msra.mxu0 %v12321
  %14944 = vmatprep.subr.bf16.mxu0 0
  %14945 = vmatpush1.bf16.msra.mxu0 %v12328
  %14946 = vmatprep.subr.bf16.mxu0 0
  %14947 = vmatpush1.bf16.msra.mxu0 %v12335
  %14948 = vmatprep.subr.bf16.mxu0 0
  %14949 = vmatpush1.bf16.msra.mxu0 %v12342
  %14950 = vmatprep.subr.bf16.mxu0 0
  %14951 = vmatpush1.bf16.msra.mxu0 %v12349
  %14952 = vmatprep.subr.bf16.mxu0 0
  %14953 = vmatpush1.bf16.msra.mxu0 %v12356
  %14954 = vmatprep.subr.bf16.mxu0 0
  %14955 = vmatpush1.bf16.msra.mxu0 %v12363
  %14956 = vmatprep.subr.bf16.mxu0 0
  %14957 = vmatpush1.bf16.msra.mxu0 %v12370
  %14958 = vmatprep.subr.bf16.mxu0 0
  %14959 = vmatpush1.bf16.msra.mxu0 %v12377
  %14960 = vmatprep.subr.bf16.mxu0 0
  %14961 = vmatpush1.bf16.msra.mxu0 %v12384
  %14962 = vmatprep.subr.bf16.mxu0 0
  %14963 = vmatpush1.bf16.msra.mxu0 %v12391
  %14964 = vmatprep.subr.bf16.mxu0 0
  %14965 = vmatpush1.bf16.msra.mxu0 %v12398
  %14966 = vmatprep.subr.bf16.mxu0 0
  %14967 = vmatpush1.bf16.msra.mxu0 %v12405
  %14968 = vmatprep.subr.bf16.mxu0 0
  %14969 = vmatpush1.bf16.msra.mxu0 %v12412
  %14970 = vmatprep.subr.bf16.mxu0 0
  %14971 = vmatpush1.bf16.msra.mxu0 %v12419
  %14972 = vmatprep.mubr.bf16.mxu0 %v8196
  %14973 = vmatmul.mubr.bf16.gmra.mrb[0].mxu0 %v8195
  %v14974 = vpop.f32.mrb[0].mxu0
  %v14975 = vadd.f32 %v14935, %v14974
  %v14976 = vpop.f32.mrb[0].mxu0
  %v14977 = vpop.f32.mrb[0].mxu0
  %v14978 = vpop.f32.mrb[0].mxu0
  %14979 = vdwg.mxu0
  %14980 = vmatprep.subr.bf16.mxu0 0
  %14981 = vmatpush1.bf16.msra.mxu0 %v12426
  %14982 = vmatprep.subr.bf16.mxu0 0
  %14983 = vmatpush1.bf16.msra.mxu0 %v12433
  %14984 = vmatprep.subr.bf16.mxu0 0
  %14985 = vmatpush1.bf16.msra.mxu0 %v12440
  %14986 = vmatprep.subr.bf16.mxu0 0
  %14987 = vmatpush1.bf16.msra.mxu0 %v12447
  %14988 = vmatprep.subr.bf16.mxu0 0
  %14989 = vmatpush1.bf16.msra.mxu0 %v12454
  %14990 = vmatprep.subr.bf16.mxu0 0
  %14991 = vmatpush1.bf16.msra.mxu0 %v12461
  %14992 = vmatprep.subr.bf16.mxu0 0
  %14993 = vmatpush1.bf16.msra.mxu0 %v12468
  %14994 = vmatprep.subr.bf16.mxu0 0
  %14995 = vmatpush1.bf16.msra.mxu0 %v12475
  %14996 = vmatprep.subr.bf16.mxu0 0
  %14997 = vmatpush1.bf16.msra.mxu0 %v12482
  %14998 = vmatprep.subr.bf16.mxu0 0
  %14999 = vmatpush1.bf16.msra.mxu0 %v12489
  %15000 = vmatprep.subr.bf16.mxu0 0
  %15001 = vmatpush1.bf16.msra.mxu0 %v12496
  %15002 = vmatprep.subr.bf16.mxu0 0
  %15003 = vmatpush1.bf16.msra.mxu0 %v12503
  %15004 = vmatprep.subr.bf16.mxu0 0
  %15005 = vmatpush1.bf16.msra.mxu0 %v12510
  %15006 = vmatprep.subr.bf16.mxu0 0
  %15007 = vmatpush1.bf16.msra.mxu0 %v12517
  %15008 = vmatprep.subr.bf16.mxu0 0
  %15009 = vmatpush1.bf16.msra.mxu0 %v12524
  %15010 = vmatprep.subr.bf16.mxu0 0
  %15011 = vmatpush1.bf16.msra.mxu0 %v12531
  %15012 = vmatprep.mubr.bf16.mxu0 %v8198
  %15013 = vmatmul.mubr.bf16.gmra.mrb[0].mxu0 %v8197
  %v15014 = vpop.f32.mrb[0].mxu0
  %v15015 = vadd.f32 %v14975, %v15014
  %v15016 = vpop.f32.mrb[0].mxu0
  %v15017 = vpop.f32.mrb[0].mxu0
  %v15018 = vpop.f32.mrb[0].mxu0
  %15019 = vdwg.mxu0
  %15020 = vmatprep.subr.bf16.mxu0 0
  %15021 = vmatpush1.bf16.msra.mxu0 %v12538
  %15022 = vmatprep.subr.bf16.mxu0 0
  %15023 = vmatpush1.bf16.msra.mxu0 %v12545
  %15024 = vmatprep.subr.bf16.mxu0 0
  %15025 = vmatpush1.bf16.msra.mxu0 %v12552
  %15026 = vmatprep.subr.bf16.mxu0 0
  %15027 = vmatpush1.bf16.msra.mxu0 %v12559
  %15028 = vmatprep.subr.bf16.mxu0 0
  %15029 = vmatpush1.bf16.msra.mxu0 %v12566
  %15030 = vmatprep.subr.bf16.mxu0 0
  %15031 = vmatpush1.bf16.msra.mxu0 %v12573
  %15032 = vmatprep.subr.bf16.mxu0 0
  %15033 = vmatpush1.bf16.msra.mxu0 %v12580
  %15034 = vmatprep.subr.bf16.mxu0 0
  %15035 = vmatpush1.bf16.msra.mxu0 %v12587
  %15036 = vmatprep.subr.bf16.mxu0 0
  %15037 = vmatpush1.bf16.msra.mxu0 %v12594
  %15038 = vmatprep.subr.bf16.mxu0 0
  %15039 = vmatpush1.bf16.msra.mxu0 %v12601
  %15040 = vmatprep.subr.bf16.mxu0 0
  %15041 = vmatpush1.bf16.msra.mxu0 %v12608
  %15042 = vmatprep.subr.bf16.mxu0 0
  %15043 = vmatpush1.bf16.msra.mxu0 %v12615
  %15044 = vmatprep.subr.bf16.mxu0 0
  %15045 = vmatpush1.bf16.msra.mxu0 %v12622
  %15046 = vmatprep.subr.bf16.mxu0 0
  %15047 = vmatpush1.bf16.msra.mxu0 %v12629
  %15048 = vmatprep.subr.bf16.mxu0 0
  %15049 = vmatpush1.bf16.msra.mxu0 %v12636
  %15050 = vmatprep.subr.bf16.mxu0 0
  %15051 = vmatpush1.bf16.msra.mxu0 %v12643
  %15052 = vmatprep.mubr.bf16.mxu0 %v8200
  %15053 = vmatmul.mubr.bf16.gmra.mrb[0].mxu0 %v8199
  %v15054 = vpop.f32.mrb[0].mxu0
  %v15055 = vadd.f32 %v15015, %v15054
  %v15056 = vpop.f32.mrb[0].mxu0
  %v15057 = vpop.f32.mrb[0].mxu0
  %v15058 = vpop.f32.mrb[0].mxu0
  %15059 = vdwg.mxu0
  %15060 = vmatprep.subr.bf16.mxu0 0
  %15061 = vmatpush1.bf16.msra.mxu0 %v12650
  %15062 = vmatprep.subr.bf16.mxu0 0
  %15063 = vmatpush1.bf16.msra.mxu0 %v12657
  %15064 = vmatprep.subr.bf16.mxu0 0
  %15065 = vmatpush1.bf16.msra.mxu0 %v12664
  %15066 = vmatprep.subr.bf16.mxu0 0
  %15067 = vmatpush1.bf16.msra.mxu0 %v12671
  %15068 = vmatprep.subr.bf16.mxu0 0
  %15069 = vmatpush1.bf16.msra.mxu0 %v12678
  %15070 = vmatprep.subr.bf16.mxu0 0
  %15071 = vmatpush1.bf16.msra.mxu0 %v12685
  %15072 = vmatprep.subr.bf16.mxu0 0
  %15073 = vmatpush1.bf16.msra.mxu0 %v12692
  %15074 = vmatprep.subr.bf16.mxu0 0
  %15075 = vmatpush1.bf16.msra.mxu0 %v12699
  %15076 = vmatprep.subr.bf16.mxu0 0
  %15077 = vmatpush1.bf16.msra.mxu0 %v12706
  %15078 = vmatprep.subr.bf16.mxu0 0
  %15079 = vmatpush1.bf16.msra.mxu0 %v12713
  %15080 = vmatprep.subr.bf16.mxu0 0
  %15081 = vmatpush1.bf16.msra.mxu0 %v12720
  %15082 = vmatprep.subr.bf16.mxu0 0
  %15083 = vmatpush1.bf16.msra.mxu0 %v12727
  %15084 = vmatprep.subr.bf16.mxu0 0
  %15085 = vmatpush1.bf16.msra.mxu0 %v12734
  %15086 = vmatprep.subr.bf16.mxu0 0
  %15087 = vmatpush1.bf16.msra.mxu0 %v12741
  %15088 = vmatprep.subr.bf16.mxu0 0
  %15089 = vmatpush1.bf16.msra.mxu0 %v12748
  %15090 = vmatprep.subr.bf16.mxu0 0
  %15091 = vmatpush1.bf16.msra.mxu0 %v12755
  %15092 = vmatprep.mubr.bf16.mxu0 %v8202
  %15093 = vmatmul.mubr.bf16.gmra.mrb[0].mxu0 %v8201
  %v15094 = vpop.f32.mrb[0].mxu0
  %v15095 = vadd.f32 %v15055, %v15094
  %v15096 = vpop.f32.mrb[0].mxu0
  %v15097 = vpop.f32.mrb[0].mxu0
  %v15098 = vpop.f32.mrb[0].mxu0
  %15099 = vdwg.mxu0
  %15100 = vmatprep.subr.bf16.mxu0 0
  %15101 = vmatpush1.bf16.msra.mxu0 %v12762
  %15102 = vmatprep.subr.bf16.mxu0 0
  %15103 = vmatpush1.bf16.msra.mxu0 %v12769
  %15104 = vmatprep.subr.bf16.mxu0 0
  %15105 = vmatpush1.bf16.msra.mxu0 %v12776
  %15106 = vmatprep.subr.bf16.mxu0 0
  %15107 = vmatpush1.bf16.msra.mxu0 %v12783
  %15108 = vmatprep.subr.bf16.mxu0 0
  %15109 = vmatpush1.bf16.msra.mxu0 %v12790
  %15110 = vmatprep.subr.bf16.mxu0 0
  %15111 = vmatpush1.bf16.msra.mxu0 %v12797
  %15112 = vmatprep.subr.bf16.mxu0 0
  %15113 = vmatpush1.bf16.msra.mxu0 %v12804
  %15114 = vmatprep.subr.bf16.mxu0 0
  %15115 = vmatpush1.bf16.msra.mxu0 %v12811
  %15116 = vmatprep.subr.bf16.mxu0 0
  %15117 = vmatpush1.bf16.msra.mxu0 %v12818
  %15118 = vmatprep.subr.bf16.mxu0 0
  %15119 = vmatpush1.bf16.msra.mxu0 %v12825
  %15120 = vmatprep.subr.bf16.mxu0 0
  %15121 = vmatpush1.bf16.msra.mxu0 %v12832
  %15122 = vmatprep.subr.bf16.mxu0 0
  %15123 = vmatpush1.bf16.msra.mxu0 %v12839
  %15124 = vmatprep.subr.bf16.mxu0 0
  %15125 = vmatpush1.bf16.msra.mxu0 %v12846
  %15126 = vmatprep.subr.bf16.mxu0 0
  %15127 = vmatpush1.bf16.msra.mxu0 %v12853
  %15128 = vmatprep.subr.bf16.mxu0 0
  %15129 = vmatpush1.bf16.msra.mxu0 %v12860
  %15130 = vmatprep.subr.bf16.mxu0 0
  %15131 = vmatpush1.bf16.msra.mxu0 %v12867
  %15132 = vmatprep.mubr.bf16.mxu0 %v8204
  %15133 = vmatmul.mubr.bf16.gmra.mrb[0].mxu0 %v8203
  %v15134 = vpop.f32.mrb[0].mxu0
  %v15135 = vadd.f32 %v15095, %v15134
  %v15136 = vpop.f32.mrb[0].mxu0
  %v15137 = vpop.f32.mrb[0].mxu0
  %v15138 = vpop.f32.mrb[0].mxu0
  %15139 = vdwg.mxu0
  %15140 = vmatprep.subr.bf16.mxu0 0
  %15141 = vmatpush1.bf16.msra.mxu0 %v12874
  %15142 = vmatprep.subr.bf16.mxu0 0
  %15143 = vmatpush1.bf16.msra.mxu0 %v12881
  %15144 = vmatprep.subr.bf16.mxu0 0
  %15145 = vmatpush1.bf16.msra.mxu0 %v12888
  %15146 = vmatprep.subr.bf16.mxu0 0
  %15147 = vmatpush1.bf16.msra.mxu0 %v12895
  %15148 = vmatprep.subr.bf16.mxu0 0
  %15149 = vmatpush1.bf16.msra.mxu0 %v12902
  %15150 = vmatprep.subr.bf16.mxu0 0
  %15151 = vmatpush1.bf16.msra.mxu0 %v12909
  %15152 = vmatprep.subr.bf16.mxu0 0
  %15153 = vmatpush1.bf16.msra.mxu0 %v12916
  %15154 = vmatprep.subr.bf16.mxu0 0
  %15155 = vmatpush1.bf16.msra.mxu0 %v12923
  %15156 = vmatprep.subr.bf16.mxu0 0
  %15157 = vmatpush1.bf16.msra.mxu0 %v12930
  %15158 = vmatprep.subr.bf16.mxu0 0
  %15159 = vmatpush1.bf16.msra.mxu0 %v12937
  %15160 = vmatprep.subr.bf16.mxu0 0
  %15161 = vmatpush1.bf16.msra.mxu0 %v12944
  %15162 = vmatprep.subr.bf16.mxu0 0
  %15163 = vmatpush1.bf16.msra.mxu0 %v12951
  %15164 = vmatprep.subr.bf16.mxu0 0
  %15165 = vmatpush1.bf16.msra.mxu0 %v12958
  %15166 = vmatprep.subr.bf16.mxu0 0
  %15167 = vmatpush1.bf16.msra.mxu0 %v12965
  %15168 = vmatprep.subr.bf16.mxu0 0
  %15169 = vmatpush1.bf16.msra.mxu0 %v12972
  %15170 = vmatprep.subr.bf16.mxu0 0
  %15171 = vmatpush1.bf16.msra.mxu0 %v12979
  %15172 = vmatprep.mubr.bf16.mxu0 %v8206
  %15173 = vmatmul.mubr.bf16.gmra.mrb[0].mxu0 %v8205
  %v15174 = vpop.f32.mrb[0].mxu0
  %v15175 = vadd.f32 %v15135, %v15174
  %v15176 = vpop.f32.mrb[0].mxu0
  %v15177 = vpop.f32.mrb[0].mxu0
  %v15178 = vpop.f32.mrb[0].mxu0
  %15179 = vdwg.mxu0
  %v15180 = vtanh.pop %v14198
  %v15181 = vtanh.pop %v14200
  %v15182 = vtanh.pop %v14526
  %v15183 = vtanh.pop %v14528
  %v15184 = vtanh.pop %v14854
  %v15185 = vtanh.pop %v14856
  %v15186 = vtanh.pop %v15175
  %15187 = vst [vmem:[%s7] sm:$0xff] %v15180
  %15188 = vst [vmem:[%s7 + $0x8] sm:$0xff] %v15181
  %15189 = vst [vmem:[%s7 + $0x10] sm:$0xff] %v15182
  %15190 = vst [vmem:[%s7 + $0x18] sm:$0xff] %v15183
  %15191 = vst [vmem:[%s7 + $0x20] sm:$0xff] %v15184
  %15192 = vst [vmem:[%s7 + $0x28] sm:$0xff] %v15185
  %15193 = vst [vmem:[%s7 + $0x30] sm:$0xff] %v15186
  // Predicated region
  $region30: #{generator_forward.1} parent=0 // pred_check
    _
  $region31: #{generator_forward.1} parent=0 // pred_check_branch
    %15195 = sbr.rel (0) target = $region33
  $region32: #{generator_forward.1} parent=0 // pred_region
    _
  $region33: #{generator_forward.1} parent=0 // pred_fallthru
    _
  // Predicated region
  $region34: #{generator_forward.1} parent=0 // pred_check
    _
  $region35: #{generator_forward.1} parent=0 // pred_check_branch
    %15197 = sbr.rel (0) target = $region37
  $region36: #{generator_forward.1} parent=0 // pred_region
    _
  $region37: #{generator_forward.1} parent=0 // pred_fallthru
    _

</llo_original>
